<compile_context>
chip_gen: v5e
topology: v5e:2x2
jax: 0.10.0
libtpu: 0.0.40
codegen_flags: <defaults>
</compile_context>

<pallas_src>
import functools

import jax
import jax.numpy as jnp
from jax.experimental import pallas as pl
from jax.experimental.pallas import tpu as pltpu

HIDDEN = 256          # fixed by the module: nn.Linear(H*W+1, 256)
TIME_EMB_DIM = 32     # fixed by the module
NUM_ACTIONS = 4
HEAD_PAD = 128        # actor(4) + critic(1) padded to one lane-dense 128 slab
U_STEPS = 8           # timesteps per grid iteration (amortizes pipeline overhead)


# --------------------------------------------------------------------------- #
# Kernel 1: serial LSTM recurrence, U timesteps per grid iteration.           #
# --------------------------------------------------------------------------- #
def _recurrent_kernel(goal_ref,     # (U, D_in)   f32  per-block goal distributions
                      h0c0_ref,     # (1, 512)    f32  [h0 | c0] (resident)
                      w1_ref,       # (D_in, 256) bf16 (resident)
                      b1_ref,       # (1, 256)    f32
                      wih_ref,      # (256, 1024) bf16 W_ih^T (resident)
                      bg_ref,       # (1, 1024)   f32  b_ih + b_hh
                      whh_ref,      # (256, 1024) bf16 W_hh^T (resident)
                      h_out_ref,    # (U, 256)    f32  h_t for this block
                      c_last_ref,   # (1, 256)    f32  c at the true last step
                      h_sc, c_sc,   # (1, 256)    f32  recurrent state carries
                      xi_sc,        # (U, 1024)   f32  hoisted gate pre-activations
                      *, n_steps, u_steps):
    g = pl.program_id(0)

    @pl.when(g == 0)
    def _():
        h_sc[...] = h0c0_ref[:, :HIDDEN]
        c_sc[...] = h0c0_ref[:, HIDDEN:]

    # ---- Batched (recurrence-independent) part for this block of U steps ----
    # x  = relu(goal @ W1 + b1)                     (U, 256)
    # XI = x @ W_ih^T + (b_ih + b_hh)               (U, 1024)
    x = jnp.dot(goal_ref[...].astype(jnp.bfloat16), w1_ref[...],
                preferred_element_type=jnp.float32) + b1_ref[...]
    x = jnp.maximum(x, 0.0)
    xi_sc[...] = jnp.dot(x.astype(jnp.bfloat16), wih_ref[...],
                         preferred_element_type=jnp.float32) + bg_ref[...]

    # ---- Serial recurrence: only h @ W_hh^T (K = 256) per step ----
    h = h_sc[...]
    c = c_sc[...]
    for u in range(u_steps):                      # static unroll, U small
        gates = xi_sc[u:u + 1, :] + jnp.dot(
            h.astype(jnp.bfloat16), whh_ref[...],
            preferred_element_type=jnp.float32)                    # (1, 1024)
        # PyTorch LSTMCell gate order: i, f, g, o
        i_g = jax.nn.sigmoid(gates[:, 0 * HIDDEN:1 * HIDDEN])
        f_g = jax.nn.sigmoid(gates[:, 1 * HIDDEN:2 * HIDDEN])
        g_g = jnp.tanh(gates[:, 2 * HIDDEN:3 * HIDDEN])
        o_g = jax.nn.sigmoid(gates[:, 3 * HIDDEN:4 * HIDDEN])
        c = f_g * c + i_g * g_g
        h = o_g * jnp.tanh(c)
        h_out_ref[u:u + 1, :] = h

        t_global = g * u_steps + u

        @pl.when(t_global == n_steps - 1)
        def _():
            c_last_ref[...] = c

    h_sc[...] = h
    c_sc[...] = c


# --------------------------------------------------------------------------- #
# Kernel 2: deferred, batched actor/critic head + masked log_softmax.         #
# --------------------------------------------------------------------------- #
def _head_kernel(h_ref,        # (U, 256)  f32
                 temb_ref,     # (U, 32)   f32
                 wh_ref,       # (256,128) bf16 merged actor|critic (h part)
                 wt_ref,       # (32, 128) bf16 merged actor|critic (time part)
                 b_ref,        # (1, 128)  f32  merged bias
                 out_ref):     # (U, 128)  f32  [log_probs(4) | value(1) | pad]
    head = (jnp.dot(h_ref[...].astype(jnp.bfloat16), wh_ref[...],
                    preferred_element_type=jnp.float32)
            + jnp.dot(temb_ref[...].astype(jnp.bfloat16), wt_ref[...],
                      preferred_element_type=jnp.float32)
            + b_ref[...])                                           # (U, 128)

    # log_softmax over the 4 actor lanes via lane masking; lane 4 = critic.
    lane = jax.lax.broadcasted_iota(jnp.int32, head.shape, 1)
    is_act = lane < NUM_ACTIONS
    masked = jnp.where(is_act, head, jnp.float32(-jnp.inf))
    m = jnp.max(masked, axis=1, keepdims=True)
    e = jnp.exp(masked - m)
    lse = jnp.log(jnp.sum(e, axis=1, keepdims=True))
    logp = head - m - lse
    out_ref[...] = jnp.where(is_act, logp, head)


# --------------------------------------------------------------------------- #
# Wrappers                                                                    #
# --------------------------------------------------------------------------- #
@jax.jit
def oracle_gold_rollout(packed, goal_probs, tx_seq, h0, c0):
    """Fused T-step OracleGold rollout.

    Args:
      packed:      params from `pack_params`.
      goal_probs:  (T, H*W+1) f32 gold goal distributions (one per step).
      tx_seq:      (T,) int32 timestep indices for the time embedding.
      h0, c0:      (1, 256) f32 initial recurrent state.

    Returns:
      log_probs (T, 4), values (T, 1), h_seq (T, 256), c_last (1, 256).
    """
    T, d_in = goal_probs.shape
    U = U_STEPS
    T_pad = ((T + U - 1) // U) * U
    n_blocks = T_pad // U

    goal_p = jnp.zeros((T_pad, d_in), jnp.float32).at[:T].set(goal_probs)
    h0c0 = jnp.concatenate([h0, c0], axis=1)                       # (1, 512)

    # Tiny time-embedding gather, off the serial chain (plain XLA, clamped).
    table = packed["time_emb_table"]                               # (L, 32)
    temb = table[jnp.clip(tx_seq, 0, table.shape[0] - 1)]          # (T, 32)
    temb_p = jnp.zeros((T_pad, TIME_EMB_DIM), jnp.float32).at[:T].set(temb)

    # ---------------- recurrent pass (strictly sequential) ---------------- #
    rec_grid = pltpu.PrefetchScalarGridSpec(
        num_scalar_prefetch=0,
        grid=(n_blocks,),
        in_specs=[
            pl.BlockSpec((U, d_in), lambda g: (g, 0)),
            pl.BlockSpec((1, 2 * HIDDEN), lambda g: (0, 0)),
            # weights / biases: constant block index -> VMEM-resident
            pl.BlockSpec((d_in, HIDDEN), lambda g: (0, 0)),
            pl.BlockSpec((1, HIDDEN), lambda g: (0, 0)),
            pl.BlockSpec((HIDDEN, 4 * HIDDEN), lambda g: (0, 0)),
            pl.BlockSpec((1, 4 * HIDDEN), lambda g: (0, 0)),
            pl.BlockSpec((HIDDEN, 4 * HIDDEN), lambda g: (0, 0)),
        ],
        out_specs=(
            pl.BlockSpec((U, HIDDEN), lambda g: (g, 0)),
            pl.BlockSpec((1, HIDDEN), lambda g: (0, 0)),
        ),
        scratch_shapes=[
            pltpu.VMEM((1, HIDDEN), jnp.float32),        # h carry
            pltpu.VMEM((1, HIDDEN), jnp.float32),        # c carry
            pltpu.VMEM((U, 4 * HIDDEN), jnp.float32),    # hoisted XI block
        ],
    )

    h_seq_pad, c_last = pl.pallas_call(
        functools.partial(_recurrent_kernel, n_steps=T, u_steps=U),
        out_shape=(
            jax.ShapeDtypeStruct((T_pad, HIDDEN), jnp.float32),
            jax.ShapeDtypeStruct((1, HIDDEN), jnp.float32),
        ),
        grid_spec=rec_grid,
        compiler_params=pltpu.CompilerParams(
            dimension_semantics=("arbitrary",)),       # sequential recurrence
    )(goal_p, h0c0, packed["w1"], packed["b1"],
      packed["w_ih_t"], packed["b_gates"], packed["w_hh_t"])

    # ---------------- deferred batched head pass (parallel) --------------- #
    # TODO(synk): on v7x this could be placed on the second TensorCore via
    # core_map to overlap with the next rollout; kept as a parallel grid here.
    head_grid = pltpu.PrefetchScalarGridSpec(
        num_scalar_prefetch=0,
        grid=(n_blocks,),
        in_specs=[
            pl.BlockSpec((U, HIDDEN), lambda g: (g, 0)),
            pl.BlockSpec((U, TIME_EMB_DIM), lambda g: (g, 0)),
            pl.BlockSpec((HIDDEN, HEAD_PAD), lambda g: (0, 0)),
            pl.BlockSpec((TIME_EMB_DIM, HEAD_PAD), lambda g: (0, 0)),
            pl.BlockSpec((1, HEAD_PAD), lambda g: (0, 0)),
        ],
        out_specs=pl.BlockSpec((U, HEAD_PAD), lambda g: (g, 0)),
    )

    head_out = pl.pallas_call(
        _head_kernel,
        out_shape=jax.ShapeDtypeStruct((T_pad, HEAD_PAD), jnp.float32),
        grid_spec=head_grid,
        compiler_params=pltpu.CompilerParams(
            dimension_semantics=("parallel",)),
    )(h_seq_pad, temb_p, packed["head_w_h"], packed["head_w_t"],
      packed["head_b"])

    log_probs = head_out[:T, :NUM_ACTIONS]
    values = head_out[:T, NUM_ACTIONS:NUM_ACTIONS + 1]
    h_seq = h_seq_pad[:T]
    return log_probs, values, h_seq, c_last


def oracle_gold_forward(packed, goal_prob, tx, h_prev, c_prev):
    """Single-step forward matching OracleGold.forward's return structure:
       (log_softmax(actor), (hx, cx), None, {'state_value': ...})."""
    goal_probs = jnp.asarray(goal_prob, jnp.float32).reshape(1, -1)
    tx_seq = jnp.asarray(tx, jnp.int32).reshape(1)
    log_probs, values, h_seq, c_last = oracle_gold_rollout(
        packed, goal_probs, tx_seq, h_prev, c_prev)
    volatile = {"state_value": values[0:1]}
    return log_probs[0:1], (h_seq[0:1], c_last), None, volatile


# --------------------------------------------------------------------------- #
# Parameters (PyTorch layout) and packing into the kernel's fused layout.     #
# --------------------------------------------------------------------------- #
def make_raw_params(key, final_image_height, final_image_width, max_episode_length):
    """Deterministic synthetic parameters in PyTorch layout (weight = (out, in))."""
    d_in = final_image_height * final_image_width + 1
    ks = jax.random.split(key, 12)

    def u(k, shape, fan_in):
        s = 1.0 / (fan_in ** 0.5)
        return jax.random.uniform(k, shape, jnp.float32, minval=-s, maxval=s)

    return {
        # nn.Embedding(max_episode_length + 1, 32)
        "time_emb_table": jax.random.normal(
            ks[0], (max_episode_length + 1, TIME_EMB_DIM), jnp.float32),
        # nn.Linear(H*W+1, 256)
        "linear_w": u(ks[1], (HIDDEN, d_in), d_in),
        "linear_b": u(ks[2], (HIDDEN,), d_in),
        # nn.LSTMCell(256, 256): gate order i, f, g, o
        "lstm_w_ih": u(ks[3], (4 * HIDDEN, HIDDEN), HIDDEN),
        "lstm_w_hh": u(ks[4], (4 * HIDDEN, HIDDEN), HIDDEN),
        "lstm_b_ih": u(ks[5], (4 * HIDDEN,), HIDDEN),
        "lstm_b_hh": u(ks[6], (4 * HIDDEN,), HIDDEN),
        # actor_linear: (256 + 32) -> 4 ; critic_linear: (256 + 32) -> 1
        "actor_w": u(ks[7], (NUM_ACTIONS, HIDDEN + TIME_EMB_DIM), HIDDEN + TIME_EMB_DIM),
        "actor_b": u(ks[8], (NUM_ACTIONS,), HIDDEN + TIME_EMB_DIM),
        "critic_w": u(ks[9], (1, HIDDEN + TIME_EMB_DIM), HIDDEN + TIME_EMB_DIM),
        "critic_b": u(ks[10], (1,), HIDDEN + TIME_EMB_DIM),
    }


def pack_params(raw):
    """Transpose / fuse / pad raw PyTorch-layout params into the kernel layout.
    Weight matrices go bf16 (HBM/VMEM bandwidth); biases stay f32."""
    f32, bf16 = jnp.float32, jnp.bfloat16

    # y = x @ W^T + b
    w1 = raw["linear_w"].T.astype(bf16)                            # (d_in, 256)
    b1 = raw["linear_b"].reshape(1, HIDDEN).astype(f32)

    # Split gate weights: XI = x @ W_ih^T + (b_ih + b_hh) is hoisted (batched);
    # only h @ W_hh^T stays inside the serial loop.
    w_ih_t = raw["lstm_w_ih"].T.astype(bf16)                       # (256, 1024)
    w_hh_t = raw["lstm_w_hh"].T.astype(bf16)                       # (256, 1024)
    b_gates = (raw["lstm_b_ih"] + raw["lstm_b_hh"]).reshape(1, 4 * HIDDEN).astype(f32)

    # Merged, lane-padded actor|critic head (deferred, batched over T).
    a_wh = raw["actor_w"][:, :HIDDEN]          # (4, 256)
    a_wt = raw["actor_w"][:, HIDDEN:]          # (4, 32)
    c_wh = raw["critic_w"][:, :HIDDEN]         # (1, 256)
    c_wt = raw["critic_w"][:, HIDDEN:]         # (1, 32)
    head_w_h = (jnp.zeros((HIDDEN, HEAD_PAD), f32)
                .at[:, :NUM_ACTIONS].set(a_wh.T)
                .at[:, NUM_ACTIONS:NUM_ACTIONS + 1].set(c_wh.T)).astype(bf16)
    head_w_t = (jnp.zeros((TIME_EMB_DIM, HEAD_PAD), f32)
                .at[:, :NUM_ACTIONS].set(a_wt.T)
                .at[:, NUM_ACTIONS:NUM_ACTIONS + 1].set(c_wt.T)).astype(bf16)
    head_b = (jnp.zeros((1, HEAD_PAD), f32)
              .at[0, :NUM_ACTIONS].set(raw["actor_b"])
              .at[0, NUM_ACTIONS:NUM_ACTIONS + 1].set(raw["critic_b"]))

    return {
        "time_emb_table": raw["time_emb_table"].astype(f32),       # (L, 32)
        "w1": w1, "b1": b1,
        "w_ih_t": w_ih_t, "w_hh_t": w_hh_t, "b_gates": b_gates,
        "head_w_h": head_w_h, "head_w_t": head_w_t, "head_b": head_b,
    }


def generate_gold_prob(goal, final_image_height, final_image_width):
    """GoalPrediction.generate_gold_prob: one-hot over H*W+1 (last = no goal)."""
    d = final_image_height * final_image_width + 1
    if goal is None or goal[0] is None or goal[1] is None:
        idx = d - 1
    else:
        row, col = int(round(goal[0])), int(round(goal[1]))
        idx = row * final_image_width + col
    return jax.nn.one_hot(idx, d, dtype=jnp.float32).reshape(1, d)


# --------------------------------------------------------------------------- #
# Pure-JAX reference (same packed/bf16 weights) for correctness checking.     #
# --------------------------------------------------------------------------- #
def reference_rollout(packed, goal_probs, tx_seq, h0, c0):
    bf16 = jnp.bfloat16
    T = goal_probs.shape[0]

    x = jnp.dot(goal_probs.astype(bf16), packed["w1"],
                preferred_element_type=jnp.float32) + packed["b1"]
    x = jnp.maximum(x, 0.0)
    xi = jnp.dot(x.astype(bf16), packed["w_ih_t"],
                 preferred_element_type=jnp.float32) + packed["b_gates"]

    h, c = h0, c0
    hs = []
    for t in range(T):
        gates = xi[t:t + 1, :] + jnp.dot(h.astype(bf16), packed["w_hh_t"],
                                         preferred_element_type=jnp.float32)
        i_g = jax.nn.sigmoid(gates[:, :HIDDEN])
        f_g = jax.nn.sigmoid(gates[:, HIDDEN:2 * HIDDEN])
        g_g = jnp.tanh(gates[:, 2 * HIDDEN:3 * HIDDEN])
        o_g = jax.nn.sigmoid(gates[:, 3 * HIDDEN:])
        c = f_g * c + i_g * g_g
        h = o_g * jnp.tanh(c)
        hs.append(h)
    h_seq = jnp.concatenate(hs, 0)                                 # (T, 256)

    table = packed["time_emb_table"]
    temb = table[jnp.clip(tx_seq, 0, table.shape[0] - 1)]          # (T, 32)
    head = (jnp.dot(h_seq.astype(bf16), packed["head_w_h"],
                    preferred_element_type=jnp.float32)
            + jnp.dot(temb.astype(bf16), packed["head_w_t"],
                      preferred_element_type=jnp.float32)
            + packed["head_b"])
    logp = jax.nn.log_softmax(head[:, :NUM_ACTIONS], axis=1)
    vals = head[:, NUM_ACTIONS:NUM_ACTIONS + 1]
    return logp, vals, h_seq, c


# --------------------------------------------------------------------------- #
if __name__ == "__main__":
    final_image_height = 8
    final_image_width = 8
    max_episode_length = 10
    T = 8                                             # fused rollout length

    key = jax.random.PRNGKey(0)
    pkey, hkey, ckey = jax.random.split(key, 3)
    raw = make_raw_params(pkey, final_image_height, final_image_width,
                          max_episode_length)
    packed = pack_params(raw)

    # Per-step goals (some steps have no visible goal) and timestep indices.
    goals = [(3, 5), (0, 0), None, (7, 7), (2, 6), (5, 1), None, (4, 4)]
    goal_probs = jnp.concatenate(
        [generate_gold_prob(g, final_image_height, final_image_width)
         for g in goals], axis=0)                     # (T, 65)
    tx_seq = jnp.arange(T, dtype=jnp.int32)
    h0 = jax.random.normal(hkey, (1, HIDDEN), jnp.float32) * 0.1
    c0 = jax.random.normal(ckey, (1, HIDDEN), jnp.float32) * 0.1

    # Fused T-step rollout (recurrent pallas_call + batched head pallas_call).
    log_probs, values, h_seq, c_last = oracle_gold_rollout(
        packed, goal_probs, tx_seq, h0, c0)
    jax.block_until_ready((log_probs, values, h_seq, c_last))

    assert log_probs.shape == (T, NUM_ACTIONS)
    assert values.shape == (T, 1)
    assert h_seq.shape == (T, HIDDEN)
    assert c_last.shape == (1, HIDDEN)

    # log_softmax rows exponentiate to 1.
    row_sums = jnp.sum(jnp.exp(log_probs), axis=1)
    assert bool(jnp.all(jnp.abs(row_sums - 1.0) < 1e-3))

    # Match the step-by-step pure-JAX reference (same bf16 weights).
    ref_logp, ref_val, ref_h, ref_c = reference_rollout(
        packed, goal_probs, tx_seq, h0, c0)
    assert bool(jnp.allclose(log_probs, ref_logp, atol=1e-2, rtol=1e-2))
    assert bool(jnp.allclose(values, ref_val, atol=1e-2, rtol=1e-2))
    assert bool(jnp.allclose(h_seq, ref_h, atol=1e-2, rtol=1e-2))
    assert bool(jnp.allclose(c_last, ref_c, atol=1e-2, rtol=1e-2))

    # Single-step wrapper returns the module's 4-tuple.
    lp1, (h1, c1), none_slot, volatile = oracle_gold_forward(
        packed, goal_probs[0], tx_seq[0], h0, c0)
    jax.block_until_ready((lp1, h1, c1, volatile["state_value"]))
    assert lp1.shape == (1, NUM_ACTIONS) and none_slot is None
    assert volatile["state_value"].shape == (1, 1)
    assert h1.shape == (1, HIDDEN) and c1.shape == (1, HIDDEN)
    assert bool(jnp.allclose(lp1, log_probs[0:1], atol=1e-2, rtol=1e-2))
    assert bool(jnp.allclose(h1, ref_h[0:1], atol=1e-2, rtol=1e-2))

    print("KERNEL_OK")
</pallas_src>

<mosaic_0001>
module attributes {stable_mosaic.version = 11 : i64} {
  func.func @_recurrent_kernel(%arg0: i32, %arg1: memref<8x65xf32, #tpu.memory_space<vmem>>, %arg2: memref<1x512xf32, #tpu.memory_space<vmem>>, %arg3: memref<65x256xbf16, #tpu.memory_space<vmem>>, %arg4: memref<1x256xf32, #tpu.memory_space<vmem>>, %arg5: memref<256x1024xbf16, #tpu.memory_space<vmem>>, %arg6: memref<1x1024xf32, #tpu.memory_space<vmem>>, %arg7: memref<256x1024xbf16, #tpu.memory_space<vmem>>, %arg8: memref<8x256xf32, #tpu.memory_space<vmem>>, %arg9: memref<1x256xf32, #tpu.memory_space<vmem>>, %arg10: memref<1x256xf32, #tpu.memory_space<vmem>>, %arg11: memref<1x256xf32, #tpu.memory_space<vmem>>, %arg12: memref<8x1024xf32, #tpu.memory_space<vmem>>) attributes {dimension_semantics = [#tpu.dimension_semantics<arbitrary>], iteration_bounds = array<i64: 1>, scalar_prefetch = 0 : i64, scratch_operands = 3 : i64, tpu.core_type = #tpu.core_type<tc>, window_params = [{transform_indices = @transform_0, window_bounds = array<i64: 8, 65>}, {pipeline_mode = #tpu.pipeline_mode<synchronous>, transform_indices = @transform_1, window_bounds = array<i64: 1, 512>}, {pipeline_mode = #tpu.pipeline_mode<synchronous>, transform_indices = @transform_2, window_bounds = array<i64: 65, 256>}, {pipeline_mode = #tpu.pipeline_mode<synchronous>, transform_indices = @transform_3, window_bounds = array<i64: 1, 256>}, {pipeline_mode = #tpu.pipeline_mode<synchronous>, transform_indices = @transform_4, window_bounds = array<i64: 256, 1024>}, {pipeline_mode = #tpu.pipeline_mode<synchronous>, transform_indices = @transform_5, window_bounds = array<i64: 1, 1024>}, {pipeline_mode = #tpu.pipeline_mode<synchronous>, transform_indices = @transform_6, window_bounds = array<i64: 256, 1024>}, {transform_indices = @transform_7, window_bounds = array<i64: 8, 256>}, {pipeline_mode = #tpu.pipeline_mode<synchronous>, transform_indices = @transform_8, window_bounds = array<i64: 1, 256>}]} {
    %c0_i32 = arith.constant 0 : i32
    %0 = arith.cmpi eq, %arg0, %c0_i32 : i32
    %1 = arith.extui %0 : i1 to i32
    %c0_i32_0 = arith.constant 0 : i32
    %2 = arith.cmpi ne, %1, %c0_i32_0 : i32
    scf.if %2 {
      %c0_119 = arith.constant 0 : index
      %c0_120 = arith.constant 0 : index
      %311 = vector.load %arg2[%c0_119, %c0_120] : memref<1x512xf32, #tpu.memory_space<vmem>>, vector<1x256xf32>
      %c0_121 = arith.constant 0 : index
      %c0_122 = arith.constant 0 : index
      %312 = vector.load %arg10[%c0_121, %c0_122] : memref<1x256xf32, #tpu.memory_space<vmem>>, vector<1x256xf32>
      tpu.vector_store %arg10[%c0_121, %c0_122], %311 {strides = array<i32>} : memref<1x256xf32, #tpu.memory_space<vmem>>, vector<1x256xf32>,
      %c0_123 = arith.constant 0 : index
      %c256 = arith.constant 256 : index
      %313 = vector.load %arg2[%c0_123, %c256] : memref<1x512xf32, #tpu.memory_space<vmem>>, vector<1x256xf32>
      %c0_124 = arith.constant 0 : index
      %c0_125 = arith.constant 0 : index
      %314 = vector.load %arg11[%c0_124, %c0_125] : memref<1x256xf32, #tpu.memory_space<vmem>>, vector<1x256xf32>
      tpu.vector_store %arg11[%c0_124, %c0_125], %313 {strides = array<i32>} : memref<1x256xf32, #tpu.memory_space<vmem>>, vector<1x256xf32>,
    } else {
    }
    %c0 = arith.constant 0 : index
    %c0_1 = arith.constant 0 : index
    %3 = vector.load %arg1[%c0, %c0_1] : memref<8x65xf32, #tpu.memory_space<vmem>>, vector<8x65xf32>
    %4 = arith.truncf %3 : vector<8x65xf32> to vector<8x65xbf16>
    %c0_2 = arith.constant 0 : index
    %c0_3 = arith.constant 0 : index
    %5 = vector.load %arg3[%c0_2, %c0_3] : memref<65x256xbf16, #tpu.memory_space<vmem>>, vector<65x256xbf16>
    %cst = arith.constant dense<0.000000e+00> : vector<8x256xf32>
    %6 = tpu.matmul %4, %5, %cst {dimension_numbers = #tpu.dot_dimension_numbers<[1], [0], [0], [1], [0, 0, 1, 1], [], []>} : vector<8x65xbf16>, vector<65x256xbf16>, vector<8x256xf32> -> vector<8x256xf32>
    %c0_4 = arith.constant 0 : index
    %c0_5 = arith.constant 0 : index
    %7 = vector.load %arg4[%c0_4, %c0_5] : memref<1x256xf32, #tpu.memory_space<vmem>>, vector<1x256xf32>
    %8 = vector.broadcast %7 : vector<1x256xf32> to vector<8x256xf32>
    %9 = arith.addf %6, %8 : vector<8x256xf32>
    %cst_6 = arith.constant 0.000000e+00 : f32
    %10 = vector.broadcast %cst_6 : f32 to vector<8x256xf32>
    %11 = arith.maximumf %9, %10 : vector<8x256xf32>
    %12 = arith.truncf %11 : vector<8x256xf32> to vector<8x256xbf16>
    %c0_7 = arith.constant 0 : index
    %c0_8 = arith.constant 0 : index
    %13 = vector.load %arg5[%c0_7, %c0_8] : memref<256x1024xbf16, #tpu.memory_space<vmem>>, vector<256x1024xbf16>
    %cst_9 = arith.constant dense<0.000000e+00> : vector<8x1024xf32>
    %14 = tpu.matmul %12, %13, %cst_9 {dimension_numbers = #tpu.dot_dimension_numbers<[1], [0], [0], [1], [0, 0, 1, 1], [], []>} : vector<8x256xbf16>, vector<256x1024xbf16>, vector<8x1024xf32> -> vector<8x1024xf32>
    %c0_10 = arith.constant 0 : index
    %c0_11 = arith.constant 0 : index
    %15 = vector.load %arg6[%c0_10, %c0_11] : memref<1x1024xf32, #tpu.memory_space<vmem>>, vector<1x1024xf32>
    %16 = vector.broadcast %15 : vector<1x1024xf32> to vector<8x1024xf32>
    %17 = arith.addf %14, %16 : vector<8x1024xf32>
    %c0_12 = arith.constant 0 : index
    %c0_13 = arith.constant 0 : index
    %18 = vector.load %arg12[%c0_12, %c0_13] : memref<8x1024xf32, #tpu.memory_space<vmem>>, vector<8x1024xf32>
    tpu.vector_store %arg12[%c0_12, %c0_13], %17 {strides = array<i32>} : memref<8x1024xf32, #tpu.memory_space<vmem>>, vector<8x1024xf32>,
    %c0_14 = arith.constant 0 : index
    %c0_15 = arith.constant 0 : index
    %19 = vector.load %arg10[%c0_14, %c0_15] : memref<1x256xf32, #tpu.memory_space<vmem>>, vector<1x256xf32>
    %c0_16 = arith.constant 0 : index
    %c0_17 = arith.constant 0 : index
    %20 = vector.load %arg11[%c0_16, %c0_17] : memref<1x256xf32, #tpu.memory_space<vmem>>, vector<1x256xf32>
    %c0_18 = arith.constant 0 : index
    %c0_19 = arith.constant 0 : index
    %21 = vector.load %arg12[%c0_18, %c0_19] : memref<8x1024xf32, #tpu.memory_space<vmem>>, vector<1x1024xf32>
    %22 = arith.truncf %19 : vector<1x256xf32> to vector<1x256xbf16>
    %c0_20 = arith.constant 0 : index
    %c0_21 = arith.constant 0 : index
    %23 = vector.load %arg7[%c0_20, %c0_21] : memref<256x1024xbf16, #tpu.memory_space<vmem>>, vector<256x1024xbf16>
    %cst_22 = arith.constant dense<0.000000e+00> : vector<1x1024xf32>
    %24 = tpu.matmul %22, %23, %cst_22 {dimension_numbers = #tpu.dot_dimension_numbers<[1], [0], [0], [1], [0, 0, 1, 1], [], []>} : vector<1x256xbf16>, vector<256x1024xbf16>, vector<1x1024xf32> -> vector<1x1024xf32>
    %25 = arith.addf %21, %24 : vector<1x1024xf32>
    %26 = vector.extract_strided_slice %25 {offsets = [0, 0], sizes = [1, 256], strides = [1, 1]} : vector<1x1024xf32> to vector<1x256xf32>
    %27 = arith.negf %26 : vector<1x256xf32>
    %28 = math.exp %27 : vector<1x256xf32>
    %cst_23 = arith.constant 1.000000e+00 : f32
    %29 = vector.broadcast %cst_23 : f32 to vector<1x256xf32>
    %30 = arith.addf %29, %28 : vector<1x256xf32>
    %31 = arith.divf %29, %30 : vector<1x256xf32>
    %32 = vector.extract_strided_slice %25 {offsets = [0, 256], sizes = [1, 256], strides = [1, 1]} : vector<1x1024xf32> to vector<1x256xf32>
    %33 = arith.negf %32 : vector<1x256xf32>
    %34 = math.exp %33 : vector<1x256xf32>
    %cst_24 = arith.constant 1.000000e+00 : f32
    %35 = vector.broadcast %cst_24 : f32 to vector<1x256xf32>
    %36 = arith.addf %35, %34 : vector<1x256xf32>
    %37 = arith.divf %35, %36 : vector<1x256xf32>
    %38 = vector.extract_strided_slice %25 {offsets = [0, 512], sizes = [1, 256], strides = [1, 1]} : vector<1x1024xf32> to vector<1x256xf32>
    %39 = math.tanh %38 : vector<1x256xf32>
    %40 = vector.extract_strided_slice %25 {offsets = [0, 768], sizes = [1, 256], strides = [1, 1]} : vector<1x1024xf32> to vector<1x256xf32>
    %41 = arith.negf %40 : vector<1x256xf32>
    %42 = math.exp %41 : vector<1x256xf32>
    %cst_25 = arith.constant 1.000000e+00 : f32
    %43 = vector.broadcast %cst_25 : f32 to vector<1x256xf32>
    %44 = arith.addf %43, %42 : vector<1x256xf32>
    %45 = arith.divf %43, %44 : vector<1x256xf32>
    %46 = arith.mulf %37, %20 : vector<1x256xf32>
    %47 = arith.mulf %31, %39 : vector<1x256xf32>
    %48 = arith.addf %46, %47 : vector<1x256xf32>
    %49 = math.tanh %48 : vector<1x256xf32>
    %50 = arith.mulf %45, %49 : vector<1x256xf32>
    %c0_26 = arith.constant 0 : index
    %c0_27 = arith.constant 0 : index
    %51 = vector.load %arg8[%c0_26, %c0_27] : memref<8x256xf32, #tpu.memory_space<vmem>>, vector<1x256xf32>
    tpu.vector_store %arg8[%c0_26, %c0_27], %50 {strides = array<i32>} : memref<8x256xf32, #tpu.memory_space<vmem>>, vector<1x256xf32>,
    %c8_i32 = arith.constant 8 : i32
    %52 = arith.muli %arg0, %c8_i32 : i32
    %c0_i32_28 = arith.constant 0 : i32
    %53 = arith.addi %52, %c0_i32_28 : i32
    %c7_i32 = arith.constant 7 : i32
    %54 = arith.cmpi eq, %53, %c7_i32 : i32
    %55 = arith.extui %54 : i1 to i32
    %c0_i32_29 = arith.constant 0 : i32
    %56 = arith.cmpi ne, %55, %c0_i32_29 : i32
    scf.if %56 {
      %c0_119 = arith.constant 0 : index
      %c0_120 = arith.constant 0 : index
      %311 = vector.load %arg9[%c0_119, %c0_120] : memref<1x256xf32, #tpu.memory_space<vmem>>, vector<1x256xf32>
      tpu.vector_store %arg9[%c0_119, %c0_120], %48 {strides = array<i32>} : memref<1x256xf32, #tpu.memory_space<vmem>>, vector<1x256xf32>,
    } else {
    }
    %c1 = arith.constant 1 : index
    %c0_30 = arith.constant 0 : index
    %57 = vector.load %arg12[%c1, %c0_30] : memref<8x1024xf32, #tpu.memory_space<vmem>>, vector<1x1024xf32>
    %58 = arith.truncf %50 : vector<1x256xf32> to vector<1x256xbf16>
    %c0_31 = arith.constant 0 : index
    %c0_32 = arith.constant 0 : index
    %59 = vector.load %arg7[%c0_31, %c0_32] : memref<256x1024xbf16, #tpu.memory_space<vmem>>, vector<256x1024xbf16>
    %cst_33 = arith.constant dense<0.000000e+00> : vector<1x1024xf32>
    %60 = tpu.matmul %58, %59, %cst_33 {dimension_numbers = #tpu.dot_dimension_numbers<[1], [0], [0], [1], [0, 0, 1, 1], [], []>} : vector<1x256xbf16>, vector<256x1024xbf16>, vector<1x1024xf32> -> vector<1x1024xf32>
    %61 = arith.addf %57, %60 : vector<1x1024xf32>
    %62 = vector.extract_strided_slice %61 {offsets = [0, 0], sizes = [1, 256], strides = [1, 1]} : vector<1x1024xf32> to vector<1x256xf32>
    %63 = arith.negf %62 : vector<1x256xf32>
    %64 = math.exp %63 : vector<1x256xf32>
    %cst_34 = arith.constant 1.000000e+00 : f32
    %65 = vector.broadcast %cst_34 : f32 to vector<1x256xf32>
    %66 = arith.addf %65, %64 : vector<1x256xf32>
    %67 = arith.divf %65, %66 : vector<1x256xf32>
    %68 = vector.extract_strided_slice %61 {offsets = [0, 256], sizes = [1, 256], strides = [1, 1]} : vector<1x1024xf32> to vector<1x256xf32>
    %69 = arith.negf %68 : vector<1x256xf32>
    %70 = math.exp %69 : vector<1x256xf32>
    %cst_35 = arith.constant 1.000000e+00 : f32
    %71 = vector.broadcast %cst_35 : f32 to vector<1x256xf32>
    %72 = arith.addf %71, %70 : vector<1x256xf32>
    %73 = arith.divf %71, %72 : vector<1x256xf32>
    %74 = vector.extract_strided_slice %61 {offsets = [0, 512], sizes = [1, 256], strides = [1, 1]} : vector<1x1024xf32> to vector<1x256xf32>
    %75 = math.tanh %74 : vector<1x256xf32>
    %76 = vector.extract_strided_slice %61 {offsets = [0, 768], sizes = [1, 256], strides = [1, 1]} : vector<1x1024xf32> to vector<1x256xf32>
    %77 = arith.negf %76 : vector<1x256xf32>
    %78 = math.exp %77 : vector<1x256xf32>
    %cst_36 = arith.constant 1.000000e+00 : f32
    %79 = vector.broadcast %cst_36 : f32 to vector<1x256xf32>
    %80 = arith.addf %79, %78 : vector<1x256xf32>
    %81 = arith.divf %79, %80 : vector<1x256xf32>
    %82 = arith.mulf %73, %48 : vector<1x256xf32>
    %83 = arith.mulf %67, %75 : vector<1x256xf32>
    %84 = arith.addf %82, %83 : vector<1x256xf32>
    %85 = math.tanh %84 : vector<1x256xf32>
    %86 = arith.mulf %81, %85 : vector<1x256xf32>
    %c1_37 = arith.constant 1 : index
    %c0_38 = arith.constant 0 : index
    %87 = vector.load %arg8[%c1_37, %c0_38] : memref<8x256xf32, #tpu.memory_space<vmem>>, vector<1x256xf32>
    tpu.vector_store %arg8[%c1_37, %c0_38], %86 {strides = array<i32>} : memref<8x256xf32, #tpu.memory_space<vmem>>, vector<1x256xf32>,
    %c8_i32_39 = arith.constant 8 : i32
    %88 = arith.muli %arg0, %c8_i32_39 : i32
    %c1_i32 = arith.constant 1 : i32
    %89 = arith.addi %88, %c1_i32 : i32
    %c7_i32_40 = arith.constant 7 : i32
    %90 = arith.cmpi eq, %89, %c7_i32_40 : i32
    %91 = arith.extui %90 : i1 to i32
    %c0_i32_41 = arith.constant 0 : i32
    %92 = arith.cmpi ne, %91, %c0_i32_41 : i32
    scf.if %92 {
      %c0_119 = arith.constant 0 : index
      %c0_120 = arith.constant 0 : index
      %311 = vector.load %arg9[%c0_119, %c0_120] : memref<1x256xf32, #tpu.memory_space<vmem>>, vector<1x256xf32>
      tpu.vector_store %arg9[%c0_119, %c0_120], %84 {strides = array<i32>} : memref<1x256xf32, #tpu.memory_space<vmem>>, vector<1x256xf32>,
    } else {
    }
    %c2 = arith.constant 2 : index
    %c0_42 = arith.constant 0 : index
    %93 = vector.load %arg12[%c2, %c0_42] : memref<8x1024xf32, #tpu.memory_space<vmem>>, vector<1x1024xf32>
    %94 = arith.truncf %86 : vector<1x256xf32> to vector<1x256xbf16>
    %c0_43 = arith.constant 0 : index
    %c0_44 = arith.constant 0 : index
    %95 = vector.load %arg7[%c0_43, %c0_44] : memref<256x1024xbf16, #tpu.memory_space<vmem>>, vector<256x1024xbf16>
    %cst_45 = arith.constant dense<0.000000e+00> : vector<1x1024xf32>
    %96 = tpu.matmul %94, %95, %cst_45 {dimension_numbers = #tpu.dot_dimension_numbers<[1], [0], [0], [1], [0, 0, 1, 1], [], []>} : vector<1x256xbf16>, vector<256x1024xbf16>, vector<1x1024xf32> -> vector<1x1024xf32>
    %97 = arith.addf %93, %96 : vector<1x1024xf32>
    %98 = vector.extract_strided_slice %97 {offsets = [0, 0], sizes = [1, 256], strides = [1, 1]} : vector<1x1024xf32> to vector<1x256xf32>
    %99 = arith.negf %98 : vector<1x256xf32>
    %100 = math.exp %99 : vector<1x256xf32>
    %cst_46 = arith.constant 1.000000e+00 : f32
    %101 = vector.broadcast %cst_46 : f32 to vector<1x256xf32>
    %102 = arith.addf %101, %100 : vector<1x256xf32>
    %103 = arith.divf %101, %102 : vector<1x256xf32>
    %104 = vector.extract_strided_slice %97 {offsets = [0, 256], sizes = [1, 256], strides = [1, 1]} : vector<1x1024xf32> to vector<1x256xf32>
    %105 = arith.negf %104 : vector<1x256xf32>
    %106 = math.exp %105 : vector<1x256xf32>
    %cst_47 = arith.constant 1.000000e+00 : f32
    %107 = vector.broadcast %cst_47 : f32 to vector<1x256xf32>
    %108 = arith.addf %107, %106 : vector<1x256xf32>
    %109 = arith.divf %107, %108 : vector<1x256xf32>
    %110 = vector.extract_strided_slice %97 {offsets = [0, 512], sizes = [1, 256], strides = [1, 1]} : vector<1x1024xf32> to vector<1x256xf32>
    %111 = math.tanh %110 : vector<1x256xf32>
    %112 = vector.extract_strided_slice %97 {offsets = [0, 768], sizes = [1, 256], strides = [1, 1]} : vector<1x1024xf32> to vector<1x256xf32>
    %113 = arith.negf %112 : vector<1x256xf32>
    %114 = math.exp %113 : vector<1x256xf32>
    %cst_48 = arith.constant 1.000000e+00 : f32
    %115 = vector.broadcast %cst_48 : f32 to vector<1x256xf32>
    %116 = arith.addf %115, %114 : vector<1x256xf32>
    %117 = arith.divf %115, %116 : vector<1x256xf32>
    %118 = arith.mulf %109, %84 : vector<1x256xf32>
    %119 = arith.mulf %103, %111 : vector<1x256xf32>
    %120 = arith.addf %118, %119 : vector<1x256xf32>
    %121 = math.tanh %120 : vector<1x256xf32>
    %122 = arith.mulf %117, %121 : vector<1x256xf32>
    %c2_49 = arith.constant 2 : index
    %c0_50 = arith.constant 0 : index
    %123 = vector.load %arg8[%c2_49, %c0_50] : memref<8x256xf32, #tpu.memory_space<vmem>>, vector<1x256xf32>
    tpu.vector_store %arg8[%c2_49, %c0_50], %122 {strides = array<i32>} : memref<8x256xf32, #tpu.memory_space<vmem>>, vector<1x256xf32>,
    %c8_i32_51 = arith.constant 8 : i32
    %124 = arith.muli %arg0, %c8_i32_51 : i32
    %c2_i32 = arith.constant 2 : i32
    %125 = arith.addi %124, %c2_i32 : i32
    %c7_i32_52 = arith.constant 7 : i32
    %126 = arith.cmpi eq, %125, %c7_i32_52 : i32
    %127 = arith.extui %126 : i1 to i32
    %c0_i32_53 = arith.constant 0 : i32
    %128 = arith.cmpi ne, %127, %c0_i32_53 : i32
    scf.if %128 {
      %c0_119 = arith.constant 0 : index
      %c0_120 = arith.constant 0 : index
      %311 = vector.load %arg9[%c0_119, %c0_120] : memref<1x256xf32, #tpu.memory_space<vmem>>, vector<1x256xf32>
      tpu.vector_store %arg9[%c0_119, %c0_120], %120 {strides = array<i32>} : memref<1x256xf32, #tpu.memory_space<vmem>>, vector<1x256xf32>,
    } else {
    }
    %c3 = arith.constant 3 : index
    %c0_54 = arith.constant 0 : index
    %129 = vector.load %arg12[%c3, %c0_54] : memref<8x1024xf32, #tpu.memory_space<vmem>>, vector<1x1024xf32>
    %130 = arith.truncf %122 : vector<1x256xf32> to vector<1x256xbf16>
    %c0_55 = arith.constant 0 : index
    %c0_56 = arith.constant 0 : index
    %131 = vector.load %arg7[%c0_55, %c0_56] : memref<256x1024xbf16, #tpu.memory_space<vmem>>, vector<256x1024xbf16>
    %cst_57 = arith.constant dense<0.000000e+00> : vector<1x1024xf32>
    %132 = tpu.matmul %130, %131, %cst_57 {dimension_numbers = #tpu.dot_dimension_numbers<[1], [0], [0], [1], [0, 0, 1, 1], [], []>} : vector<1x256xbf16>, vector<256x1024xbf16>, vector<1x1024xf32> -> vector<1x1024xf32>
    %133 = arith.addf %129, %132 : vector<1x1024xf32>
    %134 = vector.extract_strided_slice %133 {offsets = [0, 0], sizes = [1, 256], strides = [1, 1]} : vector<1x1024xf32> to vector<1x256xf32>
    %135 = arith.negf %134 : vector<1x256xf32>
    %136 = math.exp %135 : vector<1x256xf32>
    %cst_58 = arith.constant 1.000000e+00 : f32
    %137 = vector.broadcast %cst_58 : f32 to vector<1x256xf32>
    %138 = arith.addf %137, %136 : vector<1x256xf32>
    %139 = arith.divf %137, %138 : vector<1x256xf32>
    %140 = vector.extract_strided_slice %133 {offsets = [0, 256], sizes = [1, 256], strides = [1, 1]} : vector<1x1024xf32> to vector<1x256xf32>
    %141 = arith.negf %140 : vector<1x256xf32>
    %142 = math.exp %141 : vector<1x256xf32>
    %cst_59 = arith.constant 1.000000e+00 : f32
    %143 = vector.broadcast %cst_59 : f32 to vector<1x256xf32>
    %144 = arith.addf %143, %142 : vector<1x256xf32>
    %145 = arith.divf %143, %144 : vector<1x256xf32>
    %146 = vector.extract_strided_slice %133 {offsets = [0, 512], sizes = [1, 256], strides = [1, 1]} : vector<1x1024xf32> to vector<1x256xf32>
    %147 = math.tanh %146 : vector<1x256xf32>
    %148 = vector.extract_strided_slice %133 {offsets = [0, 768], sizes = [1, 256], strides = [1, 1]} : vector<1x1024xf32> to vector<1x256xf32>
    %149 = arith.negf %148 : vector<1x256xf32>
    %150 = math.exp %149 : vector<1x256xf32>
    %cst_60 = arith.constant 1.000000e+00 : f32
    %151 = vector.broadcast %cst_60 : f32 to vector<1x256xf32>
    %152 = arith.addf %151, %150 : vector<1x256xf32>
    %153 = arith.divf %151, %152 : vector<1x256xf32>
    %154 = arith.mulf %145, %120 : vector<1x256xf32>
    %155 = arith.mulf %139, %147 : vector<1x256xf32>
    %156 = arith.addf %154, %155 : vector<1x256xf32>
    %157 = math.tanh %156 : vector<1x256xf32>
    %158 = arith.mulf %153, %157 : vector<1x256xf32>
    %c3_61 = arith.constant 3 : index
    %c0_62 = arith.constant 0 : index
    %159 = vector.load %arg8[%c3_61, %c0_62] : memref<8x256xf32, #tpu.memory_space<vmem>>, vector<1x256xf32>
    tpu.vector_store %arg8[%c3_61, %c0_62], %158 {strides = array<i32>} : memref<8x256xf32, #tpu.memory_space<vmem>>, vector<1x256xf32>,
    %c8_i32_63 = arith.constant 8 : i32
    %160 = arith.muli %arg0, %c8_i32_63 : i32
    %c3_i32 = arith.constant 3 : i32
    %161 = arith.addi %160, %c3_i32 : i32
    %c7_i32_64 = arith.constant 7 : i32
    %162 = arith.cmpi eq, %161, %c7_i32_64 : i32
    %163 = arith.extui %162 : i1 to i32
    %c0_i32_65 = arith.constant 0 : i32
    %164 = arith.cmpi ne, %163, %c0_i32_65 : i32
    scf.if %164 {
      %c0_119 = arith.constant 0 : index
      %c0_120 = arith.constant 0 : index
      %311 = vector.load %arg9[%c0_119, %c0_120] : memref<1x256xf32, #tpu.memory_space<vmem>>, vector<1x256xf32>
      tpu.vector_store %arg9[%c0_119, %c0_120], %156 {strides = array<i32>} : memref<1x256xf32, #tpu.memory_space<vmem>>, vector<1x256xf32>,
    } else {
    }
    %c4 = arith.constant 4 : index
    %c0_66 = arith.constant 0 : index
    %165 = vector.load %arg12[%c4, %c0_66] : memref<8x1024xf32, #tpu.memory_space<vmem>>, vector<1x1024xf32>
    %166 = arith.truncf %158 : vector<1x256xf32> to vector<1x256xbf16>
    %c0_67 = arith.constant 0 : index
    %c0_68 = arith.constant 0 : index
    %167 = vector.load %arg7[%c0_67, %c0_68] : memref<256x1024xbf16, #tpu.memory_space<vmem>>, vector<256x1024xbf16>
    %cst_69 = arith.constant dense<0.000000e+00> : vector<1x1024xf32>
    %168 = tpu.matmul %166, %167, %cst_69 {dimension_numbers = #tpu.dot_dimension_numbers<[1], [0], [0], [1], [0, 0, 1, 1], [], []>} : vector<1x256xbf16>, vector<256x1024xbf16>, vector<1x1024xf32> -> vector<1x1024xf32>
    %169 = arith.addf %165, %168 : vector<1x1024xf32>
    %170 = vector.extract_strided_slice %169 {offsets = [0, 0], sizes = [1, 256], strides = [1, 1]} : vector<1x1024xf32> to vector<1x256xf32>
    %171 = arith.negf %170 : vector<1x256xf32>
    %172 = math.exp %171 : vector<1x256xf32>
    %cst_70 = arith.constant 1.000000e+00 : f32
    %173 = vector.broadcast %cst_70 : f32 to vector<1x256xf32>
    %174 = arith.addf %173, %172 : vector<1x256xf32>
    %175 = arith.divf %173, %174 : vector<1x256xf32>
    %176 = vector.extract_strided_slice %169 {offsets = [0, 256], sizes = [1, 256], strides = [1, 1]} : vector<1x1024xf32> to vector<1x256xf32>
    %177 = arith.negf %176 : vector<1x256xf32>
    %178 = math.exp %177 : vector<1x256xf32>
    %cst_71 = arith.constant 1.000000e+00 : f32
    %179 = vector.broadcast %cst_71 : f32 to vector<1x256xf32>
    %180 = arith.addf %179, %178 : vector<1x256xf32>
    %181 = arith.divf %179, %180 : vector<1x256xf32>
    %182 = vector.extract_strided_slice %169 {offsets = [0, 512], sizes = [1, 256], strides = [1, 1]} : vector<1x1024xf32> to vector<1x256xf32>
    %183 = math.tanh %182 : vector<1x256xf32>
    %184 = vector.extract_strided_slice %169 {offsets = [0, 768], sizes = [1, 256], strides = [1, 1]} : vector<1x1024xf32> to vector<1x256xf32>
    %185 = arith.negf %184 : vector<1x256xf32>
    %186 = math.exp %185 : vector<1x256xf32>
    %cst_72 = arith.constant 1.000000e+00 : f32
    %187 = vector.broadcast %cst_72 : f32 to vector<1x256xf32>
    %188 = arith.addf %187, %186 : vector<1x256xf32>
    %189 = arith.divf %187, %188 : vector<1x256xf32>
    %190 = arith.mulf %181, %156 : vector<1x256xf32>
    %191 = arith.mulf %175, %183 : vector<1x256xf32>
    %192 = arith.addf %190, %191 : vector<1x256xf32>
    %193 = math.tanh %192 : vector<1x256xf32>
    %194 = arith.mulf %189, %193 : vector<1x256xf32>
    %c4_73 = arith.constant 4 : index
    %c0_74 = arith.constant 0 : index
    %195 = vector.load %arg8[%c4_73, %c0_74] : memref<8x256xf32, #tpu.memory_space<vmem>>, vector<1x256xf32>
    tpu.vector_store %arg8[%c4_73, %c0_74], %194 {strides = array<i32>} : memref<8x256xf32, #tpu.memory_space<vmem>>, vector<1x256xf32>,
    %c8_i32_75 = arith.constant 8 : i32
    %196 = arith.muli %arg0, %c8_i32_75 : i32
    %c4_i32 = arith.constant 4 : i32
    %197 = arith.addi %196, %c4_i32 : i32
    %c7_i32_76 = arith.constant 7 : i32
    %198 = arith.cmpi eq, %197, %c7_i32_76 : i32
    %199 = arith.extui %198 : i1 to i32
    %c0_i32_77 = arith.constant 0 : i32
    %200 = arith.cmpi ne, %199, %c0_i32_77 : i32
    scf.if %200 {
      %c0_119 = arith.constant 0 : index
      %c0_120 = arith.constant 0 : index
      %311 = vector.load %arg9[%c0_119, %c0_120] : memref<1x256xf32, #tpu.memory_space<vmem>>, vector<1x256xf32>
      tpu.vector_store %arg9[%c0_119, %c0_120], %192 {strides = array<i32>} : memref<1x256xf32, #tpu.memory_space<vmem>>, vector<1x256xf32>,
    } else {
    }
    %c5 = arith.constant 5 : index
    %c0_78 = arith.constant 0 : index
    %201 = vector.load %arg12[%c5, %c0_78] : memref<8x1024xf32, #tpu.memory_space<vmem>>, vector<1x1024xf32>
    %202 = arith.truncf %194 : vector<1x256xf32> to vector<1x256xbf16>
    %c0_79 = arith.constant 0 : index
    %c0_80 = arith.constant 0 : index
    %203 = vector.load %arg7[%c0_79, %c0_80] : memref<256x1024xbf16, #tpu.memory_space<vmem>>, vector<256x1024xbf16>
    %cst_81 = arith.constant dense<0.000000e+00> : vector<1x1024xf32>
    %204 = tpu.matmul %202, %203, %cst_81 {dimension_numbers = #tpu.dot_dimension_numbers<[1], [0], [0], [1], [0, 0, 1, 1], [], []>} : vector<1x256xbf16>, vector<256x1024xbf16>, vector<1x1024xf32> -> vector<1x1024xf32>
    %205 = arith.addf %201, %204 : vector<1x1024xf32>
    %206 = vector.extract_strided_slice %205 {offsets = [0, 0], sizes = [1, 256], strides = [1, 1]} : vector<1x1024xf32> to vector<1x256xf32>
    %207 = arith.negf %206 : vector<1x256xf32>
    %208 = math.exp %207 : vector<1x256xf32>
    %cst_82 = arith.constant 1.000000e+00 : f32
    %209 = vector.broadcast %cst_82 : f32 to vector<1x256xf32>
    %210 = arith.addf %209, %208 : vector<1x256xf32>
    %211 = arith.divf %209, %210 : vector<1x256xf32>
    %212 = vector.extract_strided_slice %205 {offsets = [0, 256], sizes = [1, 256], strides = [1, 1]} : vector<1x1024xf32> to vector<1x256xf32>
    %213 = arith.negf %212 : vector<1x256xf32>
    %214 = math.exp %213 : vector<1x256xf32>
    %cst_83 = arith.constant 1.000000e+00 : f32
    %215 = vector.broadcast %cst_83 : f32 to vector<1x256xf32>
    %216 = arith.addf %215, %214 : vector<1x256xf32>
    %217 = arith.divf %215, %216 : vector<1x256xf32>
    %218 = vector.extract_strided_slice %205 {offsets = [0, 512], sizes = [1, 256], strides = [1, 1]} : vector<1x1024xf32> to vector<1x256xf32>
    %219 = math.tanh %218 : vector<1x256xf32>
    %220 = vector.extract_strided_slice %205 {offsets = [0, 768], sizes = [1, 256], strides = [1, 1]} : vector<1x1024xf32> to vector<1x256xf32>
    %221 = arith.negf %220 : vector<1x256xf32>
    %222 = math.exp %221 : vector<1x256xf32>
    %cst_84 = arith.constant 1.000000e+00 : f32
    %223 = vector.broadcast %cst_84 : f32 to vector<1x256xf32>
    %224 = arith.addf %223, %222 : vector<1x256xf32>
    %225 = arith.divf %223, %224 : vector<1x256xf32>
    %226 = arith.mulf %217, %192 : vector<1x256xf32>
    %227 = arith.mulf %211, %219 : vector<1x256xf32>
    %228 = arith.addf %226, %227 : vector<1x256xf32>
    %229 = math.tanh %228 : vector<1x256xf32>
    %230 = arith.mulf %225, %229 : vector<1x256xf32>
    %c5_85 = arith.constant 5 : index
    %c0_86 = arith.constant 0 : index
    %231 = vector.load %arg8[%c5_85, %c0_86] : memref<8x256xf32, #tpu.memory_space<vmem>>, vector<1x256xf32>
    tpu.vector_store %arg8[%c5_85, %c0_86], %230 {strides = array<i32>} : memref<8x256xf32, #tpu.memory_space<vmem>>, vector<1x256xf32>,
    %c8_i32_87 = arith.constant 8 : i32
    %232 = arith.muli %arg0, %c8_i32_87 : i32
    %c5_i32 = arith.constant 5 : i32
    %233 = arith.addi %232, %c5_i32 : i32
    %c7_i32_88 = arith.constant 7 : i32
    %234 = arith.cmpi eq, %233, %c7_i32_88 : i32
    %235 = arith.extui %234 : i1 to i32
    %c0_i32_89 = arith.constant 0 : i32
    %236 = arith.cmpi ne, %235, %c0_i32_89 : i32
    scf.if %236 {
      %c0_119 = arith.constant 0 : index
      %c0_120 = arith.constant 0 : index
      %311 = vector.load %arg9[%c0_119, %c0_120] : memref<1x256xf32, #tpu.memory_space<vmem>>, vector<1x256xf32>
      tpu.vector_store %arg9[%c0_119, %c0_120], %228 {strides = array<i32>} : memref<1x256xf32, #tpu.memory_space<vmem>>, vector<1x256xf32>,
    } else {
    }
    %c6 = arith.constant 6 : index
    %c0_90 = arith.constant 0 : index
    %237 = vector.load %arg12[%c6, %c0_90] : memref<8x1024xf32, #tpu.memory_space<vmem>>, vector<1x1024xf32>
    %238 = arith.truncf %230 : vector<1x256xf32> to vector<1x256xbf16>
    %c0_91 = arith.constant 0 : index
    %c0_92 = arith.constant 0 : index
    %239 = vector.load %arg7[%c0_91, %c0_92] : memref<256x1024xbf16, #tpu.memory_space<vmem>>, vector<256x1024xbf16>
    %cst_93 = arith.constant dense<0.000000e+00> : vector<1x1024xf32>
    %240 = tpu.matmul %238, %239, %cst_93 {dimension_numbers = #tpu.dot_dimension_numbers<[1], [0], [0], [1], [0, 0, 1, 1], [], []>} : vector<1x256xbf16>, vector<256x1024xbf16>, vector<1x1024xf32> -> vector<1x1024xf32>
    %241 = arith.addf %237, %240 : vector<1x1024xf32>
    %242 = vector.extract_strided_slice %241 {offsets = [0, 0], sizes = [1, 256], strides = [1, 1]} : vector<1x1024xf32> to vector<1x256xf32>
    %243 = arith.negf %242 : vector<1x256xf32>
    %244 = math.exp %243 : vector<1x256xf32>
    %cst_94 = arith.constant 1.000000e+00 : f32
    %245 = vector.broadcast %cst_94 : f32 to vector<1x256xf32>
    %246 = arith.addf %245, %244 : vector<1x256xf32>
    %247 = arith.divf %245, %246 : vector<1x256xf32>
    %248 = vector.extract_strided_slice %241 {offsets = [0, 256], sizes = [1, 256], strides = [1, 1]} : vector<1x1024xf32> to vector<1x256xf32>
    %249 = arith.negf %248 : vector<1x256xf32>
    %250 = math.exp %249 : vector<1x256xf32>
    %cst_95 = arith.constant 1.000000e+00 : f32
    %251 = vector.broadcast %cst_95 : f32 to vector<1x256xf32>
    %252 = arith.addf %251, %250 : vector<1x256xf32>
    %253 = arith.divf %251, %252 : vector<1x256xf32>
    %254 = vector.extract_strided_slice %241 {offsets = [0, 512], sizes = [1, 256], strides = [1, 1]} : vector<1x1024xf32> to vector<1x256xf32>
    %255 = math.tanh %254 : vector<1x256xf32>
    %256 = vector.extract_strided_slice %241 {offsets = [0, 768], sizes = [1, 256], strides = [1, 1]} : vector<1x1024xf32> to vector<1x256xf32>
    %257 = arith.negf %256 : vector<1x256xf32>
    %258 = math.exp %257 : vector<1x256xf32>
    %cst_96 = arith.constant 1.000000e+00 : f32
    %259 = vector.broadcast %cst_96 : f32 to vector<1x256xf32>
    %260 = arith.addf %259, %258 : vector<1x256xf32>
    %261 = arith.divf %259, %260 : vector<1x256xf32>
    %262 = arith.mulf %253, %228 : vector<1x256xf32>
    %263 = arith.mulf %247, %255 : vector<1x256xf32>
    %264 = arith.addf %262, %263 : vector<1x256xf32>
    %265 = math.tanh %264 : vector<1x256xf32>
    %266 = arith.mulf %261, %265 : vector<1x256xf32>
    %c6_97 = arith.constant 6 : index
    %c0_98 = arith.constant 0 : index
    %267 = vector.load %arg8[%c6_97, %c0_98] : memref<8x256xf32, #tpu.memory_space<vmem>>, vector<1x256xf32>
    tpu.vector_store %arg8[%c6_97, %c0_98], %266 {strides = array<i32>} : memref<8x256xf32, #tpu.memory_space<vmem>>, vector<1x256xf32>,
    %c8_i32_99 = arith.constant 8 : i32
    %268 = arith.muli %arg0, %c8_i32_99 : i32
    %c6_i32 = arith.constant 6 : i32
    %269 = arith.addi %268, %c6_i32 : i32
    %c7_i32_100 = arith.constant 7 : i32
    %270 = arith.cmpi eq, %269, %c7_i32_100 : i32
    %271 = arith.extui %270 : i1 to i32
    %c0_i32_101 = arith.constant 0 : i32
    %272 = arith.cmpi ne, %271, %c0_i32_101 : i32
    scf.if %272 {
      %c0_119 = arith.constant 0 : index
      %c0_120 = arith.constant 0 : index
      %311 = vector.load %arg9[%c0_119, %c0_120] : memref<1x256xf32, #tpu.memory_space<vmem>>, vector<1x256xf32>
      tpu.vector_store %arg9[%c0_119, %c0_120], %264 {strides = array<i32>} : memref<1x256xf32, #tpu.memory_space<vmem>>, vector<1x256xf32>,
    } else {
    }
    %c7 = arith.constant 7 : index
    %c0_102 = arith.constant 0 : index
    %273 = vector.load %arg12[%c7, %c0_102] : memref<8x1024xf32, #tpu.memory_space<vmem>>, vector<1x1024xf32>
    %274 = arith.truncf %266 : vector<1x256xf32> to vector<1x256xbf16>
    %c0_103 = arith.constant 0 : index
    %c0_104 = arith.constant 0 : index
    %275 = vector.load %arg7[%c0_103, %c0_104] : memref<256x1024xbf16, #tpu.memory_space<vmem>>, vector<256x1024xbf16>
    %cst_105 = arith.constant dense<0.000000e+00> : vector<1x1024xf32>
    %276 = tpu.matmul %274, %275, %cst_105 {dimension_numbers = #tpu.dot_dimension_numbers<[1], [0], [0], [1], [0, 0, 1, 1], [], []>} : vector<1x256xbf16>, vector<256x1024xbf16>, vector<1x1024xf32> -> vector<1x1024xf32>
    %277 = arith.addf %273, %276 : vector<1x1024xf32>
    %278 = vector.extract_strided_slice %277 {offsets = [0, 0], sizes = [1, 256], strides = [1, 1]} : vector<1x1024xf32> to vector<1x256xf32>
    %279 = arith.negf %278 : vector<1x256xf32>
    %280 = math.exp %279 : vector<1x256xf32>
    %cst_106 = arith.constant 1.000000e+00 : f32
    %281 = vector.broadcast %cst_106 : f32 to vector<1x256xf32>
    %282 = arith.addf %281, %280 : vector<1x256xf32>
    %283 = arith.divf %281, %282 : vector<1x256xf32>
    %284 = vector.extract_strided_slice %277 {offsets = [0, 256], sizes = [1, 256], strides = [1, 1]} : vector<1x1024xf32> to vector<1x256xf32>
    %285 = arith.negf %284 : vector<1x256xf32>
    %286 = math.exp %285 : vector<1x256xf32>
    %cst_107 = arith.constant 1.000000e+00 : f32
    %287 = vector.broadcast %cst_107 : f32 to vector<1x256xf32>
    %288 = arith.addf %287, %286 : vector<1x256xf32>
    %289 = arith.divf %287, %288 : vector<1x256xf32>
    %290 = vector.extract_strided_slice %277 {offsets = [0, 512], sizes = [1, 256], strides = [1, 1]} : vector<1x1024xf32> to vector<1x256xf32>
    %291 = math.tanh %290 : vector<1x256xf32>
    %292 = vector.extract_strided_slice %277 {offsets = [0, 768], sizes = [1, 256], strides = [1, 1]} : vector<1x1024xf32> to vector<1x256xf32>
    %293 = arith.negf %292 : vector<1x256xf32>
    %294 = math.exp %293 : vector<1x256xf32>
    %cst_108 = arith.constant 1.000000e+00 : f32
    %295 = vector.broadcast %cst_108 : f32 to vector<1x256xf32>
    %296 = arith.addf %295, %294 : vector<1x256xf32>
    %297 = arith.divf %295, %296 : vector<1x256xf32>
    %298 = arith.mulf %289, %264 : vector<1x256xf32>
    %299 = arith.mulf %283, %291 : vector<1x256xf32>
    %300 = arith.addf %298, %299 : vector<1x256xf32>
    %301 = math.tanh %300 : vector<1x256xf32>
    %302 = arith.mulf %297, %301 : vector<1x256xf32>
    %c7_109 = arith.constant 7 : index
    %c0_110 = arith.constant 0 : index
    %303 = vector.load %arg8[%c7_109, %c0_110] : memref<8x256xf32, #tpu.memory_space<vmem>>, vector<1x256xf32>
    tpu.vector_store %arg8[%c7_109, %c0_110], %302 {strides = array<i32>} : memref<8x256xf32, #tpu.memory_space<vmem>>, vector<1x256xf32>,
    %c8_i32_111 = arith.constant 8 : i32
    %304 = arith.muli %arg0, %c8_i32_111 : i32
    %c7_i32_112 = arith.constant 7 : i32
    %305 = arith.addi %304, %c7_i32_112 : i32
    %c7_i32_113 = arith.constant 7 : i32
    %306 = arith.cmpi eq, %305, %c7_i32_113 : i32
    %307 = arith.extui %306 : i1 to i32
    %c0_i32_114 = arith.constant 0 : i32
    %308 = arith.cmpi ne, %307, %c0_i32_114 : i32
    scf.if %308 {
      %c0_119 = arith.constant 0 : index
      %c0_120 = arith.constant 0 : index
      %311 = vector.load %arg9[%c0_119, %c0_120] : memref<1x256xf32, #tpu.memory_space<vmem>>, vector<1x256xf32>
      tpu.vector_store %arg9[%c0_119, %c0_120], %300 {strides = array<i32>} : memref<1x256xf32, #tpu.memory_space<vmem>>, vector<1x256xf32>,
    } else {
    }
    %c0_115 = arith.constant 0 : index
    %c0_116 = arith.constant 0 : index
    %309 = vector.load %arg10[%c0_115, %c0_116] : memref<1x256xf32, #tpu.memory_space<vmem>>, vector<1x256xf32>
    tpu.vector_store %arg10[%c0_115, %c0_116], %302 {strides = array<i32>} : memref<1x256xf32, #tpu.memory_space<vmem>>, vector<1x256xf32>,
    %c0_117 = arith.constant 0 : index
    %c0_118 = arith.constant 0 : index
    %310 = vector.load %arg11[%c0_117, %c0_118] : memref<1x256xf32, #tpu.memory_space<vmem>>, vector<1x256xf32>
    tpu.vector_store %arg11[%c0_117, %c0_118], %300 {strides = array<i32>} : memref<1x256xf32, #tpu.memory_space<vmem>>, vector<1x256xf32>,
    return
  }
  func.func @transform_0(%arg0: i32) -> (i32, i32) {
    %c0_i32 = arith.constant 0 : i32
    %c0_i32_0 = arith.constant 0 : i32
    return %arg0, %c0_i32 : i32, i32
  }
  func.func @transform_1(%arg0: i32) -> (i32, i32) {
    %c0_i32 = arith.constant 0 : i32
    %c0_i32_0 = arith.constant 0 : i32
    %c0_i32_1 = arith.constant 0 : i32
    return %c0_i32, %c0_i32_0 : i32, i32
  }
  func.func @transform_2(%arg0: i32) -> (i32, i32) {
    %c0_i32 = arith.constant 0 : i32
    %c0_i32_0 = arith.constant 0 : i32
    %c0_i32_1 = arith.constant 0 : i32
    return %c0_i32, %c0_i32_0 : i32, i32
  }
  func.func @transform_3(%arg0: i32) -> (i32, i32) {
    %c0_i32 = arith.constant 0 : i32
    %c0_i32_0 = arith.constant 0 : i32
    %c0_i32_1 = arith.constant 0 : i32
    return %c0_i32, %c0_i32_0 : i32, i32
  }
  func.func @transform_4(%arg0: i32) -> (i32, i32) {
    %c0_i32 = arith.constant 0 : i32
    %c0_i32_0 = arith.constant 0 : i32
    %c0_i32_1 = arith.constant 0 : i32
    return %c0_i32, %c0_i32_0 : i32, i32
  }
  func.func @transform_5(%arg0: i32) -> (i32, i32) {
    %c0_i32 = arith.constant 0 : i32
    %c0_i32_0 = arith.constant 0 : i32
    %c0_i32_1 = arith.constant 0 : i32
    return %c0_i32, %c0_i32_0 : i32, i32
  }
  func.func @transform_6(%arg0: i32) -> (i32, i32) {
    %c0_i32 = arith.constant 0 : i32
    %c0_i32_0 = arith.constant 0 : i32
    %c0_i32_1 = arith.constant 0 : i32
    return %c0_i32, %c0_i32_0 : i32, i32
  }
  func.func @transform_7(%arg0: i32) -> (i32, i32) {
    %c0_i32 = arith.constant 0 : i32
    %c0_i32_0 = arith.constant 0 : i32
    return %arg0, %c0_i32 : i32, i32
  }
  func.func @transform_8(%arg0: i32) -> (i32, i32) {
    %c0_i32 = arith.constant 0 : i32
    %c0_i32_0 = arith.constant 0 : i32
    %c0_i32_1 = arith.constant 0 : i32
    return %c0_i32, %c0_i32_0 : i32, i32
  }
}

module attributes {stable_mosaic.version = 11 : i64} {
  func.func @_head_kernel(%arg0: i32, %arg1: memref<8x256xf32, #tpu.memory_space<vmem>>, %arg2: memref<8x32xf32, #tpu.memory_space<vmem>>, %arg3: memref<256x128xbf16, #tpu.memory_space<vmem>>, %arg4: memref<32x128xbf16, #tpu.memory_space<vmem>>, %arg5: memref<1x128xf32, #tpu.memory_space<vmem>>, %arg6: memref<8x128xf32, #tpu.memory_space<vmem>>) attributes {dimension_semantics = [#tpu.dimension_semantics<parallel>], iteration_bounds = array<i64: 1>, scalar_prefetch = 0 : i64, scratch_operands = 0 : i64, tpu.core_type = #tpu.core_type<tc>, window_params = [{transform_indices = @transform_0, window_bounds = array<i64: 8, 256>}, {transform_indices = @transform_1, window_bounds = array<i64: 8, 32>}, {pipeline_mode = #tpu.pipeline_mode<synchronous>, transform_indices = @transform_2, window_bounds = array<i64: 256, 128>}, {pipeline_mode = #tpu.pipeline_mode<synchronous>, transform_indices = @transform_3, window_bounds = array<i64: 32, 128>}, {pipeline_mode = #tpu.pipeline_mode<synchronous>, transform_indices = @transform_4, window_bounds = array<i64: 1, 128>}, {transform_indices = @transform_5, window_bounds = array<i64: 8, 128>}]} {
    %c0 = arith.constant 0 : index
    %c0_0 = arith.constant 0 : index
    %0 = vector.load %arg1[%c0, %c0_0] : memref<8x256xf32, #tpu.memory_space<vmem>>, vector<8x256xf32>
    %1 = arith.truncf %0 : vector<8x256xf32> to vector<8x256xbf16>
    %c0_1 = arith.constant 0 : index
    %c0_2 = arith.constant 0 : index
    %2 = vector.load %arg3[%c0_1, %c0_2] : memref<256x128xbf16, #tpu.memory_space<vmem>>, vector<256x128xbf16>
    %cst = arith.constant dense<0.000000e+00> : vector<8x128xf32>
    %3 = tpu.matmul %1, %2, %cst {dimension_numbers = #tpu.dot_dimension_numbers<[1], [0], [0], [1], [0, 0, 1, 1], [], []>} : vector<8x256xbf16>, vector<256x128xbf16>, vector<8x128xf32> -> vector<8x128xf32>
    %c0_3 = arith.constant 0 : index
    %c0_4 = arith.constant 0 : index
    %4 = vector.load %arg2[%c0_3, %c0_4] : memref<8x32xf32, #tpu.memory_space<vmem>>, vector<8x32xf32>
    %5 = arith.truncf %4 : vector<8x32xf32> to vector<8x32xbf16>
    %c0_5 = arith.constant 0 : index
    %c0_6 = arith.constant 0 : index
    %6 = vector.load %arg4[%c0_5, %c0_6] : memref<32x128xbf16, #tpu.memory_space<vmem>>, vector<32x128xbf16>
    %cst_7 = arith.constant dense<0.000000e+00> : vector<8x128xf32>
    %7 = tpu.matmul %5, %6, %cst_7 {dimension_numbers = #tpu.dot_dimension_numbers<[1], [0], [0], [1], [0, 0, 1, 1], [], []>} : vector<8x32xbf16>, vector<32x128xbf16>, vector<8x128xf32> -> vector<8x128xf32>
    %8 = arith.addf %3, %7 : vector<8x128xf32>
    %c0_8 = arith.constant 0 : index
    %c0_9 = arith.constant 0 : index
    %9 = vector.load %arg5[%c0_8, %c0_9] : memref<1x128xf32, #tpu.memory_space<vmem>>, vector<1x128xf32>
    %10 = vector.broadcast %9 : vector<1x128xf32> to vector<8x128xf32>
    %11 = arith.addf %8, %10 : vector<8x128xf32>
    %12 = tpu.iota {dimensions = array<i32: 1>} : vector<8x128xi32>
    %c4_i32 = arith.constant 4 : i32
    %13 = vector.broadcast %c4_i32 : i32 to vector<8x128xi32>
    %14 = arith.cmpi slt, %12, %13 : vector<8x128xi32>
    %cst_10 = arith.constant 0xFF800000 : f32
    %15 = vector.broadcast %cst_10 : f32 to vector<8x128xf32>
    %16 = arith.select %14, %11, %15 : vector<8x128xi1>, vector<8x128xf32>
    %cst_11 = arith.constant dense<0xFF800000> : vector<8xf32>
    %17 = vector.multi_reduction <maximumf>, %16, %cst_11 [1] : vector<8x128xf32> to vector<8xf32>
    %18 = vector.shape_cast %17 : vector<8xf32> to vector<8x1xf32>
    %19 = vector.broadcast %18 : vector<8x1xf32> to vector<8x128xf32>
    %20 = arith.subf %16, %19 : vector<8x128xf32>
    %21 = math.exp %20 : vector<8x128xf32>
    %cst_12 = arith.constant dense<0.000000e+00> : vector<8xf32>
    %22 = vector.multi_reduction <add>, %21, %cst_12 [1] : vector<8x128xf32> to vector<8xf32>
    %23 = vector.shape_cast %22 : vector<8xf32> to vector<8x1xf32>
    %24 = math.log %23 : vector<8x1xf32>
    %25 = vector.broadcast %18 : vector<8x1xf32> to vector<8x128xf32>
    %26 = arith.subf %11, %25 : vector<8x128xf32>
    %27 = vector.broadcast %24 : vector<8x1xf32> to vector<8x128xf32>
    %28 = arith.subf %26, %27 : vector<8x128xf32>
    %29 = arith.select %14, %28, %11 : vector<8x128xi1>, vector<8x128xf32>
    %c0_13 = arith.constant 0 : index
    %c0_14 = arith.constant 0 : index
    %30 = vector.load %arg6[%c0_13, %c0_14] : memref<8x128xf32, #tpu.memory_space<vmem>>, vector<8x128xf32>
    tpu.vector_store %arg6[%c0_13, %c0_14], %29 {strides = array<i32>} : memref<8x128xf32, #tpu.memory_space<vmem>>, vector<8x128xf32>,
    return
  }
  func.func @transform_0(%arg0: i32) -> (i32, i32) {
    %c0_i32 = arith.constant 0 : i32
    %c0_i32_0 = arith.constant 0 : i32
    return %arg0, %c0_i32 : i32, i32
  }
  func.func @transform_1(%arg0: i32) -> (i32, i32) {
    %c0_i32 = arith.constant 0 : i32
    %c0_i32_0 = arith.constant 0 : i32
    return %arg0, %c0_i32 : i32, i32
  }
  func.func @transform_2(%arg0: i32) -> (i32, i32) {
    %c0_i32 = arith.constant 0 : i32
    %c0_i32_0 = arith.constant 0 : i32
    %c0_i32_1 = arith.constant 0 : i32
    return %c0_i32, %c0_i32_0 : i32, i32
  }
  func.func @transform_3(%arg0: i32) -> (i32, i32) {
    %c0_i32 = arith.constant 0 : i32
    %c0_i32_0 = arith.constant 0 : i32
    %c0_i32_1 = arith.constant 0 : i32
    return %c0_i32, %c0_i32_0 : i32, i32
  }
  func.func @transform_4(%arg0: i32) -> (i32, i32) {
    %c0_i32 = arith.constant 0 : i32
    %c0_i32_0 = arith.constant 0 : i32
    %c0_i32_1 = arith.constant 0 : i32
    return %c0_i32, %c0_i32_0 : i32, i32
  }
  func.func @transform_5(%arg0: i32) -> (i32, i32) {
    %c0_i32 = arith.constant 0 : i32
    %c0_i32_0 = arith.constant 0 : i32
    return %arg0, %c0_i32 : i32, i32
  }
}

</mosaic_0001>

<llo_original>
// kernel: oracle_gold_rollout.3
$region0: #{oracle_gold_rollout.3}
  #allocation0 [shape = 'u32[]', space=smem, size = 0x4, offset = 0x4, fixed_abs, tag = 'smem constant byte address 0x4 - core index']
  #allocation1 [shape = 'u32[72,128]{1,0:T(1,128)}', space=vmem, size = 0x9000, scoped, tag = 'internal scratch']
  %s0 = inlined_call_operand.vmem [shape: f32[8,256], index: 0, kind: input, shape index: {}]
  %s1 = inlined_call_operand.vmem [shape: f32[8,32], index: 1, kind: input, shape index: {}]
  %s2 = inlined_call_operand.hbm [shape: bf16[256,128], index: 2, kind: input, shape index: {}]
  %s3 = inlined_call_operand.vmem [shape: bf16[32,128], index: 3, kind: input, shape index: {}]
  %s4 = inlined_call_operand.vmem [shape: f32[1,128], index: 4, kind: input, shape index: {}]
  %s5 = inlined_call_operand.vmem [shape: f32[8,128], index: 5, kind: output, shape index: {}]
  %s6 = sld [smem:[#allocation0]]
  $region34: #{oracle_gold_rollout.3} parent=0
    _
  %s8 = ssub.s32 1, %s6
  %s9 = scalar_select 0, %s8, %s6
  $region1: #{oracle_gold_rollout.3} parent=0
    #allocation2 [shape = 'u8[65536]{0}', space=vmem, size = 0x10000, scoped, tag = 'input window, operand 2, single buffered']
    #allocation3 [shape = 's32[1]{0}', space=sflag, size = 0x4, scoped, tag = 'scoped memory for oracle_gold_rollout.3']
    %10 = vsyncpa [#allocation3], 0
    // Predicated region
    $region2: #{oracle_gold_rollout.3} parent=1 // pred_check
      _
    $region3: #{oracle_gold_rollout.3} parent=1 // pred_check_branch
      %12 = sbr.rel (0) target = $region5
    $region4: #{oracle_gold_rollout.3} parent=1 // pred_region
      _
    $region5: #{oracle_gold_rollout.3} parent=1 // pred_fallthru
      _
    // Predicated region
    $region6: #{oracle_gold_rollout.3} parent=1 // pred_check
      _
    $region7: #{oracle_gold_rollout.3} parent=1 // pred_check_branch
      %14 = sbr.rel (0) target = $region9
    $region8: #{oracle_gold_rollout.3} parent=1 // pred_region
      _
    $region9: #{oracle_gold_rollout.3} parent=1 // pred_fallthru
      _
    // Predicated region
    $region10: #{oracle_gold_rollout.3} parent=1 // pred_check
      _
    $region11: #{oracle_gold_rollout.3} parent=1 // pred_check_branch
      %16 = sbr.rel (0) target = $region13
    $region12: #{oracle_gold_rollout.3} parent=1 // pred_region
      %18 = vsyncadd [#allocation3], 0
      %s19 = sshll.u32 %s2, 4
      %s20 = int_to_ptr.hbm [resolvable:$true] %s19
      %s21 = sshll.u32 [#allocation2], 4
      %s22 = int_to_ptr.vmem [resolvable:$true] %s21
      %27 = dma.hbm_to_vmem [thread:$0]  %s20, 2048, %s22, [#allocation3], 64, 64, 4
    $region13: #{oracle_gold_rollout.3} parent=1 // pred_fallthru
      _
    // Predicated region
    $region14: #{oracle_gold_rollout.3} parent=1 // pred_check
      _
    $region15: #{oracle_gold_rollout.3} parent=1 // pred_check_branch
      %29 = sbr.rel (0) target = $region17
    $region16: #{oracle_gold_rollout.3} parent=1 // pred_region
      _
    $region17: #{oracle_gold_rollout.3} parent=1 // pred_fallthru
      _
    // Predicated region
    $region18: #{oracle_gold_rollout.3} parent=1 // pred_check
      _
    $region19: #{oracle_gold_rollout.3} parent=1 // pred_check_branch
      %31 = sbr.rel (0) target = $region21
    $region20: #{oracle_gold_rollout.3} parent=1 // pred_region
      _
    $region21: #{oracle_gold_rollout.3} parent=1 // pred_fallthru
      _
    // Predicated region
    $region22: #{oracle_gold_rollout.3} parent=1 // pred_check
      _
    $region23: #{oracle_gold_rollout.3} parent=1 // pred_check_branch
      %33 = sbr.rel (0) target = $region25
    $region24: #{oracle_gold_rollout.3} parent=1 // pred_region
      %35 = dma.done [#allocation3], 2048
    $region25: #{oracle_gold_rollout.3} parent=1 // pred_fallthru
      _
    %v37 = vld [vmem:[%s0] sm:$0xff]
    %v38 = vld [vmem:[%s0 + $0x8] sm:$0xff]
    %v39 = vpack.c.bf16 %v37, %v37
    %v40 = vpack.c.bf16 %v38, %v38
    %v41 = vld [vmem:[#allocation2] sm:$0xf]
    %v42 = vld [vmem:[#allocation2 + $0x4] sm:$0xf]
    %v43 = vld [vmem:[#allocation2 + $0x8] sm:$0xf]
    %v44 = vld [vmem:[#allocation2 + $0xc] sm:$0xf]
    %v45 = vld [vmem:[#allocation2 + $0x10] sm:$0xf]
    %v46 = vld [vmem:[#allocation2 + $0x14] sm:$0xf]
    %v47 = vld [vmem:[#allocation2 + $0x18] sm:$0xf]
    %v48 = vld [vmem:[#allocation2 + $0x1c] sm:$0xf]
    %v49 = vld [vmem:[#allocation2 + $0x20] sm:$0xf]
    %v50 = vld [vmem:[#allocation2 + $0x24] sm:$0xf]
    %v51 = vld [vmem:[#allocation2 + $0x28] sm:$0xf]
    %v52 = vld [vmem:[#allocation2 + $0x2c] sm:$0xf]
    %v53 = vld [vmem:[#allocation2 + $0x30] sm:$0xf]
    %v54 = vld [vmem:[#allocation2 + $0x34] sm:$0xf]
    %v55 = vld [vmem:[#allocation2 + $0x38] sm:$0xf]
    %v56 = vld [vmem:[#allocation2 + $0x3c] sm:$0xf]
    %v57 = vld [vmem:[#allocation2 + $0x40] sm:$0xf]
    %v58 = vld [vmem:[#allocation2 + $0x44] sm:$0xf]
    %v59 = vld [vmem:[#allocation2 + $0x48] sm:$0xf]
    %v60 = vld [vmem:[#allocation2 + $0x4c] sm:$0xf]
    %v61 = vld [vmem:[#allocation2 + $0x50] sm:$0xf]
    %v62 = vld [vmem:[#allocation2 + $0x54] sm:$0xf]
    %v63 = vld [vmem:[#allocation2 + $0x58] sm:$0xf]
    %v64 = vld [vmem:[#allocation2 + $0x5c] sm:$0xf]
    %v65 = vld [vmem:[#allocation2 + $0x60] sm:$0xf]
    %v66 = vld [vmem:[#allocation2 + $0x64] sm:$0xf]
    %v67 = vld [vmem:[#allocation2 + $0x68] sm:$0xf]
    %v68 = vld [vmem:[#allocation2 + $0x6c] sm:$0xf]
    %v69 = vld [vmem:[#allocation2 + $0x70] sm:$0xf]
    %v70 = vld [vmem:[#allocation2 + $0x74] sm:$0xf]
    %v71 = vld [vmem:[#allocation2 + $0x78] sm:$0xf]
    %v72 = vld [vmem:[#allocation2 + $0x7c] sm:$0xf]
    %v73 = vld [vmem:[%s1] sm:$0xff]
    %v74 = vpack.c.bf16 %v73, %v73
    %v75 = vld [vmem:[%s3] sm:$0xf]
    %v76 = vld [vmem:[%s3 + $0x4] sm:$0xf]
    %v77 = vld [vmem:[%s3 + $0x8] sm:$0xf]
    %v78 = vld [vmem:[%s3 + $0xc] sm:$0xf]
    %v83 = vunpack.c.l.b16 %v75
    %v84 = vunpack.c.l.b16 %v76
    %v85 = vunpack.c.l.b16 %v77
    %v86 = vunpack.c.l.b16 %v78
    %v87 = vpack.c.b16 %v84, %v83
    %v88 = vpack.c.b16 %v86, %v85
    %vm91 = vcmask 261120
    %v93 = vsel %vm91, %v74, 0
    %95 = vmatpush.bf16.msra.mxu0 0
    %96 = vmatpush.bf16.msra.mxu0 0
    %97 = vmatpush.bf16.msra.mxu0 0
    %98 = vmatpush.bf16.msra.mxu0 0
    %99 = vmatpush.bf16.msra.mxu0 0
    %100 = vmatpush.bf16.msra.mxu0 0
    %101 = vmatpush.bf16.msra.mxu0 %v88
    %102 = vmatpush.bf16.msra.mxu0 %v87
    %103 = vmatmul.bf16.gmra.mxu0 %v93
    %v104 = vpop.f32.mrf.mxu0
    %v105 = vadd.f32 0.0, %v104
    %v106 = vpop.f32.mrf.mxu0
    %107 = vdwg.mxu0
    %v140 = vunpack.c.l.b16 %v41
    %v141 = vunpack.c.l.b16 %v42
    %v142 = vunpack.c.l.b16 %v43
    %v143 = vunpack.c.l.b16 %v44
    %v144 = vunpack.c.l.b16 %v45
    %v145 = vunpack.c.l.b16 %v46
    %v146 = vunpack.c.l.b16 %v47
    %v147 = vunpack.c.l.b16 %v48
    %v148 = vunpack.c.l.b16 %v49
    %v149 = vunpack.c.l.b16 %v50
    %v150 = vunpack.c.l.b16 %v51
    %v151 = vunpack.c.l.b16 %v52
    %v152 = vunpack.c.l.b16 %v53
    %v153 = vunpack.c.l.b16 %v54
    %v154 = vunpack.c.l.b16 %v55
    %v155 = vunpack.c.l.b16 %v56
    %v156 = vunpack.c.l.b16 %v57
    %v157 = vunpack.c.l.b16 %v58
    %v158 = vunpack.c.l.b16 %v59
    %v159 = vunpack.c.l.b16 %v60
    %v160 = vunpack.c.l.b16 %v61
    %v161 = vunpack.c.l.b16 %v62
    %v162 = vunpack.c.l.b16 %v63
    %v163 = vunpack.c.l.b16 %v64
    %v164 = vunpack.c.l.b16 %v65
    %v165 = vunpack.c.l.b16 %v66
    %v166 = vunpack.c.l.b16 %v67
    %v167 = vunpack.c.l.b16 %v68
    %v168 = vunpack.c.l.b16 %v69
    %v169 = vunpack.c.l.b16 %v70
    %v170 = vunpack.c.l.b16 %v71
    %v171 = vunpack.c.l.b16 %v72
    %v172 = vpack.c.b16 %v141, %v140
    %v173 = vpack.c.b16 %v143, %v142
    %v174 = vpack.c.b16 %v145, %v144
    %v175 = vpack.c.b16 %v147, %v146
    %v176 = vpack.c.b16 %v149, %v148
    %v177 = vpack.c.b16 %v151, %v150
    %v178 = vpack.c.b16 %v153, %v152
    %v179 = vpack.c.b16 %v155, %v154
    %v180 = vpack.c.b16 %v157, %v156
    %v181 = vpack.c.b16 %v159, %v158
    %v182 = vpack.c.b16 %v161, %v160
    %v183 = vpack.c.b16 %v163, %v162
    %v184 = vpack.c.b16 %v165, %v164
    %v185 = vpack.c.b16 %v167, %v166
    %v186 = vpack.c.b16 %v169, %v168
    %v187 = vpack.c.b16 %v171, %v170
    %204 = vmatpush.bf16.msra.mxu0 %v179
    %205 = vmatpush.bf16.msra.mxu0 %v178
    %206 = vmatpush.bf16.msra.mxu0 %v177
    %207 = vmatpush.bf16.msra.mxu0 %v176
    %208 = vmatpush.bf16.msra.mxu0 %v175
    %209 = vmatpush.bf16.msra.mxu0 %v174
    %210 = vmatpush.bf16.msra.mxu0 %v173
    %211 = vmatpush.bf16.msra.mxu0 %v172
    %212 = vmatmul.bf16.gmra.mxu0 %v39
    %v213 = vpop.f32.mrf.mxu0
    %v214 = vadd.f32 %v105, %v213
    %v215 = vpop.f32.mrf.mxu0
    %216 = vdwg.mxu0
    %217 = vmatpush.bf16.msra.mxu0 %v187
    %218 = vmatpush.bf16.msra.mxu0 %v186
    %219 = vmatpush.bf16.msra.mxu0 %v185
    %220 = vmatpush.bf16.msra.mxu0 %v184
    %221 = vmatpush.bf16.msra.mxu0 %v183
    %222 = vmatpush.bf16.msra.mxu0 %v182
    %223 = vmatpush.bf16.msra.mxu0 %v181
    %224 = vmatpush.bf16.msra.mxu0 %v180
    %225 = vmatmul.bf16.gmra.mxu0 %v40
    %v226 = vpop.f32.mrf.mxu0
    %v227 = vadd.f32 %v214, %v226
    %v228 = vpop.f32.mrf.mxu0
    %229 = vdwg.mxu0
    %v230 = vld [vmem:[%s4] sm:$0x1]
    %v232 = vperm.slane %v230, 0
    %v234 = vadd.f32 %v227, %v232
    %v235 = vlaneseq
    %v236 = vand.u32 %v235, 127
    %vm237 = vcmp.lt.s32.totalorder %v236, 4
    %v238 = vsel %vm237, %v234, -inf
    %239 = vmax.xlane.f32.xlu0 %v238
    %v240 = vpop.xlane.xlu0 %239
    %v241 = vsub.f32 %v238, %v240
    %v242 = vmul.f32 %v241, 1.442695
    %v243 = vpow.pop %v242
    %244 = vadd.xlane.f32.xlu0 %v243
    %v245 = vpop.xlane.xlu0 %244
    %v246 = vlog2.pop %v245
    %v247 = vmul.f32 %v246, 0.6931472
    %v248 = vsub.f32 %v234, %v240
    %v249 = vsub.f32 %v248, %v247
    %v250 = vsel %vm237, %v249, %v234
    %251 = vst [vmem:[%s5] sm:$0xff] %v250
    // Predicated region
    $region26: #{oracle_gold_rollout.3} parent=1 // pred_check
      _
    $region27: #{oracle_gold_rollout.3} parent=1 // pred_check_branch
      %253 = sbr.rel (0) target = $region29
    $region28: #{oracle_gold_rollout.3} parent=1 // pred_region
      _
    $region29: #{oracle_gold_rollout.3} parent=1 // pred_fallthru
      _
    // Predicated region
    $region30: #{oracle_gold_rollout.3} parent=1 // pred_check
      _
    $region31: #{oracle_gold_rollout.3} parent=1 // pred_check_branch
      %255 = sbr.rel (0) target = $region33
    $region32: #{oracle_gold_rollout.3} parent=1 // pred_region
      _
    $region33: #{oracle_gold_rollout.3} parent=1 // pred_fallthru
      _
    %256 = vsyncpa [#allocation3], 1

// kernel: oracle_gold_rollout.2
$region0: #{oracle_gold_rollout.2}
  #allocation0 [shape = 'u32[]', space=smem, size = 0x4, offset = 0x4, fixed_abs, tag = 'smem constant byte address 0x4 - core index']
  #allocation1 [shape = 'u32[72,128]{1,0:T(1,128)}', space=vmem, size = 0x9000, scoped, tag = 'internal scratch']
  #allocation2 [shape = 'f32[1,256]{1,0:T(1,128)}', space=vmem, size = 0x400, scoped, tag = 'scratch operand']
  #allocation3 [shape = 'f32[1,256]{1,0:T(1,128)}', space=vmem, size = 0x400, scoped, tag = 'scratch operand']
  #allocation4 [shape = 'f32[8,1024]{1,0:T(8,128)}', space=vmem, size = 0x8000, scoped, tag = 'scratch operand']
  %s0 = inlined_call_operand.vmem [shape: f32[8,65], index: 0, kind: input, shape index: {}]
  %s1 = inlined_call_operand.vmem [shape: f32[1,512], index: 1, kind: input, shape index: {}]
  %s2 = inlined_call_operand.hbm [shape: bf16[65,256], index: 2, kind: input, shape index: {}]
  %s3 = inlined_call_operand.vmem [shape: f32[1,256], index: 3, kind: input, shape index: {}]
  %s4 = inlined_call_operand.hbm [shape: bf16[256,1024], index: 4, kind: input, shape index: {}]
  %s5 = inlined_call_operand.hbm [shape: f32[1,1024], index: 5, kind: input, shape index: {}]
  %s6 = inlined_call_operand.hbm [shape: bf16[256,1024], index: 6, kind: input, shape index: {}]
  %s7 = inlined_call_operand.vmem [shape: f32[8,256], index: 7, kind: output, shape index: {0}]
  %s8 = inlined_call_operand.hbm [shape: f32[1,256], index: 8, kind: output, shape index: {1}]
  %9 = xla_tuple %s7, %s8
  %s10 = sld [smem:[#allocation0]]
  $region98: #{oracle_gold_rollout.2} parent=0
    _
  %s12 = ssub.s32 1, %s10
  %s13 = scalar_select 0, %s12, %s10
  $region1: #{oracle_gold_rollout.2} parent=0
    #allocation5 [shape = 'u8[36864]{0}', space=vmem, size = 0x9000, scoped, tag = 'input window, operand 2, single buffered']
    #allocation6 [shape = 's32[1]{0}', space=sflag, size = 0x4, scoped, tag = 'scoped memory for oracle_gold_rollout.2']
    #allocation7 [shape = 's32[1]{0}', space=sflag, size = 0x4, scoped, tag = 'scoped memory for oracle_gold_rollout.2']
    #allocation8 [shape = 'u8[524288]{0}', space=vmem, size = 0x80000, scoped, tag = 'input window, operand 4, single buffered']
    #allocation9 [shape = 's32[1]{0}', space=sflag, size = 0x4, scoped, tag = 'scoped memory for oracle_gold_rollout.2']
    #allocation10 [shape = 'u8[4096]{0}', space=vmem, size = 0x1000, scoped, tag = 'input window, operand 5, single buffered']
    #allocation11 [shape = 'u8[524288]{0}', space=vmem, size = 0x80000, scoped, tag = 'input window, operand 6, single buffered']
    #allocation12 [shape = 's32[1]{0}', space=sflag, size = 0x4, scoped, tag = 'scoped memory for oracle_gold_rollout.2']
    #allocation13 [shape = 'u8[1024]{0}', space=vmem, size = 0x400, scoped, tag = 'output window, operand 1, single buffered']
    %14 = vsyncpa [#allocation6], 0
    %15 = vsyncpa [#allocation9], 0
    %16 = vsyncpa [#allocation12], 0
    %17 = vsyncpa [#allocation7], 0
    // Predicated region
    $region2: #{oracle_gold_rollout.2} parent=1 // pred_check
      _
    $region3: #{oracle_gold_rollout.2} parent=1 // pred_check_branch
      %19 = sbr.rel (0) target = $region5
    $region4: #{oracle_gold_rollout.2} parent=1 // pred_region
      _
    $region5: #{oracle_gold_rollout.2} parent=1 // pred_fallthru
      _
    // Predicated region
    $region6: #{oracle_gold_rollout.2} parent=1 // pred_check
      _
    $region7: #{oracle_gold_rollout.2} parent=1 // pred_check_branch
      %21 = sbr.rel (0) target = $region9
    $region8: #{oracle_gold_rollout.2} parent=1 // pred_region
      _
    $region9: #{oracle_gold_rollout.2} parent=1 // pred_fallthru
      _
    // Predicated region
    $region10: #{oracle_gold_rollout.2} parent=1 // pred_check
      _
    $region11: #{oracle_gold_rollout.2} parent=1 // pred_check_branch
      %23 = sbr.rel (0) target = $region13
    $region12: #{oracle_gold_rollout.2} parent=1 // pred_region
      %25 = vsyncadd [#allocation6], 0
      %s26 = sshll.u32 %s2, 4
      %s27 = int_to_ptr.hbm [resolvable:$true] %s26
      %s28 = sshll.u32 [#allocation5], 4
      %s29 = int_to_ptr.vmem [resolvable:$true] %s28
      %34 = dma.hbm_to_vmem [thread:$0]  %s27, 1152, %s29, [#allocation6], 128, 128, 8
    $region13: #{oracle_gold_rollout.2} parent=1 // pred_fallthru
      _
    // Predicated region
    $region14: #{oracle_gold_rollout.2} parent=1 // pred_check
      _
    $region15: #{oracle_gold_rollout.2} parent=1 // pred_check_branch
      %36 = sbr.rel (0) target = $region17
    $region16: #{oracle_gold_rollout.2} parent=1 // pred_region
      _
    $region17: #{oracle_gold_rollout.2} parent=1 // pred_fallthru
      _
    // Predicated region
    $region18: #{oracle_gold_rollout.2} parent=1 // pred_check
      _
    $region19: #{oracle_gold_rollout.2} parent=1 // pred_check_branch
      %38 = sbr.rel (0) target = $region21
    $region20: #{oracle_gold_rollout.2} parent=1 // pred_region
      %40 = vsyncadd [#allocation9], 0
      %s41 = sshll.u32 %s4, 4
      %s42 = int_to_ptr.hbm [resolvable:$true] %s41
      %s43 = sshll.u32 [#allocation8], 4
      %s44 = int_to_ptr.vmem [resolvable:$true] %s43
      %49 = dma.hbm_to_vmem [thread:$0]  %s42, 16384, %s44, [#allocation9], 512, 512, 32
    $region21: #{oracle_gold_rollout.2} parent=1 // pred_fallthru
      _
    // Predicated region
    $region22: #{oracle_gold_rollout.2} parent=1 // pred_check
      _
    $region23: #{oracle_gold_rollout.2} parent=1 // pred_check_branch
      %51 = sbr.rel (0) target = $region25
    $region24: #{oracle_gold_rollout.2} parent=1 // pred_region
      %53 = vsyncadd [#allocation9], 0
      %s55 = sshll.u32 %s5, 4
      %s56 = int_to_ptr.hbm [resolvable:$true] %s55
      %s57 = sshll.u32 [#allocation10], 4
      %s58 = int_to_ptr.vmem [resolvable:$true] %s57
      %60 = dma.hbm_to_vmem [thread:$0]  %s56, 128, %s58, [#allocation9]
    $region25: #{oracle_gold_rollout.2} parent=1 // pred_fallthru
      _
    // Predicated region
    $region26: #{oracle_gold_rollout.2} parent=1 // pred_check
      _
    $region27: #{oracle_gold_rollout.2} parent=1 // pred_check_branch
      %62 = sbr.rel (0) target = $region29
    $region28: #{oracle_gold_rollout.2} parent=1 // pred_region
      %64 = vsyncadd [#allocation12], 0
      %s65 = sshll.u32 %s6, 4
      %s66 = int_to_ptr.hbm [resolvable:$true] %s65
      %s67 = sshll.u32 [#allocation11], 4
      %s68 = int_to_ptr.vmem [resolvable:$true] %s67
      %73 = dma.hbm_to_vmem [thread:$0]  %s66, 16384, %s68, [#allocation12], 512, 512, 32
    $region29: #{oracle_gold_rollout.2} parent=1 // pred_fallthru
      _
    // Predicated region
    $region30: #{oracle_gold_rollout.2} parent=1 // pred_check
      _
    $region31: #{oracle_gold_rollout.2} parent=1 // pred_check_branch
      %75 = sbr.rel (0) target = $region33
    $region32: #{oracle_gold_rollout.2} parent=1 // pred_region
      %77 = dma.done [#allocation6], 1152
    $region33: #{oracle_gold_rollout.2} parent=1 // pred_fallthru
      _
    // Predicated region
    $region34: #{oracle_gold_rollout.2} parent=1 // pred_check
      _
    $region35: #{oracle_gold_rollout.2} parent=1 // pred_check_branch
      %79 = sbr.rel (0) target = $region37
    $region36: #{oracle_gold_rollout.2} parent=1 // pred_region
      %81 = dma.done [#allocation9], 16384
    $region37: #{oracle_gold_rollout.2} parent=1 // pred_fallthru
      _
    // Predicated region
    $region38: #{oracle_gold_rollout.2} parent=1 // pred_check
      _
    $region39: #{oracle_gold_rollout.2} parent=1 // pred_check_branch
      %83 = sbr.rel (0) target = $region41
    $region40: #{oracle_gold_rollout.2} parent=1 // pred_region
      %85 = dma.done [#allocation9], 128
    $region41: #{oracle_gold_rollout.2} parent=1 // pred_fallthru
      _
    // Predicated region
    $region42: #{oracle_gold_rollout.2} parent=1 // pred_check
      _
    $region43: #{oracle_gold_rollout.2} parent=1 // pred_check_branch
      %87 = sbr.rel (0) target = $region45
    $region44: #{oracle_gold_rollout.2} parent=1 // pred_region
      %89 = dma.done [#allocation12], 16384
    $region45: #{oracle_gold_rollout.2} parent=1 // pred_fallthru
      _
    %p91 = scmp.eq.s32.totalorder 0, 0
    // Predicated region
    $region46: #{oracle_gold_rollout.2} parent=1 // pred_check
      %p92 = pneg %p91
    $region47: #{oracle_gold_rollout.2} parent=1 // pred_check_branch
      %94 = sbr.rel (%p92) target = $region49
    $region48: #{oracle_gold_rollout.2} parent=1 // pred_region
      %v95 = vld [vmem:[%s1] sm:$0x3]
      %v96 = vlaneseq
      %vm97 = vcmp.ge.s32.totalorder %v96, 0
      %vm98 = vcmp.lt.s32.totalorder %v96, 256
      %vm99 = vmand %vm97, %vm98
      %100 = vst.msk [vmem:[#allocation2] sm:$0x3] %vm99, %v95
      %v101 = vld [vmem:[%s1 + $0x2] sm:$0x3]
      %102 = vst.msk [vmem:[#allocation3] sm:$0x3] %vm99, %v101
    $region49: #{oracle_gold_rollout.2} parent=1 // pred_fallthru
      _
    %v103 = vld [vmem:[%s0] sm:$0xff]
    %v104 = vpack.c.bf16 %v103, %v103
    %v105 = vld [vmem:[#allocation5] sm:$0xff]
    %v106 = vld [vmem:[#allocation5 + $0x8] sm:$0xff]
    %v107 = vld [vmem:[#allocation5 + $0x10] sm:$0xff]
    %v108 = vld [vmem:[#allocation5 + $0x18] sm:$0xff]
    %v109 = vld [vmem:[#allocation5 + $0x20] sm:$0xff]
    %v110 = vld [vmem:[#allocation5 + $0x28] sm:$0xff]
    %v111 = vld [vmem:[#allocation5 + $0x30] sm:$0xff]
    %v112 = vld [vmem:[#allocation5 + $0x38] sm:$0xff]
    %v113 = vld [vmem:[#allocation5 + $0x40] sm:$0x11]
    %v114 = vld [vmem:[%s3] sm:$0x3]
    %v116 = vperm.slane %v114, 0
    %v117 = vperm.slane %v114, 1
    %v129 = vunpack.c.l.b16 %v105
    %v130 = vunpack.c.h.b16 %v105
    %v131 = vunpack.c.l.b16 %v106
    %v132 = vunpack.c.h.b16 %v106
    %v133 = vunpack.c.l.b16 %v107
    %v134 = vunpack.c.h.b16 %v107
    %v135 = vunpack.c.l.b16 %v108
    %v136 = vunpack.c.h.b16 %v108
    %v137 = vunpack.c.l.b16 %v109
    %v138 = vunpack.c.h.b16 %v109
    %v139 = vunpack.c.l.b16 %v110
    %v140 = vunpack.c.h.b16 %v110
    %v141 = vunpack.c.l.b16 %v111
    %v142 = vunpack.c.h.b16 %v111
    %v143 = vunpack.c.l.b16 %v112
    %v144 = vunpack.c.h.b16 %v112
    %v145 = vunpack.c.l.b16 %v113
    %v146 = vunpack.c.h.b16 %v113
    %v147 = vpack.c.b16 %v131, %v129
    %v148 = vpack.c.b16 %v132, %v130
    %v149 = vpack.c.b16 %v135, %v133
    %v150 = vpack.c.b16 %v136, %v134
    %v151 = vpack.c.b16 %v139, %v137
    %v152 = vpack.c.b16 %v140, %v138
    %v153 = vpack.c.b16 %v143, %v141
    %v154 = vpack.c.b16 %v144, %v142
    %v155 = vpack.c.b16 %v145, %v145
    %v156 = vpack.c.b16 %v146, %v146
    %vm165 = vcmask 531456
    %v167 = vsel %vm165, %v104, 0
    %vm169 = vcmask 1040384
    %v170 = vsel 0, 4294967295, 65535
    %v171 = vsel %vm169, %v170, 0
    %v173 = vand.u32 %v155, %v171
    %v176 = vand.u32 %v156, %v171
    %178 = vmatpush.bf16.msra.mxu0 0
    %179 = vmatpush.bf16.msra.mxu0 0
    %180 = vmatpush.bf16.msra.mxu0 0
    %181 = vmatpush.bf16.msra.mxu0 %v173
    %182 = vmatpush.bf16.msra.mxu0 %v153
    %183 = vmatpush.bf16.msra.mxu0 %v151
    %184 = vmatpush.bf16.msra.mxu0 %v149
    %185 = vmatpush.bf16.msra.mxu0 %v147
    %186 = vmatmul.bf16.gmra.mxu0 %v167
    %v187 = vpop.f32.mrf.mxu0
    %v188 = vadd.f32 %v116, %v187
    %v189 = vpop.f32.mrf.mxu0
    %190 = vdwg.mxu0
    %191 = vmatpush.bf16.msra.mxu0 0
    %192 = vmatpush.bf16.msra.mxu0 0
    %193 = vmatpush.bf16.msra.mxu0 0
    %194 = vmatpush.bf16.msra.mxu0 %v176
    %195 = vmatpush.bf16.msra.mxu0 %v154
    %196 = vmatpush.bf16.msra.mxu0 %v152
    %197 = vmatpush.bf16.msra.mxu0 %v150
    %198 = vmatpush.bf16.msra.mxu0 %v148
    %199 = vmatmul.bf16.gmra.mxu0 %v167
    %v200 = vpop.f32.mrf.mxu0
    %v201 = vadd.f32 %v117, %v200
    %v202 = vpop.f32.mrf.mxu0
    %203 = vdwg.mxu0
    %v204 = vmax.f32 %v188, 0.0
    %v205 = vmax.f32 %v201, 0.0
    %v206 = vpack.c.bf16 %v204, %v204
    %v207 = vpack.c.bf16 %v205, %v205
    %v208 = vld [vmem:[#allocation8] sm:$0xff]
    %v209 = vld [vmem:[#allocation8 + $0x8] sm:$0xff]
    %v210 = vld [vmem:[#allocation8 + $0x10] sm:$0xff]
    %v211 = vld [vmem:[#allocation8 + $0x18] sm:$0xff]
    %v212 = vld [vmem:[#allocation8 + $0x20] sm:$0xff]
    %v213 = vld [vmem:[#allocation8 + $0x28] sm:$0xff]
    %v214 = vld [vmem:[#allocation8 + $0x30] sm:$0xff]
    %v215 = vld [vmem:[#allocation8 + $0x38] sm:$0xff]
    %v216 = vld [vmem:[#allocation8 + $0x40] sm:$0xff]
    %v217 = vld [vmem:[#allocation8 + $0x48] sm:$0xff]
    %v218 = vld [vmem:[#allocation8 + $0x50] sm:$0xff]
    %v219 = vld [vmem:[#allocation8 + $0x58] sm:$0xff]
    %v220 = vld [vmem:[#allocation8 + $0x60] sm:$0xff]
    %v221 = vld [vmem:[#allocation8 + $0x68] sm:$0xff]
    %v222 = vld [vmem:[#allocation8 + $0x70] sm:$0xff]
    %v223 = vld [vmem:[#allocation8 + $0x78] sm:$0xff]
    %v224 = vld [vmem:[#allocation8 + $0x80] sm:$0xff]
    %v225 = vld [vmem:[#allocation8 + $0x88] sm:$0xff]
    %v226 = vld [vmem:[#allocation8 + $0x90] sm:$0xff]
    %v227 = vld [vmem:[#allocation8 + $0x98] sm:$0xff]
    %v228 = vld [vmem:[#allocation8 + $0xa0] sm:$0xff]
    %v229 = vld [vmem:[#allocation8 + $0xa8] sm:$0xff]
    %v230 = vld [vmem:[#allocation8 + $0xb0] sm:$0xff]
    %v231 = vld [vmem:[#allocation8 + $0xb8] sm:$0xff]
    %v232 = vld [vmem:[#allocation8 + $0xc0] sm:$0xff]
    %v233 = vld [vmem:[#allocation8 + $0xc8] sm:$0xff]
    %v234 = vld [vmem:[#allocation8 + $0xd0] sm:$0xff]
    %v235 = vld [vmem:[#allocation8 + $0xd8] sm:$0xff]
    %v236 = vld [vmem:[#allocation8 + $0xe0] sm:$0xff]
    %v237 = vld [vmem:[#allocation8 + $0xe8] sm:$0xff]
    %v238 = vld [vmem:[#allocation8 + $0xf0] sm:$0xff]
    %v239 = vld [vmem:[#allocation8 + $0xf8] sm:$0xff]
    %v240 = vld [vmem:[#allocation8 + $0x100] sm:$0xff]
    %v241 = vld [vmem:[#allocation8 + $0x108] sm:$0xff]
    %v242 = vld [vmem:[#allocation8 + $0x110] sm:$0xff]
    %v243 = vld [vmem:[#allocation8 + $0x118] sm:$0xff]
    %v244 = vld [vmem:[#allocation8 + $0x120] sm:$0xff]
    %v245 = vld [vmem:[#allocation8 + $0x128] sm:$0xff]
    %v246 = vld [vmem:[#allocation8 + $0x130] sm:$0xff]
    %v247 = vld [vmem:[#allocation8 + $0x138] sm:$0xff]
    %v248 = vld [vmem:[#allocation8 + $0x140] sm:$0xff]
    %v249 = vld [vmem:[#allocation8 + $0x148] sm:$0xff]
    %v250 = vld [vmem:[#allocation8 + $0x150] sm:$0xff]
    %v251 = vld [vmem:[#allocation8 + $0x158] sm:$0xff]
    %v252 = vld [vmem:[#allocation8 + $0x160] sm:$0xff]
    %v253 = vld [vmem:[#allocation8 + $0x168] sm:$0xff]
    %v254 = vld [vmem:[#allocation8 + $0x170] sm:$0xff]
    %v255 = vld [vmem:[#allocation8 + $0x178] sm:$0xff]
    %v256 = vld [vmem:[#allocation8 + $0x180] sm:$0xff]
    %v257 = vld [vmem:[#allocation8 + $0x188] sm:$0xff]
    %v258 = vld [vmem:[#allocation8 + $0x190] sm:$0xff]
    %v259 = vld [vmem:[#allocation8 + $0x198] sm:$0xff]
    %v260 = vld [vmem:[#allocation8 + $0x1a0] sm:$0xff]
    %v261 = vld [vmem:[#allocation8 + $0x1a8] sm:$0xff]
    %v262 = vld [vmem:[#allocation8 + $0x1b0] sm:$0xff]
    %v263 = vld [vmem:[#allocation8 + $0x1b8] sm:$0xff]
    %v264 = vld [vmem:[#allocation8 + $0x1c0] sm:$0xff]
    %v265 = vld [vmem:[#allocation8 + $0x1c8] sm:$0xff]
    %v266 = vld [vmem:[#allocation8 + $0x1d0] sm:$0xff]
    %v267 = vld [vmem:[#allocation8 + $0x1d8] sm:$0xff]
    %v268 = vld [vmem:[#allocation8 + $0x1e0] sm:$0xff]
    %v269 = vld [vmem:[#allocation8 + $0x1e8] sm:$0xff]
    %v270 = vld [vmem:[#allocation8 + $0x1f0] sm:$0xff]
    %v271 = vld [vmem:[#allocation8 + $0x1f8] sm:$0xff]
    %v272 = vld [vmem:[#allocation8 + $0x200] sm:$0xff]
    %v273 = vld [vmem:[#allocation8 + $0x208] sm:$0xff]
    %v274 = vld [vmem:[#allocation8 + $0x210] sm:$0xff]
    %v275 = vld [vmem:[#allocation8 + $0x218] sm:$0xff]
    %v276 = vld [vmem:[#allocation8 + $0x220] sm:$0xff]
    %v277 = vld [vmem:[#allocation8 + $0x228] sm:$0xff]
    %v278 = vld [vmem:[#allocation8 + $0x230] sm:$0xff]
    %v279 = vld [vmem:[#allocation8 + $0x238] sm:$0xff]
    %v280 = vld [vmem:[#allocation8 + $0x240] sm:$0xff]
    %v281 = vld [vmem:[#allocation8 + $0x248] sm:$0xff]
    %v282 = vld [vmem:[#allocation8 + $0x250] sm:$0xff]
    %v283 = vld [vmem:[#allocation8 + $0x258] sm:$0xff]
    %v284 = vld [vmem:[#allocation8 + $0x260] sm:$0xff]
    %v285 = vld [vmem:[#allocation8 + $0x268] sm:$0xff]
    %v286 = vld [vmem:[#allocation8 + $0x270] sm:$0xff]
    %v287 = vld [vmem:[#allocation8 + $0x278] sm:$0xff]
    %v288 = vld [vmem:[#allocation8 + $0x280] sm:$0xff]
    %v289 = vld [vmem:[#allocation8 + $0x288] sm:$0xff]
    %v290 = vld [vmem:[#allocation8 + $0x290] sm:$0xff]
    %v291 = vld [vmem:[#allocation8 + $0x298] sm:$0xff]
    %v292 = vld [vmem:[#allocation8 + $0x2a0] sm:$0xff]
    %v293 = vld [vmem:[#allocation8 + $0x2a8] sm:$0xff]
    %v294 = vld [vmem:[#allocation8 + $0x2b0] sm:$0xff]
    %v295 = vld [vmem:[#allocation8 + $0x2b8] sm:$0xff]
    %v296 = vld [vmem:[#allocation8 + $0x2c0] sm:$0xff]
    %v297 = vld [vmem:[#allocation8 + $0x2c8] sm:$0xff]
    %v298 = vld [vmem:[#allocation8 + $0x2d0] sm:$0xff]
    %v299 = vld [vmem:[#allocation8 + $0x2d8] sm:$0xff]
    %v300 = vld [vmem:[#allocation8 + $0x2e0] sm:$0xff]
    %v301 = vld [vmem:[#allocation8 + $0x2e8] sm:$0xff]
    %v302 = vld [vmem:[#allocation8 + $0x2f0] sm:$0xff]
    %v303 = vld [vmem:[#allocation8 + $0x2f8] sm:$0xff]
    %v304 = vld [vmem:[#allocation8 + $0x300] sm:$0xff]
    %v305 = vld [vmem:[#allocation8 + $0x308] sm:$0xff]
    %v306 = vld [vmem:[#allocation8 + $0x310] sm:$0xff]
    %v307 = vld [vmem:[#allocation8 + $0x318] sm:$0xff]
    %v308 = vld [vmem:[#allocation8 + $0x320] sm:$0xff]
    %v309 = vld [vmem:[#allocation8 + $0x328] sm:$0xff]
    %v310 = vld [vmem:[#allocation8 + $0x330] sm:$0xff]
    %v311 = vld [vmem:[#allocation8 + $0x338] sm:$0xff]
    %v312 = vld [vmem:[#allocation8 + $0x340] sm:$0xff]
    %v313 = vld [vmem:[#allocation8 + $0x348] sm:$0xff]
    %v314 = vld [vmem:[#allocation8 + $0x350] sm:$0xff]
    %v315 = vld [vmem:[#allocation8 + $0x358] sm:$0xff]
    %v316 = vld [vmem:[#allocation8 + $0x360] sm:$0xff]
    %v317 = vld [vmem:[#allocation8 + $0x368] sm:$0xff]
    %v318 = vld [vmem:[#allocation8 + $0x370] sm:$0xff]
    %v319 = vld [vmem:[#allocation8 + $0x378] sm:$0xff]
    %v320 = vld [vmem:[#allocation8 + $0x380] sm:$0xff]
    %v321 = vld [vmem:[#allocation8 + $0x388] sm:$0xff]
    %v322 = vld [vmem:[#allocation8 + $0x390] sm:$0xff]
    %v323 = vld [vmem:[#allocation8 + $0x398] sm:$0xff]
    %v324 = vld [vmem:[#allocation8 + $0x3a0] sm:$0xff]
    %v325 = vld [vmem:[#allocation8 + $0x3a8] sm:$0xff]
    %v326 = vld [vmem:[#allocation8 + $0x3b0] sm:$0xff]
    %v327 = vld [vmem:[#allocation8 + $0x3b8] sm:$0xff]
    %v328 = vld [vmem:[#allocation8 + $0x3c0] sm:$0xff]
    %v329 = vld [vmem:[#allocation8 + $0x3c8] sm:$0xff]
    %v330 = vld [vmem:[#allocation8 + $0x3d0] sm:$0xff]
    %v331 = vld [vmem:[#allocation8 + $0x3d8] sm:$0xff]
    %v332 = vld [vmem:[#allocation8 + $0x3e0] sm:$0xff]
    %v333 = vld [vmem:[#allocation8 + $0x3e8] sm:$0xff]
    %v334 = vld [vmem:[#allocation8 + $0x3f0] sm:$0xff]
    %v335 = vld [vmem:[#allocation8 + $0x3f8] sm:$0xff]
    %v336 = vld [vmem:[#allocation10] sm:$0xff]
    %v338 = vperm.slane %v336, 0
    %v339 = vperm.slane %v336, 1
    %v340 = vperm.slane %v336, 2
    %v341 = vperm.slane %v336, 3
    %v342 = vperm.slane %v336, 4
    %v343 = vperm.slane %v336, 5
    %v344 = vperm.slane %v336, 6
    %v345 = vperm.slane %v336, 7
    %v482 = vunpack.c.l.b16 %v208
    %v483 = vunpack.c.h.b16 %v208
    %v484 = vunpack.c.l.b16 %v209
    %v485 = vunpack.c.h.b16 %v209
    %v486 = vunpack.c.l.b16 %v210
    %v487 = vunpack.c.h.b16 %v210
    %v488 = vunpack.c.l.b16 %v211
    %v489 = vunpack.c.h.b16 %v211
    %v490 = vunpack.c.l.b16 %v212
    %v491 = vunpack.c.h.b16 %v212
    %v492 = vunpack.c.l.b16 %v213
    %v493 = vunpack.c.h.b16 %v213
    %v494 = vunpack.c.l.b16 %v214
    %v495 = vunpack.c.h.b16 %v214
    %v496 = vunpack.c.l.b16 %v215
    %v497 = vunpack.c.h.b16 %v215
    %v498 = vunpack.c.l.b16 %v216
    %v499 = vunpack.c.h.b16 %v216
    %v500 = vunpack.c.l.b16 %v217
    %v501 = vunpack.c.h.b16 %v217
    %v502 = vunpack.c.l.b16 %v218
    %v503 = vunpack.c.h.b16 %v218
    %v504 = vunpack.c.l.b16 %v219
    %v505 = vunpack.c.h.b16 %v219
    %v506 = vunpack.c.l.b16 %v220
    %v507 = vunpack.c.h.b16 %v220
    %v508 = vunpack.c.l.b16 %v221
    %v509 = vunpack.c.h.b16 %v221
    %v510 = vunpack.c.l.b16 %v222
    %v511 = vunpack.c.h.b16 %v222
    %v512 = vunpack.c.l.b16 %v223
    %v513 = vunpack.c.h.b16 %v223
    %v514 = vunpack.c.l.b16 %v224
    %v515 = vunpack.c.h.b16 %v224
    %v516 = vunpack.c.l.b16 %v225
    %v517 = vunpack.c.h.b16 %v225
    %v518 = vunpack.c.l.b16 %v226
    %v519 = vunpack.c.h.b16 %v226
    %v520 = vunpack.c.l.b16 %v227
    %v521 = vunpack.c.h.b16 %v227
    %v522 = vunpack.c.l.b16 %v228
    %v523 = vunpack.c.h.b16 %v228
    %v524 = vunpack.c.l.b16 %v229
    %v525 = vunpack.c.h.b16 %v229
    %v526 = vunpack.c.l.b16 %v230
    %v527 = vunpack.c.h.b16 %v230
    %v528 = vunpack.c.l.b16 %v231
    %v529 = vunpack.c.h.b16 %v231
    %v530 = vunpack.c.l.b16 %v232
    %v531 = vunpack.c.h.b16 %v232
    %v532 = vunpack.c.l.b16 %v233
    %v533 = vunpack.c.h.b16 %v233
    %v534 = vunpack.c.l.b16 %v234
    %v535 = vunpack.c.h.b16 %v234
    %v536 = vunpack.c.l.b16 %v235
    %v537 = vunpack.c.h.b16 %v235
    %v538 = vunpack.c.l.b16 %v236
    %v539 = vunpack.c.h.b16 %v236
    %v540 = vunpack.c.l.b16 %v237
    %v541 = vunpack.c.h.b16 %v237
    %v542 = vunpack.c.l.b16 %v238
    %v543 = vunpack.c.h.b16 %v238
    %v544 = vunpack.c.l.b16 %v239
    %v545 = vunpack.c.h.b16 %v239
    %v546 = vunpack.c.l.b16 %v240
    %v547 = vunpack.c.h.b16 %v240
    %v548 = vunpack.c.l.b16 %v241
    %v549 = vunpack.c.h.b16 %v241
    %v550 = vunpack.c.l.b16 %v242
    %v551 = vunpack.c.h.b16 %v242
    %v552 = vunpack.c.l.b16 %v243
    %v553 = vunpack.c.h.b16 %v243
    %v554 = vunpack.c.l.b16 %v244
    %v555 = vunpack.c.h.b16 %v244
    %v556 = vunpack.c.l.b16 %v245
    %v557 = vunpack.c.h.b16 %v245
    %v558 = vunpack.c.l.b16 %v246
    %v559 = vunpack.c.h.b16 %v246
    %v560 = vunpack.c.l.b16 %v247
    %v561 = vunpack.c.h.b16 %v247
    %v562 = vunpack.c.l.b16 %v248
    %v563 = vunpack.c.h.b16 %v248
    %v564 = vunpack.c.l.b16 %v249
    %v565 = vunpack.c.h.b16 %v249
    %v566 = vunpack.c.l.b16 %v250
    %v567 = vunpack.c.h.b16 %v250
    %v568 = vunpack.c.l.b16 %v251
    %v569 = vunpack.c.h.b16 %v251
    %v570 = vunpack.c.l.b16 %v252
    %v571 = vunpack.c.h.b16 %v252
    %v572 = vunpack.c.l.b16 %v253
    %v573 = vunpack.c.h.b16 %v253
    %v574 = vunpack.c.l.b16 %v254
    %v575 = vunpack.c.h.b16 %v254
    %v576 = vunpack.c.l.b16 %v255
    %v577 = vunpack.c.h.b16 %v255
    %v578 = vunpack.c.l.b16 %v256
    %v579 = vunpack.c.h.b16 %v256
    %v580 = vunpack.c.l.b16 %v257
    %v581 = vunpack.c.h.b16 %v257
    %v582 = vunpack.c.l.b16 %v258
    %v583 = vunpack.c.h.b16 %v258
    %v584 = vunpack.c.l.b16 %v259
    %v585 = vunpack.c.h.b16 %v259
    %v586 = vunpack.c.l.b16 %v260
    %v587 = vunpack.c.h.b16 %v260
    %v588 = vunpack.c.l.b16 %v261
    %v589 = vunpack.c.h.b16 %v261
    %v590 = vunpack.c.l.b16 %v262
    %v591 = vunpack.c.h.b16 %v262
    %v592 = vunpack.c.l.b16 %v263
    %v593 = vunpack.c.h.b16 %v263
    %v594 = vunpack.c.l.b16 %v264
    %v595 = vunpack.c.h.b16 %v264
    %v596 = vunpack.c.l.b16 %v265
    %v597 = vunpack.c.h.b16 %v265
    %v598 = vunpack.c.l.b16 %v266
    %v599 = vunpack.c.h.b16 %v266
    %v600 = vunpack.c.l.b16 %v267
    %v601 = vunpack.c.h.b16 %v267
    %v602 = vunpack.c.l.b16 %v268
    %v603 = vunpack.c.h.b16 %v268
    %v604 = vunpack.c.l.b16 %v269
    %v605 = vunpack.c.h.b16 %v269
    %v606 = vunpack.c.l.b16 %v270
    %v607 = vunpack.c.h.b16 %v270
    %v608 = vunpack.c.l.b16 %v271
    %v609 = vunpack.c.h.b16 %v271
    %v610 = vunpack.c.l.b16 %v272
    %v611 = vunpack.c.h.b16 %v272
    %v612 = vunpack.c.l.b16 %v273
    %v613 = vunpack.c.h.b16 %v273
    %v614 = vunpack.c.l.b16 %v274
    %v615 = vunpack.c.h.b16 %v274
    %v616 = vunpack.c.l.b16 %v275
    %v617 = vunpack.c.h.b16 %v275
    %v618 = vunpack.c.l.b16 %v276
    %v619 = vunpack.c.h.b16 %v276
    %v620 = vunpack.c.l.b16 %v277
    %v621 = vunpack.c.h.b16 %v277
    %v622 = vunpack.c.l.b16 %v278
    %v623 = vunpack.c.h.b16 %v278
    %v624 = vunpack.c.l.b16 %v279
    %v625 = vunpack.c.h.b16 %v279
    %v626 = vunpack.c.l.b16 %v280
    %v627 = vunpack.c.h.b16 %v280
    %v628 = vunpack.c.l.b16 %v281
    %v629 = vunpack.c.h.b16 %v281
    %v630 = vunpack.c.l.b16 %v282
    %v631 = vunpack.c.h.b16 %v282
    %v632 = vunpack.c.l.b16 %v283
    %v633 = vunpack.c.h.b16 %v283
    %v634 = vunpack.c.l.b16 %v284
    %v635 = vunpack.c.h.b16 %v284
    %v636 = vunpack.c.l.b16 %v285
    %v637 = vunpack.c.h.b16 %v285
    %v638 = vunpack.c.l.b16 %v286
    %v639 = vunpack.c.h.b16 %v286
    %v640 = vunpack.c.l.b16 %v287
    %v641 = vunpack.c.h.b16 %v287
    %v642 = vunpack.c.l.b16 %v288
    %v643 = vunpack.c.h.b16 %v288
    %v644 = vunpack.c.l.b16 %v289
    %v645 = vunpack.c.h.b16 %v289
    %v646 = vunpack.c.l.b16 %v290
    %v647 = vunpack.c.h.b16 %v290
    %v648 = vunpack.c.l.b16 %v291
    %v649 = vunpack.c.h.b16 %v291
    %v650 = vunpack.c.l.b16 %v292
    %v651 = vunpack.c.h.b16 %v292
    %v652 = vunpack.c.l.b16 %v293
    %v653 = vunpack.c.h.b16 %v293
    %v654 = vunpack.c.l.b16 %v294
    %v655 = vunpack.c.h.b16 %v294
    %v656 = vunpack.c.l.b16 %v295
    %v657 = vunpack.c.h.b16 %v295
    %v658 = vunpack.c.l.b16 %v296
    %v659 = vunpack.c.h.b16 %v296
    %v660 = vunpack.c.l.b16 %v297
    %v661 = vunpack.c.h.b16 %v297
    %v662 = vunpack.c.l.b16 %v298
    %v663 = vunpack.c.h.b16 %v298
    %v664 = vunpack.c.l.b16 %v299
    %v665 = vunpack.c.h.b16 %v299
    %v666 = vunpack.c.l.b16 %v300
    %v667 = vunpack.c.h.b16 %v300
    %v668 = vunpack.c.l.b16 %v301
    %v669 = vunpack.c.h.b16 %v301
    %v670 = vunpack.c.l.b16 %v302
    %v671 = vunpack.c.h.b16 %v302
    %v672 = vunpack.c.l.b16 %v303
    %v673 = vunpack.c.h.b16 %v303
    %v674 = vunpack.c.l.b16 %v304
    %v675 = vunpack.c.h.b16 %v304
    %v676 = vunpack.c.l.b16 %v305
    %v677 = vunpack.c.h.b16 %v305
    %v678 = vunpack.c.l.b16 %v306
    %v679 = vunpack.c.h.b16 %v306
    %v680 = vunpack.c.l.b16 %v307
    %v681 = vunpack.c.h.b16 %v307
    %v682 = vunpack.c.l.b16 %v308
    %v683 = vunpack.c.h.b16 %v308
    %v684 = vunpack.c.l.b16 %v309
    %v685 = vunpack.c.h.b16 %v309
    %v686 = vunpack.c.l.b16 %v310
    %v687 = vunpack.c.h.b16 %v310
    %v688 = vunpack.c.l.b16 %v311
    %v689 = vunpack.c.h.b16 %v311
    %v690 = vunpack.c.l.b16 %v312
    %v691 = vunpack.c.h.b16 %v312
    %v692 = vunpack.c.l.b16 %v313
    %v693 = vunpack.c.h.b16 %v313
    %v694 = vunpack.c.l.b16 %v314
    %v695 = vunpack.c.h.b16 %v314
    %v696 = vunpack.c.l.b16 %v315
    %v697 = vunpack.c.h.b16 %v315
    %v698 = vunpack.c.l.b16 %v316
    %v699 = vunpack.c.h.b16 %v316
    %v700 = vunpack.c.l.b16 %v317
    %v701 = vunpack.c.h.b16 %v317
    %v702 = vunpack.c.l.b16 %v318
    %v703 = vunpack.c.h.b16 %v318
    %v704 = vunpack.c.l.b16 %v319
    %v705 = vunpack.c.h.b16 %v319
    %v706 = vunpack.c.l.b16 %v320
    %v707 = vunpack.c.h.b16 %v320
    %v708 = vunpack.c.l.b16 %v321
    %v709 = vunpack.c.h.b16 %v321
    %v710 = vunpack.c.l.b16 %v322
    %v711 = vunpack.c.h.b16 %v322
    %v712 = vunpack.c.l.b16 %v323
    %v713 = vunpack.c.h.b16 %v323
    %v714 = vunpack.c.l.b16 %v324
    %v715 = vunpack.c.h.b16 %v324
    %v716 = vunpack.c.l.b16 %v325
    %v717 = vunpack.c.h.b16 %v325
    %v718 = vunpack.c.l.b16 %v326
    %v719 = vunpack.c.h.b16 %v326
    %v720 = vunpack.c.l.b16 %v327
    %v721 = vunpack.c.h.b16 %v327
    %v722 = vunpack.c.l.b16 %v328
    %v723 = vunpack.c.h.b16 %v328
    %v724 = vunpack.c.l.b16 %v329
    %v725 = vunpack.c.h.b16 %v329
    %v726 = vunpack.c.l.b16 %v330
    %v727 = vunpack.c.h.b16 %v330
    %v728 = vunpack.c.l.b16 %v331
    %v729 = vunpack.c.h.b16 %v331
    %v730 = vunpack.c.l.b16 %v332
    %v731 = vunpack.c.h.b16 %v332
    %v732 = vunpack.c.l.b16 %v333
    %v733 = vunpack.c.h.b16 %v333
    %v734 = vunpack.c.l.b16 %v334
    %v735 = vunpack.c.h.b16 %v334
    %v736 = vunpack.c.l.b16 %v335
    %v737 = vunpack.c.h.b16 %v335
    %v738 = vpack.c.b16 %v490, %v482
    %v739 = vpack.c.b16 %v491, %v483
    %v740 = vpack.c.b16 %v492, %v484
    %v741 = vpack.c.b16 %v493, %v485
    %v742 = vpack.c.b16 %v494, %v486
    %v743 = vpack.c.b16 %v495, %v487
    %v744 = vpack.c.b16 %v496, %v488
    %v745 = vpack.c.b16 %v497, %v489
    %v746 = vpack.c.b16 %v506, %v498
    %v747 = vpack.c.b16 %v507, %v499
    %v748 = vpack.c.b16 %v508, %v500
    %v749 = vpack.c.b16 %v509, %v501
    %v750 = vpack.c.b16 %v510, %v502
    %v751 = vpack.c.b16 %v511, %v503
    %v752 = vpack.c.b16 %v512, %v504
    %v753 = vpack.c.b16 %v513, %v505
    %v754 = vpack.c.b16 %v522, %v514
    %v755 = vpack.c.b16 %v523, %v515
    %v756 = vpack.c.b16 %v524, %v516
    %v757 = vpack.c.b16 %v525, %v517
    %v758 = vpack.c.b16 %v526, %v518
    %v759 = vpack.c.b16 %v527, %v519
    %v760 = vpack.c.b16 %v528, %v520
    %v761 = vpack.c.b16 %v529, %v521
    %v762 = vpack.c.b16 %v538, %v530
    %v763 = vpack.c.b16 %v539, %v531
    %v764 = vpack.c.b16 %v540, %v532
    %v765 = vpack.c.b16 %v541, %v533
    %v766 = vpack.c.b16 %v542, %v534
    %v767 = vpack.c.b16 %v543, %v535
    %v768 = vpack.c.b16 %v544, %v536
    %v769 = vpack.c.b16 %v545, %v537
    %v770 = vpack.c.b16 %v554, %v546
    %v771 = vpack.c.b16 %v555, %v547
    %v772 = vpack.c.b16 %v556, %v548
    %v773 = vpack.c.b16 %v557, %v549
    %v774 = vpack.c.b16 %v558, %v550
    %v775 = vpack.c.b16 %v559, %v551
    %v776 = vpack.c.b16 %v560, %v552
    %v777 = vpack.c.b16 %v561, %v553
    %v778 = vpack.c.b16 %v570, %v562
    %v779 = vpack.c.b16 %v571, %v563
    %v780 = vpack.c.b16 %v572, %v564
    %v781 = vpack.c.b16 %v573, %v565
    %v782 = vpack.c.b16 %v574, %v566
    %v783 = vpack.c.b16 %v575, %v567
    %v784 = vpack.c.b16 %v576, %v568
    %v785 = vpack.c.b16 %v577, %v569
    %v786 = vpack.c.b16 %v586, %v578
    %v787 = vpack.c.b16 %v587, %v579
    %v788 = vpack.c.b16 %v588, %v580
    %v789 = vpack.c.b16 %v589, %v581
    %v790 = vpack.c.b16 %v590, %v582
    %v791 = vpack.c.b16 %v591, %v583
    %v792 = vpack.c.b16 %v592, %v584
    %v793 = vpack.c.b16 %v593, %v585
    %v794 = vpack.c.b16 %v602, %v594
    %v795 = vpack.c.b16 %v603, %v595
    %v796 = vpack.c.b16 %v604, %v596
    %v797 = vpack.c.b16 %v605, %v597
    %v798 = vpack.c.b16 %v606, %v598
    %v799 = vpack.c.b16 %v607, %v599
    %v800 = vpack.c.b16 %v608, %v600
    %v801 = vpack.c.b16 %v609, %v601
    %v802 = vpack.c.b16 %v618, %v610
    %v803 = vpack.c.b16 %v619, %v611
    %v804 = vpack.c.b16 %v620, %v612
    %v805 = vpack.c.b16 %v621, %v613
    %v806 = vpack.c.b16 %v622, %v614
    %v807 = vpack.c.b16 %v623, %v615
    %v808 = vpack.c.b16 %v624, %v616
    %v809 = vpack.c.b16 %v625, %v617
    %v810 = vpack.c.b16 %v634, %v626
    %v811 = vpack.c.b16 %v635, %v627
    %v812 = vpack.c.b16 %v636, %v628
    %v813 = vpack.c.b16 %v637, %v629
    %v814 = vpack.c.b16 %v638, %v630
    %v815 = vpack.c.b16 %v639, %v631
    %v816 = vpack.c.b16 %v640, %v632
    %v817 = vpack.c.b16 %v641, %v633
    %v818 = vpack.c.b16 %v650, %v642
    %v819 = vpack.c.b16 %v651, %v643
    %v820 = vpack.c.b16 %v652, %v644
    %v821 = vpack.c.b16 %v653, %v645
    %v822 = vpack.c.b16 %v654, %v646
    %v823 = vpack.c.b16 %v655, %v647
    %v824 = vpack.c.b16 %v656, %v648
    %v825 = vpack.c.b16 %v657, %v649
    %v826 = vpack.c.b16 %v666, %v658
    %v827 = vpack.c.b16 %v667, %v659
    %v828 = vpack.c.b16 %v668, %v660
    %v829 = vpack.c.b16 %v669, %v661
    %v830 = vpack.c.b16 %v670, %v662
    %v831 = vpack.c.b16 %v671, %v663
    %v832 = vpack.c.b16 %v672, %v664
    %v833 = vpack.c.b16 %v673, %v665
    %v834 = vpack.c.b16 %v682, %v674
    %v835 = vpack.c.b16 %v683, %v675
    %v836 = vpack.c.b16 %v684, %v676
    %v837 = vpack.c.b16 %v685, %v677
    %v838 = vpack.c.b16 %v686, %v678
    %v839 = vpack.c.b16 %v687, %v679
    %v840 = vpack.c.b16 %v688, %v680
    %v841 = vpack.c.b16 %v689, %v681
    %v842 = vpack.c.b16 %v698, %v690
    %v843 = vpack.c.b16 %v699, %v691
    %v844 = vpack.c.b16 %v700, %v692
    %v845 = vpack.c.b16 %v701, %v693
    %v846 = vpack.c.b16 %v702, %v694
    %v847 = vpack.c.b16 %v703, %v695
    %v848 = vpack.c.b16 %v704, %v696
    %v849 = vpack.c.b16 %v705, %v697
    %v850 = vpack.c.b16 %v714, %v706
    %v851 = vpack.c.b16 %v715, %v707
    %v852 = vpack.c.b16 %v716, %v708
    %v853 = vpack.c.b16 %v717, %v709
    %v854 = vpack.c.b16 %v718, %v710
    %v855 = vpack.c.b16 %v719, %v711
    %v856 = vpack.c.b16 %v720, %v712
    %v857 = vpack.c.b16 %v721, %v713
    %v858 = vpack.c.b16 %v730, %v722
    %v859 = vpack.c.b16 %v731, %v723
    %v860 = vpack.c.b16 %v732, %v724
    %v861 = vpack.c.b16 %v733, %v725
    %v862 = vpack.c.b16 %v734, %v726
    %v863 = vpack.c.b16 %v735, %v727
    %v864 = vpack.c.b16 %v736, %v728
    %v865 = vpack.c.b16 %v737, %v729
    %994 = vmatpush.bf16.msra.mxu0 %v794
    %995 = vmatpush.bf16.msra.mxu0 %v786
    %996 = vmatpush.bf16.msra.mxu0 %v778
    %997 = vmatpush.bf16.msra.mxu0 %v770
    %998 = vmatpush.bf16.msra.mxu0 %v762
    %999 = vmatpush.bf16.msra.mxu0 %v754
    %1000 = vmatpush.bf16.msra.mxu0 %v746
    %1001 = vmatpush.bf16.msra.mxu0 %v738
    %1002 = vmatmul.bf16.gmra.mxu0 %v206
    %v1003 = vpop.f32.mrf.mxu0
    %v1004 = vadd.f32 %v338, %v1003
    %v1005 = vpop.f32.mrf.mxu0
    %1006 = vdwg.mxu0
    %1007 = vmatpush.bf16.msra.mxu0 %v858
    %1008 = vmatpush.bf16.msra.mxu0 %v850
    %1009 = vmatpush.bf16.msra.mxu0 %v842
    %1010 = vmatpush.bf16.msra.mxu0 %v834
    %1011 = vmatpush.bf16.msra.mxu0 %v826
    %1012 = vmatpush.bf16.msra.mxu0 %v818
    %1013 = vmatpush.bf16.msra.mxu0 %v810
    %1014 = vmatpush.bf16.msra.mxu0 %v802
    %1015 = vmatmul.bf16.gmra.mxu0 %v207
    %v1016 = vpop.f32.mrf.mxu0
    %v1017 = vadd.f32 %v1004, %v1016
    %v1018 = vpop.f32.mrf.mxu0
    %1019 = vdwg.mxu0
    %1020 = vmatpush.bf16.msra.mxu0 %v795
    %1021 = vmatpush.bf16.msra.mxu0 %v787
    %1022 = vmatpush.bf16.msra.mxu0 %v779
    %1023 = vmatpush.bf16.msra.mxu0 %v771
    %1024 = vmatpush.bf16.msra.mxu0 %v763
    %1025 = vmatpush.bf16.msra.mxu0 %v755
    %1026 = vmatpush.bf16.msra.mxu0 %v747
    %1027 = vmatpush.bf16.msra.mxu0 %v739
    %1028 = vmatmul.bf16.gmra.mxu0 %v206
    %v1029 = vpop.f32.mrf.mxu0
    %v1030 = vadd.f32 %v339, %v1029
    %v1031 = vpop.f32.mrf.mxu0
    %1032 = vdwg.mxu0
    %1033 = vmatpush.bf16.msra.mxu0 %v859
    %1034 = vmatpush.bf16.msra.mxu0 %v851
    %1035 = vmatpush.bf16.msra.mxu0 %v843
    %1036 = vmatpush.bf16.msra.mxu0 %v835
    %1037 = vmatpush.bf16.msra.mxu0 %v827
    %1038 = vmatpush.bf16.msra.mxu0 %v819
    %1039 = vmatpush.bf16.msra.mxu0 %v811
    %1040 = vmatpush.bf16.msra.mxu0 %v803
    %1041 = vmatmul.bf16.gmra.mxu0 %v207
    %v1042 = vpop.f32.mrf.mxu0
    %v1043 = vadd.f32 %v1030, %v1042
    %v1044 = vpop.f32.mrf.mxu0
    %1045 = vdwg.mxu0
    %1046 = vmatpush.bf16.msra.mxu0 %v796
    %1047 = vmatpush.bf16.msra.mxu0 %v788
    %1048 = vmatpush.bf16.msra.mxu0 %v780
    %1049 = vmatpush.bf16.msra.mxu0 %v772
    %1050 = vmatpush.bf16.msra.mxu0 %v764
    %1051 = vmatpush.bf16.msra.mxu0 %v756
    %1052 = vmatpush.bf16.msra.mxu0 %v748
    %1053 = vmatpush.bf16.msra.mxu0 %v740
    %1054 = vmatmul.bf16.gmra.mxu0 %v206
    %v1055 = vpop.f32.mrf.mxu0
    %v1056 = vadd.f32 %v340, %v1055
    %v1057 = vpop.f32.mrf.mxu0
    %1058 = vdwg.mxu0
    %1059 = vmatpush.bf16.msra.mxu0 %v860
    %1060 = vmatpush.bf16.msra.mxu0 %v852
    %1061 = vmatpush.bf16.msra.mxu0 %v844
    %1062 = vmatpush.bf16.msra.mxu0 %v836
    %1063 = vmatpush.bf16.msra.mxu0 %v828
    %1064 = vmatpush.bf16.msra.mxu0 %v820
    %1065 = vmatpush.bf16.msra.mxu0 %v812
    %1066 = vmatpush.bf16.msra.mxu0 %v804
    %1067 = vmatmul.bf16.gmra.mxu0 %v207
    %v1068 = vpop.f32.mrf.mxu0
    %v1069 = vadd.f32 %v1056, %v1068
    %v1070 = vpop.f32.mrf.mxu0
    %1071 = vdwg.mxu0
    %1072 = vmatpush.bf16.msra.mxu0 %v797
    %1073 = vmatpush.bf16.msra.mxu0 %v789
    %1074 = vmatpush.bf16.msra.mxu0 %v781
    %1075 = vmatpush.bf16.msra.mxu0 %v773
    %1076 = vmatpush.bf16.msra.mxu0 %v765
    %1077 = vmatpush.bf16.msra.mxu0 %v757
    %1078 = vmatpush.bf16.msra.mxu0 %v749
    %1079 = vmatpush.bf16.msra.mxu0 %v741
    %1080 = vmatmul.bf16.gmra.mxu0 %v206
    %v1081 = vpop.f32.mrf.mxu0
    %v1082 = vadd.f32 %v341, %v1081
    %v1083 = vpop.f32.mrf.mxu0
    %1084 = vdwg.mxu0
    %1085 = vmatpush.bf16.msra.mxu0 %v861
    %1086 = vmatpush.bf16.msra.mxu0 %v853
    %1087 = vmatpush.bf16.msra.mxu0 %v845
    %1088 = vmatpush.bf16.msra.mxu0 %v837
    %1089 = vmatpush.bf16.msra.mxu0 %v829
    %1090 = vmatpush.bf16.msra.mxu0 %v821
    %1091 = vmatpush.bf16.msra.mxu0 %v813
    %1092 = vmatpush.bf16.msra.mxu0 %v805
    %1093 = vmatmul.bf16.gmra.mxu0 %v207
    %v1094 = vpop.f32.mrf.mxu0
    %v1095 = vadd.f32 %v1082, %v1094
    %v1096 = vpop.f32.mrf.mxu0
    %1097 = vdwg.mxu0
    %1098 = vmatpush.bf16.msra.mxu0 %v798
    %1099 = vmatpush.bf16.msra.mxu0 %v790
    %1100 = vmatpush.bf16.msra.mxu0 %v782
    %1101 = vmatpush.bf16.msra.mxu0 %v774
    %1102 = vmatpush.bf16.msra.mxu0 %v766
    %1103 = vmatpush.bf16.msra.mxu0 %v758
    %1104 = vmatpush.bf16.msra.mxu0 %v750
    %1105 = vmatpush.bf16.msra.mxu0 %v742
    %1106 = vmatmul.bf16.gmra.mxu0 %v206
    %v1107 = vpop.f32.mrf.mxu0
    %v1108 = vadd.f32 %v342, %v1107
    %v1109 = vpop.f32.mrf.mxu0
    %1110 = vdwg.mxu0
    %1111 = vmatpush.bf16.msra.mxu0 %v862
    %1112 = vmatpush.bf16.msra.mxu0 %v854
    %1113 = vmatpush.bf16.msra.mxu0 %v846
    %1114 = vmatpush.bf16.msra.mxu0 %v838
    %1115 = vmatpush.bf16.msra.mxu0 %v830
    %1116 = vmatpush.bf16.msra.mxu0 %v822
    %1117 = vmatpush.bf16.msra.mxu0 %v814
    %1118 = vmatpush.bf16.msra.mxu0 %v806
    %1119 = vmatmul.bf16.gmra.mxu0 %v207
    %v1120 = vpop.f32.mrf.mxu0
    %v1121 = vadd.f32 %v1108, %v1120
    %v1122 = vpop.f32.mrf.mxu0
    %1123 = vdwg.mxu0
    %1124 = vmatpush.bf16.msra.mxu0 %v799
    %1125 = vmatpush.bf16.msra.mxu0 %v791
    %1126 = vmatpush.bf16.msra.mxu0 %v783
    %1127 = vmatpush.bf16.msra.mxu0 %v775
    %1128 = vmatpush.bf16.msra.mxu0 %v767
    %1129 = vmatpush.bf16.msra.mxu0 %v759
    %1130 = vmatpush.bf16.msra.mxu0 %v751
    %1131 = vmatpush.bf16.msra.mxu0 %v743
    %1132 = vmatmul.bf16.gmra.mxu0 %v206
    %v1133 = vpop.f32.mrf.mxu0
    %v1134 = vadd.f32 %v343, %v1133
    %v1135 = vpop.f32.mrf.mxu0
    %1136 = vdwg.mxu0
    %1137 = vmatpush.bf16.msra.mxu0 %v863
    %1138 = vmatpush.bf16.msra.mxu0 %v855
    %1139 = vmatpush.bf16.msra.mxu0 %v847
    %1140 = vmatpush.bf16.msra.mxu0 %v839
    %1141 = vmatpush.bf16.msra.mxu0 %v831
    %1142 = vmatpush.bf16.msra.mxu0 %v823
    %1143 = vmatpush.bf16.msra.mxu0 %v815
    %1144 = vmatpush.bf16.msra.mxu0 %v807
    %1145 = vmatmul.bf16.gmra.mxu0 %v207
    %v1146 = vpop.f32.mrf.mxu0
    %v1147 = vadd.f32 %v1134, %v1146
    %v1148 = vpop.f32.mrf.mxu0
    %1149 = vdwg.mxu0
    %1150 = vmatpush.bf16.msra.mxu0 %v800
    %1151 = vmatpush.bf16.msra.mxu0 %v792
    %1152 = vmatpush.bf16.msra.mxu0 %v784
    %1153 = vmatpush.bf16.msra.mxu0 %v776
    %1154 = vmatpush.bf16.msra.mxu0 %v768
    %1155 = vmatpush.bf16.msra.mxu0 %v760
    %1156 = vmatpush.bf16.msra.mxu0 %v752
    %1157 = vmatpush.bf16.msra.mxu0 %v744
    %1158 = vmatmul.bf16.gmra.mxu0 %v206
    %v1159 = vpop.f32.mrf.mxu0
    %v1160 = vadd.f32 %v344, %v1159
    %v1161 = vpop.f32.mrf.mxu0
    %1162 = vdwg.mxu0
    %1163 = vmatpush.bf16.msra.mxu0 %v864
    %1164 = vmatpush.bf16.msra.mxu0 %v856
    %1165 = vmatpush.bf16.msra.mxu0 %v848
    %1166 = vmatpush.bf16.msra.mxu0 %v840
    %1167 = vmatpush.bf16.msra.mxu0 %v832
    %1168 = vmatpush.bf16.msra.mxu0 %v824
    %1169 = vmatpush.bf16.msra.mxu0 %v816
    %1170 = vmatpush.bf16.msra.mxu0 %v808
    %1171 = vmatmul.bf16.gmra.mxu0 %v207
    %v1172 = vpop.f32.mrf.mxu0
    %v1173 = vadd.f32 %v1160, %v1172
    %v1174 = vpop.f32.mrf.mxu0
    %1175 = vdwg.mxu0
    %1176 = vmatpush.bf16.msra.mxu0 %v801
    %1177 = vmatpush.bf16.msra.mxu0 %v793
    %1178 = vmatpush.bf16.msra.mxu0 %v785
    %1179 = vmatpush.bf16.msra.mxu0 %v777
    %1180 = vmatpush.bf16.msra.mxu0 %v769
    %1181 = vmatpush.bf16.msra.mxu0 %v761
    %1182 = vmatpush.bf16.msra.mxu0 %v753
    %1183 = vmatpush.bf16.msra.mxu0 %v745
    %1184 = vmatmul.bf16.gmra.mxu0 %v206
    %v1185 = vpop.f32.mrf.mxu0
    %v1186 = vadd.f32 %v345, %v1185
    %v1187 = vpop.f32.mrf.mxu0
    %1188 = vdwg.mxu0
    %1189 = vmatpush.bf16.msra.mxu0 %v865
    %1190 = vmatpush.bf16.msra.mxu0 %v857
    %1191 = vmatpush.bf16.msra.mxu0 %v849
    %1192 = vmatpush.bf16.msra.mxu0 %v841
    %1193 = vmatpush.bf16.msra.mxu0 %v833
    %1194 = vmatpush.bf16.msra.mxu0 %v825
    %1195 = vmatpush.bf16.msra.mxu0 %v817
    %1196 = vmatpush.bf16.msra.mxu0 %v809
    %1197 = vmatmul.bf16.gmra.mxu0 %v207
    %v1198 = vpop.f32.mrf.mxu0
    %v1199 = vadd.f32 %v1186, %v1198
    %v1200 = vpop.f32.mrf.mxu0
    %1201 = vdwg.mxu0
    %1202 = vst [vmem:[#allocation4] sm:$0xff] %v1017
    %1203 = vst [vmem:[#allocation4 + $0x8] sm:$0xff] %v1043
    %1204 = vst [vmem:[#allocation4 + $0x10] sm:$0xff] %v1069
    %1205 = vst [vmem:[#allocation4 + $0x18] sm:$0xff] %v1095
    %1206 = vst [vmem:[#allocation4 + $0x20] sm:$0xff] %v1121
    %1207 = vst [vmem:[#allocation4 + $0x28] sm:$0xff] %v1147
    %1208 = vst [vmem:[#allocation4 + $0x30] sm:$0xff] %v1173
    %1209 = vst [vmem:[#allocation4 + $0x38] sm:$0xff] %v1199
    %v1210 = vld [vmem:[#allocation2] sm:$0x3]
    %v1211 = vld [vmem:[#allocation3] sm:$0x3]
    %v1212 = vld [vmem:[#allocation4] ss:$8 sm:$0xf]
    %v1213 = vld [vmem:[#allocation4] ss:$8 sm:$0xf0]
    %v1214 = vor.u32 %v1212, %v1213
    %v1216 = vperm.slane %v1210, 0
    %v1217 = vperm.slane %v1210, 1
    %v1220 = vpack.c.bf16 %v1216, %v1216
    %v1221 = vpack.c.bf16 %v1217, %v1217
    %v1222 = vld [vmem:[#allocation11] sm:$0xff]
    %v1223 = vld [vmem:[#allocation11 + $0x8] sm:$0xff]
    %v1224 = vld [vmem:[#allocation11 + $0x10] sm:$0xff]
    %v1225 = vld [vmem:[#allocation11 + $0x18] sm:$0xff]
    %v1226 = vld [vmem:[#allocation11 + $0x20] sm:$0xff]
    %v1227 = vld [vmem:[#allocation11 + $0x28] sm:$0xff]
    %v1228 = vld [vmem:[#allocation11 + $0x30] sm:$0xff]
    %v1229 = vld [vmem:[#allocation11 + $0x38] sm:$0xff]
    %v1230 = vld [vmem:[#allocation11 + $0x40] sm:$0xff]
    %v1231 = vld [vmem:[#allocation11 + $0x48] sm:$0xff]
    %v1232 = vld [vmem:[#allocation11 + $0x50] sm:$0xff]
    %v1233 = vld [vmem:[#allocation11 + $0x58] sm:$0xff]
    %v1234 = vld [vmem:[#allocation11 + $0x60] sm:$0xff]
    %v1235 = vld [vmem:[#allocation11 + $0x68] sm:$0xff]
    %v1236 = vld [vmem:[#allocation11 + $0x70] sm:$0xff]
    %v1237 = vld [vmem:[#allocation11 + $0x78] sm:$0xff]
    %v1238 = vld [vmem:[#allocation11 + $0x80] sm:$0xff]
    %v1239 = vld [vmem:[#allocation11 + $0x88] sm:$0xff]
    %v1240 = vld [vmem:[#allocation11 + $0x90] sm:$0xff]
    %v1241 = vld [vmem:[#allocation11 + $0x98] sm:$0xff]
    %v1242 = vld [vmem:[#allocation11 + $0xa0] sm:$0xff]
    %v1243 = vld [vmem:[#allocation11 + $0xa8] sm:$0xff]
    %v1244 = vld [vmem:[#allocation11 + $0xb0] sm:$0xff]
    %v1245 = vld [vmem:[#allocation11 + $0xb8] sm:$0xff]
    %v1246 = vld [vmem:[#allocation11 + $0xc0] sm:$0xff]
    %v1247 = vld [vmem:[#allocation11 + $0xc8] sm:$0xff]
    %v1248 = vld [vmem:[#allocation11 + $0xd0] sm:$0xff]
    %v1249 = vld [vmem:[#allocation11 + $0xd8] sm:$0xff]
    %v1250 = vld [vmem:[#allocation11 + $0xe0] sm:$0xff]
    %v1251 = vld [vmem:[#allocation11 + $0xe8] sm:$0xff]
    %v1252 = vld [vmem:[#allocation11 + $0xf0] sm:$0xff]
    %v1253 = vld [vmem:[#allocation11 + $0xf8] sm:$0xff]
    %v1254 = vld [vmem:[#allocation11 + $0x100] sm:$0xff]
    %v1255 = vld [vmem:[#allocation11 + $0x108] sm:$0xff]
    %v1256 = vld [vmem:[#allocation11 + $0x110] sm:$0xff]
    %v1257 = vld [vmem:[#allocation11 + $0x118] sm:$0xff]
    %v1258 = vld [vmem:[#allocation11 + $0x120] sm:$0xff]
    %v1259 = vld [vmem:[#allocation11 + $0x128] sm:$0xff]
    %v1260 = vld [vmem:[#allocation11 + $0x130] sm:$0xff]
    %v1261 = vld [vmem:[#allocation11 + $0x138] sm:$0xff]
    %v1262 = vld [vmem:[#allocation11 + $0x140] sm:$0xff]
    %v1263 = vld [vmem:[#allocation11 + $0x148] sm:$0xff]
    %v1264 = vld [vmem:[#allocation11 + $0x150] sm:$0xff]
    %v1265 = vld [vmem:[#allocation11 + $0x158] sm:$0xff]
    %v1266 = vld [vmem:[#allocation11 + $0x160] sm:$0xff]
    %v1267 = vld [vmem:[#allocation11 + $0x168] sm:$0xff]
    %v1268 = vld [vmem:[#allocation11 + $0x170] sm:$0xff]
    %v1269 = vld [vmem:[#allocation11 + $0x178] sm:$0xff]
    %v1270 = vld [vmem:[#allocation11 + $0x180] sm:$0xff]
    %v1271 = vld [vmem:[#allocation11 + $0x188] sm:$0xff]
    %v1272 = vld [vmem:[#allocation11 + $0x190] sm:$0xff]
    %v1273 = vld [vmem:[#allocation11 + $0x198] sm:$0xff]
    %v1274 = vld [vmem:[#allocation11 + $0x1a0] sm:$0xff]
    %v1275 = vld [vmem:[#allocation11 + $0x1a8] sm:$0xff]
    %v1276 = vld [vmem:[#allocation11 + $0x1b0] sm:$0xff]
    %v1277 = vld [vmem:[#allocation11 + $0x1b8] sm:$0xff]
    %v1278 = vld [vmem:[#allocation11 + $0x1c0] sm:$0xff]
    %v1279 = vld [vmem:[#allocation11 + $0x1c8] sm:$0xff]
    %v1280 = vld [vmem:[#allocation11 + $0x1d0] sm:$0xff]
    %v1281 = vld [vmem:[#allocation11 + $0x1d8] sm:$0xff]
    %v1282 = vld [vmem:[#allocation11 + $0x1e0] sm:$0xff]
    %v1283 = vld [vmem:[#allocation11 + $0x1e8] sm:$0xff]
    %v1284 = vld [vmem:[#allocation11 + $0x1f0] sm:$0xff]
    %v1285 = vld [vmem:[#allocation11 + $0x1f8] sm:$0xff]
    %v1286 = vld [vmem:[#allocation11 + $0x200] sm:$0xff]
    %v1287 = vld [vmem:[#allocation11 + $0x208] sm:$0xff]
    %v1288 = vld [vmem:[#allocation11 + $0x210] sm:$0xff]
    %v1289 = vld [vmem:[#allocation11 + $0x218] sm:$0xff]
    %v1290 = vld [vmem:[#allocation11 + $0x220] sm:$0xff]
    %v1291 = vld [vmem:[#allocation11 + $0x228] sm:$0xff]
    %v1292 = vld [vmem:[#allocation11 + $0x230] sm:$0xff]
    %v1293 = vld [vmem:[#allocation11 + $0x238] sm:$0xff]
    %v1294 = vld [vmem:[#allocation11 + $0x240] sm:$0xff]
    %v1295 = vld [vmem:[#allocation11 + $0x248] sm:$0xff]
    %v1296 = vld [vmem:[#allocation11 + $0x250] sm:$0xff]
    %v1297 = vld [vmem:[#allocation11 + $0x258] sm:$0xff]
    %v1298 = vld [vmem:[#allocation11 + $0x260] sm:$0xff]
    %v1299 = vld [vmem:[#allocation11 + $0x268] sm:$0xff]
    %v1300 = vld [vmem:[#allocation11 + $0x270] sm:$0xff]
    %v1301 = vld [vmem:[#allocation11 + $0x278] sm:$0xff]
    %v1302 = vld [vmem:[#allocation11 + $0x280] sm:$0xff]
    %v1303 = vld [vmem:[#allocation11 + $0x288] sm:$0xff]
    %v1304 = vld [vmem:[#allocation11 + $0x290] sm:$0xff]
    %v1305 = vld [vmem:[#allocation11 + $0x298] sm:$0xff]
    %v1306 = vld [vmem:[#allocation11 + $0x2a0] sm:$0xff]
    %v1307 = vld [vmem:[#allocation11 + $0x2a8] sm:$0xff]
    %v1308 = vld [vmem:[#allocation11 + $0x2b0] sm:$0xff]
    %v1309 = vld [vmem:[#allocation11 + $0x2b8] sm:$0xff]
    %v1310 = vld [vmem:[#allocation11 + $0x2c0] sm:$0xff]
    %v1311 = vld [vmem:[#allocation11 + $0x2c8] sm:$0xff]
    %v1312 = vld [vmem:[#allocation11 + $0x2d0] sm:$0xff]
    %v1313 = vld [vmem:[#allocation11 + $0x2d8] sm:$0xff]
    %v1314 = vld [vmem:[#allocation11 + $0x2e0] sm:$0xff]
    %v1315 = vld [vmem:[#allocation11 + $0x2e8] sm:$0xff]
    %v1316 = vld [vmem:[#allocation11 + $0x2f0] sm:$0xff]
    %v1317 = vld [vmem:[#allocation11 + $0x2f8] sm:$0xff]
    %v1318 = vld [vmem:[#allocation11 + $0x300] sm:$0xff]
    %v1319 = vld [vmem:[#allocation11 + $0x308] sm:$0xff]
    %v1320 = vld [vmem:[#allocation11 + $0x310] sm:$0xff]
    %v1321 = vld [vmem:[#allocation11 + $0x318] sm:$0xff]
    %v1322 = vld [vmem:[#allocation11 + $0x320] sm:$0xff]
    %v1323 = vld [vmem:[#allocation11 + $0x328] sm:$0xff]
    %v1324 = vld [vmem:[#allocation11 + $0x330] sm:$0xff]
    %v1325 = vld [vmem:[#allocation11 + $0x338] sm:$0xff]
    %v1326 = vld [vmem:[#allocation11 + $0x340] sm:$0xff]
    %v1327 = vld [vmem:[#allocation11 + $0x348] sm:$0xff]
    %v1328 = vld [vmem:[#allocation11 + $0x350] sm:$0xff]
    %v1329 = vld [vmem:[#allocation11 + $0x358] sm:$0xff]
    %v1330 = vld [vmem:[#allocation11 + $0x360] sm:$0xff]
    %v1331 = vld [vmem:[#allocation11 + $0x368] sm:$0xff]
    %v1332 = vld [vmem:[#allocation11 + $0x370] sm:$0xff]
    %v1333 = vld [vmem:[#allocation11 + $0x378] sm:$0xff]
    %v1334 = vld [vmem:[#allocation11 + $0x380] sm:$0xff]
    %v1335 = vld [vmem:[#allocation11 + $0x388] sm:$0xff]
    %v1336 = vld [vmem:[#allocation11 + $0x390] sm:$0xff]
    %v1337 = vld [vmem:[#allocation11 + $0x398] sm:$0xff]
    %v1338 = vld [vmem:[#allocation11 + $0x3a0] sm:$0xff]
    %v1339 = vld [vmem:[#allocation11 + $0x3a8] sm:$0xff]
    %v1340 = vld [vmem:[#allocation11 + $0x3b0] sm:$0xff]
    %v1341 = vld [vmem:[#allocation11 + $0x3b8] sm:$0xff]
    %v1342 = vld [vmem:[#allocation11 + $0x3c0] sm:$0xff]
    %v1343 = vld [vmem:[#allocation11 + $0x3c8] sm:$0xff]
    %v1344 = vld [vmem:[#allocation11 + $0x3d0] sm:$0xff]
    %v1345 = vld [vmem:[#allocation11 + $0x3d8] sm:$0xff]
    %v1346 = vld [vmem:[#allocation11 + $0x3e0] sm:$0xff]
    %v1347 = vld [vmem:[#allocation11 + $0x3e8] sm:$0xff]
    %v1348 = vld [vmem:[#allocation11 + $0x3f0] sm:$0xff]
    %v1349 = vld [vmem:[#allocation11 + $0x3f8] sm:$0xff]
    %v1478 = vunpack.c.l.b16 %v1222
    %v1479 = vunpack.c.h.b16 %v1222
    %v1480 = vunpack.c.l.b16 %v1223
    %v1481 = vunpack.c.h.b16 %v1223
    %v1482 = vunpack.c.l.b16 %v1224
    %v1483 = vunpack.c.h.b16 %v1224
    %v1484 = vunpack.c.l.b16 %v1225
    %v1485 = vunpack.c.h.b16 %v1225
    %v1486 = vunpack.c.l.b16 %v1226
    %v1487 = vunpack.c.h.b16 %v1226
    %v1488 = vunpack.c.l.b16 %v1227
    %v1489 = vunpack.c.h.b16 %v1227
    %v1490 = vunpack.c.l.b16 %v1228
    %v1491 = vunpack.c.h.b16 %v1228
    %v1492 = vunpack.c.l.b16 %v1229
    %v1493 = vunpack.c.h.b16 %v1229
    %v1494 = vunpack.c.l.b16 %v1230
    %v1495 = vunpack.c.h.b16 %v1230
    %v1496 = vunpack.c.l.b16 %v1231
    %v1497 = vunpack.c.h.b16 %v1231
    %v1498 = vunpack.c.l.b16 %v1232
    %v1499 = vunpack.c.h.b16 %v1232
    %v1500 = vunpack.c.l.b16 %v1233
    %v1501 = vunpack.c.h.b16 %v1233
    %v1502 = vunpack.c.l.b16 %v1234
    %v1503 = vunpack.c.h.b16 %v1234
    %v1504 = vunpack.c.l.b16 %v1235
    %v1505 = vunpack.c.h.b16 %v1235
    %v1506 = vunpack.c.l.b16 %v1236
    %v1507 = vunpack.c.h.b16 %v1236
    %v1508 = vunpack.c.l.b16 %v1237
    %v1509 = vunpack.c.h.b16 %v1237
    %v1510 = vunpack.c.l.b16 %v1238
    %v1511 = vunpack.c.h.b16 %v1238
    %v1512 = vunpack.c.l.b16 %v1239
    %v1513 = vunpack.c.h.b16 %v1239
    %v1514 = vunpack.c.l.b16 %v1240
    %v1515 = vunpack.c.h.b16 %v1240
    %v1516 = vunpack.c.l.b16 %v1241
    %v1517 = vunpack.c.h.b16 %v1241
    %v1518 = vunpack.c.l.b16 %v1242
    %v1519 = vunpack.c.h.b16 %v1242
    %v1520 = vunpack.c.l.b16 %v1243
    %v1521 = vunpack.c.h.b16 %v1243
    %v1522 = vunpack.c.l.b16 %v1244
    %v1523 = vunpack.c.h.b16 %v1244
    %v1524 = vunpack.c.l.b16 %v1245
    %v1525 = vunpack.c.h.b16 %v1245
    %v1526 = vunpack.c.l.b16 %v1246
    %v1527 = vunpack.c.h.b16 %v1246
    %v1528 = vunpack.c.l.b16 %v1247
    %v1529 = vunpack.c.h.b16 %v1247
    %v1530 = vunpack.c.l.b16 %v1248
    %v1531 = vunpack.c.h.b16 %v1248
    %v1532 = vunpack.c.l.b16 %v1249
    %v1533 = vunpack.c.h.b16 %v1249
    %v1534 = vunpack.c.l.b16 %v1250
    %v1535 = vunpack.c.h.b16 %v1250
    %v1536 = vunpack.c.l.b16 %v1251
    %v1537 = vunpack.c.h.b16 %v1251
    %v1538 = vunpack.c.l.b16 %v1252
    %v1539 = vunpack.c.h.b16 %v1252
    %v1540 = vunpack.c.l.b16 %v1253
    %v1541 = vunpack.c.h.b16 %v1253
    %v1542 = vunpack.c.l.b16 %v1254
    %v1543 = vunpack.c.h.b16 %v1254
    %v1544 = vunpack.c.l.b16 %v1255
    %v1545 = vunpack.c.h.b16 %v1255
    %v1546 = vunpack.c.l.b16 %v1256
    %v1547 = vunpack.c.h.b16 %v1256
    %v1548 = vunpack.c.l.b16 %v1257
    %v1549 = vunpack.c.h.b16 %v1257
    %v1550 = vunpack.c.l.b16 %v1258
    %v1551 = vunpack.c.h.b16 %v1258
    %v1552 = vunpack.c.l.b16 %v1259
    %v1553 = vunpack.c.h.b16 %v1259
    %v1554 = vunpack.c.l.b16 %v1260
    %v1555 = vunpack.c.h.b16 %v1260
    %v1556 = vunpack.c.l.b16 %v1261
    %v1557 = vunpack.c.h.b16 %v1261
    %v1558 = vunpack.c.l.b16 %v1262
    %v1559 = vunpack.c.h.b16 %v1262
    %v1560 = vunpack.c.l.b16 %v1263
    %v1561 = vunpack.c.h.b16 %v1263
    %v1562 = vunpack.c.l.b16 %v1264
    %v1563 = vunpack.c.h.b16 %v1264
    %v1564 = vunpack.c.l.b16 %v1265
    %v1565 = vunpack.c.h.b16 %v1265
    %v1566 = vunpack.c.l.b16 %v1266
    %v1567 = vunpack.c.h.b16 %v1266
    %v1568 = vunpack.c.l.b16 %v1267
    %v1569 = vunpack.c.h.b16 %v1267
    %v1570 = vunpack.c.l.b16 %v1268
    %v1571 = vunpack.c.h.b16 %v1268
    %v1572 = vunpack.c.l.b16 %v1269
    %v1573 = vunpack.c.h.b16 %v1269
    %v1574 = vunpack.c.l.b16 %v1270
    %v1575 = vunpack.c.h.b16 %v1270
    %v1576 = vunpack.c.l.b16 %v1271
    %v1577 = vunpack.c.h.b16 %v1271
    %v1578 = vunpack.c.l.b16 %v1272
    %v1579 = vunpack.c.h.b16 %v1272
    %v1580 = vunpack.c.l.b16 %v1273
    %v1581 = vunpack.c.h.b16 %v1273
    %v1582 = vunpack.c.l.b16 %v1274
    %v1583 = vunpack.c.h.b16 %v1274
    %v1584 = vunpack.c.l.b16 %v1275
    %v1585 = vunpack.c.h.b16 %v1275
    %v1586 = vunpack.c.l.b16 %v1276
    %v1587 = vunpack.c.h.b16 %v1276
    %v1588 = vunpack.c.l.b16 %v1277
    %v1589 = vunpack.c.h.b16 %v1277
    %v1590 = vunpack.c.l.b16 %v1278
    %v1591 = vunpack.c.h.b16 %v1278
    %v1592 = vunpack.c.l.b16 %v1279
    %v1593 = vunpack.c.h.b16 %v1279
    %v1594 = vunpack.c.l.b16 %v1280
    %v1595 = vunpack.c.h.b16 %v1280
    %v1596 = vunpack.c.l.b16 %v1281
    %v1597 = vunpack.c.h.b16 %v1281
    %v1598 = vunpack.c.l.b16 %v1282
    %v1599 = vunpack.c.h.b16 %v1282
    %v1600 = vunpack.c.l.b16 %v1283
    %v1601 = vunpack.c.h.b16 %v1283
    %v1602 = vunpack.c.l.b16 %v1284
    %v1603 = vunpack.c.h.b16 %v1284
    %v1604 = vunpack.c.l.b16 %v1285
    %v1605 = vunpack.c.h.b16 %v1285
    %v1606 = vunpack.c.l.b16 %v1286
    %v1607 = vunpack.c.h.b16 %v1286
    %v1608 = vunpack.c.l.b16 %v1287
    %v1609 = vunpack.c.h.b16 %v1287
    %v1610 = vunpack.c.l.b16 %v1288
    %v1611 = vunpack.c.h.b16 %v1288
    %v1612 = vunpack.c.l.b16 %v1289
    %v1613 = vunpack.c.h.b16 %v1289
    %v1614 = vunpack.c.l.b16 %v1290
    %v1615 = vunpack.c.h.b16 %v1290
    %v1616 = vunpack.c.l.b16 %v1291
    %v1617 = vunpack.c.h.b16 %v1291
    %v1618 = vunpack.c.l.b16 %v1292
    %v1619 = vunpack.c.h.b16 %v1292
    %v1620 = vunpack.c.l.b16 %v1293
    %v1621 = vunpack.c.h.b16 %v1293
    %v1622 = vunpack.c.l.b16 %v1294
    %v1623 = vunpack.c.h.b16 %v1294
    %v1624 = vunpack.c.l.b16 %v1295
    %v1625 = vunpack.c.h.b16 %v1295
    %v1626 = vunpack.c.l.b16 %v1296
    %v1627 = vunpack.c.h.b16 %v1296
    %v1628 = vunpack.c.l.b16 %v1297
    %v1629 = vunpack.c.h.b16 %v1297
    %v1630 = vunpack.c.l.b16 %v1298
    %v1631 = vunpack.c.h.b16 %v1298
    %v1632 = vunpack.c.l.b16 %v1299
    %v1633 = vunpack.c.h.b16 %v1299
    %v1634 = vunpack.c.l.b16 %v1300
    %v1635 = vunpack.c.h.b16 %v1300
    %v1636 = vunpack.c.l.b16 %v1301
    %v1637 = vunpack.c.h.b16 %v1301
    %v1638 = vunpack.c.l.b16 %v1302
    %v1639 = vunpack.c.h.b16 %v1302
    %v1640 = vunpack.c.l.b16 %v1303
    %v1641 = vunpack.c.h.b16 %v1303
    %v1642 = vunpack.c.l.b16 %v1304
    %v1643 = vunpack.c.h.b16 %v1304
    %v1644 = vunpack.c.l.b16 %v1305
    %v1645 = vunpack.c.h.b16 %v1305
    %v1646 = vunpack.c.l.b16 %v1306
    %v1647 = vunpack.c.h.b16 %v1306
    %v1648 = vunpack.c.l.b16 %v1307
    %v1649 = vunpack.c.h.b16 %v1307
    %v1650 = vunpack.c.l.b16 %v1308
    %v1651 = vunpack.c.h.b16 %v1308
    %v1652 = vunpack.c.l.b16 %v1309
    %v1653 = vunpack.c.h.b16 %v1309
    %v1654 = vunpack.c.l.b16 %v1310
    %v1655 = vunpack.c.h.b16 %v1310
    %v1656 = vunpack.c.l.b16 %v1311
    %v1657 = vunpack.c.h.b16 %v1311
    %v1658 = vunpack.c.l.b16 %v1312
    %v1659 = vunpack.c.h.b16 %v1312
    %v1660 = vunpack.c.l.b16 %v1313
    %v1661 = vunpack.c.h.b16 %v1313
    %v1662 = vunpack.c.l.b16 %v1314
    %v1663 = vunpack.c.h.b16 %v1314
    %v1664 = vunpack.c.l.b16 %v1315
    %v1665 = vunpack.c.h.b16 %v1315
    %v1666 = vunpack.c.l.b16 %v1316
    %v1667 = vunpack.c.h.b16 %v1316
    %v1668 = vunpack.c.l.b16 %v1317
    %v1669 = vunpack.c.h.b16 %v1317
    %v1670 = vunpack.c.l.b16 %v1318
    %v1671 = vunpack.c.h.b16 %v1318
    %v1672 = vunpack.c.l.b16 %v1319
    %v1673 = vunpack.c.h.b16 %v1319
    %v1674 = vunpack.c.l.b16 %v1320
    %v1675 = vunpack.c.h.b16 %v1320
    %v1676 = vunpack.c.l.b16 %v1321
    %v1677 = vunpack.c.h.b16 %v1321
    %v1678 = vunpack.c.l.b16 %v1322
    %v1679 = vunpack.c.h.b16 %v1322
    %v1680 = vunpack.c.l.b16 %v1323
    %v1681 = vunpack.c.h.b16 %v1323
    %v1682 = vunpack.c.l.b16 %v1324
    %v1683 = vunpack.c.h.b16 %v1324
    %v1684 = vunpack.c.l.b16 %v1325
    %v1685 = vunpack.c.h.b16 %v1325
    %v1686 = vunpack.c.l.b16 %v1326
    %v1687 = vunpack.c.h.b16 %v1326
    %v1688 = vunpack.c.l.b16 %v1327
    %v1689 = vunpack.c.h.b16 %v1327
    %v1690 = vunpack.c.l.b16 %v1328
    %v1691 = vunpack.c.h.b16 %v1328
    %v1692 = vunpack.c.l.b16 %v1329
    %v1693 = vunpack.c.h.b16 %v1329
    %v1694 = vunpack.c.l.b16 %v1330
    %v1695 = vunpack.c.h.b16 %v1330
    %v1696 = vunpack.c.l.b16 %v1331
    %v1697 = vunpack.c.h.b16 %v1331
    %v1698 = vunpack.c.l.b16 %v1332
    %v1699 = vunpack.c.h.b16 %v1332
    %v1700 = vunpack.c.l.b16 %v1333
    %v1701 = vunpack.c.h.b16 %v1333
    %v1702 = vunpack.c.l.b16 %v1334
    %v1703 = vunpack.c.h.b16 %v1334
    %v1704 = vunpack.c.l.b16 %v1335
    %v1705 = vunpack.c.h.b16 %v1335
    %v1706 = vunpack.c.l.b16 %v1336
    %v1707 = vunpack.c.h.b16 %v1336
    %v1708 = vunpack.c.l.b16 %v1337
    %v1709 = vunpack.c.h.b16 %v1337
    %v1710 = vunpack.c.l.b16 %v1338
    %v1711 = vunpack.c.h.b16 %v1338
    %v1712 = vunpack.c.l.b16 %v1339
    %v1713 = vunpack.c.h.b16 %v1339
    %v1714 = vunpack.c.l.b16 %v1340
    %v1715 = vunpack.c.h.b16 %v1340
    %v1716 = vunpack.c.l.b16 %v1341
    %v1717 = vunpack.c.h.b16 %v1341
    %v1718 = vunpack.c.l.b16 %v1342
    %v1719 = vunpack.c.h.b16 %v1342
    %v1720 = vunpack.c.l.b16 %v1343
    %v1721 = vunpack.c.h.b16 %v1343
    %v1722 = vunpack.c.l.b16 %v1344
    %v1723 = vunpack.c.h.b16 %v1344
    %v1724 = vunpack.c.l.b16 %v1345
    %v1725 = vunpack.c.h.b16 %v1345
    %v1726 = vunpack.c.l.b16 %v1346
    %v1727 = vunpack.c.h.b16 %v1346
    %v1728 = vunpack.c.l.b16 %v1347
    %v1729 = vunpack.c.h.b16 %v1347
    %v1730 = vunpack.c.l.b16 %v1348
    %v1731 = vunpack.c.h.b16 %v1348
    %v1732 = vunpack.c.l.b16 %v1349
    %v1733 = vunpack.c.h.b16 %v1349
    %v1734 = vpack.c.b16 %v1486, %v1478
    %v1735 = vpack.c.b16 %v1487, %v1479
    %v1736 = vpack.c.b16 %v1488, %v1480
    %v1737 = vpack.c.b16 %v1489, %v1481
    %v1738 = vpack.c.b16 %v1490, %v1482
    %v1739 = vpack.c.b16 %v1491, %v1483
    %v1740 = vpack.c.b16 %v1492, %v1484
    %v1741 = vpack.c.b16 %v1493, %v1485
    %v1742 = vpack.c.b16 %v1502, %v1494
    %v1743 = vpack.c.b16 %v1503, %v1495
    %v1744 = vpack.c.b16 %v1504, %v1496
    %v1745 = vpack.c.b16 %v1505, %v1497
    %v1746 = vpack.c.b16 %v1506, %v1498
    %v1747 = vpack.c.b16 %v1507, %v1499
    %v1748 = vpack.c.b16 %v1508, %v1500
    %v1749 = vpack.c.b16 %v1509, %v1501
    %v1750 = vpack.c.b16 %v1518, %v1510
    %v1751 = vpack.c.b16 %v1519, %v1511
    %v1752 = vpack.c.b16 %v1520, %v1512
    %v1753 = vpack.c.b16 %v1521, %v1513
    %v1754 = vpack.c.b16 %v1522, %v1514
    %v1755 = vpack.c.b16 %v1523, %v1515
    %v1756 = vpack.c.b16 %v1524, %v1516
    %v1757 = vpack.c.b16 %v1525, %v1517
    %v1758 = vpack.c.b16 %v1534, %v1526
    %v1759 = vpack.c.b16 %v1535, %v1527
    %v1760 = vpack.c.b16 %v1536, %v1528
    %v1761 = vpack.c.b16 %v1537, %v1529
    %v1762 = vpack.c.b16 %v1538, %v1530
    %v1763 = vpack.c.b16 %v1539, %v1531
    %v1764 = vpack.c.b16 %v1540, %v1532
    %v1765 = vpack.c.b16 %v1541, %v1533
    %v1766 = vpack.c.b16 %v1550, %v1542
    %v1767 = vpack.c.b16 %v1551, %v1543
    %v1768 = vpack.c.b16 %v1552, %v1544
    %v1769 = vpack.c.b16 %v1553, %v1545
    %v1770 = vpack.c.b16 %v1554, %v1546
    %v1771 = vpack.c.b16 %v1555, %v1547
    %v1772 = vpack.c.b16 %v1556, %v1548
    %v1773 = vpack.c.b16 %v1557, %v1549
    %v1774 = vpack.c.b16 %v1566, %v1558
    %v1775 = vpack.c.b16 %v1567, %v1559
    %v1776 = vpack.c.b16 %v1568, %v1560
    %v1777 = vpack.c.b16 %v1569, %v1561
    %v1778 = vpack.c.b16 %v1570, %v1562
    %v1779 = vpack.c.b16 %v1571, %v1563
    %v1780 = vpack.c.b16 %v1572, %v1564
    %v1781 = vpack.c.b16 %v1573, %v1565
    %v1782 = vpack.c.b16 %v1582, %v1574
    %v1783 = vpack.c.b16 %v1583, %v1575
    %v1784 = vpack.c.b16 %v1584, %v1576
    %v1785 = vpack.c.b16 %v1585, %v1577
    %v1786 = vpack.c.b16 %v1586, %v1578
    %v1787 = vpack.c.b16 %v1587, %v1579
    %v1788 = vpack.c.b16 %v1588, %v1580
    %v1789 = vpack.c.b16 %v1589, %v1581
    %v1790 = vpack.c.b16 %v1598, %v1590
    %v1791 = vpack.c.b16 %v1599, %v1591
    %v1792 = vpack.c.b16 %v1600, %v1592
    %v1793 = vpack.c.b16 %v1601, %v1593
    %v1794 = vpack.c.b16 %v1602, %v1594
    %v1795 = vpack.c.b16 %v1603, %v1595
    %v1796 = vpack.c.b16 %v1604, %v1596
    %v1797 = vpack.c.b16 %v1605, %v1597
    %v1798 = vpack.c.b16 %v1614, %v1606
    %v1799 = vpack.c.b16 %v1615, %v1607
    %v1800 = vpack.c.b16 %v1616, %v1608
    %v1801 = vpack.c.b16 %v1617, %v1609
    %v1802 = vpack.c.b16 %v1618, %v1610
    %v1803 = vpack.c.b16 %v1619, %v1611
    %v1804 = vpack.c.b16 %v1620, %v1612
    %v1805 = vpack.c.b16 %v1621, %v1613
    %v1806 = vpack.c.b16 %v1630, %v1622
    %v1807 = vpack.c.b16 %v1631, %v1623
    %v1808 = vpack.c.b16 %v1632, %v1624
    %v1809 = vpack.c.b16 %v1633, %v1625
    %v1810 = vpack.c.b16 %v1634, %v1626
    %v1811 = vpack.c.b16 %v1635, %v1627
    %v1812 = vpack.c.b16 %v1636, %v1628
    %v1813 = vpack.c.b16 %v1637, %v1629
    %v1814 = vpack.c.b16 %v1646, %v1638
    %v1815 = vpack.c.b16 %v1647, %v1639
    %v1816 = vpack.c.b16 %v1648, %v1640
    %v1817 = vpack.c.b16 %v1649, %v1641
    %v1818 = vpack.c.b16 %v1650, %v1642
    %v1819 = vpack.c.b16 %v1651, %v1643
    %v1820 = vpack.c.b16 %v1652, %v1644
    %v1821 = vpack.c.b16 %v1653, %v1645
    %v1822 = vpack.c.b16 %v1662, %v1654
    %v1823 = vpack.c.b16 %v1663, %v1655
    %v1824 = vpack.c.b16 %v1664, %v1656
    %v1825 = vpack.c.b16 %v1665, %v1657
    %v1826 = vpack.c.b16 %v1666, %v1658
    %v1827 = vpack.c.b16 %v1667, %v1659
    %v1828 = vpack.c.b16 %v1668, %v1660
    %v1829 = vpack.c.b16 %v1669, %v1661
    %v1830 = vpack.c.b16 %v1678, %v1670
    %v1831 = vpack.c.b16 %v1679, %v1671
    %v1832 = vpack.c.b16 %v1680, %v1672
    %v1833 = vpack.c.b16 %v1681, %v1673
    %v1834 = vpack.c.b16 %v1682, %v1674
    %v1835 = vpack.c.b16 %v1683, %v1675
    %v1836 = vpack.c.b16 %v1684, %v1676
    %v1837 = vpack.c.b16 %v1685, %v1677
    %v1838 = vpack.c.b16 %v1694, %v1686
    %v1839 = vpack.c.b16 %v1695, %v1687
    %v1840 = vpack.c.b16 %v1696, %v1688
    %v1841 = vpack.c.b16 %v1697, %v1689
    %v1842 = vpack.c.b16 %v1698, %v1690
    %v1843 = vpack.c.b16 %v1699, %v1691
    %v1844 = vpack.c.b16 %v1700, %v1692
    %v1845 = vpack.c.b16 %v1701, %v1693
    %v1846 = vpack.c.b16 %v1710, %v1702
    %v1847 = vpack.c.b16 %v1711, %v1703
    %v1848 = vpack.c.b16 %v1712, %v1704
    %v1849 = vpack.c.b16 %v1713, %v1705
    %v1850 = vpack.c.b16 %v1714, %v1706
    %v1851 = vpack.c.b16 %v1715, %v1707
    %v1852 = vpack.c.b16 %v1716, %v1708
    %v1853 = vpack.c.b16 %v1717, %v1709
    %v1854 = vpack.c.b16 %v1726, %v1718
    %v1855 = vpack.c.b16 %v1727, %v1719
    %v1856 = vpack.c.b16 %v1728, %v1720
    %v1857 = vpack.c.b16 %v1729, %v1721
    %v1858 = vpack.c.b16 %v1730, %v1722
    %v1859 = vpack.c.b16 %v1731, %v1723
    %v1860 = vpack.c.b16 %v1732, %v1724
    %v1861 = vpack.c.b16 %v1733, %v1725
    %1990 = vmatpush.bf16.msra.mxu0 %v1790
    %1991 = vmatpush.bf16.msra.mxu0 %v1782
    %1992 = vmatpush.bf16.msra.mxu0 %v1774
    %1993 = vmatpush.bf16.msra.mxu0 %v1766
    %1994 = vmatpush.bf16.msra.mxu0 %v1758
    %1995 = vmatpush.bf16.msra.mxu0 %v1750
    %1996 = vmatpush.bf16.msra.mxu0 %v1742
    %1997 = vmatpush.bf16.msra.mxu0 %v1734
    %1998 = vmatmul.bf16.gmra.mxu0 %v1220
    %v1999 = vpop.f32.mrf.mxu0
    %v2000 = vadd.f32 0.0, %v1999
    %v2001 = vpop.f32.mrf.mxu0
    %2002 = vdwg.mxu0
    %2003 = vmatpush.bf16.msra.mxu0 %v1854
    %2004 = vmatpush.bf16.msra.mxu0 %v1846
    %2005 = vmatpush.bf16.msra.mxu0 %v1838
    %2006 = vmatpush.bf16.msra.mxu0 %v1830
    %2007 = vmatpush.bf16.msra.mxu0 %v1822
    %2008 = vmatpush.bf16.msra.mxu0 %v1814
    %2009 = vmatpush.bf16.msra.mxu0 %v1806
    %2010 = vmatpush.bf16.msra.mxu0 %v1798
    %2011 = vmatmul.bf16.gmra.mxu0 %v1221
    %v2012 = vpop.f32.mrf.mxu0
    %v2013 = vadd.f32 %v2000, %v2012
    %v2014 = vpop.f32.mrf.mxu0
    %2015 = vdwg.mxu0
    %2016 = vmatpush.bf16.msra.mxu0 %v1791
    %2017 = vmatpush.bf16.msra.mxu0 %v1783
    %2018 = vmatpush.bf16.msra.mxu0 %v1775
    %2019 = vmatpush.bf16.msra.mxu0 %v1767
    %2020 = vmatpush.bf16.msra.mxu0 %v1759
    %2021 = vmatpush.bf16.msra.mxu0 %v1751
    %2022 = vmatpush.bf16.msra.mxu0 %v1743
    %2023 = vmatpush.bf16.msra.mxu0 %v1735
    %2024 = vmatmul.bf16.gmra.mxu0 %v1220
    %v2025 = vpop.f32.mrf.mxu0
    %v2026 = vadd.f32 0.0, %v2025
    %v2027 = vpop.f32.mrf.mxu0
    %2028 = vdwg.mxu0
    %2029 = vmatpush.bf16.msra.mxu0 %v1855
    %2030 = vmatpush.bf16.msra.mxu0 %v1847
    %2031 = vmatpush.bf16.msra.mxu0 %v1839
    %2032 = vmatpush.bf16.msra.mxu0 %v1831
    %2033 = vmatpush.bf16.msra.mxu0 %v1823
    %2034 = vmatpush.bf16.msra.mxu0 %v1815
    %2035 = vmatpush.bf16.msra.mxu0 %v1807
    %2036 = vmatpush.bf16.msra.mxu0 %v1799
    %2037 = vmatmul.bf16.gmra.mxu0 %v1221
    %v2038 = vpop.f32.mrf.mxu0
    %v2039 = vadd.f32 %v2026, %v2038
    %v2040 = vpop.f32.mrf.mxu0
    %2041 = vdwg.mxu0
    %2042 = vmatpush.bf16.msra.mxu0 %v1792
    %2043 = vmatpush.bf16.msra.mxu0 %v1784
    %2044 = vmatpush.bf16.msra.mxu0 %v1776
    %2045 = vmatpush.bf16.msra.mxu0 %v1768
    %2046 = vmatpush.bf16.msra.mxu0 %v1760
    %2047 = vmatpush.bf16.msra.mxu0 %v1752
    %2048 = vmatpush.bf16.msra.mxu0 %v1744
    %2049 = vmatpush.bf16.msra.mxu0 %v1736
    %2050 = vmatmul.bf16.gmra.mxu0 %v1220
    %v2051 = vpop.f32.mrf.mxu0
    %v2052 = vadd.f32 0.0, %v2051
    %v2053 = vpop.f32.mrf.mxu0
    %2054 = vdwg.mxu0
    %2055 = vmatpush.bf16.msra.mxu0 %v1856
    %2056 = vmatpush.bf16.msra.mxu0 %v1848
    %2057 = vmatpush.bf16.msra.mxu0 %v1840
    %2058 = vmatpush.bf16.msra.mxu0 %v1832
    %2059 = vmatpush.bf16.msra.mxu0 %v1824
    %2060 = vmatpush.bf16.msra.mxu0 %v1816
    %2061 = vmatpush.bf16.msra.mxu0 %v1808
    %2062 = vmatpush.bf16.msra.mxu0 %v1800
    %2063 = vmatmul.bf16.gmra.mxu0 %v1221
    %v2064 = vpop.f32.mrf.mxu0
    %v2065 = vadd.f32 %v2052, %v2064
    %v2066 = vpop.f32.mrf.mxu0
    %2067 = vdwg.mxu0
    %2068 = vmatpush.bf16.msra.mxu0 %v1793
    %2069 = vmatpush.bf16.msra.mxu0 %v1785
    %2070 = vmatpush.bf16.msra.mxu0 %v1777
    %2071 = vmatpush.bf16.msra.mxu0 %v1769
    %2072 = vmatpush.bf16.msra.mxu0 %v1761
    %2073 = vmatpush.bf16.msra.mxu0 %v1753
    %2074 = vmatpush.bf16.msra.mxu0 %v1745
    %2075 = vmatpush.bf16.msra.mxu0 %v1737
    %2076 = vmatmul.bf16.gmra.mxu0 %v1220
    %v2077 = vpop.f32.mrf.mxu0
    %v2078 = vadd.f32 0.0, %v2077
    %v2079 = vpop.f32.mrf.mxu0
    %2080 = vdwg.mxu0
    %2081 = vmatpush.bf16.msra.mxu0 %v1857
    %2082 = vmatpush.bf16.msra.mxu0 %v1849
    %2083 = vmatpush.bf16.msra.mxu0 %v1841
    %2084 = vmatpush.bf16.msra.mxu0 %v1833
    %2085 = vmatpush.bf16.msra.mxu0 %v1825
    %2086 = vmatpush.bf16.msra.mxu0 %v1817
    %2087 = vmatpush.bf16.msra.mxu0 %v1809
    %2088 = vmatpush.bf16.msra.mxu0 %v1801
    %2089 = vmatmul.bf16.gmra.mxu0 %v1221
    %v2090 = vpop.f32.mrf.mxu0
    %v2091 = vadd.f32 %v2078, %v2090
    %v2092 = vpop.f32.mrf.mxu0
    %2093 = vdwg.mxu0
    %2094 = vmatpush.bf16.msra.mxu0 %v1794
    %2095 = vmatpush.bf16.msra.mxu0 %v1786
    %2096 = vmatpush.bf16.msra.mxu0 %v1778
    %2097 = vmatpush.bf16.msra.mxu0 %v1770
    %2098 = vmatpush.bf16.msra.mxu0 %v1762
    %2099 = vmatpush.bf16.msra.mxu0 %v1754
    %2100 = vmatpush.bf16.msra.mxu0 %v1746
    %2101 = vmatpush.bf16.msra.mxu0 %v1738
    %2102 = vmatmul.bf16.gmra.mxu0 %v1220
    %v2103 = vpop.f32.mrf.mxu0
    %v2104 = vadd.f32 0.0, %v2103
    %v2105 = vpop.f32.mrf.mxu0
    %2106 = vdwg.mxu0
    %2107 = vmatpush.bf16.msra.mxu0 %v1858
    %2108 = vmatpush.bf16.msra.mxu0 %v1850
    %2109 = vmatpush.bf16.msra.mxu0 %v1842
    %2110 = vmatpush.bf16.msra.mxu0 %v1834
    %2111 = vmatpush.bf16.msra.mxu0 %v1826
    %2112 = vmatpush.bf16.msra.mxu0 %v1818
    %2113 = vmatpush.bf16.msra.mxu0 %v1810
    %2114 = vmatpush.bf16.msra.mxu0 %v1802
    %2115 = vmatmul.bf16.gmra.mxu0 %v1221
    %v2116 = vpop.f32.mrf.mxu0
    %v2117 = vadd.f32 %v2104, %v2116
    %v2118 = vpop.f32.mrf.mxu0
    %2119 = vdwg.mxu0
    %2120 = vmatpush.bf16.msra.mxu0 %v1795
    %2121 = vmatpush.bf16.msra.mxu0 %v1787
    %2122 = vmatpush.bf16.msra.mxu0 %v1779
    %2123 = vmatpush.bf16.msra.mxu0 %v1771
    %2124 = vmatpush.bf16.msra.mxu0 %v1763
    %2125 = vmatpush.bf16.msra.mxu0 %v1755
    %2126 = vmatpush.bf16.msra.mxu0 %v1747
    %2127 = vmatpush.bf16.msra.mxu0 %v1739
    %2128 = vmatmul.bf16.gmra.mxu0 %v1220
    %v2129 = vpop.f32.mrf.mxu0
    %v2130 = vadd.f32 0.0, %v2129
    %v2131 = vpop.f32.mrf.mxu0
    %2132 = vdwg.mxu0
    %2133 = vmatpush.bf16.msra.mxu0 %v1859
    %2134 = vmatpush.bf16.msra.mxu0 %v1851
    %2135 = vmatpush.bf16.msra.mxu0 %v1843
    %2136 = vmatpush.bf16.msra.mxu0 %v1835
    %2137 = vmatpush.bf16.msra.mxu0 %v1827
    %2138 = vmatpush.bf16.msra.mxu0 %v1819
    %2139 = vmatpush.bf16.msra.mxu0 %v1811
    %2140 = vmatpush.bf16.msra.mxu0 %v1803
    %2141 = vmatmul.bf16.gmra.mxu0 %v1221
    %v2142 = vpop.f32.mrf.mxu0
    %v2143 = vadd.f32 %v2130, %v2142
    %v2144 = vpop.f32.mrf.mxu0
    %2145 = vdwg.mxu0
    %2146 = vmatpush.bf16.msra.mxu0 %v1796
    %2147 = vmatpush.bf16.msra.mxu0 %v1788
    %2148 = vmatpush.bf16.msra.mxu0 %v1780
    %2149 = vmatpush.bf16.msra.mxu0 %v1772
    %2150 = vmatpush.bf16.msra.mxu0 %v1764
    %2151 = vmatpush.bf16.msra.mxu0 %v1756
    %2152 = vmatpush.bf16.msra.mxu0 %v1748
    %2153 = vmatpush.bf16.msra.mxu0 %v1740
    %2154 = vmatmul.bf16.gmra.mxu0 %v1220
    %v2155 = vpop.f32.mrf.mxu0
    %v2156 = vadd.f32 0.0, %v2155
    %v2157 = vpop.f32.mrf.mxu0
    %2158 = vdwg.mxu0
    %2159 = vmatpush.bf16.msra.mxu0 %v1860
    %2160 = vmatpush.bf16.msra.mxu0 %v1852
    %2161 = vmatpush.bf16.msra.mxu0 %v1844
    %2162 = vmatpush.bf16.msra.mxu0 %v1836
    %2163 = vmatpush.bf16.msra.mxu0 %v1828
    %2164 = vmatpush.bf16.msra.mxu0 %v1820
    %2165 = vmatpush.bf16.msra.mxu0 %v1812
    %2166 = vmatpush.bf16.msra.mxu0 %v1804
    %2167 = vmatmul.bf16.gmra.mxu0 %v1221
    %v2168 = vpop.f32.mrf.mxu0
    %v2169 = vadd.f32 %v2156, %v2168
    %v2170 = vpop.f32.mrf.mxu0
    %2171 = vdwg.mxu0
    %2172 = vmatpush.bf16.msra.mxu0 %v1797
    %2173 = vmatpush.bf16.msra.mxu0 %v1789
    %2174 = vmatpush.bf16.msra.mxu0 %v1781
    %2175 = vmatpush.bf16.msra.mxu0 %v1773
    %2176 = vmatpush.bf16.msra.mxu0 %v1765
    %2177 = vmatpush.bf16.msra.mxu0 %v1757
    %2178 = vmatpush.bf16.msra.mxu0 %v1749
    %2179 = vmatpush.bf16.msra.mxu0 %v1741
    %2180 = vmatmul.bf16.gmra.mxu0 %v1220
    %v2181 = vpop.f32.mrf.mxu0
    %v2182 = vadd.f32 0.0, %v2181
    %v2183 = vpop.f32.mrf.mxu0
    %2184 = vdwg.mxu0
    %2185 = vmatpush.bf16.msra.mxu0 %v1861
    %2186 = vmatpush.bf16.msra.mxu0 %v1853
    %2187 = vmatpush.bf16.msra.mxu0 %v1845
    %2188 = vmatpush.bf16.msra.mxu0 %v1837
    %2189 = vmatpush.bf16.msra.mxu0 %v1829
    %2190 = vmatpush.bf16.msra.mxu0 %v1821
    %2191 = vmatpush.bf16.msra.mxu0 %v1813
    %2192 = vmatpush.bf16.msra.mxu0 %v1805
    %2193 = vmatmul.bf16.gmra.mxu0 %v1221
    %v2194 = vpop.f32.mrf.mxu0
    %v2195 = vadd.f32 %v2182, %v2194
    %v2196 = vpop.f32.mrf.mxu0
    %2197 = vdwg.mxu0
    %v2206 = vrot.slane %v2039, 7
    %v2207 = vrot.slane %v2065, 6
    %v2208 = vrot.slane %v2091, 5
    %v2209 = vrot.slane %v2117, 4
    %v2210 = vrot.slane %v2143, 3
    %v2211 = vrot.slane %v2169, 2
    %v2212 = vrot.slane %v2195, 1
    %v2213 = vsel %vm169, %v2013, %v2206
    %vm2214 = vcmask 1042434
    %v2215 = vsel %vm2214, %v2207, %v2208
    %vm2216 = vcmask 1041408
    %v2217 = vsel %vm2216, %v2213, %v2215
    %vm2218 = vcmask 1044484
    %v2219 = vsel %vm2218, %v2209, %v2210
    %vm2220 = vcmask 1046534
    %v2221 = vsel %vm2220, %v2211, %v2212
    %vm2222 = vcmask 1045508
    %v2223 = vsel %vm2222, %v2219, %v2221
    %vm2224 = vcmask 1043456
    %v2225 = vsel %vm2224, %v2217, %v2223
    %v2227 = vadd.f32 %v1214, %v2225
    %v2228 = vxor.u32 %v2227, 2147483648
    %v2229 = vmul.f32 %v2228, 1.442695
    %v2230 = vpow.pop %v2229
    %v2231 = vadd.f32 %v2230, 1.0
    %v2232 = vrcp.pop %v2231
    %v2233 = vmul.f32 %v2231, %v2232
    %v2234 = vsub.f32 1.0, %v2233
    %v2235 = vmul.f32 %v2232, %v2234
    %v2236 = vadd.f32 %v2232, %v2235
    %vm2237 = vweird.f32 %v2231
    %vm2238 = vweird.f32 %v2232
    %vm2239 = vmor %vm2237, %vm2238
    %v2240 = vsel %vm2239, %v2232, %v2236
    %v2241 = vand.u32 2147483647, %v2231
    %vm2242 = vcmp.eq.f32.partialorder %v2241, 8.507059e+37
    %v2243 = vand.u32 %v2231, 2147483648
    %v2244 = vor.u32 1.1754944e-38, %v2243
    %v2245 = vsel %vm2242, %v2244, %v2240
    %v2246 = vmul.f32 1.0, %v2245
    %v2248 = vrot.slane %v2227, 2
    %v2250 = vxor.u32 %v2248, 2147483648
    %v2251 = vmul.f32 %v2250, 1.442695
    %v2252 = vpow.pop %v2251
    %v2253 = vadd.f32 %v2252, 1.0
    %v2254 = vrcp.pop %v2253
    %v2255 = vmul.f32 %v2253, %v2254
    %v2256 = vsub.f32 1.0, %v2255
    %v2257 = vmul.f32 %v2254, %v2256
    %v2258 = vadd.f32 %v2254, %v2257
    %vm2259 = vweird.f32 %v2253
    %vm2260 = vweird.f32 %v2254
    %vm2261 = vmor %vm2259, %vm2260
    %v2262 = vsel %vm2261, %v2254, %v2258
    %v2263 = vand.u32 2147483647, %v2253
    %vm2264 = vcmp.eq.f32.partialorder %v2263, 8.507059e+37
    %v2265 = vand.u32 %v2253, 2147483648
    %v2266 = vor.u32 1.1754944e-38, %v2265
    %v2267 = vsel %vm2264, %v2266, %v2262
    %v2268 = vmul.f32 1.0, %v2267
    %v2269 = vrot.slane %v2227, 4
    %v2271 = vtanh.pop %v2269
    %v2272 = vrot.slane %v2227, 6
    %v2274 = vxor.u32 %v2272, 2147483648
    %v2275 = vmul.f32 %v2274, 1.442695
    %v2276 = vpow.pop %v2275
    %v2277 = vadd.f32 %v2276, 1.0
    %v2278 = vrcp.pop %v2277
    %v2279 = vmul.f32 %v2277, %v2278
    %v2280 = vsub.f32 1.0, %v2279
    %v2281 = vmul.f32 %v2278, %v2280
    %v2282 = vadd.f32 %v2278, %v2281
    %vm2283 = vweird.f32 %v2277
    %vm2284 = vweird.f32 %v2278
    %vm2285 = vmor %vm2283, %vm2284
    %v2286 = vsel %vm2285, %v2278, %v2282
    %v2287 = vand.u32 2147483647, %v2277
    %vm2288 = vcmp.eq.f32.partialorder %v2287, 8.507059e+37
    %v2289 = vand.u32 %v2277, 2147483648
    %v2290 = vor.u32 1.1754944e-38, %v2289
    %v2291 = vsel %vm2288, %v2290, %v2286
    %v2292 = vmul.f32 1.0, %v2291
    %v2293 = vmul.f32 %v2268, %v1211
    %v2294 = vmul.f32 %v2246, %v2271
    %v2295 = vadd.f32 %v2293, %v2294
    %v2296 = vtanh.pop %v2295
    %v2297 = vmul.f32 %v2292, %v2296
    %v2298 = vlaneseq
    %vm2299 = vcmp.ge.s32.totalorder %v2298, 0
    %vm2300 = vcmp.lt.s32.totalorder %v2298, 256
    %vm2301 = vmand %vm2299, %vm2300
    %2302 = vst.msk [vmem:[%s7] ss:$8 sm:$0x3] %vm2301, %v2297
    %2303 = vst.msk [vmem:[%s7] ss:$8 sm:$0x0] %vm2301, %v2297
    %s2304 = smul.u32 0, 8
    %p2305 = scmp.eq.s32.totalorder %s2304, 7
    // Predicated region
    $region50: #{oracle_gold_rollout.2} parent=1 // pred_check
      %p2306 = pneg %p2305
    $region51: #{oracle_gold_rollout.2} parent=1 // pred_check_branch
      %2308 = sbr.rel (%p2306) target = $region53
    $region52: #{oracle_gold_rollout.2} parent=1 // pred_region
      %2309 = vst.msk [vmem:[#allocation13] sm:$0x3] %vm2301, %v2295
    $region53: #{oracle_gold_rollout.2} parent=1 // pred_fallthru
      _
    %s2310 = scalar_lea.vmem [#allocation4], 1
    %v2311 = vld [vmem:[%s2310] ss:$8 sm:$0xf]
    %v2312 = vld [vmem:[%s2310] ss:$8 sm:$0xf0]
    %v2313 = vor.u32 %v2311, %v2312
    %v2315 = vperm.slane %v2297, 0
    %v2316 = vperm.slane %v2297, 1
    %v2319 = vpack.c.bf16 %v2315, %v2315
    %v2320 = vpack.c.bf16 %v2316, %v2316
    %v2321 = vld [vmem:[#allocation11] sm:$0xff]
    %v2322 = vld [vmem:[#allocation11 + $0x8] sm:$0xff]
    %v2323 = vld [vmem:[#allocation11 + $0x10] sm:$0xff]
    %v2324 = vld [vmem:[#allocation11 + $0x18] sm:$0xff]
    %v2325 = vld [vmem:[#allocation11 + $0x20] sm:$0xff]
    %v2326 = vld [vmem:[#allocation11 + $0x28] sm:$0xff]
    %v2327 = vld [vmem:[#allocation11 + $0x30] sm:$0xff]
    %v2328 = vld [vmem:[#allocation11 + $0x38] sm:$0xff]
    %v2329 = vld [vmem:[#allocation11 + $0x40] sm:$0xff]
    %v2330 = vld [vmem:[#allocation11 + $0x48] sm:$0xff]
    %v2331 = vld [vmem:[#allocation11 + $0x50] sm:$0xff]
    %v2332 = vld [vmem:[#allocation11 + $0x58] sm:$0xff]
    %v2333 = vld [vmem:[#allocation11 + $0x60] sm:$0xff]
    %v2334 = vld [vmem:[#allocation11 + $0x68] sm:$0xff]
    %v2335 = vld [vmem:[#allocation11 + $0x70] sm:$0xff]
    %v2336 = vld [vmem:[#allocation11 + $0x78] sm:$0xff]
    %v2337 = vld [vmem:[#allocation11 + $0x80] sm:$0xff]
    %v2338 = vld [vmem:[#allocation11 + $0x88] sm:$0xff]
    %v2339 = vld [vmem:[#allocation11 + $0x90] sm:$0xff]
    %v2340 = vld [vmem:[#allocation11 + $0x98] sm:$0xff]
    %v2341 = vld [vmem:[#allocation11 + $0xa0] sm:$0xff]
    %v2342 = vld [vmem:[#allocation11 + $0xa8] sm:$0xff]
    %v2343 = vld [vmem:[#allocation11 + $0xb0] sm:$0xff]
    %v2344 = vld [vmem:[#allocation11 + $0xb8] sm:$0xff]
    %v2345 = vld [vmem:[#allocation11 + $0xc0] sm:$0xff]
    %v2346 = vld [vmem:[#allocation11 + $0xc8] sm:$0xff]
    %v2347 = vld [vmem:[#allocation11 + $0xd0] sm:$0xff]
    %v2348 = vld [vmem:[#allocation11 + $0xd8] sm:$0xff]
    %v2349 = vld [vmem:[#allocation11 + $0xe0] sm:$0xff]
    %v2350 = vld [vmem:[#allocation11 + $0xe8] sm:$0xff]
    %v2351 = vld [vmem:[#allocation11 + $0xf0] sm:$0xff]
    %v2352 = vld [vmem:[#allocation11 + $0xf8] sm:$0xff]
    %v2353 = vld [vmem:[#allocation11 + $0x100] sm:$0xff]
    %v2354 = vld [vmem:[#allocation11 + $0x108] sm:$0xff]
    %v2355 = vld [vmem:[#allocation11 + $0x110] sm:$0xff]
    %v2356 = vld [vmem:[#allocation11 + $0x118] sm:$0xff]
    %v2357 = vld [vmem:[#allocation11 + $0x120] sm:$0xff]
    %v2358 = vld [vmem:[#allocation11 + $0x128] sm:$0xff]
    %v2359 = vld [vmem:[#allocation11 + $0x130] sm:$0xff]
    %v2360 = vld [vmem:[#allocation11 + $0x138] sm:$0xff]
    %v2361 = vld [vmem:[#allocation11 + $0x140] sm:$0xff]
    %v2362 = vld [vmem:[#allocation11 + $0x148] sm:$0xff]
    %v2363 = vld [vmem:[#allocation11 + $0x150] sm:$0xff]
    %v2364 = vld [vmem:[#allocation11 + $0x158] sm:$0xff]
    %v2365 = vld [vmem:[#allocation11 + $0x160] sm:$0xff]
    %v2366 = vld [vmem:[#allocation11 + $0x168] sm:$0xff]
    %v2367 = vld [vmem:[#allocation11 + $0x170] sm:$0xff]
    %v2368 = vld [vmem:[#allocation11 + $0x178] sm:$0xff]
    %v2369 = vld [vmem:[#allocation11 + $0x180] sm:$0xff]
    %v2370 = vld [vmem:[#allocation11 + $0x188] sm:$0xff]
    %v2371 = vld [vmem:[#allocation11 + $0x190] sm:$0xff]
    %v2372 = vld [vmem:[#allocation11 + $0x198] sm:$0xff]
    %v2373 = vld [vmem:[#allocation11 + $0x1a0] sm:$0xff]
    %v2374 = vld [vmem:[#allocation11 + $0x1a8] sm:$0xff]
    %v2375 = vld [vmem:[#allocation11 + $0x1b0] sm:$0xff]
    %v2376 = vld [vmem:[#allocation11 + $0x1b8] sm:$0xff]
    %v2377 = vld [vmem:[#allocation11 + $0x1c0] sm:$0xff]
    %v2378 = vld [vmem:[#allocation11 + $0x1c8] sm:$0xff]
    %v2379 = vld [vmem:[#allocation11 + $0x1d0] sm:$0xff]
    %v2380 = vld [vmem:[#allocation11 + $0x1d8] sm:$0xff]
    %v2381 = vld [vmem:[#allocation11 + $0x1e0] sm:$0xff]
    %v2382 = vld [vmem:[#allocation11 + $0x1e8] sm:$0xff]
    %v2383 = vld [vmem:[#allocation11 + $0x1f0] sm:$0xff]
    %v2384 = vld [vmem:[#allocation11 + $0x1f8] sm:$0xff]
    %v2385 = vld [vmem:[#allocation11 + $0x200] sm:$0xff]
    %v2386 = vld [vmem:[#allocation11 + $0x208] sm:$0xff]
    %v2387 = vld [vmem:[#allocation11 + $0x210] sm:$0xff]
    %v2388 = vld [vmem:[#allocation11 + $0x218] sm:$0xff]
    %v2389 = vld [vmem:[#allocation11 + $0x220] sm:$0xff]
    %v2390 = vld [vmem:[#allocation11 + $0x228] sm:$0xff]
    %v2391 = vld [vmem:[#allocation11 + $0x230] sm:$0xff]
    %v2392 = vld [vmem:[#allocation11 + $0x238] sm:$0xff]
    %v2393 = vld [vmem:[#allocation11 + $0x240] sm:$0xff]
    %v2394 = vld [vmem:[#allocation11 + $0x248] sm:$0xff]
    %v2395 = vld [vmem:[#allocation11 + $0x250] sm:$0xff]
    %v2396 = vld [vmem:[#allocation11 + $0x258] sm:$0xff]
    %v2397 = vld [vmem:[#allocation11 + $0x260] sm:$0xff]
    %v2398 = vld [vmem:[#allocation11 + $0x268] sm:$0xff]
    %v2399 = vld [vmem:[#allocation11 + $0x270] sm:$0xff]
    %v2400 = vld [vmem:[#allocation11 + $0x278] sm:$0xff]
    %v2401 = vld [vmem:[#allocation11 + $0x280] sm:$0xff]
    %v2402 = vld [vmem:[#allocation11 + $0x288] sm:$0xff]
    %v2403 = vld [vmem:[#allocation11 + $0x290] sm:$0xff]
    %v2404 = vld [vmem:[#allocation11 + $0x298] sm:$0xff]
    %v2405 = vld [vmem:[#allocation11 + $0x2a0] sm:$0xff]
    %v2406 = vld [vmem:[#allocation11 + $0x2a8] sm:$0xff]
    %v2407 = vld [vmem:[#allocation11 + $0x2b0] sm:$0xff]
    %v2408 = vld [vmem:[#allocation11 + $0x2b8] sm:$0xff]
    %v2409 = vld [vmem:[#allocation11 + $0x2c0] sm:$0xff]
    %v2410 = vld [vmem:[#allocation11 + $0x2c8] sm:$0xff]
    %v2411 = vld [vmem:[#allocation11 + $0x2d0] sm:$0xff]
    %v2412 = vld [vmem:[#allocation11 + $0x2d8] sm:$0xff]
    %v2413 = vld [vmem:[#allocation11 + $0x2e0] sm:$0xff]
    %v2414 = vld [vmem:[#allocation11 + $0x2e8] sm:$0xff]
    %v2415 = vld [vmem:[#allocation11 + $0x2f0] sm:$0xff]
    %v2416 = vld [vmem:[#allocation11 + $0x2f8] sm:$0xff]
    %v2417 = vld [vmem:[#allocation11 + $0x300] sm:$0xff]
    %v2418 = vld [vmem:[#allocation11 + $0x308] sm:$0xff]
    %v2419 = vld [vmem:[#allocation11 + $0x310] sm:$0xff]
    %v2420 = vld [vmem:[#allocation11 + $0x318] sm:$0xff]
    %v2421 = vld [vmem:[#allocation11 + $0x320] sm:$0xff]
    %v2422 = vld [vmem:[#allocation11 + $0x328] sm:$0xff]
    %v2423 = vld [vmem:[#allocation11 + $0x330] sm:$0xff]
    %v2424 = vld [vmem:[#allocation11 + $0x338] sm:$0xff]
    %v2425 = vld [vmem:[#allocation11 + $0x340] sm:$0xff]
    %v2426 = vld [vmem:[#allocation11 + $0x348] sm:$0xff]
    %v2427 = vld [vmem:[#allocation11 + $0x350] sm:$0xff]
    %v2428 = vld [vmem:[#allocation11 + $0x358] sm:$0xff]
    %v2429 = vld [vmem:[#allocation11 + $0x360] sm:$0xff]
    %v2430 = vld [vmem:[#allocation11 + $0x368] sm:$0xff]
    %v2431 = vld [vmem:[#allocation11 + $0x370] sm:$0xff]
    %v2432 = vld [vmem:[#allocation11 + $0x378] sm:$0xff]
    %v2433 = vld [vmem:[#allocation11 + $0x380] sm:$0xff]
    %v2434 = vld [vmem:[#allocation11 + $0x388] sm:$0xff]
    %v2435 = vld [vmem:[#allocation11 + $0x390] sm:$0xff]
    %v2436 = vld [vmem:[#allocation11 + $0x398] sm:$0xff]
    %v2437 = vld [vmem:[#allocation11 + $0x3a0] sm:$0xff]
    %v2438 = vld [vmem:[#allocation11 + $0x3a8] sm:$0xff]
    %v2439 = vld [vmem:[#allocation11 + $0x3b0] sm:$0xff]
    %v2440 = vld [vmem:[#allocation11 + $0x3b8] sm:$0xff]
    %v2441 = vld [vmem:[#allocation11 + $0x3c0] sm:$0xff]
    %v2442 = vld [vmem:[#allocation11 + $0x3c8] sm:$0xff]
    %v2443 = vld [vmem:[#allocation11 + $0x3d0] sm:$0xff]
    %v2444 = vld [vmem:[#allocation11 + $0x3d8] sm:$0xff]
    %v2445 = vld [vmem:[#allocation11 + $0x3e0] sm:$0xff]
    %v2446 = vld [vmem:[#allocation11 + $0x3e8] sm:$0xff]
    %v2447 = vld [vmem:[#allocation11 + $0x3f0] sm:$0xff]
    %v2448 = vld [vmem:[#allocation11 + $0x3f8] sm:$0xff]
    %v2577 = vunpack.c.l.b16 %v2321
    %v2578 = vunpack.c.h.b16 %v2321
    %v2579 = vunpack.c.l.b16 %v2322
    %v2580 = vunpack.c.h.b16 %v2322
    %v2581 = vunpack.c.l.b16 %v2323
    %v2582 = vunpack.c.h.b16 %v2323
    %v2583 = vunpack.c.l.b16 %v2324
    %v2584 = vunpack.c.h.b16 %v2324
    %v2585 = vunpack.c.l.b16 %v2325
    %v2586 = vunpack.c.h.b16 %v2325
    %v2587 = vunpack.c.l.b16 %v2326
    %v2588 = vunpack.c.h.b16 %v2326
    %v2589 = vunpack.c.l.b16 %v2327
    %v2590 = vunpack.c.h.b16 %v2327
    %v2591 = vunpack.c.l.b16 %v2328
    %v2592 = vunpack.c.h.b16 %v2328
    %v2593 = vunpack.c.l.b16 %v2329
    %v2594 = vunpack.c.h.b16 %v2329
    %v2595 = vunpack.c.l.b16 %v2330
    %v2596 = vunpack.c.h.b16 %v2330
    %v2597 = vunpack.c.l.b16 %v2331
    %v2598 = vunpack.c.h.b16 %v2331
    %v2599 = vunpack.c.l.b16 %v2332
    %v2600 = vunpack.c.h.b16 %v2332
    %v2601 = vunpack.c.l.b16 %v2333
    %v2602 = vunpack.c.h.b16 %v2333
    %v2603 = vunpack.c.l.b16 %v2334
    %v2604 = vunpack.c.h.b16 %v2334
    %v2605 = vunpack.c.l.b16 %v2335
    %v2606 = vunpack.c.h.b16 %v2335
    %v2607 = vunpack.c.l.b16 %v2336
    %v2608 = vunpack.c.h.b16 %v2336
    %v2609 = vunpack.c.l.b16 %v2337
    %v2610 = vunpack.c.h.b16 %v2337
    %v2611 = vunpack.c.l.b16 %v2338
    %v2612 = vunpack.c.h.b16 %v2338
    %v2613 = vunpack.c.l.b16 %v2339
    %v2614 = vunpack.c.h.b16 %v2339
    %v2615 = vunpack.c.l.b16 %v2340
    %v2616 = vunpack.c.h.b16 %v2340
    %v2617 = vunpack.c.l.b16 %v2341
    %v2618 = vunpack.c.h.b16 %v2341
    %v2619 = vunpack.c.l.b16 %v2342
    %v2620 = vunpack.c.h.b16 %v2342
    %v2621 = vunpack.c.l.b16 %v2343
    %v2622 = vunpack.c.h.b16 %v2343
    %v2623 = vunpack.c.l.b16 %v2344
    %v2624 = vunpack.c.h.b16 %v2344
    %v2625 = vunpack.c.l.b16 %v2345
    %v2626 = vunpack.c.h.b16 %v2345
    %v2627 = vunpack.c.l.b16 %v2346
    %v2628 = vunpack.c.h.b16 %v2346
    %v2629 = vunpack.c.l.b16 %v2347
    %v2630 = vunpack.c.h.b16 %v2347
    %v2631 = vunpack.c.l.b16 %v2348
    %v2632 = vunpack.c.h.b16 %v2348
    %v2633 = vunpack.c.l.b16 %v2349
    %v2634 = vunpack.c.h.b16 %v2349
    %v2635 = vunpack.c.l.b16 %v2350
    %v2636 = vunpack.c.h.b16 %v2350
    %v2637 = vunpack.c.l.b16 %v2351
    %v2638 = vunpack.c.h.b16 %v2351
    %v2639 = vunpack.c.l.b16 %v2352
    %v2640 = vunpack.c.h.b16 %v2352
    %v2641 = vunpack.c.l.b16 %v2353
    %v2642 = vunpack.c.h.b16 %v2353
    %v2643 = vunpack.c.l.b16 %v2354
    %v2644 = vunpack.c.h.b16 %v2354
    %v2645 = vunpack.c.l.b16 %v2355
    %v2646 = vunpack.c.h.b16 %v2355
    %v2647 = vunpack.c.l.b16 %v2356
    %v2648 = vunpack.c.h.b16 %v2356
    %v2649 = vunpack.c.l.b16 %v2357
    %v2650 = vunpack.c.h.b16 %v2357
    %v2651 = vunpack.c.l.b16 %v2358
    %v2652 = vunpack.c.h.b16 %v2358
    %v2653 = vunpack.c.l.b16 %v2359
    %v2654 = vunpack.c.h.b16 %v2359
    %v2655 = vunpack.c.l.b16 %v2360
    %v2656 = vunpack.c.h.b16 %v2360
    %v2657 = vunpack.c.l.b16 %v2361
    %v2658 = vunpack.c.h.b16 %v2361
    %v2659 = vunpack.c.l.b16 %v2362
    %v2660 = vunpack.c.h.b16 %v2362
    %v2661 = vunpack.c.l.b16 %v2363
    %v2662 = vunpack.c.h.b16 %v2363
    %v2663 = vunpack.c.l.b16 %v2364
    %v2664 = vunpack.c.h.b16 %v2364
    %v2665 = vunpack.c.l.b16 %v2365
    %v2666 = vunpack.c.h.b16 %v2365
    %v2667 = vunpack.c.l.b16 %v2366
    %v2668 = vunpack.c.h.b16 %v2366
    %v2669 = vunpack.c.l.b16 %v2367
    %v2670 = vunpack.c.h.b16 %v2367
    %v2671 = vunpack.c.l.b16 %v2368
    %v2672 = vunpack.c.h.b16 %v2368
    %v2673 = vunpack.c.l.b16 %v2369
    %v2674 = vunpack.c.h.b16 %v2369
    %v2675 = vunpack.c.l.b16 %v2370
    %v2676 = vunpack.c.h.b16 %v2370
    %v2677 = vunpack.c.l.b16 %v2371
    %v2678 = vunpack.c.h.b16 %v2371
    %v2679 = vunpack.c.l.b16 %v2372
    %v2680 = vunpack.c.h.b16 %v2372
    %v2681 = vunpack.c.l.b16 %v2373
    %v2682 = vunpack.c.h.b16 %v2373
    %v2683 = vunpack.c.l.b16 %v2374
    %v2684 = vunpack.c.h.b16 %v2374
    %v2685 = vunpack.c.l.b16 %v2375
    %v2686 = vunpack.c.h.b16 %v2375
    %v2687 = vunpack.c.l.b16 %v2376
    %v2688 = vunpack.c.h.b16 %v2376
    %v2689 = vunpack.c.l.b16 %v2377
    %v2690 = vunpack.c.h.b16 %v2377
    %v2691 = vunpack.c.l.b16 %v2378
    %v2692 = vunpack.c.h.b16 %v2378
    %v2693 = vunpack.c.l.b16 %v2379
    %v2694 = vunpack.c.h.b16 %v2379
    %v2695 = vunpack.c.l.b16 %v2380
    %v2696 = vunpack.c.h.b16 %v2380
    %v2697 = vunpack.c.l.b16 %v2381
    %v2698 = vunpack.c.h.b16 %v2381
    %v2699 = vunpack.c.l.b16 %v2382
    %v2700 = vunpack.c.h.b16 %v2382
    %v2701 = vunpack.c.l.b16 %v2383
    %v2702 = vunpack.c.h.b16 %v2383
    %v2703 = vunpack.c.l.b16 %v2384
    %v2704 = vunpack.c.h.b16 %v2384
    %v2705 = vunpack.c.l.b16 %v2385
    %v2706 = vunpack.c.h.b16 %v2385
    %v2707 = vunpack.c.l.b16 %v2386
    %v2708 = vunpack.c.h.b16 %v2386
    %v2709 = vunpack.c.l.b16 %v2387
    %v2710 = vunpack.c.h.b16 %v2387
    %v2711 = vunpack.c.l.b16 %v2388
    %v2712 = vunpack.c.h.b16 %v2388
    %v2713 = vunpack.c.l.b16 %v2389
    %v2714 = vunpack.c.h.b16 %v2389
    %v2715 = vunpack.c.l.b16 %v2390
    %v2716 = vunpack.c.h.b16 %v2390
    %v2717 = vunpack.c.l.b16 %v2391
    %v2718 = vunpack.c.h.b16 %v2391
    %v2719 = vunpack.c.l.b16 %v2392
    %v2720 = vunpack.c.h.b16 %v2392
    %v2721 = vunpack.c.l.b16 %v2393
    %v2722 = vunpack.c.h.b16 %v2393
    %v2723 = vunpack.c.l.b16 %v2394
    %v2724 = vunpack.c.h.b16 %v2394
    %v2725 = vunpack.c.l.b16 %v2395
    %v2726 = vunpack.c.h.b16 %v2395
    %v2727 = vunpack.c.l.b16 %v2396
    %v2728 = vunpack.c.h.b16 %v2396
    %v2729 = vunpack.c.l.b16 %v2397
    %v2730 = vunpack.c.h.b16 %v2397
    %v2731 = vunpack.c.l.b16 %v2398
    %v2732 = vunpack.c.h.b16 %v2398
    %v2733 = vunpack.c.l.b16 %v2399
    %v2734 = vunpack.c.h.b16 %v2399
    %v2735 = vunpack.c.l.b16 %v2400
    %v2736 = vunpack.c.h.b16 %v2400
    %v2737 = vunpack.c.l.b16 %v2401
    %v2738 = vunpack.c.h.b16 %v2401
    %v2739 = vunpack.c.l.b16 %v2402
    %v2740 = vunpack.c.h.b16 %v2402
    %v2741 = vunpack.c.l.b16 %v2403
    %v2742 = vunpack.c.h.b16 %v2403
    %v2743 = vunpack.c.l.b16 %v2404
    %v2744 = vunpack.c.h.b16 %v2404
    %v2745 = vunpack.c.l.b16 %v2405
    %v2746 = vunpack.c.h.b16 %v2405
    %v2747 = vunpack.c.l.b16 %v2406
    %v2748 = vunpack.c.h.b16 %v2406
    %v2749 = vunpack.c.l.b16 %v2407
    %v2750 = vunpack.c.h.b16 %v2407
    %v2751 = vunpack.c.l.b16 %v2408
    %v2752 = vunpack.c.h.b16 %v2408
    %v2753 = vunpack.c.l.b16 %v2409
    %v2754 = vunpack.c.h.b16 %v2409
    %v2755 = vunpack.c.l.b16 %v2410
    %v2756 = vunpack.c.h.b16 %v2410
    %v2757 = vunpack.c.l.b16 %v2411
    %v2758 = vunpack.c.h.b16 %v2411
    %v2759 = vunpack.c.l.b16 %v2412
    %v2760 = vunpack.c.h.b16 %v2412
    %v2761 = vunpack.c.l.b16 %v2413
    %v2762 = vunpack.c.h.b16 %v2413
    %v2763 = vunpack.c.l.b16 %v2414
    %v2764 = vunpack.c.h.b16 %v2414
    %v2765 = vunpack.c.l.b16 %v2415
    %v2766 = vunpack.c.h.b16 %v2415
    %v2767 = vunpack.c.l.b16 %v2416
    %v2768 = vunpack.c.h.b16 %v2416
    %v2769 = vunpack.c.l.b16 %v2417
    %v2770 = vunpack.c.h.b16 %v2417
    %v2771 = vunpack.c.l.b16 %v2418
    %v2772 = vunpack.c.h.b16 %v2418
    %v2773 = vunpack.c.l.b16 %v2419
    %v2774 = vunpack.c.h.b16 %v2419
    %v2775 = vunpack.c.l.b16 %v2420
    %v2776 = vunpack.c.h.b16 %v2420
    %v2777 = vunpack.c.l.b16 %v2421
    %v2778 = vunpack.c.h.b16 %v2421
    %v2779 = vunpack.c.l.b16 %v2422
    %v2780 = vunpack.c.h.b16 %v2422
    %v2781 = vunpack.c.l.b16 %v2423
    %v2782 = vunpack.c.h.b16 %v2423
    %v2783 = vunpack.c.l.b16 %v2424
    %v2784 = vunpack.c.h.b16 %v2424
    %v2785 = vunpack.c.l.b16 %v2425
    %v2786 = vunpack.c.h.b16 %v2425
    %v2787 = vunpack.c.l.b16 %v2426
    %v2788 = vunpack.c.h.b16 %v2426
    %v2789 = vunpack.c.l.b16 %v2427
    %v2790 = vunpack.c.h.b16 %v2427
    %v2791 = vunpack.c.l.b16 %v2428
    %v2792 = vunpack.c.h.b16 %v2428
    %v2793 = vunpack.c.l.b16 %v2429
    %v2794 = vunpack.c.h.b16 %v2429
    %v2795 = vunpack.c.l.b16 %v2430
    %v2796 = vunpack.c.h.b16 %v2430
    %v2797 = vunpack.c.l.b16 %v2431
    %v2798 = vunpack.c.h.b16 %v2431
    %v2799 = vunpack.c.l.b16 %v2432
    %v2800 = vunpack.c.h.b16 %v2432
    %v2801 = vunpack.c.l.b16 %v2433
    %v2802 = vunpack.c.h.b16 %v2433
    %v2803 = vunpack.c.l.b16 %v2434
    %v2804 = vunpack.c.h.b16 %v2434
    %v2805 = vunpack.c.l.b16 %v2435
    %v2806 = vunpack.c.h.b16 %v2435
    %v2807 = vunpack.c.l.b16 %v2436
    %v2808 = vunpack.c.h.b16 %v2436
    %v2809 = vunpack.c.l.b16 %v2437
    %v2810 = vunpack.c.h.b16 %v2437
    %v2811 = vunpack.c.l.b16 %v2438
    %v2812 = vunpack.c.h.b16 %v2438
    %v2813 = vunpack.c.l.b16 %v2439
    %v2814 = vunpack.c.h.b16 %v2439
    %v2815 = vunpack.c.l.b16 %v2440
    %v2816 = vunpack.c.h.b16 %v2440
    %v2817 = vunpack.c.l.b16 %v2441
    %v2818 = vunpack.c.h.b16 %v2441
    %v2819 = vunpack.c.l.b16 %v2442
    %v2820 = vunpack.c.h.b16 %v2442
    %v2821 = vunpack.c.l.b16 %v2443
    %v2822 = vunpack.c.h.b16 %v2443
    %v2823 = vunpack.c.l.b16 %v2444
    %v2824 = vunpack.c.h.b16 %v2444
    %v2825 = vunpack.c.l.b16 %v2445
    %v2826 = vunpack.c.h.b16 %v2445
    %v2827 = vunpack.c.l.b16 %v2446
    %v2828 = vunpack.c.h.b16 %v2446
    %v2829 = vunpack.c.l.b16 %v2447
    %v2830 = vunpack.c.h.b16 %v2447
    %v2831 = vunpack.c.l.b16 %v2448
    %v2832 = vunpack.c.h.b16 %v2448
    %v2833 = vpack.c.b16 %v2585, %v2577
    %v2834 = vpack.c.b16 %v2586, %v2578
    %v2835 = vpack.c.b16 %v2587, %v2579
    %v2836 = vpack.c.b16 %v2588, %v2580
    %v2837 = vpack.c.b16 %v2589, %v2581
    %v2838 = vpack.c.b16 %v2590, %v2582
    %v2839 = vpack.c.b16 %v2591, %v2583
    %v2840 = vpack.c.b16 %v2592, %v2584
    %v2841 = vpack.c.b16 %v2601, %v2593
    %v2842 = vpack.c.b16 %v2602, %v2594
    %v2843 = vpack.c.b16 %v2603, %v2595
    %v2844 = vpack.c.b16 %v2604, %v2596
    %v2845 = vpack.c.b16 %v2605, %v2597
    %v2846 = vpack.c.b16 %v2606, %v2598
    %v2847 = vpack.c.b16 %v2607, %v2599
    %v2848 = vpack.c.b16 %v2608, %v2600
    %v2849 = vpack.c.b16 %v2617, %v2609
    %v2850 = vpack.c.b16 %v2618, %v2610
    %v2851 = vpack.c.b16 %v2619, %v2611
    %v2852 = vpack.c.b16 %v2620, %v2612
    %v2853 = vpack.c.b16 %v2621, %v2613
    %v2854 = vpack.c.b16 %v2622, %v2614
    %v2855 = vpack.c.b16 %v2623, %v2615
    %v2856 = vpack.c.b16 %v2624, %v2616
    %v2857 = vpack.c.b16 %v2633, %v2625
    %v2858 = vpack.c.b16 %v2634, %v2626
    %v2859 = vpack.c.b16 %v2635, %v2627
    %v2860 = vpack.c.b16 %v2636, %v2628
    %v2861 = vpack.c.b16 %v2637, %v2629
    %v2862 = vpack.c.b16 %v2638, %v2630
    %v2863 = vpack.c.b16 %v2639, %v2631
    %v2864 = vpack.c.b16 %v2640, %v2632
    %v2865 = vpack.c.b16 %v2649, %v2641
    %v2866 = vpack.c.b16 %v2650, %v2642
    %v2867 = vpack.c.b16 %v2651, %v2643
    %v2868 = vpack.c.b16 %v2652, %v2644
    %v2869 = vpack.c.b16 %v2653, %v2645
    %v2870 = vpack.c.b16 %v2654, %v2646
    %v2871 = vpack.c.b16 %v2655, %v2647
    %v2872 = vpack.c.b16 %v2656, %v2648
    %v2873 = vpack.c.b16 %v2665, %v2657
    %v2874 = vpack.c.b16 %v2666, %v2658
    %v2875 = vpack.c.b16 %v2667, %v2659
    %v2876 = vpack.c.b16 %v2668, %v2660
    %v2877 = vpack.c.b16 %v2669, %v2661
    %v2878 = vpack.c.b16 %v2670, %v2662
    %v2879 = vpack.c.b16 %v2671, %v2663
    %v2880 = vpack.c.b16 %v2672, %v2664
    %v2881 = vpack.c.b16 %v2681, %v2673
    %v2882 = vpack.c.b16 %v2682, %v2674
    %v2883 = vpack.c.b16 %v2683, %v2675
    %v2884 = vpack.c.b16 %v2684, %v2676
    %v2885 = vpack.c.b16 %v2685, %v2677
    %v2886 = vpack.c.b16 %v2686, %v2678
    %v2887 = vpack.c.b16 %v2687, %v2679
    %v2888 = vpack.c.b16 %v2688, %v2680
    %v2889 = vpack.c.b16 %v2697, %v2689
    %v2890 = vpack.c.b16 %v2698, %v2690
    %v2891 = vpack.c.b16 %v2699, %v2691
    %v2892 = vpack.c.b16 %v2700, %v2692
    %v2893 = vpack.c.b16 %v2701, %v2693
    %v2894 = vpack.c.b16 %v2702, %v2694
    %v2895 = vpack.c.b16 %v2703, %v2695
    %v2896 = vpack.c.b16 %v2704, %v2696
    %v2897 = vpack.c.b16 %v2713, %v2705
    %v2898 = vpack.c.b16 %v2714, %v2706
    %v2899 = vpack.c.b16 %v2715, %v2707
    %v2900 = vpack.c.b16 %v2716, %v2708
    %v2901 = vpack.c.b16 %v2717, %v2709
    %v2902 = vpack.c.b16 %v2718, %v2710
    %v2903 = vpack.c.b16 %v2719, %v2711
    %v2904 = vpack.c.b16 %v2720, %v2712
    %v2905 = vpack.c.b16 %v2729, %v2721
    %v2906 = vpack.c.b16 %v2730, %v2722
    %v2907 = vpack.c.b16 %v2731, %v2723
    %v2908 = vpack.c.b16 %v2732, %v2724
    %v2909 = vpack.c.b16 %v2733, %v2725
    %v2910 = vpack.c.b16 %v2734, %v2726
    %v2911 = vpack.c.b16 %v2735, %v2727
    %v2912 = vpack.c.b16 %v2736, %v2728
    %v2913 = vpack.c.b16 %v2745, %v2737
    %v2914 = vpack.c.b16 %v2746, %v2738
    %v2915 = vpack.c.b16 %v2747, %v2739
    %v2916 = vpack.c.b16 %v2748, %v2740
    %v2917 = vpack.c.b16 %v2749, %v2741
    %v2918 = vpack.c.b16 %v2750, %v2742
    %v2919 = vpack.c.b16 %v2751, %v2743
    %v2920 = vpack.c.b16 %v2752, %v2744
    %v2921 = vpack.c.b16 %v2761, %v2753
    %v2922 = vpack.c.b16 %v2762, %v2754
    %v2923 = vpack.c.b16 %v2763, %v2755
    %v2924 = vpack.c.b16 %v2764, %v2756
    %v2925 = vpack.c.b16 %v2765, %v2757
    %v2926 = vpack.c.b16 %v2766, %v2758
    %v2927 = vpack.c.b16 %v2767, %v2759
    %v2928 = vpack.c.b16 %v2768, %v2760
    %v2929 = vpack.c.b16 %v2777, %v2769
    %v2930 = vpack.c.b16 %v2778, %v2770
    %v2931 = vpack.c.b16 %v2779, %v2771
    %v2932 = vpack.c.b16 %v2780, %v2772
    %v2933 = vpack.c.b16 %v2781, %v2773
    %v2934 = vpack.c.b16 %v2782, %v2774
    %v2935 = vpack.c.b16 %v2783, %v2775
    %v2936 = vpack.c.b16 %v2784, %v2776
    %v2937 = vpack.c.b16 %v2793, %v2785
    %v2938 = vpack.c.b16 %v2794, %v2786
    %v2939 = vpack.c.b16 %v2795, %v2787
    %v2940 = vpack.c.b16 %v2796, %v2788
    %v2941 = vpack.c.b16 %v2797, %v2789
    %v2942 = vpack.c.b16 %v2798, %v2790
    %v2943 = vpack.c.b16 %v2799, %v2791
    %v2944 = vpack.c.b16 %v2800, %v2792
    %v2945 = vpack.c.b16 %v2809, %v2801
    %v2946 = vpack.c.b16 %v2810, %v2802
    %v2947 = vpack.c.b16 %v2811, %v2803
    %v2948 = vpack.c.b16 %v2812, %v2804
    %v2949 = vpack.c.b16 %v2813, %v2805
    %v2950 = vpack.c.b16 %v2814, %v2806
    %v2951 = vpack.c.b16 %v2815, %v2807
    %v2952 = vpack.c.b16 %v2816, %v2808
    %v2953 = vpack.c.b16 %v2825, %v2817
    %v2954 = vpack.c.b16 %v2826, %v2818
    %v2955 = vpack.c.b16 %v2827, %v2819
    %v2956 = vpack.c.b16 %v2828, %v2820
    %v2957 = vpack.c.b16 %v2829, %v2821
    %v2958 = vpack.c.b16 %v2830, %v2822
    %v2959 = vpack.c.b16 %v2831, %v2823
    %v2960 = vpack.c.b16 %v2832, %v2824
    %3089 = vmatpush.bf16.msra.mxu0 %v2889
    %3090 = vmatpush.bf16.msra.mxu0 %v2881
    %3091 = vmatpush.bf16.msra.mxu0 %v2873
    %3092 = vmatpush.bf16.msra.mxu0 %v2865
    %3093 = vmatpush.bf16.msra.mxu0 %v2857
    %3094 = vmatpush.bf16.msra.mxu0 %v2849
    %3095 = vmatpush.bf16.msra.mxu0 %v2841
    %3096 = vmatpush.bf16.msra.mxu0 %v2833
    %3097 = vmatmul.bf16.gmra.mxu0 %v2319
    %v3098 = vpop.f32.mrf.mxu0
    %v3099 = vadd.f32 0.0, %v3098
    %v3100 = vpop.f32.mrf.mxu0
    %3101 = vdwg.mxu0
    %3102 = vmatpush.bf16.msra.mxu0 %v2953
    %3103 = vmatpush.bf16.msra.mxu0 %v2945
    %3104 = vmatpush.bf16.msra.mxu0 %v2937
    %3105 = vmatpush.bf16.msra.mxu0 %v2929
    %3106 = vmatpush.bf16.msra.mxu0 %v2921
    %3107 = vmatpush.bf16.msra.mxu0 %v2913
    %3108 = vmatpush.bf16.msra.mxu0 %v2905
    %3109 = vmatpush.bf16.msra.mxu0 %v2897
    %3110 = vmatmul.bf16.gmra.mxu0 %v2320
    %v3111 = vpop.f32.mrf.mxu0
    %v3112 = vadd.f32 %v3099, %v3111
    %v3113 = vpop.f32.mrf.mxu0
    %3114 = vdwg.mxu0
    %3115 = vmatpush.bf16.msra.mxu0 %v2890
    %3116 = vmatpush.bf16.msra.mxu0 %v2882
    %3117 = vmatpush.bf16.msra.mxu0 %v2874
    %3118 = vmatpush.bf16.msra.mxu0 %v2866
    %3119 = vmatpush.bf16.msra.mxu0 %v2858
    %3120 = vmatpush.bf16.msra.mxu0 %v2850
    %3121 = vmatpush.bf16.msra.mxu0 %v2842
    %3122 = vmatpush.bf16.msra.mxu0 %v2834
    %3123 = vmatmul.bf16.gmra.mxu0 %v2319
    %v3124 = vpop.f32.mrf.mxu0
    %v3125 = vadd.f32 0.0, %v3124
    %v3126 = vpop.f32.mrf.mxu0
    %3127 = vdwg.mxu0
    %3128 = vmatpush.bf16.msra.mxu0 %v2954
    %3129 = vmatpush.bf16.msra.mxu0 %v2946
    %3130 = vmatpush.bf16.msra.mxu0 %v2938
    %3131 = vmatpush.bf16.msra.mxu0 %v2930
    %3132 = vmatpush.bf16.msra.mxu0 %v2922
    %3133 = vmatpush.bf16.msra.mxu0 %v2914
    %3134 = vmatpush.bf16.msra.mxu0 %v2906
    %3135 = vmatpush.bf16.msra.mxu0 %v2898
    %3136 = vmatmul.bf16.gmra.mxu0 %v2320
    %v3137 = vpop.f32.mrf.mxu0
    %v3138 = vadd.f32 %v3125, %v3137
    %v3139 = vpop.f32.mrf.mxu0
    %3140 = vdwg.mxu0
    %3141 = vmatpush.bf16.msra.mxu0 %v2891
    %3142 = vmatpush.bf16.msra.mxu0 %v2883
    %3143 = vmatpush.bf16.msra.mxu0 %v2875
    %3144 = vmatpush.bf16.msra.mxu0 %v2867
    %3145 = vmatpush.bf16.msra.mxu0 %v2859
    %3146 = vmatpush.bf16.msra.mxu0 %v2851
    %3147 = vmatpush.bf16.msra.mxu0 %v2843
    %3148 = vmatpush.bf16.msra.mxu0 %v2835
    %3149 = vmatmul.bf16.gmra.mxu0 %v2319
    %v3150 = vpop.f32.mrf.mxu0
    %v3151 = vadd.f32 0.0, %v3150
    %v3152 = vpop.f32.mrf.mxu0
    %3153 = vdwg.mxu0
    %3154 = vmatpush.bf16.msra.mxu0 %v2955
    %3155 = vmatpush.bf16.msra.mxu0 %v2947
    %3156 = vmatpush.bf16.msra.mxu0 %v2939
    %3157 = vmatpush.bf16.msra.mxu0 %v2931
    %3158 = vmatpush.bf16.msra.mxu0 %v2923
    %3159 = vmatpush.bf16.msra.mxu0 %v2915
    %3160 = vmatpush.bf16.msra.mxu0 %v2907
    %3161 = vmatpush.bf16.msra.mxu0 %v2899
    %3162 = vmatmul.bf16.gmra.mxu0 %v2320
    %v3163 = vpop.f32.mrf.mxu0
    %v3164 = vadd.f32 %v3151, %v3163
    %v3165 = vpop.f32.mrf.mxu0
    %3166 = vdwg.mxu0
    %3167 = vmatpush.bf16.msra.mxu0 %v2892
    %3168 = vmatpush.bf16.msra.mxu0 %v2884
    %3169 = vmatpush.bf16.msra.mxu0 %v2876
    %3170 = vmatpush.bf16.msra.mxu0 %v2868
    %3171 = vmatpush.bf16.msra.mxu0 %v2860
    %3172 = vmatpush.bf16.msra.mxu0 %v2852
    %3173 = vmatpush.bf16.msra.mxu0 %v2844
    %3174 = vmatpush.bf16.msra.mxu0 %v2836
    %3175 = vmatmul.bf16.gmra.mxu0 %v2319
    %v3176 = vpop.f32.mrf.mxu0
    %v3177 = vadd.f32 0.0, %v3176
    %v3178 = vpop.f32.mrf.mxu0
    %3179 = vdwg.mxu0
    %3180 = vmatpush.bf16.msra.mxu0 %v2956
    %3181 = vmatpush.bf16.msra.mxu0 %v2948
    %3182 = vmatpush.bf16.msra.mxu0 %v2940
    %3183 = vmatpush.bf16.msra.mxu0 %v2932
    %3184 = vmatpush.bf16.msra.mxu0 %v2924
    %3185 = vmatpush.bf16.msra.mxu0 %v2916
    %3186 = vmatpush.bf16.msra.mxu0 %v2908
    %3187 = vmatpush.bf16.msra.mxu0 %v2900
    %3188 = vmatmul.bf16.gmra.mxu0 %v2320
    %v3189 = vpop.f32.mrf.mxu0
    %v3190 = vadd.f32 %v3177, %v3189
    %v3191 = vpop.f32.mrf.mxu0
    %3192 = vdwg.mxu0
    %3193 = vmatpush.bf16.msra.mxu0 %v2893
    %3194 = vmatpush.bf16.msra.mxu0 %v2885
    %3195 = vmatpush.bf16.msra.mxu0 %v2877
    %3196 = vmatpush.bf16.msra.mxu0 %v2869
    %3197 = vmatpush.bf16.msra.mxu0 %v2861
    %3198 = vmatpush.bf16.msra.mxu0 %v2853
    %3199 = vmatpush.bf16.msra.mxu0 %v2845
    %3200 = vmatpush.bf16.msra.mxu0 %v2837
    %3201 = vmatmul.bf16.gmra.mxu0 %v2319
    %v3202 = vpop.f32.mrf.mxu0
    %v3203 = vadd.f32 0.0, %v3202
    %v3204 = vpop.f32.mrf.mxu0
    %3205 = vdwg.mxu0
    %3206 = vmatpush.bf16.msra.mxu0 %v2957
    %3207 = vmatpush.bf16.msra.mxu0 %v2949
    %3208 = vmatpush.bf16.msra.mxu0 %v2941
    %3209 = vmatpush.bf16.msra.mxu0 %v2933
    %3210 = vmatpush.bf16.msra.mxu0 %v2925
    %3211 = vmatpush.bf16.msra.mxu0 %v2917
    %3212 = vmatpush.bf16.msra.mxu0 %v2909
    %3213 = vmatpush.bf16.msra.mxu0 %v2901
    %3214 = vmatmul.bf16.gmra.mxu0 %v2320
    %v3215 = vpop.f32.mrf.mxu0
    %v3216 = vadd.f32 %v3203, %v3215
    %v3217 = vpop.f32.mrf.mxu0
    %3218 = vdwg.mxu0
    %3219 = vmatpush.bf16.msra.mxu0 %v2894
    %3220 = vmatpush.bf16.msra.mxu0 %v2886
    %3221 = vmatpush.bf16.msra.mxu0 %v2878
    %3222 = vmatpush.bf16.msra.mxu0 %v2870
    %3223 = vmatpush.bf16.msra.mxu0 %v2862
    %3224 = vmatpush.bf16.msra.mxu0 %v2854
    %3225 = vmatpush.bf16.msra.mxu0 %v2846
    %3226 = vmatpush.bf16.msra.mxu0 %v2838
    %3227 = vmatmul.bf16.gmra.mxu0 %v2319
    %v3228 = vpop.f32.mrf.mxu0
    %v3229 = vadd.f32 0.0, %v3228
    %v3230 = vpop.f32.mrf.mxu0
    %3231 = vdwg.mxu0
    %3232 = vmatpush.bf16.msra.mxu0 %v2958
    %3233 = vmatpush.bf16.msra.mxu0 %v2950
    %3234 = vmatpush.bf16.msra.mxu0 %v2942
    %3235 = vmatpush.bf16.msra.mxu0 %v2934
    %3236 = vmatpush.bf16.msra.mxu0 %v2926
    %3237 = vmatpush.bf16.msra.mxu0 %v2918
    %3238 = vmatpush.bf16.msra.mxu0 %v2910
    %3239 = vmatpush.bf16.msra.mxu0 %v2902
    %3240 = vmatmul.bf16.gmra.mxu0 %v2320
    %v3241 = vpop.f32.mrf.mxu0
    %v3242 = vadd.f32 %v3229, %v3241
    %v3243 = vpop.f32.mrf.mxu0
    %3244 = vdwg.mxu0
    %3245 = vmatpush.bf16.msra.mxu0 %v2895
    %3246 = vmatpush.bf16.msra.mxu0 %v2887
    %3247 = vmatpush.bf16.msra.mxu0 %v2879
    %3248 = vmatpush.bf16.msra.mxu0 %v2871
    %3249 = vmatpush.bf16.msra.mxu0 %v2863
    %3250 = vmatpush.bf16.msra.mxu0 %v2855
    %3251 = vmatpush.bf16.msra.mxu0 %v2847
    %3252 = vmatpush.bf16.msra.mxu0 %v2839
    %3253 = vmatmul.bf16.gmra.mxu0 %v2319
    %v3254 = vpop.f32.mrf.mxu0
    %v3255 = vadd.f32 0.0, %v3254
    %v3256 = vpop.f32.mrf.mxu0
    %3257 = vdwg.mxu0
    %3258 = vmatpush.bf16.msra.mxu0 %v2959
    %3259 = vmatpush.bf16.msra.mxu0 %v2951
    %3260 = vmatpush.bf16.msra.mxu0 %v2943
    %3261 = vmatpush.bf16.msra.mxu0 %v2935
    %3262 = vmatpush.bf16.msra.mxu0 %v2927
    %3263 = vmatpush.bf16.msra.mxu0 %v2919
    %3264 = vmatpush.bf16.msra.mxu0 %v2911
    %3265 = vmatpush.bf16.msra.mxu0 %v2903
    %3266 = vmatmul.bf16.gmra.mxu0 %v2320
    %v3267 = vpop.f32.mrf.mxu0
    %v3268 = vadd.f32 %v3255, %v3267
    %v3269 = vpop.f32.mrf.mxu0
    %3270 = vdwg.mxu0
    %3271 = vmatpush.bf16.msra.mxu0 %v2896
    %3272 = vmatpush.bf16.msra.mxu0 %v2888
    %3273 = vmatpush.bf16.msra.mxu0 %v2880
    %3274 = vmatpush.bf16.msra.mxu0 %v2872
    %3275 = vmatpush.bf16.msra.mxu0 %v2864
    %3276 = vmatpush.bf16.msra.mxu0 %v2856
    %3277 = vmatpush.bf16.msra.mxu0 %v2848
    %3278 = vmatpush.bf16.msra.mxu0 %v2840
    %3279 = vmatmul.bf16.gmra.mxu0 %v2319
    %v3280 = vpop.f32.mrf.mxu0
    %v3281 = vadd.f32 0.0, %v3280
    %v3282 = vpop.f32.mrf.mxu0
    %3283 = vdwg.mxu0
    %3284 = vmatpush.bf16.msra.mxu0 %v2960
    %3285 = vmatpush.bf16.msra.mxu0 %v2952
    %3286 = vmatpush.bf16.msra.mxu0 %v2944
    %3287 = vmatpush.bf16.msra.mxu0 %v2936
    %3288 = vmatpush.bf16.msra.mxu0 %v2928
    %3289 = vmatpush.bf16.msra.mxu0 %v2920
    %3290 = vmatpush.bf16.msra.mxu0 %v2912
    %3291 = vmatpush.bf16.msra.mxu0 %v2904
    %3292 = vmatmul.bf16.gmra.mxu0 %v2320
    %v3293 = vpop.f32.mrf.mxu0
    %v3294 = vadd.f32 %v3281, %v3293
    %v3295 = vpop.f32.mrf.mxu0
    %3296 = vdwg.mxu0
    %v3305 = vrot.slane %v3138, 7
    %v3306 = vrot.slane %v3164, 6
    %v3307 = vrot.slane %v3190, 5
    %v3308 = vrot.slane %v3216, 4
    %v3309 = vrot.slane %v3242, 3
    %v3310 = vrot.slane %v3268, 2
    %v3311 = vrot.slane %v3294, 1
    %v3312 = vsel %vm169, %v3112, %v3305
    %v3313 = vsel %vm2214, %v3306, %v3307
    %v3314 = vsel %vm2216, %v3312, %v3313
    %v3315 = vsel %vm2218, %v3308, %v3309
    %v3316 = vsel %vm2220, %v3310, %v3311
    %v3317 = vsel %vm2222, %v3315, %v3316
    %v3318 = vsel %vm2224, %v3314, %v3317
    %v3320 = vadd.f32 %v2313, %v3318
    %v3321 = vxor.u32 %v3320, 2147483648
    %v3322 = vmul.f32 %v3321, 1.442695
    %v3323 = vpow.pop %v3322
    %v3324 = vadd.f32 %v3323, 1.0
    %v3325 = vrcp.pop %v3324
    %v3326 = vmul.f32 %v3324, %v3325
    %v3327 = vsub.f32 1.0, %v3326
    %v3328 = vmul.f32 %v3325, %v3327
    %v3329 = vadd.f32 %v3325, %v3328
    %vm3330 = vweird.f32 %v3324
    %vm3331 = vweird.f32 %v3325
    %vm3332 = vmor %vm3330, %vm3331
    %v3333 = vsel %vm3332, %v3325, %v3329
    %v3334 = vand.u32 2147483647, %v3324
    %vm3335 = vcmp.eq.f32.partialorder %v3334, 8.507059e+37
    %v3336 = vand.u32 %v3324, 2147483648
    %v3337 = vor.u32 1.1754944e-38, %v3336
    %v3338 = vsel %vm3335, %v3337, %v3333
    %v3339 = vmul.f32 1.0, %v3338
    %v3341 = vrot.slane %v3320, 2
    %v3343 = vxor.u32 %v3341, 2147483648
    %v3344 = vmul.f32 %v3343, 1.442695
    %v3345 = vpow.pop %v3344
    %v3346 = vadd.f32 %v3345, 1.0
    %v3347 = vrcp.pop %v3346
    %v3348 = vmul.f32 %v3346, %v3347
    %v3349 = vsub.f32 1.0, %v3348
    %v3350 = vmul.f32 %v3347, %v3349
    %v3351 = vadd.f32 %v3347, %v3350
    %vm3352 = vweird.f32 %v3346
    %vm3353 = vweird.f32 %v3347
    %vm3354 = vmor %vm3352, %vm3353
    %v3355 = vsel %vm3354, %v3347, %v3351
    %v3356 = vand.u32 2147483647, %v3346
    %vm3357 = vcmp.eq.f32.partialorder %v3356, 8.507059e+37
    %v3358 = vand.u32 %v3346, 2147483648
    %v3359 = vor.u32 1.1754944e-38, %v3358
    %v3360 = vsel %vm3357, %v3359, %v3355
    %v3361 = vmul.f32 1.0, %v3360
    %v3362 = vrot.slane %v3320, 4
    %v3364 = vtanh.pop %v3362
    %v3365 = vrot.slane %v3320, 6
    %v3367 = vxor.u32 %v3365, 2147483648
    %v3368 = vmul.f32 %v3367, 1.442695
    %v3369 = vpow.pop %v3368
    %v3370 = vadd.f32 %v3369, 1.0
    %v3371 = vrcp.pop %v3370
    %v3372 = vmul.f32 %v3370, %v3371
    %v3373 = vsub.f32 1.0, %v3372
    %v3374 = vmul.f32 %v3371, %v3373
    %v3375 = vadd.f32 %v3371, %v3374
    %vm3376 = vweird.f32 %v3370
    %vm3377 = vweird.f32 %v3371
    %vm3378 = vmor %vm3376, %vm3377
    %v3379 = vsel %vm3378, %v3371, %v3375
    %v3380 = vand.u32 2147483647, %v3370
    %vm3381 = vcmp.eq.f32.partialorder %v3380, 8.507059e+37
    %v3382 = vand.u32 %v3370, 2147483648
    %v3383 = vor.u32 1.1754944e-38, %v3382
    %v3384 = vsel %vm3381, %v3383, %v3379
    %v3385 = vmul.f32 1.0, %v3384
    %v3386 = vmul.f32 %v3361, %v2295
    %v3387 = vmul.f32 %v3339, %v3364
    %v3388 = vadd.f32 %v3386, %v3387
    %v3389 = vtanh.pop %v3388
    %v3390 = vmul.f32 %v3385, %v3389
    %s3391 = scalar_lea.vmem %s7, 1
    %3392 = vst.msk [vmem:[%s3391] ss:$8 sm:$0x3] %vm2301, %v3390
    %3393 = vst.msk [vmem:[%s3391] ss:$8 sm:$0x0] %vm2301, %v3390
    %s3394 = sadd.s32 %s2304, 1
    %p3395 = scmp.eq.s32.totalorder %s3394, 7
    // Predicated region
    $region54: #{oracle_gold_rollout.2} parent=1 // pred_check
      %p3396 = pneg %p3395
    $region55: #{oracle_gold_rollout.2} parent=1 // pred_check_branch
      %3398 = sbr.rel (%p3396) target = $region57
    $region56: #{oracle_gold_rollout.2} parent=1 // pred_region
      %3399 = vst.msk [vmem:[#allocation13] sm:$0x3] %vm2301, %v3388
    $region57: #{oracle_gold_rollout.2} parent=1 // pred_fallthru
      _
    %s3400 = scalar_lea.vmem [#allocation4], 2
    %v3401 = vld [vmem:[%s3400] ss:$8 sm:$0xf]
    %v3402 = vld [vmem:[%s3400] ss:$8 sm:$0xf0]
    %v3403 = vor.u32 %v3401, %v3402
    %v3405 = vperm.slane %v3390, 0
    %v3406 = vperm.slane %v3390, 1
    %v3409 = vpack.c.bf16 %v3405, %v3405
    %v3410 = vpack.c.bf16 %v3406, %v3406
    %v3411 = vld [vmem:[#allocation11] sm:$0xff]
    %v3412 = vld [vmem:[#allocation11 + $0x8] sm:$0xff]
    %v3413 = vld [vmem:[#allocation11 + $0x10] sm:$0xff]
    %v3414 = vld [vmem:[#allocation11 + $0x18] sm:$0xff]
    %v3415 = vld [vmem:[#allocation11 + $0x20] sm:$0xff]
    %v3416 = vld [vmem:[#allocation11 + $0x28] sm:$0xff]
    %v3417 = vld [vmem:[#allocation11 + $0x30] sm:$0xff]
    %v3418 = vld [vmem:[#allocation11 + $0x38] sm:$0xff]
    %v3419 = vld [vmem:[#allocation11 + $0x40] sm:$0xff]
    %v3420 = vld [vmem:[#allocation11 + $0x48] sm:$0xff]
    %v3421 = vld [vmem:[#allocation11 + $0x50] sm:$0xff]
    %v3422 = vld [vmem:[#allocation11 + $0x58] sm:$0xff]
    %v3423 = vld [vmem:[#allocation11 + $0x60] sm:$0xff]
    %v3424 = vld [vmem:[#allocation11 + $0x68] sm:$0xff]
    %v3425 = vld [vmem:[#allocation11 + $0x70] sm:$0xff]
    %v3426 = vld [vmem:[#allocation11 + $0x78] sm:$0xff]
    %v3427 = vld [vmem:[#allocation11 + $0x80] sm:$0xff]
    %v3428 = vld [vmem:[#allocation11 + $0x88] sm:$0xff]
    %v3429 = vld [vmem:[#allocation11 + $0x90] sm:$0xff]
    %v3430 = vld [vmem:[#allocation11 + $0x98] sm:$0xff]
    %v3431 = vld [vmem:[#allocation11 + $0xa0] sm:$0xff]
    %v3432 = vld [vmem:[#allocation11 + $0xa8] sm:$0xff]
    %v3433 = vld [vmem:[#allocation11 + $0xb0] sm:$0xff]
    %v3434 = vld [vmem:[#allocation11 + $0xb8] sm:$0xff]
    %v3435 = vld [vmem:[#allocation11 + $0xc0] sm:$0xff]
    %v3436 = vld [vmem:[#allocation11 + $0xc8] sm:$0xff]
    %v3437 = vld [vmem:[#allocation11 + $0xd0] sm:$0xff]
    %v3438 = vld [vmem:[#allocation11 + $0xd8] sm:$0xff]
    %v3439 = vld [vmem:[#allocation11 + $0xe0] sm:$0xff]
    %v3440 = vld [vmem:[#allocation11 + $0xe8] sm:$0xff]
    %v3441 = vld [vmem:[#allocation11 + $0xf0] sm:$0xff]
    %v3442 = vld [vmem:[#allocation11 + $0xf8] sm:$0xff]
    %v3443 = vld [vmem:[#allocation11 + $0x100] sm:$0xff]
    %v3444 = vld [vmem:[#allocation11 + $0x108] sm:$0xff]
    %v3445 = vld [vmem:[#allocation11 + $0x110] sm:$0xff]
    %v3446 = vld [vmem:[#allocation11 + $0x118] sm:$0xff]
    %v3447 = vld [vmem:[#allocation11 + $0x120] sm:$0xff]
    %v3448 = vld [vmem:[#allocation11 + $0x128] sm:$0xff]
    %v3449 = vld [vmem:[#allocation11 + $0x130] sm:$0xff]
    %v3450 = vld [vmem:[#allocation11 + $0x138] sm:$0xff]
    %v3451 = vld [vmem:[#allocation11 + $0x140] sm:$0xff]
    %v3452 = vld [vmem:[#allocation11 + $0x148] sm:$0xff]
    %v3453 = vld [vmem:[#allocation11 + $0x150] sm:$0xff]
    %v3454 = vld [vmem:[#allocation11 + $0x158] sm:$0xff]
    %v3455 = vld [vmem:[#allocation11 + $0x160] sm:$0xff]
    %v3456 = vld [vmem:[#allocation11 + $0x168] sm:$0xff]
    %v3457 = vld [vmem:[#allocation11 + $0x170] sm:$0xff]
    %v3458 = vld [vmem:[#allocation11 + $0x178] sm:$0xff]
    %v3459 = vld [vmem:[#allocation11 + $0x180] sm:$0xff]
    %v3460 = vld [vmem:[#allocation11 + $0x188] sm:$0xff]
    %v3461 = vld [vmem:[#allocation11 + $0x190] sm:$0xff]
    %v3462 = vld [vmem:[#allocation11 + $0x198] sm:$0xff]
    %v3463 = vld [vmem:[#allocation11 + $0x1a0] sm:$0xff]
    %v3464 = vld [vmem:[#allocation11 + $0x1a8] sm:$0xff]
    %v3465 = vld [vmem:[#allocation11 + $0x1b0] sm:$0xff]
    %v3466 = vld [vmem:[#allocation11 + $0x1b8] sm:$0xff]
    %v3467 = vld [vmem:[#allocation11 + $0x1c0] sm:$0xff]
    %v3468 = vld [vmem:[#allocation11 + $0x1c8] sm:$0xff]
    %v3469 = vld [vmem:[#allocation11 + $0x1d0] sm:$0xff]
    %v3470 = vld [vmem:[#allocation11 + $0x1d8] sm:$0xff]
    %v3471 = vld [vmem:[#allocation11 + $0x1e0] sm:$0xff]
    %v3472 = vld [vmem:[#allocation11 + $0x1e8] sm:$0xff]
    %v3473 = vld [vmem:[#allocation11 + $0x1f0] sm:$0xff]
    %v3474 = vld [vmem:[#allocation11 + $0x1f8] sm:$0xff]
    %v3475 = vld [vmem:[#allocation11 + $0x200] sm:$0xff]
    %v3476 = vld [vmem:[#allocation11 + $0x208] sm:$0xff]
    %v3477 = vld [vmem:[#allocation11 + $0x210] sm:$0xff]
    %v3478 = vld [vmem:[#allocation11 + $0x218] sm:$0xff]
    %v3479 = vld [vmem:[#allocation11 + $0x220] sm:$0xff]
    %v3480 = vld [vmem:[#allocation11 + $0x228] sm:$0xff]
    %v3481 = vld [vmem:[#allocation11 + $0x230] sm:$0xff]
    %v3482 = vld [vmem:[#allocation11 + $0x238] sm:$0xff]
    %v3483 = vld [vmem:[#allocation11 + $0x240] sm:$0xff]
    %v3484 = vld [vmem:[#allocation11 + $0x248] sm:$0xff]
    %v3485 = vld [vmem:[#allocation11 + $0x250] sm:$0xff]
    %v3486 = vld [vmem:[#allocation11 + $0x258] sm:$0xff]
    %v3487 = vld [vmem:[#allocation11 + $0x260] sm:$0xff]
    %v3488 = vld [vmem:[#allocation11 + $0x268] sm:$0xff]
    %v3489 = vld [vmem:[#allocation11 + $0x270] sm:$0xff]
    %v3490 = vld [vmem:[#allocation11 + $0x278] sm:$0xff]
    %v3491 = vld [vmem:[#allocation11 + $0x280] sm:$0xff]
    %v3492 = vld [vmem:[#allocation11 + $0x288] sm:$0xff]
    %v3493 = vld [vmem:[#allocation11 + $0x290] sm:$0xff]
    %v3494 = vld [vmem:[#allocation11 + $0x298] sm:$0xff]
    %v3495 = vld [vmem:[#allocation11 + $0x2a0] sm:$0xff]
    %v3496 = vld [vmem:[#allocation11 + $0x2a8] sm:$0xff]
    %v3497 = vld [vmem:[#allocation11 + $0x2b0] sm:$0xff]
    %v3498 = vld [vmem:[#allocation11 + $0x2b8] sm:$0xff]
    %v3499 = vld [vmem:[#allocation11 + $0x2c0] sm:$0xff]
    %v3500 = vld [vmem:[#allocation11 + $0x2c8] sm:$0xff]
    %v3501 = vld [vmem:[#allocation11 + $0x2d0] sm:$0xff]
    %v3502 = vld [vmem:[#allocation11 + $0x2d8] sm:$0xff]
    %v3503 = vld [vmem:[#allocation11 + $0x2e0] sm:$0xff]
    %v3504 = vld [vmem:[#allocation11 + $0x2e8] sm:$0xff]
    %v3505 = vld [vmem:[#allocation11 + $0x2f0] sm:$0xff]
    %v3506 = vld [vmem:[#allocation11 + $0x2f8] sm:$0xff]
    %v3507 = vld [vmem:[#allocation11 + $0x300] sm:$0xff]
    %v3508 = vld [vmem:[#allocation11 + $0x308] sm:$0xff]
    %v3509 = vld [vmem:[#allocation11 + $0x310] sm:$0xff]
    %v3510 = vld [vmem:[#allocation11 + $0x318] sm:$0xff]
    %v3511 = vld [vmem:[#allocation11 + $0x320] sm:$0xff]
    %v3512 = vld [vmem:[#allocation11 + $0x328] sm:$0xff]
    %v3513 = vld [vmem:[#allocation11 + $0x330] sm:$0xff]
    %v3514 = vld [vmem:[#allocation11 + $0x338] sm:$0xff]
    %v3515 = vld [vmem:[#allocation11 + $0x340] sm:$0xff]
    %v3516 = vld [vmem:[#allocation11 + $0x348] sm:$0xff]
    %v3517 = vld [vmem:[#allocation11 + $0x350] sm:$0xff]
    %v3518 = vld [vmem:[#allocation11 + $0x358] sm:$0xff]
    %v3519 = vld [vmem:[#allocation11 + $0x360] sm:$0xff]
    %v3520 = vld [vmem:[#allocation11 + $0x368] sm:$0xff]
    %v3521 = vld [vmem:[#allocation11 + $0x370] sm:$0xff]
    %v3522 = vld [vmem:[#allocation11 + $0x378] sm:$0xff]
    %v3523 = vld [vmem:[#allocation11 + $0x380] sm:$0xff]
    %v3524 = vld [vmem:[#allocation11 + $0x388] sm:$0xff]
    %v3525 = vld [vmem:[#allocation11 + $0x390] sm:$0xff]
    %v3526 = vld [vmem:[#allocation11 + $0x398] sm:$0xff]
    %v3527 = vld [vmem:[#allocation11 + $0x3a0] sm:$0xff]
    %v3528 = vld [vmem:[#allocation11 + $0x3a8] sm:$0xff]
    %v3529 = vld [vmem:[#allocation11 + $0x3b0] sm:$0xff]
    %v3530 = vld [vmem:[#allocation11 + $0x3b8] sm:$0xff]
    %v3531 = vld [vmem:[#allocation11 + $0x3c0] sm:$0xff]
    %v3532 = vld [vmem:[#allocation11 + $0x3c8] sm:$0xff]
    %v3533 = vld [vmem:[#allocation11 + $0x3d0] sm:$0xff]
    %v3534 = vld [vmem:[#allocation11 + $0x3d8] sm:$0xff]
    %v3535 = vld [vmem:[#allocation11 + $0x3e0] sm:$0xff]
    %v3536 = vld [vmem:[#allocation11 + $0x3e8] sm:$0xff]
    %v3537 = vld [vmem:[#allocation11 + $0x3f0] sm:$0xff]
    %v3538 = vld [vmem:[#allocation11 + $0x3f8] sm:$0xff]
    %v3667 = vunpack.c.l.b16 %v3411
    %v3668 = vunpack.c.h.b16 %v3411
    %v3669 = vunpack.c.l.b16 %v3412
    %v3670 = vunpack.c.h.b16 %v3412
    %v3671 = vunpack.c.l.b16 %v3413
    %v3672 = vunpack.c.h.b16 %v3413
    %v3673 = vunpack.c.l.b16 %v3414
    %v3674 = vunpack.c.h.b16 %v3414
    %v3675 = vunpack.c.l.b16 %v3415
    %v3676 = vunpack.c.h.b16 %v3415
    %v3677 = vunpack.c.l.b16 %v3416
    %v3678 = vunpack.c.h.b16 %v3416
    %v3679 = vunpack.c.l.b16 %v3417
    %v3680 = vunpack.c.h.b16 %v3417
    %v3681 = vunpack.c.l.b16 %v3418
    %v3682 = vunpack.c.h.b16 %v3418
    %v3683 = vunpack.c.l.b16 %v3419
    %v3684 = vunpack.c.h.b16 %v3419
    %v3685 = vunpack.c.l.b16 %v3420
    %v3686 = vunpack.c.h.b16 %v3420
    %v3687 = vunpack.c.l.b16 %v3421
    %v3688 = vunpack.c.h.b16 %v3421
    %v3689 = vunpack.c.l.b16 %v3422
    %v3690 = vunpack.c.h.b16 %v3422
    %v3691 = vunpack.c.l.b16 %v3423
    %v3692 = vunpack.c.h.b16 %v3423
    %v3693 = vunpack.c.l.b16 %v3424
    %v3694 = vunpack.c.h.b16 %v3424
    %v3695 = vunpack.c.l.b16 %v3425
    %v3696 = vunpack.c.h.b16 %v3425
    %v3697 = vunpack.c.l.b16 %v3426
    %v3698 = vunpack.c.h.b16 %v3426
    %v3699 = vunpack.c.l.b16 %v3427
    %v3700 = vunpack.c.h.b16 %v3427
    %v3701 = vunpack.c.l.b16 %v3428
    %v3702 = vunpack.c.h.b16 %v3428
    %v3703 = vunpack.c.l.b16 %v3429
    %v3704 = vunpack.c.h.b16 %v3429
    %v3705 = vunpack.c.l.b16 %v3430
    %v3706 = vunpack.c.h.b16 %v3430
    %v3707 = vunpack.c.l.b16 %v3431
    %v3708 = vunpack.c.h.b16 %v3431
    %v3709 = vunpack.c.l.b16 %v3432
    %v3710 = vunpack.c.h.b16 %v3432
    %v3711 = vunpack.c.l.b16 %v3433
    %v3712 = vunpack.c.h.b16 %v3433
    %v3713 = vunpack.c.l.b16 %v3434
    %v3714 = vunpack.c.h.b16 %v3434
    %v3715 = vunpack.c.l.b16 %v3435
    %v3716 = vunpack.c.h.b16 %v3435
    %v3717 = vunpack.c.l.b16 %v3436
    %v3718 = vunpack.c.h.b16 %v3436
    %v3719 = vunpack.c.l.b16 %v3437
    %v3720 = vunpack.c.h.b16 %v3437
    %v3721 = vunpack.c.l.b16 %v3438
    %v3722 = vunpack.c.h.b16 %v3438
    %v3723 = vunpack.c.l.b16 %v3439
    %v3724 = vunpack.c.h.b16 %v3439
    %v3725 = vunpack.c.l.b16 %v3440
    %v3726 = vunpack.c.h.b16 %v3440
    %v3727 = vunpack.c.l.b16 %v3441
    %v3728 = vunpack.c.h.b16 %v3441
    %v3729 = vunpack.c.l.b16 %v3442
    %v3730 = vunpack.c.h.b16 %v3442
    %v3731 = vunpack.c.l.b16 %v3443
    %v3732 = vunpack.c.h.b16 %v3443
    %v3733 = vunpack.c.l.b16 %v3444
    %v3734 = vunpack.c.h.b16 %v3444
    %v3735 = vunpack.c.l.b16 %v3445
    %v3736 = vunpack.c.h.b16 %v3445
    %v3737 = vunpack.c.l.b16 %v3446
    %v3738 = vunpack.c.h.b16 %v3446
    %v3739 = vunpack.c.l.b16 %v3447
    %v3740 = vunpack.c.h.b16 %v3447
    %v3741 = vunpack.c.l.b16 %v3448
    %v3742 = vunpack.c.h.b16 %v3448
    %v3743 = vunpack.c.l.b16 %v3449
    %v3744 = vunpack.c.h.b16 %v3449
    %v3745 = vunpack.c.l.b16 %v3450
    %v3746 = vunpack.c.h.b16 %v3450
    %v3747 = vunpack.c.l.b16 %v3451
    %v3748 = vunpack.c.h.b16 %v3451
    %v3749 = vunpack.c.l.b16 %v3452
    %v3750 = vunpack.c.h.b16 %v3452
    %v3751 = vunpack.c.l.b16 %v3453
    %v3752 = vunpack.c.h.b16 %v3453
    %v3753 = vunpack.c.l.b16 %v3454
    %v3754 = vunpack.c.h.b16 %v3454
    %v3755 = vunpack.c.l.b16 %v3455
    %v3756 = vunpack.c.h.b16 %v3455
    %v3757 = vunpack.c.l.b16 %v3456
    %v3758 = vunpack.c.h.b16 %v3456
    %v3759 = vunpack.c.l.b16 %v3457
    %v3760 = vunpack.c.h.b16 %v3457
    %v3761 = vunpack.c.l.b16 %v3458
    %v3762 = vunpack.c.h.b16 %v3458
    %v3763 = vunpack.c.l.b16 %v3459
    %v3764 = vunpack.c.h.b16 %v3459
    %v3765 = vunpack.c.l.b16 %v3460
    %v3766 = vunpack.c.h.b16 %v3460
    %v3767 = vunpack.c.l.b16 %v3461
    %v3768 = vunpack.c.h.b16 %v3461
    %v3769 = vunpack.c.l.b16 %v3462
    %v3770 = vunpack.c.h.b16 %v3462
    %v3771 = vunpack.c.l.b16 %v3463
    %v3772 = vunpack.c.h.b16 %v3463
    %v3773 = vunpack.c.l.b16 %v3464
    %v3774 = vunpack.c.h.b16 %v3464
    %v3775 = vunpack.c.l.b16 %v3465
    %v3776 = vunpack.c.h.b16 %v3465
    %v3777 = vunpack.c.l.b16 %v3466
    %v3778 = vunpack.c.h.b16 %v3466
    %v3779 = vunpack.c.l.b16 %v3467
    %v3780 = vunpack.c.h.b16 %v3467
    %v3781 = vunpack.c.l.b16 %v3468
    %v3782 = vunpack.c.h.b16 %v3468
    %v3783 = vunpack.c.l.b16 %v3469
    %v3784 = vunpack.c.h.b16 %v3469
    %v3785 = vunpack.c.l.b16 %v3470
    %v3786 = vunpack.c.h.b16 %v3470
    %v3787 = vunpack.c.l.b16 %v3471
    %v3788 = vunpack.c.h.b16 %v3471
    %v3789 = vunpack.c.l.b16 %v3472
    %v3790 = vunpack.c.h.b16 %v3472
    %v3791 = vunpack.c.l.b16 %v3473
    %v3792 = vunpack.c.h.b16 %v3473
    %v3793 = vunpack.c.l.b16 %v3474
    %v3794 = vunpack.c.h.b16 %v3474
    %v3795 = vunpack.c.l.b16 %v3475
    %v3796 = vunpack.c.h.b16 %v3475
    %v3797 = vunpack.c.l.b16 %v3476
    %v3798 = vunpack.c.h.b16 %v3476
    %v3799 = vunpack.c.l.b16 %v3477
    %v3800 = vunpack.c.h.b16 %v3477
    %v3801 = vunpack.c.l.b16 %v3478
    %v3802 = vunpack.c.h.b16 %v3478
    %v3803 = vunpack.c.l.b16 %v3479
    %v3804 = vunpack.c.h.b16 %v3479
    %v3805 = vunpack.c.l.b16 %v3480
    %v3806 = vunpack.c.h.b16 %v3480
    %v3807 = vunpack.c.l.b16 %v3481
    %v3808 = vunpack.c.h.b16 %v3481
    %v3809 = vunpack.c.l.b16 %v3482
    %v3810 = vunpack.c.h.b16 %v3482
    %v3811 = vunpack.c.l.b16 %v3483
    %v3812 = vunpack.c.h.b16 %v3483
    %v3813 = vunpack.c.l.b16 %v3484
    %v3814 = vunpack.c.h.b16 %v3484
    %v3815 = vunpack.c.l.b16 %v3485
    %v3816 = vunpack.c.h.b16 %v3485
    %v3817 = vunpack.c.l.b16 %v3486
    %v3818 = vunpack.c.h.b16 %v3486
    %v3819 = vunpack.c.l.b16 %v3487
    %v3820 = vunpack.c.h.b16 %v3487
    %v3821 = vunpack.c.l.b16 %v3488
    %v3822 = vunpack.c.h.b16 %v3488
    %v3823 = vunpack.c.l.b16 %v3489
    %v3824 = vunpack.c.h.b16 %v3489
    %v3825 = vunpack.c.l.b16 %v3490
    %v3826 = vunpack.c.h.b16 %v3490
    %v3827 = vunpack.c.l.b16 %v3491
    %v3828 = vunpack.c.h.b16 %v3491
    %v3829 = vunpack.c.l.b16 %v3492
    %v3830 = vunpack.c.h.b16 %v3492
    %v3831 = vunpack.c.l.b16 %v3493
    %v3832 = vunpack.c.h.b16 %v3493
    %v3833 = vunpack.c.l.b16 %v3494
    %v3834 = vunpack.c.h.b16 %v3494
    %v3835 = vunpack.c.l.b16 %v3495
    %v3836 = vunpack.c.h.b16 %v3495
    %v3837 = vunpack.c.l.b16 %v3496
    %v3838 = vunpack.c.h.b16 %v3496
    %v3839 = vunpack.c.l.b16 %v3497
    %v3840 = vunpack.c.h.b16 %v3497
    %v3841 = vunpack.c.l.b16 %v3498
    %v3842 = vunpack.c.h.b16 %v3498
    %v3843 = vunpack.c.l.b16 %v3499
    %v3844 = vunpack.c.h.b16 %v3499
    %v3845 = vunpack.c.l.b16 %v3500
    %v3846 = vunpack.c.h.b16 %v3500
    %v3847 = vunpack.c.l.b16 %v3501
    %v3848 = vunpack.c.h.b16 %v3501
    %v3849 = vunpack.c.l.b16 %v3502
    %v3850 = vunpack.c.h.b16 %v3502
    %v3851 = vunpack.c.l.b16 %v3503
    %v3852 = vunpack.c.h.b16 %v3503
    %v3853 = vunpack.c.l.b16 %v3504
    %v3854 = vunpack.c.h.b16 %v3504
    %v3855 = vunpack.c.l.b16 %v3505
    %v3856 = vunpack.c.h.b16 %v3505
    %v3857 = vunpack.c.l.b16 %v3506
    %v3858 = vunpack.c.h.b16 %v3506
    %v3859 = vunpack.c.l.b16 %v3507
    %v3860 = vunpack.c.h.b16 %v3507
    %v3861 = vunpack.c.l.b16 %v3508
    %v3862 = vunpack.c.h.b16 %v3508
    %v3863 = vunpack.c.l.b16 %v3509
    %v3864 = vunpack.c.h.b16 %v3509
    %v3865 = vunpack.c.l.b16 %v3510
    %v3866 = vunpack.c.h.b16 %v3510
    %v3867 = vunpack.c.l.b16 %v3511
    %v3868 = vunpack.c.h.b16 %v3511
    %v3869 = vunpack.c.l.b16 %v3512
    %v3870 = vunpack.c.h.b16 %v3512
    %v3871 = vunpack.c.l.b16 %v3513
    %v3872 = vunpack.c.h.b16 %v3513
    %v3873 = vunpack.c.l.b16 %v3514
    %v3874 = vunpack.c.h.b16 %v3514
    %v3875 = vunpack.c.l.b16 %v3515
    %v3876 = vunpack.c.h.b16 %v3515
    %v3877 = vunpack.c.l.b16 %v3516
    %v3878 = vunpack.c.h.b16 %v3516
    %v3879 = vunpack.c.l.b16 %v3517
    %v3880 = vunpack.c.h.b16 %v3517
    %v3881 = vunpack.c.l.b16 %v3518
    %v3882 = vunpack.c.h.b16 %v3518
    %v3883 = vunpack.c.l.b16 %v3519
    %v3884 = vunpack.c.h.b16 %v3519
    %v3885 = vunpack.c.l.b16 %v3520
    %v3886 = vunpack.c.h.b16 %v3520
    %v3887 = vunpack.c.l.b16 %v3521
    %v3888 = vunpack.c.h.b16 %v3521
    %v3889 = vunpack.c.l.b16 %v3522
    %v3890 = vunpack.c.h.b16 %v3522
    %v3891 = vunpack.c.l.b16 %v3523
    %v3892 = vunpack.c.h.b16 %v3523
    %v3893 = vunpack.c.l.b16 %v3524
    %v3894 = vunpack.c.h.b16 %v3524
    %v3895 = vunpack.c.l.b16 %v3525
    %v3896 = vunpack.c.h.b16 %v3525
    %v3897 = vunpack.c.l.b16 %v3526
    %v3898 = vunpack.c.h.b16 %v3526
    %v3899 = vunpack.c.l.b16 %v3527
    %v3900 = vunpack.c.h.b16 %v3527
    %v3901 = vunpack.c.l.b16 %v3528
    %v3902 = vunpack.c.h.b16 %v3528
    %v3903 = vunpack.c.l.b16 %v3529
    %v3904 = vunpack.c.h.b16 %v3529
    %v3905 = vunpack.c.l.b16 %v3530
    %v3906 = vunpack.c.h.b16 %v3530
    %v3907 = vunpack.c.l.b16 %v3531
    %v3908 = vunpack.c.h.b16 %v3531
    %v3909 = vunpack.c.l.b16 %v3532
    %v3910 = vunpack.c.h.b16 %v3532
    %v3911 = vunpack.c.l.b16 %v3533
    %v3912 = vunpack.c.h.b16 %v3533
    %v3913 = vunpack.c.l.b16 %v3534
    %v3914 = vunpack.c.h.b16 %v3534
    %v3915 = vunpack.c.l.b16 %v3535
    %v3916 = vunpack.c.h.b16 %v3535
    %v3917 = vunpack.c.l.b16 %v3536
    %v3918 = vunpack.c.h.b16 %v3536
    %v3919 = vunpack.c.l.b16 %v3537
    %v3920 = vunpack.c.h.b16 %v3537
    %v3921 = vunpack.c.l.b16 %v3538
    %v3922 = vunpack.c.h.b16 %v3538
    %v3923 = vpack.c.b16 %v3675, %v3667
    %v3924 = vpack.c.b16 %v3676, %v3668
    %v3925 = vpack.c.b16 %v3677, %v3669
    %v3926 = vpack.c.b16 %v3678, %v3670
    %v3927 = vpack.c.b16 %v3679, %v3671
    %v3928 = vpack.c.b16 %v3680, %v3672
    %v3929 = vpack.c.b16 %v3681, %v3673
    %v3930 = vpack.c.b16 %v3682, %v3674
    %v3931 = vpack.c.b16 %v3691, %v3683
    %v3932 = vpack.c.b16 %v3692, %v3684
    %v3933 = vpack.c.b16 %v3693, %v3685
    %v3934 = vpack.c.b16 %v3694, %v3686
    %v3935 = vpack.c.b16 %v3695, %v3687
    %v3936 = vpack.c.b16 %v3696, %v3688
    %v3937 = vpack.c.b16 %v3697, %v3689
    %v3938 = vpack.c.b16 %v3698, %v3690
    %v3939 = vpack.c.b16 %v3707, %v3699
    %v3940 = vpack.c.b16 %v3708, %v3700
    %v3941 = vpack.c.b16 %v3709, %v3701
    %v3942 = vpack.c.b16 %v3710, %v3702
    %v3943 = vpack.c.b16 %v3711, %v3703
    %v3944 = vpack.c.b16 %v3712, %v3704
    %v3945 = vpack.c.b16 %v3713, %v3705
    %v3946 = vpack.c.b16 %v3714, %v3706
    %v3947 = vpack.c.b16 %v3723, %v3715
    %v3948 = vpack.c.b16 %v3724, %v3716
    %v3949 = vpack.c.b16 %v3725, %v3717
    %v3950 = vpack.c.b16 %v3726, %v3718
    %v3951 = vpack.c.b16 %v3727, %v3719
    %v3952 = vpack.c.b16 %v3728, %v3720
    %v3953 = vpack.c.b16 %v3729, %v3721
    %v3954 = vpack.c.b16 %v3730, %v3722
    %v3955 = vpack.c.b16 %v3739, %v3731
    %v3956 = vpack.c.b16 %v3740, %v3732
    %v3957 = vpack.c.b16 %v3741, %v3733
    %v3958 = vpack.c.b16 %v3742, %v3734
    %v3959 = vpack.c.b16 %v3743, %v3735
    %v3960 = vpack.c.b16 %v3744, %v3736
    %v3961 = vpack.c.b16 %v3745, %v3737
    %v3962 = vpack.c.b16 %v3746, %v3738
    %v3963 = vpack.c.b16 %v3755, %v3747
    %v3964 = vpack.c.b16 %v3756, %v3748
    %v3965 = vpack.c.b16 %v3757, %v3749
    %v3966 = vpack.c.b16 %v3758, %v3750
    %v3967 = vpack.c.b16 %v3759, %v3751
    %v3968 = vpack.c.b16 %v3760, %v3752
    %v3969 = vpack.c.b16 %v3761, %v3753
    %v3970 = vpack.c.b16 %v3762, %v3754
    %v3971 = vpack.c.b16 %v3771, %v3763
    %v3972 = vpack.c.b16 %v3772, %v3764
    %v3973 = vpack.c.b16 %v3773, %v3765
    %v3974 = vpack.c.b16 %v3774, %v3766
    %v3975 = vpack.c.b16 %v3775, %v3767
    %v3976 = vpack.c.b16 %v3776, %v3768
    %v3977 = vpack.c.b16 %v3777, %v3769
    %v3978 = vpack.c.b16 %v3778, %v3770
    %v3979 = vpack.c.b16 %v3787, %v3779
    %v3980 = vpack.c.b16 %v3788, %v3780
    %v3981 = vpack.c.b16 %v3789, %v3781
    %v3982 = vpack.c.b16 %v3790, %v3782
    %v3983 = vpack.c.b16 %v3791, %v3783
    %v3984 = vpack.c.b16 %v3792, %v3784
    %v3985 = vpack.c.b16 %v3793, %v3785
    %v3986 = vpack.c.b16 %v3794, %v3786
    %v3987 = vpack.c.b16 %v3803, %v3795
    %v3988 = vpack.c.b16 %v3804, %v3796
    %v3989 = vpack.c.b16 %v3805, %v3797
    %v3990 = vpack.c.b16 %v3806, %v3798
    %v3991 = vpack.c.b16 %v3807, %v3799
    %v3992 = vpack.c.b16 %v3808, %v3800
    %v3993 = vpack.c.b16 %v3809, %v3801
    %v3994 = vpack.c.b16 %v3810, %v3802
    %v3995 = vpack.c.b16 %v3819, %v3811
    %v3996 = vpack.c.b16 %v3820, %v3812
    %v3997 = vpack.c.b16 %v3821, %v3813
    %v3998 = vpack.c.b16 %v3822, %v3814
    %v3999 = vpack.c.b16 %v3823, %v3815
    %v4000 = vpack.c.b16 %v3824, %v3816
    %v4001 = vpack.c.b16 %v3825, %v3817
    %v4002 = vpack.c.b16 %v3826, %v3818
    %v4003 = vpack.c.b16 %v3835, %v3827
    %v4004 = vpack.c.b16 %v3836, %v3828
    %v4005 = vpack.c.b16 %v3837, %v3829
    %v4006 = vpack.c.b16 %v3838, %v3830
    %v4007 = vpack.c.b16 %v3839, %v3831
    %v4008 = vpack.c.b16 %v3840, %v3832
    %v4009 = vpack.c.b16 %v3841, %v3833
    %v4010 = vpack.c.b16 %v3842, %v3834
    %v4011 = vpack.c.b16 %v3851, %v3843
    %v4012 = vpack.c.b16 %v3852, %v3844
    %v4013 = vpack.c.b16 %v3853, %v3845
    %v4014 = vpack.c.b16 %v3854, %v3846
    %v4015 = vpack.c.b16 %v3855, %v3847
    %v4016 = vpack.c.b16 %v3856, %v3848
    %v4017 = vpack.c.b16 %v3857, %v3849
    %v4018 = vpack.c.b16 %v3858, %v3850
    %v4019 = vpack.c.b16 %v3867, %v3859
    %v4020 = vpack.c.b16 %v3868, %v3860
    %v4021 = vpack.c.b16 %v3869, %v3861
    %v4022 = vpack.c.b16 %v3870, %v3862
    %v4023 = vpack.c.b16 %v3871, %v3863
    %v4024 = vpack.c.b16 %v3872, %v3864
    %v4025 = vpack.c.b16 %v3873, %v3865
    %v4026 = vpack.c.b16 %v3874, %v3866
    %v4027 = vpack.c.b16 %v3883, %v3875
    %v4028 = vpack.c.b16 %v3884, %v3876
    %v4029 = vpack.c.b16 %v3885, %v3877
    %v4030 = vpack.c.b16 %v3886, %v3878
    %v4031 = vpack.c.b16 %v3887, %v3879
    %v4032 = vpack.c.b16 %v3888, %v3880
    %v4033 = vpack.c.b16 %v3889, %v3881
    %v4034 = vpack.c.b16 %v3890, %v3882
    %v4035 = vpack.c.b16 %v3899, %v3891
    %v4036 = vpack.c.b16 %v3900, %v3892
    %v4037 = vpack.c.b16 %v3901, %v3893
    %v4038 = vpack.c.b16 %v3902, %v3894
    %v4039 = vpack.c.b16 %v3903, %v3895
    %v4040 = vpack.c.b16 %v3904, %v3896
    %v4041 = vpack.c.b16 %v3905, %v3897
    %v4042 = vpack.c.b16 %v3906, %v3898
    %v4043 = vpack.c.b16 %v3915, %v3907
    %v4044 = vpack.c.b16 %v3916, %v3908
    %v4045 = vpack.c.b16 %v3917, %v3909
    %v4046 = vpack.c.b16 %v3918, %v3910
    %v4047 = vpack.c.b16 %v3919, %v3911
    %v4048 = vpack.c.b16 %v3920, %v3912
    %v4049 = vpack.c.b16 %v3921, %v3913
    %v4050 = vpack.c.b16 %v3922, %v3914
    %4179 = vmatpush.bf16.msra.mxu0 %v3979
    %4180 = vmatpush.bf16.msra.mxu0 %v3971
    %4181 = vmatpush.bf16.msra.mxu0 %v3963
    %4182 = vmatpush.bf16.msra.mxu0 %v3955
    %4183 = vmatpush.bf16.msra.mxu0 %v3947
    %4184 = vmatpush.bf16.msra.mxu0 %v3939
    %4185 = vmatpush.bf16.msra.mxu0 %v3931
    %4186 = vmatpush.bf16.msra.mxu0 %v3923
    %4187 = vmatmul.bf16.gmra.mxu0 %v3409
    %v4188 = vpop.f32.mrf.mxu0
    %v4189 = vadd.f32 0.0, %v4188
    %v4190 = vpop.f32.mrf.mxu0
    %4191 = vdwg.mxu0
    %4192 = vmatpush.bf16.msra.mxu0 %v4043
    %4193 = vmatpush.bf16.msra.mxu0 %v4035
    %4194 = vmatpush.bf16.msra.mxu0 %v4027
    %4195 = vmatpush.bf16.msra.mxu0 %v4019
    %4196 = vmatpush.bf16.msra.mxu0 %v4011
    %4197 = vmatpush.bf16.msra.mxu0 %v4003
    %4198 = vmatpush.bf16.msra.mxu0 %v3995
    %4199 = vmatpush.bf16.msra.mxu0 %v3987
    %4200 = vmatmul.bf16.gmra.mxu0 %v3410
    %v4201 = vpop.f32.mrf.mxu0
    %v4202 = vadd.f32 %v4189, %v4201
    %v4203 = vpop.f32.mrf.mxu0
    %4204 = vdwg.mxu0
    %4205 = vmatpush.bf16.msra.mxu0 %v3980
    %4206 = vmatpush.bf16.msra.mxu0 %v3972
    %4207 = vmatpush.bf16.msra.mxu0 %v3964
    %4208 = vmatpush.bf16.msra.mxu0 %v3956
    %4209 = vmatpush.bf16.msra.mxu0 %v3948
    %4210 = vmatpush.bf16.msra.mxu0 %v3940
    %4211 = vmatpush.bf16.msra.mxu0 %v3932
    %4212 = vmatpush.bf16.msra.mxu0 %v3924
    %4213 = vmatmul.bf16.gmra.mxu0 %v3409
    %v4214 = vpop.f32.mrf.mxu0
    %v4215 = vadd.f32 0.0, %v4214
    %v4216 = vpop.f32.mrf.mxu0
    %4217 = vdwg.mxu0
    %4218 = vmatpush.bf16.msra.mxu0 %v4044
    %4219 = vmatpush.bf16.msra.mxu0 %v4036
    %4220 = vmatpush.bf16.msra.mxu0 %v4028
    %4221 = vmatpush.bf16.msra.mxu0 %v4020
    %4222 = vmatpush.bf16.msra.mxu0 %v4012
    %4223 = vmatpush.bf16.msra.mxu0 %v4004
    %4224 = vmatpush.bf16.msra.mxu0 %v3996
    %4225 = vmatpush.bf16.msra.mxu0 %v3988
    %4226 = vmatmul.bf16.gmra.mxu0 %v3410
    %v4227 = vpop.f32.mrf.mxu0
    %v4228 = vadd.f32 %v4215, %v4227
    %v4229 = vpop.f32.mrf.mxu0
    %4230 = vdwg.mxu0
    %4231 = vmatpush.bf16.msra.mxu0 %v3981
    %4232 = vmatpush.bf16.msra.mxu0 %v3973
    %4233 = vmatpush.bf16.msra.mxu0 %v3965
    %4234 = vmatpush.bf16.msra.mxu0 %v3957
    %4235 = vmatpush.bf16.msra.mxu0 %v3949
    %4236 = vmatpush.bf16.msra.mxu0 %v3941
    %4237 = vmatpush.bf16.msra.mxu0 %v3933
    %4238 = vmatpush.bf16.msra.mxu0 %v3925
    %4239 = vmatmul.bf16.gmra.mxu0 %v3409
    %v4240 = vpop.f32.mrf.mxu0
    %v4241 = vadd.f32 0.0, %v4240
    %v4242 = vpop.f32.mrf.mxu0
    %4243 = vdwg.mxu0
    %4244 = vmatpush.bf16.msra.mxu0 %v4045
    %4245 = vmatpush.bf16.msra.mxu0 %v4037
    %4246 = vmatpush.bf16.msra.mxu0 %v4029
    %4247 = vmatpush.bf16.msra.mxu0 %v4021
    %4248 = vmatpush.bf16.msra.mxu0 %v4013
    %4249 = vmatpush.bf16.msra.mxu0 %v4005
    %4250 = vmatpush.bf16.msra.mxu0 %v3997
    %4251 = vmatpush.bf16.msra.mxu0 %v3989
    %4252 = vmatmul.bf16.gmra.mxu0 %v3410
    %v4253 = vpop.f32.mrf.mxu0
    %v4254 = vadd.f32 %v4241, %v4253
    %v4255 = vpop.f32.mrf.mxu0
    %4256 = vdwg.mxu0
    %4257 = vmatpush.bf16.msra.mxu0 %v3982
    %4258 = vmatpush.bf16.msra.mxu0 %v3974
    %4259 = vmatpush.bf16.msra.mxu0 %v3966
    %4260 = vmatpush.bf16.msra.mxu0 %v3958
    %4261 = vmatpush.bf16.msra.mxu0 %v3950
    %4262 = vmatpush.bf16.msra.mxu0 %v3942
    %4263 = vmatpush.bf16.msra.mxu0 %v3934
    %4264 = vmatpush.bf16.msra.mxu0 %v3926
    %4265 = vmatmul.bf16.gmra.mxu0 %v3409
    %v4266 = vpop.f32.mrf.mxu0
    %v4267 = vadd.f32 0.0, %v4266
    %v4268 = vpop.f32.mrf.mxu0
    %4269 = vdwg.mxu0
    %4270 = vmatpush.bf16.msra.mxu0 %v4046
    %4271 = vmatpush.bf16.msra.mxu0 %v4038
    %4272 = vmatpush.bf16.msra.mxu0 %v4030
    %4273 = vmatpush.bf16.msra.mxu0 %v4022
    %4274 = vmatpush.bf16.msra.mxu0 %v4014
    %4275 = vmatpush.bf16.msra.mxu0 %v4006
    %4276 = vmatpush.bf16.msra.mxu0 %v3998
    %4277 = vmatpush.bf16.msra.mxu0 %v3990
    %4278 = vmatmul.bf16.gmra.mxu0 %v3410
    %v4279 = vpop.f32.mrf.mxu0
    %v4280 = vadd.f32 %v4267, %v4279
    %v4281 = vpop.f32.mrf.mxu0
    %4282 = vdwg.mxu0
    %4283 = vmatpush.bf16.msra.mxu0 %v3983
    %4284 = vmatpush.bf16.msra.mxu0 %v3975
    %4285 = vmatpush.bf16.msra.mxu0 %v3967
    %4286 = vmatpush.bf16.msra.mxu0 %v3959
    %4287 = vmatpush.bf16.msra.mxu0 %v3951
    %4288 = vmatpush.bf16.msra.mxu0 %v3943
    %4289 = vmatpush.bf16.msra.mxu0 %v3935
    %4290 = vmatpush.bf16.msra.mxu0 %v3927
    %4291 = vmatmul.bf16.gmra.mxu0 %v3409
    %v4292 = vpop.f32.mrf.mxu0
    %v4293 = vadd.f32 0.0, %v4292
    %v4294 = vpop.f32.mrf.mxu0
    %4295 = vdwg.mxu0
    %4296 = vmatpush.bf16.msra.mxu0 %v4047
    %4297 = vmatpush.bf16.msra.mxu0 %v4039
    %4298 = vmatpush.bf16.msra.mxu0 %v4031
    %4299 = vmatpush.bf16.msra.mxu0 %v4023
    %4300 = vmatpush.bf16.msra.mxu0 %v4015
    %4301 = vmatpush.bf16.msra.mxu0 %v4007
    %4302 = vmatpush.bf16.msra.mxu0 %v3999
    %4303 = vmatpush.bf16.msra.mxu0 %v3991
    %4304 = vmatmul.bf16.gmra.mxu0 %v3410
    %v4305 = vpop.f32.mrf.mxu0
    %v4306 = vadd.f32 %v4293, %v4305
    %v4307 = vpop.f32.mrf.mxu0
    %4308 = vdwg.mxu0
    %4309 = vmatpush.bf16.msra.mxu0 %v3984
    %4310 = vmatpush.bf16.msra.mxu0 %v3976
    %4311 = vmatpush.bf16.msra.mxu0 %v3968
    %4312 = vmatpush.bf16.msra.mxu0 %v3960
    %4313 = vmatpush.bf16.msra.mxu0 %v3952
    %4314 = vmatpush.bf16.msra.mxu0 %v3944
    %4315 = vmatpush.bf16.msra.mxu0 %v3936
    %4316 = vmatpush.bf16.msra.mxu0 %v3928
    %4317 = vmatmul.bf16.gmra.mxu0 %v3409
    %v4318 = vpop.f32.mrf.mxu0
    %v4319 = vadd.f32 0.0, %v4318
    %v4320 = vpop.f32.mrf.mxu0
    %4321 = vdwg.mxu0
    %4322 = vmatpush.bf16.msra.mxu0 %v4048
    %4323 = vmatpush.bf16.msra.mxu0 %v4040
    %4324 = vmatpush.bf16.msra.mxu0 %v4032
    %4325 = vmatpush.bf16.msra.mxu0 %v4024
    %4326 = vmatpush.bf16.msra.mxu0 %v4016
    %4327 = vmatpush.bf16.msra.mxu0 %v4008
    %4328 = vmatpush.bf16.msra.mxu0 %v4000
    %4329 = vmatpush.bf16.msra.mxu0 %v3992
    %4330 = vmatmul.bf16.gmra.mxu0 %v3410
    %v4331 = vpop.f32.mrf.mxu0
    %v4332 = vadd.f32 %v4319, %v4331
    %v4333 = vpop.f32.mrf.mxu0
    %4334 = vdwg.mxu0
    %4335 = vmatpush.bf16.msra.mxu0 %v3985
    %4336 = vmatpush.bf16.msra.mxu0 %v3977
    %4337 = vmatpush.bf16.msra.mxu0 %v3969
    %4338 = vmatpush.bf16.msra.mxu0 %v3961
    %4339 = vmatpush.bf16.msra.mxu0 %v3953
    %4340 = vmatpush.bf16.msra.mxu0 %v3945
    %4341 = vmatpush.bf16.msra.mxu0 %v3937
    %4342 = vmatpush.bf16.msra.mxu0 %v3929
    %4343 = vmatmul.bf16.gmra.mxu0 %v3409
    %v4344 = vpop.f32.mrf.mxu0
    %v4345 = vadd.f32 0.0, %v4344
    %v4346 = vpop.f32.mrf.mxu0
    %4347 = vdwg.mxu0
    %4348 = vmatpush.bf16.msra.mxu0 %v4049
    %4349 = vmatpush.bf16.msra.mxu0 %v4041
    %4350 = vmatpush.bf16.msra.mxu0 %v4033
    %4351 = vmatpush.bf16.msra.mxu0 %v4025
    %4352 = vmatpush.bf16.msra.mxu0 %v4017
    %4353 = vmatpush.bf16.msra.mxu0 %v4009
    %4354 = vmatpush.bf16.msra.mxu0 %v4001
    %4355 = vmatpush.bf16.msra.mxu0 %v3993
    %4356 = vmatmul.bf16.gmra.mxu0 %v3410
    %v4357 = vpop.f32.mrf.mxu0
    %v4358 = vadd.f32 %v4345, %v4357
    %v4359 = vpop.f32.mrf.mxu0
    %4360 = vdwg.mxu0
    %4361 = vmatpush.bf16.msra.mxu0 %v3986
    %4362 = vmatpush.bf16.msra.mxu0 %v3978
    %4363 = vmatpush.bf16.msra.mxu0 %v3970
    %4364 = vmatpush.bf16.msra.mxu0 %v3962
    %4365 = vmatpush.bf16.msra.mxu0 %v3954
    %4366 = vmatpush.bf16.msra.mxu0 %v3946
    %4367 = vmatpush.bf16.msra.mxu0 %v3938
    %4368 = vmatpush.bf16.msra.mxu0 %v3930
    %4369 = vmatmul.bf16.gmra.mxu0 %v3409
    %v4370 = vpop.f32.mrf.mxu0
    %v4371 = vadd.f32 0.0, %v4370
    %v4372 = vpop.f32.mrf.mxu0
    %4373 = vdwg.mxu0
    %4374 = vmatpush.bf16.msra.mxu0 %v4050
    %4375 = vmatpush.bf16.msra.mxu0 %v4042
    %4376 = vmatpush.bf16.msra.mxu0 %v4034
    %4377 = vmatpush.bf16.msra.mxu0 %v4026
    %4378 = vmatpush.bf16.msra.mxu0 %v4018
    %4379 = vmatpush.bf16.msra.mxu0 %v4010
    %4380 = vmatpush.bf16.msra.mxu0 %v4002
    %4381 = vmatpush.bf16.msra.mxu0 %v3994
    %4382 = vmatmul.bf16.gmra.mxu0 %v3410
    %v4383 = vpop.f32.mrf.mxu0
    %v4384 = vadd.f32 %v4371, %v4383
    %v4385 = vpop.f32.mrf.mxu0
    %4386 = vdwg.mxu0
    %v4395 = vrot.slane %v4228, 7
    %v4396 = vrot.slane %v4254, 6
    %v4397 = vrot.slane %v4280, 5
    %v4398 = vrot.slane %v4306, 4
    %v4399 = vrot.slane %v4332, 3
    %v4400 = vrot.slane %v4358, 2
    %v4401 = vrot.slane %v4384, 1
    %v4402 = vsel %vm169, %v4202, %v4395
    %v4403 = vsel %vm2214, %v4396, %v4397
    %v4404 = vsel %vm2216, %v4402, %v4403
    %v4405 = vsel %vm2218, %v4398, %v4399
    %v4406 = vsel %vm2220, %v4400, %v4401
    %v4407 = vsel %vm2222, %v4405, %v4406
    %v4408 = vsel %vm2224, %v4404, %v4407
    %v4410 = vadd.f32 %v3403, %v4408
    %v4411 = vxor.u32 %v4410, 2147483648
    %v4412 = vmul.f32 %v4411, 1.442695
    %v4413 = vpow.pop %v4412
    %v4414 = vadd.f32 %v4413, 1.0
    %v4415 = vrcp.pop %v4414
    %v4416 = vmul.f32 %v4414, %v4415
    %v4417 = vsub.f32 1.0, %v4416
    %v4418 = vmul.f32 %v4415, %v4417
    %v4419 = vadd.f32 %v4415, %v4418
    %vm4420 = vweird.f32 %v4414
    %vm4421 = vweird.f32 %v4415
    %vm4422 = vmor %vm4420, %vm4421
    %v4423 = vsel %vm4422, %v4415, %v4419
    %v4424 = vand.u32 2147483647, %v4414
    %vm4425 = vcmp.eq.f32.partialorder %v4424, 8.507059e+37
    %v4426 = vand.u32 %v4414, 2147483648
    %v4427 = vor.u32 1.1754944e-38, %v4426
    %v4428 = vsel %vm4425, %v4427, %v4423
    %v4429 = vmul.f32 1.0, %v4428
    %v4431 = vrot.slane %v4410, 2
    %v4433 = vxor.u32 %v4431, 2147483648
    %v4434 = vmul.f32 %v4433, 1.442695
    %v4435 = vpow.pop %v4434
    %v4436 = vadd.f32 %v4435, 1.0
    %v4437 = vrcp.pop %v4436
    %v4438 = vmul.f32 %v4436, %v4437
    %v4439 = vsub.f32 1.0, %v4438
    %v4440 = vmul.f32 %v4437, %v4439
    %v4441 = vadd.f32 %v4437, %v4440
    %vm4442 = vweird.f32 %v4436
    %vm4443 = vweird.f32 %v4437
    %vm4444 = vmor %vm4442, %vm4443
    %v4445 = vsel %vm4444, %v4437, %v4441
    %v4446 = vand.u32 2147483647, %v4436
    %vm4447 = vcmp.eq.f32.partialorder %v4446, 8.507059e+37
    %v4448 = vand.u32 %v4436, 2147483648
    %v4449 = vor.u32 1.1754944e-38, %v4448
    %v4450 = vsel %vm4447, %v4449, %v4445
    %v4451 = vmul.f32 1.0, %v4450
    %v4452 = vrot.slane %v4410, 4
    %v4454 = vtanh.pop %v4452
    %v4455 = vrot.slane %v4410, 6
    %v4457 = vxor.u32 %v4455, 2147483648
    %v4458 = vmul.f32 %v4457, 1.442695
    %v4459 = vpow.pop %v4458
    %v4460 = vadd.f32 %v4459, 1.0
    %v4461 = vrcp.pop %v4460
    %v4462 = vmul.f32 %v4460, %v4461
    %v4463 = vsub.f32 1.0, %v4462
    %v4464 = vmul.f32 %v4461, %v4463
    %v4465 = vadd.f32 %v4461, %v4464
    %vm4466 = vweird.f32 %v4460
    %vm4467 = vweird.f32 %v4461
    %vm4468 = vmor %vm4466, %vm4467
    %v4469 = vsel %vm4468, %v4461, %v4465
    %v4470 = vand.u32 2147483647, %v4460
    %vm4471 = vcmp.eq.f32.partialorder %v4470, 8.507059e+37
    %v4472 = vand.u32 %v4460, 2147483648
    %v4473 = vor.u32 1.1754944e-38, %v4472
    %v4474 = vsel %vm4471, %v4473, %v4469
    %v4475 = vmul.f32 1.0, %v4474
    %v4476 = vmul.f32 %v4451, %v3388
    %v4477 = vmul.f32 %v4429, %v4454
    %v4478 = vadd.f32 %v4476, %v4477
    %v4479 = vtanh.pop %v4478
    %v4480 = vmul.f32 %v4475, %v4479
    %s4481 = scalar_lea.vmem %s7, 2
    %4482 = vst.msk [vmem:[%s4481] ss:$8 sm:$0x3] %vm2301, %v4480
    %4483 = vst.msk [vmem:[%s4481] ss:$8 sm:$0x0] %vm2301, %v4480
    %s4484 = sadd.s32 %s2304, 2
    %p4485 = scmp.eq.s32.totalorder %s4484, 7
    // Predicated region
    $region58: #{oracle_gold_rollout.2} parent=1 // pred_check
      %p4486 = pneg %p4485
    $region59: #{oracle_gold_rollout.2} parent=1 // pred_check_branch
      %4488 = sbr.rel (%p4486) target = $region61
    $region60: #{oracle_gold_rollout.2} parent=1 // pred_region
      %4489 = vst.msk [vmem:[#allocation13] sm:$0x3] %vm2301, %v4478
    $region61: #{oracle_gold_rollout.2} parent=1 // pred_fallthru
      _
    %s4490 = scalar_lea.vmem [#allocation4], 3
    %v4491 = vld [vmem:[%s4490] ss:$8 sm:$0xf]
    %v4492 = vld [vmem:[%s4490] ss:$8 sm:$0xf0]
    %v4493 = vor.u32 %v4491, %v4492
    %v4495 = vperm.slane %v4480, 0
    %v4496 = vperm.slane %v4480, 1
    %v4499 = vpack.c.bf16 %v4495, %v4495
    %v4500 = vpack.c.bf16 %v4496, %v4496
    %v4501 = vld [vmem:[#allocation11] sm:$0xff]
    %v4502 = vld [vmem:[#allocation11 + $0x8] sm:$0xff]
    %v4503 = vld [vmem:[#allocation11 + $0x10] sm:$0xff]
    %v4504 = vld [vmem:[#allocation11 + $0x18] sm:$0xff]
    %v4505 = vld [vmem:[#allocation11 + $0x20] sm:$0xff]
    %v4506 = vld [vmem:[#allocation11 + $0x28] sm:$0xff]
    %v4507 = vld [vmem:[#allocation11 + $0x30] sm:$0xff]
    %v4508 = vld [vmem:[#allocation11 + $0x38] sm:$0xff]
    %v4509 = vld [vmem:[#allocation11 + $0x40] sm:$0xff]
    %v4510 = vld [vmem:[#allocation11 + $0x48] sm:$0xff]
    %v4511 = vld [vmem:[#allocation11 + $0x50] sm:$0xff]
    %v4512 = vld [vmem:[#allocation11 + $0x58] sm:$0xff]
    %v4513 = vld [vmem:[#allocation11 + $0x60] sm:$0xff]
    %v4514 = vld [vmem:[#allocation11 + $0x68] sm:$0xff]
    %v4515 = vld [vmem:[#allocation11 + $0x70] sm:$0xff]
    %v4516 = vld [vmem:[#allocation11 + $0x78] sm:$0xff]
    %v4517 = vld [vmem:[#allocation11 + $0x80] sm:$0xff]
    %v4518 = vld [vmem:[#allocation11 + $0x88] sm:$0xff]
    %v4519 = vld [vmem:[#allocation11 + $0x90] sm:$0xff]
    %v4520 = vld [vmem:[#allocation11 + $0x98] sm:$0xff]
    %v4521 = vld [vmem:[#allocation11 + $0xa0] sm:$0xff]
    %v4522 = vld [vmem:[#allocation11 + $0xa8] sm:$0xff]
    %v4523 = vld [vmem:[#allocation11 + $0xb0] sm:$0xff]
    %v4524 = vld [vmem:[#allocation11 + $0xb8] sm:$0xff]
    %v4525 = vld [vmem:[#allocation11 + $0xc0] sm:$0xff]
    %v4526 = vld [vmem:[#allocation11 + $0xc8] sm:$0xff]
    %v4527 = vld [vmem:[#allocation11 + $0xd0] sm:$0xff]
    %v4528 = vld [vmem:[#allocation11 + $0xd8] sm:$0xff]
    %v4529 = vld [vmem:[#allocation11 + $0xe0] sm:$0xff]
    %v4530 = vld [vmem:[#allocation11 + $0xe8] sm:$0xff]
    %v4531 = vld [vmem:[#allocation11 + $0xf0] sm:$0xff]
    %v4532 = vld [vmem:[#allocation11 + $0xf8] sm:$0xff]
    %v4533 = vld [vmem:[#allocation11 + $0x100] sm:$0xff]
    %v4534 = vld [vmem:[#allocation11 + $0x108] sm:$0xff]
    %v4535 = vld [vmem:[#allocation11 + $0x110] sm:$0xff]
    %v4536 = vld [vmem:[#allocation11 + $0x118] sm:$0xff]
    %v4537 = vld [vmem:[#allocation11 + $0x120] sm:$0xff]
    %v4538 = vld [vmem:[#allocation11 + $0x128] sm:$0xff]
    %v4539 = vld [vmem:[#allocation11 + $0x130] sm:$0xff]
    %v4540 = vld [vmem:[#allocation11 + $0x138] sm:$0xff]
    %v4541 = vld [vmem:[#allocation11 + $0x140] sm:$0xff]
    %v4542 = vld [vmem:[#allocation11 + $0x148] sm:$0xff]
    %v4543 = vld [vmem:[#allocation11 + $0x150] sm:$0xff]
    %v4544 = vld [vmem:[#allocation11 + $0x158] sm:$0xff]
    %v4545 = vld [vmem:[#allocation11 + $0x160] sm:$0xff]
    %v4546 = vld [vmem:[#allocation11 + $0x168] sm:$0xff]
    %v4547 = vld [vmem:[#allocation11 + $0x170] sm:$0xff]
    %v4548 = vld [vmem:[#allocation11 + $0x178] sm:$0xff]
    %v4549 = vld [vmem:[#allocation11 + $0x180] sm:$0xff]
    %v4550 = vld [vmem:[#allocation11 + $0x188] sm:$0xff]
    %v4551 = vld [vmem:[#allocation11 + $0x190] sm:$0xff]
    %v4552 = vld [vmem:[#allocation11 + $0x198] sm:$0xff]
    %v4553 = vld [vmem:[#allocation11 + $0x1a0] sm:$0xff]
    %v4554 = vld [vmem:[#allocation11 + $0x1a8] sm:$0xff]
    %v4555 = vld [vmem:[#allocation11 + $0x1b0] sm:$0xff]
    %v4556 = vld [vmem:[#allocation11 + $0x1b8] sm:$0xff]
    %v4557 = vld [vmem:[#allocation11 + $0x1c0] sm:$0xff]
    %v4558 = vld [vmem:[#allocation11 + $0x1c8] sm:$0xff]
    %v4559 = vld [vmem:[#allocation11 + $0x1d0] sm:$0xff]
    %v4560 = vld [vmem:[#allocation11 + $0x1d8] sm:$0xff]
    %v4561 = vld [vmem:[#allocation11 + $0x1e0] sm:$0xff]
    %v4562 = vld [vmem:[#allocation11 + $0x1e8] sm:$0xff]
    %v4563 = vld [vmem:[#allocation11 + $0x1f0] sm:$0xff]
    %v4564 = vld [vmem:[#allocation11 + $0x1f8] sm:$0xff]
    %v4565 = vld [vmem:[#allocation11 + $0x200] sm:$0xff]
    %v4566 = vld [vmem:[#allocation11 + $0x208] sm:$0xff]
    %v4567 = vld [vmem:[#allocation11 + $0x210] sm:$0xff]
    %v4568 = vld [vmem:[#allocation11 + $0x218] sm:$0xff]
    %v4569 = vld [vmem:[#allocation11 + $0x220] sm:$0xff]
    %v4570 = vld [vmem:[#allocation11 + $0x228] sm:$0xff]
    %v4571 = vld [vmem:[#allocation11 + $0x230] sm:$0xff]
    %v4572 = vld [vmem:[#allocation11 + $0x238] sm:$0xff]
    %v4573 = vld [vmem:[#allocation11 + $0x240] sm:$0xff]
    %v4574 = vld [vmem:[#allocation11 + $0x248] sm:$0xff]
    %v4575 = vld [vmem:[#allocation11 + $0x250] sm:$0xff]
    %v4576 = vld [vmem:[#allocation11 + $0x258] sm:$0xff]
    %v4577 = vld [vmem:[#allocation11 + $0x260] sm:$0xff]
    %v4578 = vld [vmem:[#allocation11 + $0x268] sm:$0xff]
    %v4579 = vld [vmem:[#allocation11 + $0x270] sm:$0xff]
    %v4580 = vld [vmem:[#allocation11 + $0x278] sm:$0xff]
    %v4581 = vld [vmem:[#allocation11 + $0x280] sm:$0xff]
    %v4582 = vld [vmem:[#allocation11 + $0x288] sm:$0xff]
    %v4583 = vld [vmem:[#allocation11 + $0x290] sm:$0xff]
    %v4584 = vld [vmem:[#allocation11 + $0x298] sm:$0xff]
    %v4585 = vld [vmem:[#allocation11 + $0x2a0] sm:$0xff]
    %v4586 = vld [vmem:[#allocation11 + $0x2a8] sm:$0xff]
    %v4587 = vld [vmem:[#allocation11 + $0x2b0] sm:$0xff]
    %v4588 = vld [vmem:[#allocation11 + $0x2b8] sm:$0xff]
    %v4589 = vld [vmem:[#allocation11 + $0x2c0] sm:$0xff]
    %v4590 = vld [vmem:[#allocation11 + $0x2c8] sm:$0xff]
    %v4591 = vld [vmem:[#allocation11 + $0x2d0] sm:$0xff]
    %v4592 = vld [vmem:[#allocation11 + $0x2d8] sm:$0xff]
    %v4593 = vld [vmem:[#allocation11 + $0x2e0] sm:$0xff]
    %v4594 = vld [vmem:[#allocation11 + $0x2e8] sm:$0xff]
    %v4595 = vld [vmem:[#allocation11 + $0x2f0] sm:$0xff]
    %v4596 = vld [vmem:[#allocation11 + $0x2f8] sm:$0xff]
    %v4597 = vld [vmem:[#allocation11 + $0x300] sm:$0xff]
    %v4598 = vld [vmem:[#allocation11 + $0x308] sm:$0xff]
    %v4599 = vld [vmem:[#allocation11 + $0x310] sm:$0xff]
    %v4600 = vld [vmem:[#allocation11 + $0x318] sm:$0xff]
    %v4601 = vld [vmem:[#allocation11 + $0x320] sm:$0xff]
    %v4602 = vld [vmem:[#allocation11 + $0x328] sm:$0xff]
    %v4603 = vld [vmem:[#allocation11 + $0x330] sm:$0xff]
    %v4604 = vld [vmem:[#allocation11 + $0x338] sm:$0xff]
    %v4605 = vld [vmem:[#allocation11 + $0x340] sm:$0xff]
    %v4606 = vld [vmem:[#allocation11 + $0x348] sm:$0xff]
    %v4607 = vld [vmem:[#allocation11 + $0x350] sm:$0xff]
    %v4608 = vld [vmem:[#allocation11 + $0x358] sm:$0xff]
    %v4609 = vld [vmem:[#allocation11 + $0x360] sm:$0xff]
    %v4610 = vld [vmem:[#allocation11 + $0x368] sm:$0xff]
    %v4611 = vld [vmem:[#allocation11 + $0x370] sm:$0xff]
    %v4612 = vld [vmem:[#allocation11 + $0x378] sm:$0xff]
    %v4613 = vld [vmem:[#allocation11 + $0x380] sm:$0xff]
    %v4614 = vld [vmem:[#allocation11 + $0x388] sm:$0xff]
    %v4615 = vld [vmem:[#allocation11 + $0x390] sm:$0xff]
    %v4616 = vld [vmem:[#allocation11 + $0x398] sm:$0xff]
    %v4617 = vld [vmem:[#allocation11 + $0x3a0] sm:$0xff]
    %v4618 = vld [vmem:[#allocation11 + $0x3a8] sm:$0xff]
    %v4619 = vld [vmem:[#allocation11 + $0x3b0] sm:$0xff]
    %v4620 = vld [vmem:[#allocation11 + $0x3b8] sm:$0xff]
    %v4621 = vld [vmem:[#allocation11 + $0x3c0] sm:$0xff]
    %v4622 = vld [vmem:[#allocation11 + $0x3c8] sm:$0xff]
    %v4623 = vld [vmem:[#allocation11 + $0x3d0] sm:$0xff]
    %v4624 = vld [vmem:[#allocation11 + $0x3d8] sm:$0xff]
    %v4625 = vld [vmem:[#allocation11 + $0x3e0] sm:$0xff]
    %v4626 = vld [vmem:[#allocation11 + $0x3e8] sm:$0xff]
    %v4627 = vld [vmem:[#allocation11 + $0x3f0] sm:$0xff]
    %v4628 = vld [vmem:[#allocation11 + $0x3f8] sm:$0xff]
    %v4757 = vunpack.c.l.b16 %v4501
    %v4758 = vunpack.c.h.b16 %v4501
    %v4759 = vunpack.c.l.b16 %v4502
    %v4760 = vunpack.c.h.b16 %v4502
    %v4761 = vunpack.c.l.b16 %v4503
    %v4762 = vunpack.c.h.b16 %v4503
    %v4763 = vunpack.c.l.b16 %v4504
    %v4764 = vunpack.c.h.b16 %v4504
    %v4765 = vunpack.c.l.b16 %v4505
    %v4766 = vunpack.c.h.b16 %v4505
    %v4767 = vunpack.c.l.b16 %v4506
    %v4768 = vunpack.c.h.b16 %v4506
    %v4769 = vunpack.c.l.b16 %v4507
    %v4770 = vunpack.c.h.b16 %v4507
    %v4771 = vunpack.c.l.b16 %v4508
    %v4772 = vunpack.c.h.b16 %v4508
    %v4773 = vunpack.c.l.b16 %v4509
    %v4774 = vunpack.c.h.b16 %v4509
    %v4775 = vunpack.c.l.b16 %v4510
    %v4776 = vunpack.c.h.b16 %v4510
    %v4777 = vunpack.c.l.b16 %v4511
    %v4778 = vunpack.c.h.b16 %v4511
    %v4779 = vunpack.c.l.b16 %v4512
    %v4780 = vunpack.c.h.b16 %v4512
    %v4781 = vunpack.c.l.b16 %v4513
    %v4782 = vunpack.c.h.b16 %v4513
    %v4783 = vunpack.c.l.b16 %v4514
    %v4784 = vunpack.c.h.b16 %v4514
    %v4785 = vunpack.c.l.b16 %v4515
    %v4786 = vunpack.c.h.b16 %v4515
    %v4787 = vunpack.c.l.b16 %v4516
    %v4788 = vunpack.c.h.b16 %v4516
    %v4789 = vunpack.c.l.b16 %v4517
    %v4790 = vunpack.c.h.b16 %v4517
    %v4791 = vunpack.c.l.b16 %v4518
    %v4792 = vunpack.c.h.b16 %v4518
    %v4793 = vunpack.c.l.b16 %v4519
    %v4794 = vunpack.c.h.b16 %v4519
    %v4795 = vunpack.c.l.b16 %v4520
    %v4796 = vunpack.c.h.b16 %v4520
    %v4797 = vunpack.c.l.b16 %v4521
    %v4798 = vunpack.c.h.b16 %v4521
    %v4799 = vunpack.c.l.b16 %v4522
    %v4800 = vunpack.c.h.b16 %v4522
    %v4801 = vunpack.c.l.b16 %v4523
    %v4802 = vunpack.c.h.b16 %v4523
    %v4803 = vunpack.c.l.b16 %v4524
    %v4804 = vunpack.c.h.b16 %v4524
    %v4805 = vunpack.c.l.b16 %v4525
    %v4806 = vunpack.c.h.b16 %v4525
    %v4807 = vunpack.c.l.b16 %v4526
    %v4808 = vunpack.c.h.b16 %v4526
    %v4809 = vunpack.c.l.b16 %v4527
    %v4810 = vunpack.c.h.b16 %v4527
    %v4811 = vunpack.c.l.b16 %v4528
    %v4812 = vunpack.c.h.b16 %v4528
    %v4813 = vunpack.c.l.b16 %v4529
    %v4814 = vunpack.c.h.b16 %v4529
    %v4815 = vunpack.c.l.b16 %v4530
    %v4816 = vunpack.c.h.b16 %v4530
    %v4817 = vunpack.c.l.b16 %v4531
    %v4818 = vunpack.c.h.b16 %v4531
    %v4819 = vunpack.c.l.b16 %v4532
    %v4820 = vunpack.c.h.b16 %v4532
    %v4821 = vunpack.c.l.b16 %v4533
    %v4822 = vunpack.c.h.b16 %v4533
    %v4823 = vunpack.c.l.b16 %v4534
    %v4824 = vunpack.c.h.b16 %v4534
    %v4825 = vunpack.c.l.b16 %v4535
    %v4826 = vunpack.c.h.b16 %v4535
    %v4827 = vunpack.c.l.b16 %v4536
    %v4828 = vunpack.c.h.b16 %v4536
    %v4829 = vunpack.c.l.b16 %v4537
    %v4830 = vunpack.c.h.b16 %v4537
    %v4831 = vunpack.c.l.b16 %v4538
    %v4832 = vunpack.c.h.b16 %v4538
    %v4833 = vunpack.c.l.b16 %v4539
    %v4834 = vunpack.c.h.b16 %v4539
    %v4835 = vunpack.c.l.b16 %v4540
    %v4836 = vunpack.c.h.b16 %v4540
    %v4837 = vunpack.c.l.b16 %v4541
    %v4838 = vunpack.c.h.b16 %v4541
    %v4839 = vunpack.c.l.b16 %v4542
    %v4840 = vunpack.c.h.b16 %v4542
    %v4841 = vunpack.c.l.b16 %v4543
    %v4842 = vunpack.c.h.b16 %v4543
    %v4843 = vunpack.c.l.b16 %v4544
    %v4844 = vunpack.c.h.b16 %v4544
    %v4845 = vunpack.c.l.b16 %v4545
    %v4846 = vunpack.c.h.b16 %v4545
    %v4847 = vunpack.c.l.b16 %v4546
    %v4848 = vunpack.c.h.b16 %v4546
    %v4849 = vunpack.c.l.b16 %v4547
    %v4850 = vunpack.c.h.b16 %v4547
    %v4851 = vunpack.c.l.b16 %v4548
    %v4852 = vunpack.c.h.b16 %v4548
    %v4853 = vunpack.c.l.b16 %v4549
    %v4854 = vunpack.c.h.b16 %v4549
    %v4855 = vunpack.c.l.b16 %v4550
    %v4856 = vunpack.c.h.b16 %v4550
    %v4857 = vunpack.c.l.b16 %v4551
    %v4858 = vunpack.c.h.b16 %v4551
    %v4859 = vunpack.c.l.b16 %v4552
    %v4860 = vunpack.c.h.b16 %v4552
    %v4861 = vunpack.c.l.b16 %v4553
    %v4862 = vunpack.c.h.b16 %v4553
    %v4863 = vunpack.c.l.b16 %v4554
    %v4864 = vunpack.c.h.b16 %v4554
    %v4865 = vunpack.c.l.b16 %v4555
    %v4866 = vunpack.c.h.b16 %v4555
    %v4867 = vunpack.c.l.b16 %v4556
    %v4868 = vunpack.c.h.b16 %v4556
    %v4869 = vunpack.c.l.b16 %v4557
    %v4870 = vunpack.c.h.b16 %v4557
    %v4871 = vunpack.c.l.b16 %v4558
    %v4872 = vunpack.c.h.b16 %v4558
    %v4873 = vunpack.c.l.b16 %v4559
    %v4874 = vunpack.c.h.b16 %v4559
    %v4875 = vunpack.c.l.b16 %v4560
    %v4876 = vunpack.c.h.b16 %v4560
    %v4877 = vunpack.c.l.b16 %v4561
    %v4878 = vunpack.c.h.b16 %v4561
    %v4879 = vunpack.c.l.b16 %v4562
    %v4880 = vunpack.c.h.b16 %v4562
    %v4881 = vunpack.c.l.b16 %v4563
    %v4882 = vunpack.c.h.b16 %v4563
    %v4883 = vunpack.c.l.b16 %v4564
    %v4884 = vunpack.c.h.b16 %v4564
    %v4885 = vunpack.c.l.b16 %v4565
    %v4886 = vunpack.c.h.b16 %v4565
    %v4887 = vunpack.c.l.b16 %v4566
    %v4888 = vunpack.c.h.b16 %v4566
    %v4889 = vunpack.c.l.b16 %v4567
    %v4890 = vunpack.c.h.b16 %v4567
    %v4891 = vunpack.c.l.b16 %v4568
    %v4892 = vunpack.c.h.b16 %v4568
    %v4893 = vunpack.c.l.b16 %v4569
    %v4894 = vunpack.c.h.b16 %v4569
    %v4895 = vunpack.c.l.b16 %v4570
    %v4896 = vunpack.c.h.b16 %v4570
    %v4897 = vunpack.c.l.b16 %v4571
    %v4898 = vunpack.c.h.b16 %v4571
    %v4899 = vunpack.c.l.b16 %v4572
    %v4900 = vunpack.c.h.b16 %v4572
    %v4901 = vunpack.c.l.b16 %v4573
    %v4902 = vunpack.c.h.b16 %v4573
    %v4903 = vunpack.c.l.b16 %v4574
    %v4904 = vunpack.c.h.b16 %v4574
    %v4905 = vunpack.c.l.b16 %v4575
    %v4906 = vunpack.c.h.b16 %v4575
    %v4907 = vunpack.c.l.b16 %v4576
    %v4908 = vunpack.c.h.b16 %v4576
    %v4909 = vunpack.c.l.b16 %v4577
    %v4910 = vunpack.c.h.b16 %v4577
    %v4911 = vunpack.c.l.b16 %v4578
    %v4912 = vunpack.c.h.b16 %v4578
    %v4913 = vunpack.c.l.b16 %v4579
    %v4914 = vunpack.c.h.b16 %v4579
    %v4915 = vunpack.c.l.b16 %v4580
    %v4916 = vunpack.c.h.b16 %v4580
    %v4917 = vunpack.c.l.b16 %v4581
    %v4918 = vunpack.c.h.b16 %v4581
    %v4919 = vunpack.c.l.b16 %v4582
    %v4920 = vunpack.c.h.b16 %v4582
    %v4921 = vunpack.c.l.b16 %v4583
    %v4922 = vunpack.c.h.b16 %v4583
    %v4923 = vunpack.c.l.b16 %v4584
    %v4924 = vunpack.c.h.b16 %v4584
    %v4925 = vunpack.c.l.b16 %v4585
    %v4926 = vunpack.c.h.b16 %v4585
    %v4927 = vunpack.c.l.b16 %v4586
    %v4928 = vunpack.c.h.b16 %v4586
    %v4929 = vunpack.c.l.b16 %v4587
    %v4930 = vunpack.c.h.b16 %v4587
    %v4931 = vunpack.c.l.b16 %v4588
    %v4932 = vunpack.c.h.b16 %v4588
    %v4933 = vunpack.c.l.b16 %v4589
    %v4934 = vunpack.c.h.b16 %v4589
    %v4935 = vunpack.c.l.b16 %v4590
    %v4936 = vunpack.c.h.b16 %v4590
    %v4937 = vunpack.c.l.b16 %v4591
    %v4938 = vunpack.c.h.b16 %v4591
    %v4939 = vunpack.c.l.b16 %v4592
    %v4940 = vunpack.c.h.b16 %v4592
    %v4941 = vunpack.c.l.b16 %v4593
    %v4942 = vunpack.c.h.b16 %v4593
    %v4943 = vunpack.c.l.b16 %v4594
    %v4944 = vunpack.c.h.b16 %v4594
    %v4945 = vunpack.c.l.b16 %v4595
    %v4946 = vunpack.c.h.b16 %v4595
    %v4947 = vunpack.c.l.b16 %v4596
    %v4948 = vunpack.c.h.b16 %v4596
    %v4949 = vunpack.c.l.b16 %v4597
    %v4950 = vunpack.c.h.b16 %v4597
    %v4951 = vunpack.c.l.b16 %v4598
    %v4952 = vunpack.c.h.b16 %v4598
    %v4953 = vunpack.c.l.b16 %v4599
    %v4954 = vunpack.c.h.b16 %v4599
    %v4955 = vunpack.c.l.b16 %v4600
    %v4956 = vunpack.c.h.b16 %v4600
    %v4957 = vunpack.c.l.b16 %v4601
    %v4958 = vunpack.c.h.b16 %v4601
    %v4959 = vunpack.c.l.b16 %v4602
    %v4960 = vunpack.c.h.b16 %v4602
    %v4961 = vunpack.c.l.b16 %v4603
    %v4962 = vunpack.c.h.b16 %v4603
    %v4963 = vunpack.c.l.b16 %v4604
    %v4964 = vunpack.c.h.b16 %v4604
    %v4965 = vunpack.c.l.b16 %v4605
    %v4966 = vunpack.c.h.b16 %v4605
    %v4967 = vunpack.c.l.b16 %v4606
    %v4968 = vunpack.c.h.b16 %v4606
    %v4969 = vunpack.c.l.b16 %v4607
    %v4970 = vunpack.c.h.b16 %v4607
    %v4971 = vunpack.c.l.b16 %v4608
    %v4972 = vunpack.c.h.b16 %v4608
    %v4973 = vunpack.c.l.b16 %v4609
    %v4974 = vunpack.c.h.b16 %v4609
    %v4975 = vunpack.c.l.b16 %v4610
    %v4976 = vunpack.c.h.b16 %v4610
    %v4977 = vunpack.c.l.b16 %v4611
    %v4978 = vunpack.c.h.b16 %v4611
    %v4979 = vunpack.c.l.b16 %v4612
    %v4980 = vunpack.c.h.b16 %v4612
    %v4981 = vunpack.c.l.b16 %v4613
    %v4982 = vunpack.c.h.b16 %v4613
    %v4983 = vunpack.c.l.b16 %v4614
    %v4984 = vunpack.c.h.b16 %v4614
    %v4985 = vunpack.c.l.b16 %v4615
    %v4986 = vunpack.c.h.b16 %v4615
    %v4987 = vunpack.c.l.b16 %v4616
    %v4988 = vunpack.c.h.b16 %v4616
    %v4989 = vunpack.c.l.b16 %v4617
    %v4990 = vunpack.c.h.b16 %v4617
    %v4991 = vunpack.c.l.b16 %v4618
    %v4992 = vunpack.c.h.b16 %v4618
    %v4993 = vunpack.c.l.b16 %v4619
    %v4994 = vunpack.c.h.b16 %v4619
    %v4995 = vunpack.c.l.b16 %v4620
    %v4996 = vunpack.c.h.b16 %v4620
    %v4997 = vunpack.c.l.b16 %v4621
    %v4998 = vunpack.c.h.b16 %v4621
    %v4999 = vunpack.c.l.b16 %v4622
    %v5000 = vunpack.c.h.b16 %v4622
    %v5001 = vunpack.c.l.b16 %v4623
    %v5002 = vunpack.c.h.b16 %v4623
    %v5003 = vunpack.c.l.b16 %v4624
    %v5004 = vunpack.c.h.b16 %v4624
    %v5005 = vunpack.c.l.b16 %v4625
    %v5006 = vunpack.c.h.b16 %v4625
    %v5007 = vunpack.c.l.b16 %v4626
    %v5008 = vunpack.c.h.b16 %v4626
    %v5009 = vunpack.c.l.b16 %v4627
    %v5010 = vunpack.c.h.b16 %v4627
    %v5011 = vunpack.c.l.b16 %v4628
    %v5012 = vunpack.c.h.b16 %v4628
    %v5013 = vpack.c.b16 %v4765, %v4757
    %v5014 = vpack.c.b16 %v4766, %v4758
    %v5015 = vpack.c.b16 %v4767, %v4759
    %v5016 = vpack.c.b16 %v4768, %v4760
    %v5017 = vpack.c.b16 %v4769, %v4761
    %v5018 = vpack.c.b16 %v4770, %v4762
    %v5019 = vpack.c.b16 %v4771, %v4763
    %v5020 = vpack.c.b16 %v4772, %v4764
    %v5021 = vpack.c.b16 %v4781, %v4773
    %v5022 = vpack.c.b16 %v4782, %v4774
    %v5023 = vpack.c.b16 %v4783, %v4775
    %v5024 = vpack.c.b16 %v4784, %v4776
    %v5025 = vpack.c.b16 %v4785, %v4777
    %v5026 = vpack.c.b16 %v4786, %v4778
    %v5027 = vpack.c.b16 %v4787, %v4779
    %v5028 = vpack.c.b16 %v4788, %v4780
    %v5029 = vpack.c.b16 %v4797, %v4789
    %v5030 = vpack.c.b16 %v4798, %v4790
    %v5031 = vpack.c.b16 %v4799, %v4791
    %v5032 = vpack.c.b16 %v4800, %v4792
    %v5033 = vpack.c.b16 %v4801, %v4793
    %v5034 = vpack.c.b16 %v4802, %v4794
    %v5035 = vpack.c.b16 %v4803, %v4795
    %v5036 = vpack.c.b16 %v4804, %v4796
    %v5037 = vpack.c.b16 %v4813, %v4805
    %v5038 = vpack.c.b16 %v4814, %v4806
    %v5039 = vpack.c.b16 %v4815, %v4807
    %v5040 = vpack.c.b16 %v4816, %v4808
    %v5041 = vpack.c.b16 %v4817, %v4809
    %v5042 = vpack.c.b16 %v4818, %v4810
    %v5043 = vpack.c.b16 %v4819, %v4811
    %v5044 = vpack.c.b16 %v4820, %v4812
    %v5045 = vpack.c.b16 %v4829, %v4821
    %v5046 = vpack.c.b16 %v4830, %v4822
    %v5047 = vpack.c.b16 %v4831, %v4823
    %v5048 = vpack.c.b16 %v4832, %v4824
    %v5049 = vpack.c.b16 %v4833, %v4825
    %v5050 = vpack.c.b16 %v4834, %v4826
    %v5051 = vpack.c.b16 %v4835, %v4827
    %v5052 = vpack.c.b16 %v4836, %v4828
    %v5053 = vpack.c.b16 %v4845, %v4837
    %v5054 = vpack.c.b16 %v4846, %v4838
    %v5055 = vpack.c.b16 %v4847, %v4839
    %v5056 = vpack.c.b16 %v4848, %v4840
    %v5057 = vpack.c.b16 %v4849, %v4841
    %v5058 = vpack.c.b16 %v4850, %v4842
    %v5059 = vpack.c.b16 %v4851, %v4843
    %v5060 = vpack.c.b16 %v4852, %v4844
    %v5061 = vpack.c.b16 %v4861, %v4853
    %v5062 = vpack.c.b16 %v4862, %v4854
    %v5063 = vpack.c.b16 %v4863, %v4855
    %v5064 = vpack.c.b16 %v4864, %v4856
    %v5065 = vpack.c.b16 %v4865, %v4857
    %v5066 = vpack.c.b16 %v4866, %v4858
    %v5067 = vpack.c.b16 %v4867, %v4859
    %v5068 = vpack.c.b16 %v4868, %v4860
    %v5069 = vpack.c.b16 %v4877, %v4869
    %v5070 = vpack.c.b16 %v4878, %v4870
    %v5071 = vpack.c.b16 %v4879, %v4871
    %v5072 = vpack.c.b16 %v4880, %v4872
    %v5073 = vpack.c.b16 %v4881, %v4873
    %v5074 = vpack.c.b16 %v4882, %v4874
    %v5075 = vpack.c.b16 %v4883, %v4875
    %v5076 = vpack.c.b16 %v4884, %v4876
    %v5077 = vpack.c.b16 %v4893, %v4885
    %v5078 = vpack.c.b16 %v4894, %v4886
    %v5079 = vpack.c.b16 %v4895, %v4887
    %v5080 = vpack.c.b16 %v4896, %v4888
    %v5081 = vpack.c.b16 %v4897, %v4889
    %v5082 = vpack.c.b16 %v4898, %v4890
    %v5083 = vpack.c.b16 %v4899, %v4891
    %v5084 = vpack.c.b16 %v4900, %v4892
    %v5085 = vpack.c.b16 %v4909, %v4901
    %v5086 = vpack.c.b16 %v4910, %v4902
    %v5087 = vpack.c.b16 %v4911, %v4903
    %v5088 = vpack.c.b16 %v4912, %v4904
    %v5089 = vpack.c.b16 %v4913, %v4905
    %v5090 = vpack.c.b16 %v4914, %v4906
    %v5091 = vpack.c.b16 %v4915, %v4907
    %v5092 = vpack.c.b16 %v4916, %v4908
    %v5093 = vpack.c.b16 %v4925, %v4917
    %v5094 = vpack.c.b16 %v4926, %v4918
    %v5095 = vpack.c.b16 %v4927, %v4919
    %v5096 = vpack.c.b16 %v4928, %v4920
    %v5097 = vpack.c.b16 %v4929, %v4921
    %v5098 = vpack.c.b16 %v4930, %v4922
    %v5099 = vpack.c.b16 %v4931, %v4923
    %v5100 = vpack.c.b16 %v4932, %v4924
    %v5101 = vpack.c.b16 %v4941, %v4933
    %v5102 = vpack.c.b16 %v4942, %v4934
    %v5103 = vpack.c.b16 %v4943, %v4935
    %v5104 = vpack.c.b16 %v4944, %v4936
    %v5105 = vpack.c.b16 %v4945, %v4937
    %v5106 = vpack.c.b16 %v4946, %v4938
    %v5107 = vpack.c.b16 %v4947, %v4939
    %v5108 = vpack.c.b16 %v4948, %v4940
    %v5109 = vpack.c.b16 %v4957, %v4949
    %v5110 = vpack.c.b16 %v4958, %v4950
    %v5111 = vpack.c.b16 %v4959, %v4951
    %v5112 = vpack.c.b16 %v4960, %v4952
    %v5113 = vpack.c.b16 %v4961, %v4953
    %v5114 = vpack.c.b16 %v4962, %v4954
    %v5115 = vpack.c.b16 %v4963, %v4955
    %v5116 = vpack.c.b16 %v4964, %v4956
    %v5117 = vpack.c.b16 %v4973, %v4965
    %v5118 = vpack.c.b16 %v4974, %v4966
    %v5119 = vpack.c.b16 %v4975, %v4967
    %v5120 = vpack.c.b16 %v4976, %v4968
    %v5121 = vpack.c.b16 %v4977, %v4969
    %v5122 = vpack.c.b16 %v4978, %v4970
    %v5123 = vpack.c.b16 %v4979, %v4971
    %v5124 = vpack.c.b16 %v4980, %v4972
    %v5125 = vpack.c.b16 %v4989, %v4981
    %v5126 = vpack.c.b16 %v4990, %v4982
    %v5127 = vpack.c.b16 %v4991, %v4983
    %v5128 = vpack.c.b16 %v4992, %v4984
    %v5129 = vpack.c.b16 %v4993, %v4985
    %v5130 = vpack.c.b16 %v4994, %v4986
    %v5131 = vpack.c.b16 %v4995, %v4987
    %v5132 = vpack.c.b16 %v4996, %v4988
    %v5133 = vpack.c.b16 %v5005, %v4997
    %v5134 = vpack.c.b16 %v5006, %v4998
    %v5135 = vpack.c.b16 %v5007, %v4999
    %v5136 = vpack.c.b16 %v5008, %v5000
    %v5137 = vpack.c.b16 %v5009, %v5001
    %v5138 = vpack.c.b16 %v5010, %v5002
    %v5139 = vpack.c.b16 %v5011, %v5003
    %v5140 = vpack.c.b16 %v5012, %v5004
    %5269 = vmatpush.bf16.msra.mxu0 %v5069
    %5270 = vmatpush.bf16.msra.mxu0 %v5061
    %5271 = vmatpush.bf16.msra.mxu0 %v5053
    %5272 = vmatpush.bf16.msra.mxu0 %v5045
    %5273 = vmatpush.bf16.msra.mxu0 %v5037
    %5274 = vmatpush.bf16.msra.mxu0 %v5029
    %5275 = vmatpush.bf16.msra.mxu0 %v5021
    %5276 = vmatpush.bf16.msra.mxu0 %v5013
    %5277 = vmatmul.bf16.gmra.mxu0 %v4499
    %v5278 = vpop.f32.mrf.mxu0
    %v5279 = vadd.f32 0.0, %v5278
    %v5280 = vpop.f32.mrf.mxu0
    %5281 = vdwg.mxu0
    %5282 = vmatpush.bf16.msra.mxu0 %v5133
    %5283 = vmatpush.bf16.msra.mxu0 %v5125
    %5284 = vmatpush.bf16.msra.mxu0 %v5117
    %5285 = vmatpush.bf16.msra.mxu0 %v5109
    %5286 = vmatpush.bf16.msra.mxu0 %v5101
    %5287 = vmatpush.bf16.msra.mxu0 %v5093
    %5288 = vmatpush.bf16.msra.mxu0 %v5085
    %5289 = vmatpush.bf16.msra.mxu0 %v5077
    %5290 = vmatmul.bf16.gmra.mxu0 %v4500
    %v5291 = vpop.f32.mrf.mxu0
    %v5292 = vadd.f32 %v5279, %v5291
    %v5293 = vpop.f32.mrf.mxu0
    %5294 = vdwg.mxu0
    %5295 = vmatpush.bf16.msra.mxu0 %v5070
    %5296 = vmatpush.bf16.msra.mxu0 %v5062
    %5297 = vmatpush.bf16.msra.mxu0 %v5054
    %5298 = vmatpush.bf16.msra.mxu0 %v5046
    %5299 = vmatpush.bf16.msra.mxu0 %v5038
    %5300 = vmatpush.bf16.msra.mxu0 %v5030
    %5301 = vmatpush.bf16.msra.mxu0 %v5022
    %5302 = vmatpush.bf16.msra.mxu0 %v5014
    %5303 = vmatmul.bf16.gmra.mxu0 %v4499
    %v5304 = vpop.f32.mrf.mxu0
    %v5305 = vadd.f32 0.0, %v5304
    %v5306 = vpop.f32.mrf.mxu0
    %5307 = vdwg.mxu0
    %5308 = vmatpush.bf16.msra.mxu0 %v5134
    %5309 = vmatpush.bf16.msra.mxu0 %v5126
    %5310 = vmatpush.bf16.msra.mxu0 %v5118
    %5311 = vmatpush.bf16.msra.mxu0 %v5110
    %5312 = vmatpush.bf16.msra.mxu0 %v5102
    %5313 = vmatpush.bf16.msra.mxu0 %v5094
    %5314 = vmatpush.bf16.msra.mxu0 %v5086
    %5315 = vmatpush.bf16.msra.mxu0 %v5078
    %5316 = vmatmul.bf16.gmra.mxu0 %v4500
    %v5317 = vpop.f32.mrf.mxu0
    %v5318 = vadd.f32 %v5305, %v5317
    %v5319 = vpop.f32.mrf.mxu0
    %5320 = vdwg.mxu0
    %5321 = vmatpush.bf16.msra.mxu0 %v5071
    %5322 = vmatpush.bf16.msra.mxu0 %v5063
    %5323 = vmatpush.bf16.msra.mxu0 %v5055
    %5324 = vmatpush.bf16.msra.mxu0 %v5047
    %5325 = vmatpush.bf16.msra.mxu0 %v5039
    %5326 = vmatpush.bf16.msra.mxu0 %v5031
    %5327 = vmatpush.bf16.msra.mxu0 %v5023
    %5328 = vmatpush.bf16.msra.mxu0 %v5015
    %5329 = vmatmul.bf16.gmra.mxu0 %v4499
    %v5330 = vpop.f32.mrf.mxu0
    %v5331 = vadd.f32 0.0, %v5330
    %v5332 = vpop.f32.mrf.mxu0
    %5333 = vdwg.mxu0
    %5334 = vmatpush.bf16.msra.mxu0 %v5135
    %5335 = vmatpush.bf16.msra.mxu0 %v5127
    %5336 = vmatpush.bf16.msra.mxu0 %v5119
    %5337 = vmatpush.bf16.msra.mxu0 %v5111
    %5338 = vmatpush.bf16.msra.mxu0 %v5103
    %5339 = vmatpush.bf16.msra.mxu0 %v5095
    %5340 = vmatpush.bf16.msra.mxu0 %v5087
    %5341 = vmatpush.bf16.msra.mxu0 %v5079
    %5342 = vmatmul.bf16.gmra.mxu0 %v4500
    %v5343 = vpop.f32.mrf.mxu0
    %v5344 = vadd.f32 %v5331, %v5343
    %v5345 = vpop.f32.mrf.mxu0
    %5346 = vdwg.mxu0
    %5347 = vmatpush.bf16.msra.mxu0 %v5072
    %5348 = vmatpush.bf16.msra.mxu0 %v5064
    %5349 = vmatpush.bf16.msra.mxu0 %v5056
    %5350 = vmatpush.bf16.msra.mxu0 %v5048
    %5351 = vmatpush.bf16.msra.mxu0 %v5040
    %5352 = vmatpush.bf16.msra.mxu0 %v5032
    %5353 = vmatpush.bf16.msra.mxu0 %v5024
    %5354 = vmatpush.bf16.msra.mxu0 %v5016
    %5355 = vmatmul.bf16.gmra.mxu0 %v4499
    %v5356 = vpop.f32.mrf.mxu0
    %v5357 = vadd.f32 0.0, %v5356
    %v5358 = vpop.f32.mrf.mxu0
    %5359 = vdwg.mxu0
    %5360 = vmatpush.bf16.msra.mxu0 %v5136
    %5361 = vmatpush.bf16.msra.mxu0 %v5128
    %5362 = vmatpush.bf16.msra.mxu0 %v5120
    %5363 = vmatpush.bf16.msra.mxu0 %v5112
    %5364 = vmatpush.bf16.msra.mxu0 %v5104
    %5365 = vmatpush.bf16.msra.mxu0 %v5096
    %5366 = vmatpush.bf16.msra.mxu0 %v5088
    %5367 = vmatpush.bf16.msra.mxu0 %v5080
    %5368 = vmatmul.bf16.gmra.mxu0 %v4500
    %v5369 = vpop.f32.mrf.mxu0
    %v5370 = vadd.f32 %v5357, %v5369
    %v5371 = vpop.f32.mrf.mxu0
    %5372 = vdwg.mxu0
    %5373 = vmatpush.bf16.msra.mxu0 %v5073
    %5374 = vmatpush.bf16.msra.mxu0 %v5065
    %5375 = vmatpush.bf16.msra.mxu0 %v5057
    %5376 = vmatpush.bf16.msra.mxu0 %v5049
    %5377 = vmatpush.bf16.msra.mxu0 %v5041
    %5378 = vmatpush.bf16.msra.mxu0 %v5033
    %5379 = vmatpush.bf16.msra.mxu0 %v5025
    %5380 = vmatpush.bf16.msra.mxu0 %v5017
    %5381 = vmatmul.bf16.gmra.mxu0 %v4499
    %v5382 = vpop.f32.mrf.mxu0
    %v5383 = vadd.f32 0.0, %v5382
    %v5384 = vpop.f32.mrf.mxu0
    %5385 = vdwg.mxu0
    %5386 = vmatpush.bf16.msra.mxu0 %v5137
    %5387 = vmatpush.bf16.msra.mxu0 %v5129
    %5388 = vmatpush.bf16.msra.mxu0 %v5121
    %5389 = vmatpush.bf16.msra.mxu0 %v5113
    %5390 = vmatpush.bf16.msra.mxu0 %v5105
    %5391 = vmatpush.bf16.msra.mxu0 %v5097
    %5392 = vmatpush.bf16.msra.mxu0 %v5089
    %5393 = vmatpush.bf16.msra.mxu0 %v5081
    %5394 = vmatmul.bf16.gmra.mxu0 %v4500
    %v5395 = vpop.f32.mrf.mxu0
    %v5396 = vadd.f32 %v5383, %v5395
    %v5397 = vpop.f32.mrf.mxu0
    %5398 = vdwg.mxu0
    %5399 = vmatpush.bf16.msra.mxu0 %v5074
    %5400 = vmatpush.bf16.msra.mxu0 %v5066
    %5401 = vmatpush.bf16.msra.mxu0 %v5058
    %5402 = vmatpush.bf16.msra.mxu0 %v5050
    %5403 = vmatpush.bf16.msra.mxu0 %v5042
    %5404 = vmatpush.bf16.msra.mxu0 %v5034
    %5405 = vmatpush.bf16.msra.mxu0 %v5026
    %5406 = vmatpush.bf16.msra.mxu0 %v5018
    %5407 = vmatmul.bf16.gmra.mxu0 %v4499
    %v5408 = vpop.f32.mrf.mxu0
    %v5409 = vadd.f32 0.0, %v5408
    %v5410 = vpop.f32.mrf.mxu0
    %5411 = vdwg.mxu0
    %5412 = vmatpush.bf16.msra.mxu0 %v5138
    %5413 = vmatpush.bf16.msra.mxu0 %v5130
    %5414 = vmatpush.bf16.msra.mxu0 %v5122
    %5415 = vmatpush.bf16.msra.mxu0 %v5114
    %5416 = vmatpush.bf16.msra.mxu0 %v5106
    %5417 = vmatpush.bf16.msra.mxu0 %v5098
    %5418 = vmatpush.bf16.msra.mxu0 %v5090
    %5419 = vmatpush.bf16.msra.mxu0 %v5082
    %5420 = vmatmul.bf16.gmra.mxu0 %v4500
    %v5421 = vpop.f32.mrf.mxu0
    %v5422 = vadd.f32 %v5409, %v5421
    %v5423 = vpop.f32.mrf.mxu0
    %5424 = vdwg.mxu0
    %5425 = vmatpush.bf16.msra.mxu0 %v5075
    %5426 = vmatpush.bf16.msra.mxu0 %v5067
    %5427 = vmatpush.bf16.msra.mxu0 %v5059
    %5428 = vmatpush.bf16.msra.mxu0 %v5051
    %5429 = vmatpush.bf16.msra.mxu0 %v5043
    %5430 = vmatpush.bf16.msra.mxu0 %v5035
    %5431 = vmatpush.bf16.msra.mxu0 %v5027
    %5432 = vmatpush.bf16.msra.mxu0 %v5019
    %5433 = vmatmul.bf16.gmra.mxu0 %v4499
    %v5434 = vpop.f32.mrf.mxu0
    %v5435 = vadd.f32 0.0, %v5434
    %v5436 = vpop.f32.mrf.mxu0
    %5437 = vdwg.mxu0
    %5438 = vmatpush.bf16.msra.mxu0 %v5139
    %5439 = vmatpush.bf16.msra.mxu0 %v5131
    %5440 = vmatpush.bf16.msra.mxu0 %v5123
    %5441 = vmatpush.bf16.msra.mxu0 %v5115
    %5442 = vmatpush.bf16.msra.mxu0 %v5107
    %5443 = vmatpush.bf16.msra.mxu0 %v5099
    %5444 = vmatpush.bf16.msra.mxu0 %v5091
    %5445 = vmatpush.bf16.msra.mxu0 %v5083
    %5446 = vmatmul.bf16.gmra.mxu0 %v4500
    %v5447 = vpop.f32.mrf.mxu0
    %v5448 = vadd.f32 %v5435, %v5447
    %v5449 = vpop.f32.mrf.mxu0
    %5450 = vdwg.mxu0
    %5451 = vmatpush.bf16.msra.mxu0 %v5076
    %5452 = vmatpush.bf16.msra.mxu0 %v5068
    %5453 = vmatpush.bf16.msra.mxu0 %v5060
    %5454 = vmatpush.bf16.msra.mxu0 %v5052
    %5455 = vmatpush.bf16.msra.mxu0 %v5044
    %5456 = vmatpush.bf16.msra.mxu0 %v5036
    %5457 = vmatpush.bf16.msra.mxu0 %v5028
    %5458 = vmatpush.bf16.msra.mxu0 %v5020
    %5459 = vmatmul.bf16.gmra.mxu0 %v4499
    %v5460 = vpop.f32.mrf.mxu0
    %v5461 = vadd.f32 0.0, %v5460
    %v5462 = vpop.f32.mrf.mxu0
    %5463 = vdwg.mxu0
    %5464 = vmatpush.bf16.msra.mxu0 %v5140
    %5465 = vmatpush.bf16.msra.mxu0 %v5132
    %5466 = vmatpush.bf16.msra.mxu0 %v5124
    %5467 = vmatpush.bf16.msra.mxu0 %v5116
    %5468 = vmatpush.bf16.msra.mxu0 %v5108
    %5469 = vmatpush.bf16.msra.mxu0 %v5100
    %5470 = vmatpush.bf16.msra.mxu0 %v5092
    %5471 = vmatpush.bf16.msra.mxu0 %v5084
    %5472 = vmatmul.bf16.gmra.mxu0 %v4500
    %v5473 = vpop.f32.mrf.mxu0
    %v5474 = vadd.f32 %v5461, %v5473
    %v5475 = vpop.f32.mrf.mxu0
    %5476 = vdwg.mxu0
    %v5485 = vrot.slane %v5318, 7
    %v5486 = vrot.slane %v5344, 6
    %v5487 = vrot.slane %v5370, 5
    %v5488 = vrot.slane %v5396, 4
    %v5489 = vrot.slane %v5422, 3
    %v5490 = vrot.slane %v5448, 2
    %v5491 = vrot.slane %v5474, 1
    %v5492 = vsel %vm169, %v5292, %v5485
    %v5493 = vsel %vm2214, %v5486, %v5487
    %v5494 = vsel %vm2216, %v5492, %v5493
    %v5495 = vsel %vm2218, %v5488, %v5489
    %v5496 = vsel %vm2220, %v5490, %v5491
    %v5497 = vsel %vm2222, %v5495, %v5496
    %v5498 = vsel %vm2224, %v5494, %v5497
    %v5500 = vadd.f32 %v4493, %v5498
    %v5501 = vxor.u32 %v5500, 2147483648
    %v5502 = vmul.f32 %v5501, 1.442695
    %v5503 = vpow.pop %v5502
    %v5504 = vadd.f32 %v5503, 1.0
    %v5505 = vrcp.pop %v5504
    %v5506 = vmul.f32 %v5504, %v5505
    %v5507 = vsub.f32 1.0, %v5506
    %v5508 = vmul.f32 %v5505, %v5507
    %v5509 = vadd.f32 %v5505, %v5508
    %vm5510 = vweird.f32 %v5504
    %vm5511 = vweird.f32 %v5505
    %vm5512 = vmor %vm5510, %vm5511
    %v5513 = vsel %vm5512, %v5505, %v5509
    %v5514 = vand.u32 2147483647, %v5504
    %vm5515 = vcmp.eq.f32.partialorder %v5514, 8.507059e+37
    %v5516 = vand.u32 %v5504, 2147483648
    %v5517 = vor.u32 1.1754944e-38, %v5516
    %v5518 = vsel %vm5515, %v5517, %v5513
    %v5519 = vmul.f32 1.0, %v5518
    %v5521 = vrot.slane %v5500, 2
    %v5523 = vxor.u32 %v5521, 2147483648
    %v5524 = vmul.f32 %v5523, 1.442695
    %v5525 = vpow.pop %v5524
    %v5526 = vadd.f32 %v5525, 1.0
    %v5527 = vrcp.pop %v5526
    %v5528 = vmul.f32 %v5526, %v5527
    %v5529 = vsub.f32 1.0, %v5528
    %v5530 = vmul.f32 %v5527, %v5529
    %v5531 = vadd.f32 %v5527, %v5530
    %vm5532 = vweird.f32 %v5526
    %vm5533 = vweird.f32 %v5527
    %vm5534 = vmor %vm5532, %vm5533
    %v5535 = vsel %vm5534, %v5527, %v5531
    %v5536 = vand.u32 2147483647, %v5526
    %vm5537 = vcmp.eq.f32.partialorder %v5536, 8.507059e+37
    %v5538 = vand.u32 %v5526, 2147483648
    %v5539 = vor.u32 1.1754944e-38, %v5538
    %v5540 = vsel %vm5537, %v5539, %v5535
    %v5541 = vmul.f32 1.0, %v5540
    %v5542 = vrot.slane %v5500, 4
    %v5544 = vtanh.pop %v5542
    %v5545 = vrot.slane %v5500, 6
    %v5547 = vxor.u32 %v5545, 2147483648
    %v5548 = vmul.f32 %v5547, 1.442695
    %v5549 = vpow.pop %v5548
    %v5550 = vadd.f32 %v5549, 1.0
    %v5551 = vrcp.pop %v5550
    %v5552 = vmul.f32 %v5550, %v5551
    %v5553 = vsub.f32 1.0, %v5552
    %v5554 = vmul.f32 %v5551, %v5553
    %v5555 = vadd.f32 %v5551, %v5554
    %vm5556 = vweird.f32 %v5550
    %vm5557 = vweird.f32 %v5551
    %vm5558 = vmor %vm5556, %vm5557
    %v5559 = vsel %vm5558, %v5551, %v5555
    %v5560 = vand.u32 2147483647, %v5550
    %vm5561 = vcmp.eq.f32.partialorder %v5560, 8.507059e+37
    %v5562 = vand.u32 %v5550, 2147483648
    %v5563 = vor.u32 1.1754944e-38, %v5562
    %v5564 = vsel %vm5561, %v5563, %v5559
    %v5565 = vmul.f32 1.0, %v5564
    %v5566 = vmul.f32 %v5541, %v4478
    %v5567 = vmul.f32 %v5519, %v5544
    %v5568 = vadd.f32 %v5566, %v5567
    %v5569 = vtanh.pop %v5568
    %v5570 = vmul.f32 %v5565, %v5569
    %s5571 = scalar_lea.vmem %s7, 3
    %5572 = vst.msk [vmem:[%s5571] ss:$8 sm:$0x3] %vm2301, %v5570
    %5573 = vst.msk [vmem:[%s5571] ss:$8 sm:$0x0] %vm2301, %v5570
    %s5574 = sadd.s32 %s2304, 3
    %p5575 = scmp.eq.s32.totalorder %s5574, 7
    // Predicated region
    $region62: #{oracle_gold_rollout.2} parent=1 // pred_check
      %p5576 = pneg %p5575
    $region63: #{oracle_gold_rollout.2} parent=1 // pred_check_branch
      %5578 = sbr.rel (%p5576) target = $region65
    $region64: #{oracle_gold_rollout.2} parent=1 // pred_region
      %5579 = vst.msk [vmem:[#allocation13] sm:$0x3] %vm2301, %v5568
    $region65: #{oracle_gold_rollout.2} parent=1 // pred_fallthru
      _
    %s5580 = scalar_lea.vmem [#allocation4], 4
    %v5581 = vld [vmem:[%s5580] ss:$8 sm:$0xf]
    %v5582 = vld [vmem:[%s5580] ss:$8 sm:$0xf0]
    %v5583 = vor.u32 %v5581, %v5582
    %v5585 = vperm.slane %v5570, 0
    %v5586 = vperm.slane %v5570, 1
    %v5589 = vpack.c.bf16 %v5585, %v5585
    %v5590 = vpack.c.bf16 %v5586, %v5586
    %v5591 = vld [vmem:[#allocation11] sm:$0xff]
    %v5592 = vld [vmem:[#allocation11 + $0x8] sm:$0xff]
    %v5593 = vld [vmem:[#allocation11 + $0x10] sm:$0xff]
    %v5594 = vld [vmem:[#allocation11 + $0x18] sm:$0xff]
    %v5595 = vld [vmem:[#allocation11 + $0x20] sm:$0xff]
    %v5596 = vld [vmem:[#allocation11 + $0x28] sm:$0xff]
    %v5597 = vld [vmem:[#allocation11 + $0x30] sm:$0xff]
    %v5598 = vld [vmem:[#allocation11 + $0x38] sm:$0xff]
    %v5599 = vld [vmem:[#allocation11 + $0x40] sm:$0xff]
    %v5600 = vld [vmem:[#allocation11 + $0x48] sm:$0xff]
    %v5601 = vld [vmem:[#allocation11 + $0x50] sm:$0xff]
    %v5602 = vld [vmem:[#allocation11 + $0x58] sm:$0xff]
    %v5603 = vld [vmem:[#allocation11 + $0x60] sm:$0xff]
    %v5604 = vld [vmem:[#allocation11 + $0x68] sm:$0xff]
    %v5605 = vld [vmem:[#allocation11 + $0x70] sm:$0xff]
    %v5606 = vld [vmem:[#allocation11 + $0x78] sm:$0xff]
    %v5607 = vld [vmem:[#allocation11 + $0x80] sm:$0xff]
    %v5608 = vld [vmem:[#allocation11 + $0x88] sm:$0xff]
    %v5609 = vld [vmem:[#allocation11 + $0x90] sm:$0xff]
    %v5610 = vld [vmem:[#allocation11 + $0x98] sm:$0xff]
    %v5611 = vld [vmem:[#allocation11 + $0xa0] sm:$0xff]
    %v5612 = vld [vmem:[#allocation11 + $0xa8] sm:$0xff]
    %v5613 = vld [vmem:[#allocation11 + $0xb0] sm:$0xff]
    %v5614 = vld [vmem:[#allocation11 + $0xb8] sm:$0xff]
    %v5615 = vld [vmem:[#allocation11 + $0xc0] sm:$0xff]
    %v5616 = vld [vmem:[#allocation11 + $0xc8] sm:$0xff]
    %v5617 = vld [vmem:[#allocation11 + $0xd0] sm:$0xff]
    %v5618 = vld [vmem:[#allocation11 + $0xd8] sm:$0xff]
    %v5619 = vld [vmem:[#allocation11 + $0xe0] sm:$0xff]
    %v5620 = vld [vmem:[#allocation11 + $0xe8] sm:$0xff]
    %v5621 = vld [vmem:[#allocation11 + $0xf0] sm:$0xff]
    %v5622 = vld [vmem:[#allocation11 + $0xf8] sm:$0xff]
    %v5623 = vld [vmem:[#allocation11 + $0x100] sm:$0xff]
    %v5624 = vld [vmem:[#allocation11 + $0x108] sm:$0xff]
    %v5625 = vld [vmem:[#allocation11 + $0x110] sm:$0xff]
    %v5626 = vld [vmem:[#allocation11 + $0x118] sm:$0xff]
    %v5627 = vld [vmem:[#allocation11 + $0x120] sm:$0xff]
    %v5628 = vld [vmem:[#allocation11 + $0x128] sm:$0xff]
    %v5629 = vld [vmem:[#allocation11 + $0x130] sm:$0xff]
    %v5630 = vld [vmem:[#allocation11 + $0x138] sm:$0xff]
    %v5631 = vld [vmem:[#allocation11 + $0x140] sm:$0xff]
    %v5632 = vld [vmem:[#allocation11 + $0x148] sm:$0xff]
    %v5633 = vld [vmem:[#allocation11 + $0x150] sm:$0xff]
    %v5634 = vld [vmem:[#allocation11 + $0x158] sm:$0xff]
    %v5635 = vld [vmem:[#allocation11 + $0x160] sm:$0xff]
    %v5636 = vld [vmem:[#allocation11 + $0x168] sm:$0xff]
    %v5637 = vld [vmem:[#allocation11 + $0x170] sm:$0xff]
    %v5638 = vld [vmem:[#allocation11 + $0x178] sm:$0xff]
    %v5639 = vld [vmem:[#allocation11 + $0x180] sm:$0xff]
    %v5640 = vld [vmem:[#allocation11 + $0x188] sm:$0xff]
    %v5641 = vld [vmem:[#allocation11 + $0x190] sm:$0xff]
    %v5642 = vld [vmem:[#allocation11 + $0x198] sm:$0xff]
    %v5643 = vld [vmem:[#allocation11 + $0x1a0] sm:$0xff]
    %v5644 = vld [vmem:[#allocation11 + $0x1a8] sm:$0xff]
    %v5645 = vld [vmem:[#allocation11 + $0x1b0] sm:$0xff]
    %v5646 = vld [vmem:[#allocation11 + $0x1b8] sm:$0xff]
    %v5647 = vld [vmem:[#allocation11 + $0x1c0] sm:$0xff]
    %v5648 = vld [vmem:[#allocation11 + $0x1c8] sm:$0xff]
    %v5649 = vld [vmem:[#allocation11 + $0x1d0] sm:$0xff]
    %v5650 = vld [vmem:[#allocation11 + $0x1d8] sm:$0xff]
    %v5651 = vld [vmem:[#allocation11 + $0x1e0] sm:$0xff]
    %v5652 = vld [vmem:[#allocation11 + $0x1e8] sm:$0xff]
    %v5653 = vld [vmem:[#allocation11 + $0x1f0] sm:$0xff]
    %v5654 = vld [vmem:[#allocation11 + $0x1f8] sm:$0xff]
    %v5655 = vld [vmem:[#allocation11 + $0x200] sm:$0xff]
    %v5656 = vld [vmem:[#allocation11 + $0x208] sm:$0xff]
    %v5657 = vld [vmem:[#allocation11 + $0x210] sm:$0xff]
    %v5658 = vld [vmem:[#allocation11 + $0x218] sm:$0xff]
    %v5659 = vld [vmem:[#allocation11 + $0x220] sm:$0xff]
    %v5660 = vld [vmem:[#allocation11 + $0x228] sm:$0xff]
    %v5661 = vld [vmem:[#allocation11 + $0x230] sm:$0xff]
    %v5662 = vld [vmem:[#allocation11 + $0x238] sm:$0xff]
    %v5663 = vld [vmem:[#allocation11 + $0x240] sm:$0xff]
    %v5664 = vld [vmem:[#allocation11 + $0x248] sm:$0xff]
    %v5665 = vld [vmem:[#allocation11 + $0x250] sm:$0xff]
    %v5666 = vld [vmem:[#allocation11 + $0x258] sm:$0xff]
    %v5667 = vld [vmem:[#allocation11 + $0x260] sm:$0xff]
    %v5668 = vld [vmem:[#allocation11 + $0x268] sm:$0xff]
    %v5669 = vld [vmem:[#allocation11 + $0x270] sm:$0xff]
    %v5670 = vld [vmem:[#allocation11 + $0x278] sm:$0xff]
    %v5671 = vld [vmem:[#allocation11 + $0x280] sm:$0xff]
    %v5672 = vld [vmem:[#allocation11 + $0x288] sm:$0xff]
    %v5673 = vld [vmem:[#allocation11 + $0x290] sm:$0xff]
    %v5674 = vld [vmem:[#allocation11 + $0x298] sm:$0xff]
    %v5675 = vld [vmem:[#allocation11 + $0x2a0] sm:$0xff]
    %v5676 = vld [vmem:[#allocation11 + $0x2a8] sm:$0xff]
    %v5677 = vld [vmem:[#allocation11 + $0x2b0] sm:$0xff]
    %v5678 = vld [vmem:[#allocation11 + $0x2b8] sm:$0xff]
    %v5679 = vld [vmem:[#allocation11 + $0x2c0] sm:$0xff]
    %v5680 = vld [vmem:[#allocation11 + $0x2c8] sm:$0xff]
    %v5681 = vld [vmem:[#allocation11 + $0x2d0] sm:$0xff]
    %v5682 = vld [vmem:[#allocation11 + $0x2d8] sm:$0xff]
    %v5683 = vld [vmem:[#allocation11 + $0x2e0] sm:$0xff]
    %v5684 = vld [vmem:[#allocation11 + $0x2e8] sm:$0xff]
    %v5685 = vld [vmem:[#allocation11 + $0x2f0] sm:$0xff]
    %v5686 = vld [vmem:[#allocation11 + $0x2f8] sm:$0xff]
    %v5687 = vld [vmem:[#allocation11 + $0x300] sm:$0xff]
    %v5688 = vld [vmem:[#allocation11 + $0x308] sm:$0xff]
    %v5689 = vld [vmem:[#allocation11 + $0x310] sm:$0xff]
    %v5690 = vld [vmem:[#allocation11 + $0x318] sm:$0xff]
    %v5691 = vld [vmem:[#allocation11 + $0x320] sm:$0xff]
    %v5692 = vld [vmem:[#allocation11 + $0x328] sm:$0xff]
    %v5693 = vld [vmem:[#allocation11 + $0x330] sm:$0xff]
    %v5694 = vld [vmem:[#allocation11 + $0x338] sm:$0xff]
    %v5695 = vld [vmem:[#allocation11 + $0x340] sm:$0xff]
    %v5696 = vld [vmem:[#allocation11 + $0x348] sm:$0xff]
    %v5697 = vld [vmem:[#allocation11 + $0x350] sm:$0xff]
    %v5698 = vld [vmem:[#allocation11 + $0x358] sm:$0xff]
    %v5699 = vld [vmem:[#allocation11 + $0x360] sm:$0xff]
    %v5700 = vld [vmem:[#allocation11 + $0x368] sm:$0xff]
    %v5701 = vld [vmem:[#allocation11 + $0x370] sm:$0xff]
    %v5702 = vld [vmem:[#allocation11 + $0x378] sm:$0xff]
    %v5703 = vld [vmem:[#allocation11 + $0x380] sm:$0xff]
    %v5704 = vld [vmem:[#allocation11 + $0x388] sm:$0xff]
    %v5705 = vld [vmem:[#allocation11 + $0x390] sm:$0xff]
    %v5706 = vld [vmem:[#allocation11 + $0x398] sm:$0xff]
    %v5707 = vld [vmem:[#allocation11 + $0x3a0] sm:$0xff]
    %v5708 = vld [vmem:[#allocation11 + $0x3a8] sm:$0xff]
    %v5709 = vld [vmem:[#allocation11 + $0x3b0] sm:$0xff]
    %v5710 = vld [vmem:[#allocation11 + $0x3b8] sm:$0xff]
    %v5711 = vld [vmem:[#allocation11 + $0x3c0] sm:$0xff]
    %v5712 = vld [vmem:[#allocation11 + $0x3c8] sm:$0xff]
    %v5713 = vld [vmem:[#allocation11 + $0x3d0] sm:$0xff]
    %v5714 = vld [vmem:[#allocation11 + $0x3d8] sm:$0xff]
    %v5715 = vld [vmem:[#allocation11 + $0x3e0] sm:$0xff]
    %v5716 = vld [vmem:[#allocation11 + $0x3e8] sm:$0xff]
    %v5717 = vld [vmem:[#allocation11 + $0x3f0] sm:$0xff]
    %v5718 = vld [vmem:[#allocation11 + $0x3f8] sm:$0xff]
    %v5847 = vunpack.c.l.b16 %v5591
    %v5848 = vunpack.c.h.b16 %v5591
    %v5849 = vunpack.c.l.b16 %v5592
    %v5850 = vunpack.c.h.b16 %v5592
    %v5851 = vunpack.c.l.b16 %v5593
    %v5852 = vunpack.c.h.b16 %v5593
    %v5853 = vunpack.c.l.b16 %v5594
    %v5854 = vunpack.c.h.b16 %v5594
    %v5855 = vunpack.c.l.b16 %v5595
    %v5856 = vunpack.c.h.b16 %v5595
    %v5857 = vunpack.c.l.b16 %v5596
    %v5858 = vunpack.c.h.b16 %v5596
    %v5859 = vunpack.c.l.b16 %v5597
    %v5860 = vunpack.c.h.b16 %v5597
    %v5861 = vunpack.c.l.b16 %v5598
    %v5862 = vunpack.c.h.b16 %v5598
    %v5863 = vunpack.c.l.b16 %v5599
    %v5864 = vunpack.c.h.b16 %v5599
    %v5865 = vunpack.c.l.b16 %v5600
    %v5866 = vunpack.c.h.b16 %v5600
    %v5867 = vunpack.c.l.b16 %v5601
    %v5868 = vunpack.c.h.b16 %v5601
    %v5869 = vunpack.c.l.b16 %v5602
    %v5870 = vunpack.c.h.b16 %v5602
    %v5871 = vunpack.c.l.b16 %v5603
    %v5872 = vunpack.c.h.b16 %v5603
    %v5873 = vunpack.c.l.b16 %v5604
    %v5874 = vunpack.c.h.b16 %v5604
    %v5875 = vunpack.c.l.b16 %v5605
    %v5876 = vunpack.c.h.b16 %v5605
    %v5877 = vunpack.c.l.b16 %v5606
    %v5878 = vunpack.c.h.b16 %v5606
    %v5879 = vunpack.c.l.b16 %v5607
    %v5880 = vunpack.c.h.b16 %v5607
    %v5881 = vunpack.c.l.b16 %v5608
    %v5882 = vunpack.c.h.b16 %v5608
    %v5883 = vunpack.c.l.b16 %v5609
    %v5884 = vunpack.c.h.b16 %v5609
    %v5885 = vunpack.c.l.b16 %v5610
    %v5886 = vunpack.c.h.b16 %v5610
    %v5887 = vunpack.c.l.b16 %v5611
    %v5888 = vunpack.c.h.b16 %v5611
    %v5889 = vunpack.c.l.b16 %v5612
    %v5890 = vunpack.c.h.b16 %v5612
    %v5891 = vunpack.c.l.b16 %v5613
    %v5892 = vunpack.c.h.b16 %v5613
    %v5893 = vunpack.c.l.b16 %v5614
    %v5894 = vunpack.c.h.b16 %v5614
    %v5895 = vunpack.c.l.b16 %v5615
    %v5896 = vunpack.c.h.b16 %v5615
    %v5897 = vunpack.c.l.b16 %v5616
    %v5898 = vunpack.c.h.b16 %v5616
    %v5899 = vunpack.c.l.b16 %v5617
    %v5900 = vunpack.c.h.b16 %v5617
    %v5901 = vunpack.c.l.b16 %v5618
    %v5902 = vunpack.c.h.b16 %v5618
    %v5903 = vunpack.c.l.b16 %v5619
    %v5904 = vunpack.c.h.b16 %v5619
    %v5905 = vunpack.c.l.b16 %v5620
    %v5906 = vunpack.c.h.b16 %v5620
    %v5907 = vunpack.c.l.b16 %v5621
    %v5908 = vunpack.c.h.b16 %v5621
    %v5909 = vunpack.c.l.b16 %v5622
    %v5910 = vunpack.c.h.b16 %v5622
    %v5911 = vunpack.c.l.b16 %v5623
    %v5912 = vunpack.c.h.b16 %v5623
    %v5913 = vunpack.c.l.b16 %v5624
    %v5914 = vunpack.c.h.b16 %v5624
    %v5915 = vunpack.c.l.b16 %v5625
    %v5916 = vunpack.c.h.b16 %v5625
    %v5917 = vunpack.c.l.b16 %v5626
    %v5918 = vunpack.c.h.b16 %v5626
    %v5919 = vunpack.c.l.b16 %v5627
    %v5920 = vunpack.c.h.b16 %v5627
    %v5921 = vunpack.c.l.b16 %v5628
    %v5922 = vunpack.c.h.b16 %v5628
    %v5923 = vunpack.c.l.b16 %v5629
    %v5924 = vunpack.c.h.b16 %v5629
    %v5925 = vunpack.c.l.b16 %v5630
    %v5926 = vunpack.c.h.b16 %v5630
    %v5927 = vunpack.c.l.b16 %v5631
    %v5928 = vunpack.c.h.b16 %v5631
    %v5929 = vunpack.c.l.b16 %v5632
    %v5930 = vunpack.c.h.b16 %v5632
    %v5931 = vunpack.c.l.b16 %v5633
    %v5932 = vunpack.c.h.b16 %v5633
    %v5933 = vunpack.c.l.b16 %v5634
    %v5934 = vunpack.c.h.b16 %v5634
    %v5935 = vunpack.c.l.b16 %v5635
    %v5936 = vunpack.c.h.b16 %v5635
    %v5937 = vunpack.c.l.b16 %v5636
    %v5938 = vunpack.c.h.b16 %v5636
    %v5939 = vunpack.c.l.b16 %v5637
    %v5940 = vunpack.c.h.b16 %v5637
    %v5941 = vunpack.c.l.b16 %v5638
    %v5942 = vunpack.c.h.b16 %v5638
    %v5943 = vunpack.c.l.b16 %v5639
    %v5944 = vunpack.c.h.b16 %v5639
    %v5945 = vunpack.c.l.b16 %v5640
    %v5946 = vunpack.c.h.b16 %v5640
    %v5947 = vunpack.c.l.b16 %v5641
    %v5948 = vunpack.c.h.b16 %v5641
    %v5949 = vunpack.c.l.b16 %v5642
    %v5950 = vunpack.c.h.b16 %v5642
    %v5951 = vunpack.c.l.b16 %v5643
    %v5952 = vunpack.c.h.b16 %v5643
    %v5953 = vunpack.c.l.b16 %v5644
    %v5954 = vunpack.c.h.b16 %v5644
    %v5955 = vunpack.c.l.b16 %v5645
    %v5956 = vunpack.c.h.b16 %v5645
    %v5957 = vunpack.c.l.b16 %v5646
    %v5958 = vunpack.c.h.b16 %v5646
    %v5959 = vunpack.c.l.b16 %v5647
    %v5960 = vunpack.c.h.b16 %v5647
    %v5961 = vunpack.c.l.b16 %v5648
    %v5962 = vunpack.c.h.b16 %v5648
    %v5963 = vunpack.c.l.b16 %v5649
    %v5964 = vunpack.c.h.b16 %v5649
    %v5965 = vunpack.c.l.b16 %v5650
    %v5966 = vunpack.c.h.b16 %v5650
    %v5967 = vunpack.c.l.b16 %v5651
    %v5968 = vunpack.c.h.b16 %v5651
    %v5969 = vunpack.c.l.b16 %v5652
    %v5970 = vunpack.c.h.b16 %v5652
    %v5971 = vunpack.c.l.b16 %v5653
    %v5972 = vunpack.c.h.b16 %v5653
    %v5973 = vunpack.c.l.b16 %v5654
    %v5974 = vunpack.c.h.b16 %v5654
    %v5975 = vunpack.c.l.b16 %v5655
    %v5976 = vunpack.c.h.b16 %v5655
    %v5977 = vunpack.c.l.b16 %v5656
    %v5978 = vunpack.c.h.b16 %v5656
    %v5979 = vunpack.c.l.b16 %v5657
    %v5980 = vunpack.c.h.b16 %v5657
    %v5981 = vunpack.c.l.b16 %v5658
    %v5982 = vunpack.c.h.b16 %v5658
    %v5983 = vunpack.c.l.b16 %v5659
    %v5984 = vunpack.c.h.b16 %v5659
    %v5985 = vunpack.c.l.b16 %v5660
    %v5986 = vunpack.c.h.b16 %v5660
    %v5987 = vunpack.c.l.b16 %v5661
    %v5988 = vunpack.c.h.b16 %v5661
    %v5989 = vunpack.c.l.b16 %v5662
    %v5990 = vunpack.c.h.b16 %v5662
    %v5991 = vunpack.c.l.b16 %v5663
    %v5992 = vunpack.c.h.b16 %v5663
    %v5993 = vunpack.c.l.b16 %v5664
    %v5994 = vunpack.c.h.b16 %v5664
    %v5995 = vunpack.c.l.b16 %v5665
    %v5996 = vunpack.c.h.b16 %v5665
    %v5997 = vunpack.c.l.b16 %v5666
    %v5998 = vunpack.c.h.b16 %v5666
    %v5999 = vunpack.c.l.b16 %v5667
    %v6000 = vunpack.c.h.b16 %v5667
    %v6001 = vunpack.c.l.b16 %v5668
    %v6002 = vunpack.c.h.b16 %v5668
    %v6003 = vunpack.c.l.b16 %v5669
    %v6004 = vunpack.c.h.b16 %v5669
    %v6005 = vunpack.c.l.b16 %v5670
    %v6006 = vunpack.c.h.b16 %v5670
    %v6007 = vunpack.c.l.b16 %v5671
    %v6008 = vunpack.c.h.b16 %v5671
    %v6009 = vunpack.c.l.b16 %v5672
    %v6010 = vunpack.c.h.b16 %v5672
    %v6011 = vunpack.c.l.b16 %v5673
    %v6012 = vunpack.c.h.b16 %v5673
    %v6013 = vunpack.c.l.b16 %v5674
    %v6014 = vunpack.c.h.b16 %v5674
    %v6015 = vunpack.c.l.b16 %v5675
    %v6016 = vunpack.c.h.b16 %v5675
    %v6017 = vunpack.c.l.b16 %v5676
    %v6018 = vunpack.c.h.b16 %v5676
    %v6019 = vunpack.c.l.b16 %v5677
    %v6020 = vunpack.c.h.b16 %v5677
    %v6021 = vunpack.c.l.b16 %v5678
    %v6022 = vunpack.c.h.b16 %v5678
    %v6023 = vunpack.c.l.b16 %v5679
    %v6024 = vunpack.c.h.b16 %v5679
    %v6025 = vunpack.c.l.b16 %v5680
    %v6026 = vunpack.c.h.b16 %v5680
    %v6027 = vunpack.c.l.b16 %v5681
    %v6028 = vunpack.c.h.b16 %v5681
    %v6029 = vunpack.c.l.b16 %v5682
    %v6030 = vunpack.c.h.b16 %v5682
    %v6031 = vunpack.c.l.b16 %v5683
    %v6032 = vunpack.c.h.b16 %v5683
    %v6033 = vunpack.c.l.b16 %v5684
    %v6034 = vunpack.c.h.b16 %v5684
    %v6035 = vunpack.c.l.b16 %v5685
    %v6036 = vunpack.c.h.b16 %v5685
    %v6037 = vunpack.c.l.b16 %v5686
    %v6038 = vunpack.c.h.b16 %v5686
    %v6039 = vunpack.c.l.b16 %v5687
    %v6040 = vunpack.c.h.b16 %v5687
    %v6041 = vunpack.c.l.b16 %v5688
    %v6042 = vunpack.c.h.b16 %v5688
    %v6043 = vunpack.c.l.b16 %v5689
    %v6044 = vunpack.c.h.b16 %v5689
    %v6045 = vunpack.c.l.b16 %v5690
    %v6046 = vunpack.c.h.b16 %v5690
    %v6047 = vunpack.c.l.b16 %v5691
    %v6048 = vunpack.c.h.b16 %v5691
    %v6049 = vunpack.c.l.b16 %v5692
    %v6050 = vunpack.c.h.b16 %v5692
    %v6051 = vunpack.c.l.b16 %v5693
    %v6052 = vunpack.c.h.b16 %v5693
    %v6053 = vunpack.c.l.b16 %v5694
    %v6054 = vunpack.c.h.b16 %v5694
    %v6055 = vunpack.c.l.b16 %v5695
    %v6056 = vunpack.c.h.b16 %v5695
    %v6057 = vunpack.c.l.b16 %v5696
    %v6058 = vunpack.c.h.b16 %v5696
    %v6059 = vunpack.c.l.b16 %v5697
    %v6060 = vunpack.c.h.b16 %v5697
    %v6061 = vunpack.c.l.b16 %v5698
    %v6062 = vunpack.c.h.b16 %v5698
    %v6063 = vunpack.c.l.b16 %v5699
    %v6064 = vunpack.c.h.b16 %v5699
    %v6065 = vunpack.c.l.b16 %v5700
    %v6066 = vunpack.c.h.b16 %v5700
    %v6067 = vunpack.c.l.b16 %v5701
    %v6068 = vunpack.c.h.b16 %v5701
    %v6069 = vunpack.c.l.b16 %v5702
    %v6070 = vunpack.c.h.b16 %v5702
    %v6071 = vunpack.c.l.b16 %v5703
    %v6072 = vunpack.c.h.b16 %v5703
    %v6073 = vunpack.c.l.b16 %v5704
    %v6074 = vunpack.c.h.b16 %v5704
    %v6075 = vunpack.c.l.b16 %v5705
    %v6076 = vunpack.c.h.b16 %v5705
    %v6077 = vunpack.c.l.b16 %v5706
    %v6078 = vunpack.c.h.b16 %v5706
    %v6079 = vunpack.c.l.b16 %v5707
    %v6080 = vunpack.c.h.b16 %v5707
    %v6081 = vunpack.c.l.b16 %v5708
    %v6082 = vunpack.c.h.b16 %v5708
    %v6083 = vunpack.c.l.b16 %v5709
    %v6084 = vunpack.c.h.b16 %v5709
    %v6085 = vunpack.c.l.b16 %v5710
    %v6086 = vunpack.c.h.b16 %v5710
    %v6087 = vunpack.c.l.b16 %v5711
    %v6088 = vunpack.c.h.b16 %v5711
    %v6089 = vunpack.c.l.b16 %v5712
    %v6090 = vunpack.c.h.b16 %v5712
    %v6091 = vunpack.c.l.b16 %v5713
    %v6092 = vunpack.c.h.b16 %v5713
    %v6093 = vunpack.c.l.b16 %v5714
    %v6094 = vunpack.c.h.b16 %v5714
    %v6095 = vunpack.c.l.b16 %v5715
    %v6096 = vunpack.c.h.b16 %v5715
    %v6097 = vunpack.c.l.b16 %v5716
    %v6098 = vunpack.c.h.b16 %v5716
    %v6099 = vunpack.c.l.b16 %v5717
    %v6100 = vunpack.c.h.b16 %v5717
    %v6101 = vunpack.c.l.b16 %v5718
    %v6102 = vunpack.c.h.b16 %v5718
    %v6103 = vpack.c.b16 %v5855, %v5847
    %v6104 = vpack.c.b16 %v5856, %v5848
    %v6105 = vpack.c.b16 %v5857, %v5849
    %v6106 = vpack.c.b16 %v5858, %v5850
    %v6107 = vpack.c.b16 %v5859, %v5851
    %v6108 = vpack.c.b16 %v5860, %v5852
    %v6109 = vpack.c.b16 %v5861, %v5853
    %v6110 = vpack.c.b16 %v5862, %v5854
    %v6111 = vpack.c.b16 %v5871, %v5863
    %v6112 = vpack.c.b16 %v5872, %v5864
    %v6113 = vpack.c.b16 %v5873, %v5865
    %v6114 = vpack.c.b16 %v5874, %v5866
    %v6115 = vpack.c.b16 %v5875, %v5867
    %v6116 = vpack.c.b16 %v5876, %v5868
    %v6117 = vpack.c.b16 %v5877, %v5869
    %v6118 = vpack.c.b16 %v5878, %v5870
    %v6119 = vpack.c.b16 %v5887, %v5879
    %v6120 = vpack.c.b16 %v5888, %v5880
    %v6121 = vpack.c.b16 %v5889, %v5881
    %v6122 = vpack.c.b16 %v5890, %v5882
    %v6123 = vpack.c.b16 %v5891, %v5883
    %v6124 = vpack.c.b16 %v5892, %v5884
    %v6125 = vpack.c.b16 %v5893, %v5885
    %v6126 = vpack.c.b16 %v5894, %v5886
    %v6127 = vpack.c.b16 %v5903, %v5895
    %v6128 = vpack.c.b16 %v5904, %v5896
    %v6129 = vpack.c.b16 %v5905, %v5897
    %v6130 = vpack.c.b16 %v5906, %v5898
    %v6131 = vpack.c.b16 %v5907, %v5899
    %v6132 = vpack.c.b16 %v5908, %v5900
    %v6133 = vpack.c.b16 %v5909, %v5901
    %v6134 = vpack.c.b16 %v5910, %v5902
    %v6135 = vpack.c.b16 %v5919, %v5911
    %v6136 = vpack.c.b16 %v5920, %v5912
    %v6137 = vpack.c.b16 %v5921, %v5913
    %v6138 = vpack.c.b16 %v5922, %v5914
    %v6139 = vpack.c.b16 %v5923, %v5915
    %v6140 = vpack.c.b16 %v5924, %v5916
    %v6141 = vpack.c.b16 %v5925, %v5917
    %v6142 = vpack.c.b16 %v5926, %v5918
    %v6143 = vpack.c.b16 %v5935, %v5927
    %v6144 = vpack.c.b16 %v5936, %v5928
    %v6145 = vpack.c.b16 %v5937, %v5929
    %v6146 = vpack.c.b16 %v5938, %v5930
    %v6147 = vpack.c.b16 %v5939, %v5931
    %v6148 = vpack.c.b16 %v5940, %v5932
    %v6149 = vpack.c.b16 %v5941, %v5933
    %v6150 = vpack.c.b16 %v5942, %v5934
    %v6151 = vpack.c.b16 %v5951, %v5943
    %v6152 = vpack.c.b16 %v5952, %v5944
    %v6153 = vpack.c.b16 %v5953, %v5945
    %v6154 = vpack.c.b16 %v5954, %v5946
    %v6155 = vpack.c.b16 %v5955, %v5947
    %v6156 = vpack.c.b16 %v5956, %v5948
    %v6157 = vpack.c.b16 %v5957, %v5949
    %v6158 = vpack.c.b16 %v5958, %v5950
    %v6159 = vpack.c.b16 %v5967, %v5959
    %v6160 = vpack.c.b16 %v5968, %v5960
    %v6161 = vpack.c.b16 %v5969, %v5961
    %v6162 = vpack.c.b16 %v5970, %v5962
    %v6163 = vpack.c.b16 %v5971, %v5963
    %v6164 = vpack.c.b16 %v5972, %v5964
    %v6165 = vpack.c.b16 %v5973, %v5965
    %v6166 = vpack.c.b16 %v5974, %v5966
    %v6167 = vpack.c.b16 %v5983, %v5975
    %v6168 = vpack.c.b16 %v5984, %v5976
    %v6169 = vpack.c.b16 %v5985, %v5977
    %v6170 = vpack.c.b16 %v5986, %v5978
    %v6171 = vpack.c.b16 %v5987, %v5979
    %v6172 = vpack.c.b16 %v5988, %v5980
    %v6173 = vpack.c.b16 %v5989, %v5981
    %v6174 = vpack.c.b16 %v5990, %v5982
    %v6175 = vpack.c.b16 %v5999, %v5991
    %v6176 = vpack.c.b16 %v6000, %v5992
    %v6177 = vpack.c.b16 %v6001, %v5993
    %v6178 = vpack.c.b16 %v6002, %v5994
    %v6179 = vpack.c.b16 %v6003, %v5995
    %v6180 = vpack.c.b16 %v6004, %v5996
    %v6181 = vpack.c.b16 %v6005, %v5997
    %v6182 = vpack.c.b16 %v6006, %v5998
    %v6183 = vpack.c.b16 %v6015, %v6007
    %v6184 = vpack.c.b16 %v6016, %v6008
    %v6185 = vpack.c.b16 %v6017, %v6009
    %v6186 = vpack.c.b16 %v6018, %v6010
    %v6187 = vpack.c.b16 %v6019, %v6011
    %v6188 = vpack.c.b16 %v6020, %v6012
    %v6189 = vpack.c.b16 %v6021, %v6013
    %v6190 = vpack.c.b16 %v6022, %v6014
    %v6191 = vpack.c.b16 %v6031, %v6023
    %v6192 = vpack.c.b16 %v6032, %v6024
    %v6193 = vpack.c.b16 %v6033, %v6025
    %v6194 = vpack.c.b16 %v6034, %v6026
    %v6195 = vpack.c.b16 %v6035, %v6027
    %v6196 = vpack.c.b16 %v6036, %v6028
    %v6197 = vpack.c.b16 %v6037, %v6029
    %v6198 = vpack.c.b16 %v6038, %v6030
    %v6199 = vpack.c.b16 %v6047, %v6039
    %v6200 = vpack.c.b16 %v6048, %v6040
    %v6201 = vpack.c.b16 %v6049, %v6041
    %v6202 = vpack.c.b16 %v6050, %v6042
    %v6203 = vpack.c.b16 %v6051, %v6043
    %v6204 = vpack.c.b16 %v6052, %v6044
    %v6205 = vpack.c.b16 %v6053, %v6045
    %v6206 = vpack.c.b16 %v6054, %v6046
    %v6207 = vpack.c.b16 %v6063, %v6055
    %v6208 = vpack.c.b16 %v6064, %v6056
    %v6209 = vpack.c.b16 %v6065, %v6057
    %v6210 = vpack.c.b16 %v6066, %v6058
    %v6211 = vpack.c.b16 %v6067, %v6059
    %v6212 = vpack.c.b16 %v6068, %v6060
    %v6213 = vpack.c.b16 %v6069, %v6061
    %v6214 = vpack.c.b16 %v6070, %v6062
    %v6215 = vpack.c.b16 %v6079, %v6071
    %v6216 = vpack.c.b16 %v6080, %v6072
    %v6217 = vpack.c.b16 %v6081, %v6073
    %v6218 = vpack.c.b16 %v6082, %v6074
    %v6219 = vpack.c.b16 %v6083, %v6075
    %v6220 = vpack.c.b16 %v6084, %v6076
    %v6221 = vpack.c.b16 %v6085, %v6077
    %v6222 = vpack.c.b16 %v6086, %v6078
    %v6223 = vpack.c.b16 %v6095, %v6087
    %v6224 = vpack.c.b16 %v6096, %v6088
    %v6225 = vpack.c.b16 %v6097, %v6089
    %v6226 = vpack.c.b16 %v6098, %v6090
    %v6227 = vpack.c.b16 %v6099, %v6091
    %v6228 = vpack.c.b16 %v6100, %v6092
    %v6229 = vpack.c.b16 %v6101, %v6093
    %v6230 = vpack.c.b16 %v6102, %v6094
    %6359 = vmatpush.bf16.msra.mxu0 %v6159
    %6360 = vmatpush.bf16.msra.mxu0 %v6151
    %6361 = vmatpush.bf16.msra.mxu0 %v6143
    %6362 = vmatpush.bf16.msra.mxu0 %v6135
    %6363 = vmatpush.bf16.msra.mxu0 %v6127
    %6364 = vmatpush.bf16.msra.mxu0 %v6119
    %6365 = vmatpush.bf16.msra.mxu0 %v6111
    %6366 = vmatpush.bf16.msra.mxu0 %v6103
    %6367 = vmatmul.bf16.gmra.mxu0 %v5589
    %v6368 = vpop.f32.mrf.mxu0
    %v6369 = vadd.f32 0.0, %v6368
    %v6370 = vpop.f32.mrf.mxu0
    %6371 = vdwg.mxu0
    %6372 = vmatpush.bf16.msra.mxu0 %v6223
    %6373 = vmatpush.bf16.msra.mxu0 %v6215
    %6374 = vmatpush.bf16.msra.mxu0 %v6207
    %6375 = vmatpush.bf16.msra.mxu0 %v6199
    %6376 = vmatpush.bf16.msra.mxu0 %v6191
    %6377 = vmatpush.bf16.msra.mxu0 %v6183
    %6378 = vmatpush.bf16.msra.mxu0 %v6175
    %6379 = vmatpush.bf16.msra.mxu0 %v6167
    %6380 = vmatmul.bf16.gmra.mxu0 %v5590
    %v6381 = vpop.f32.mrf.mxu0
    %v6382 = vadd.f32 %v6369, %v6381
    %v6383 = vpop.f32.mrf.mxu0
    %6384 = vdwg.mxu0
    %6385 = vmatpush.bf16.msra.mxu0 %v6160
    %6386 = vmatpush.bf16.msra.mxu0 %v6152
    %6387 = vmatpush.bf16.msra.mxu0 %v6144
    %6388 = vmatpush.bf16.msra.mxu0 %v6136
    %6389 = vmatpush.bf16.msra.mxu0 %v6128
    %6390 = vmatpush.bf16.msra.mxu0 %v6120
    %6391 = vmatpush.bf16.msra.mxu0 %v6112
    %6392 = vmatpush.bf16.msra.mxu0 %v6104
    %6393 = vmatmul.bf16.gmra.mxu0 %v5589
    %v6394 = vpop.f32.mrf.mxu0
    %v6395 = vadd.f32 0.0, %v6394
    %v6396 = vpop.f32.mrf.mxu0
    %6397 = vdwg.mxu0
    %6398 = vmatpush.bf16.msra.mxu0 %v6224
    %6399 = vmatpush.bf16.msra.mxu0 %v6216
    %6400 = vmatpush.bf16.msra.mxu0 %v6208
    %6401 = vmatpush.bf16.msra.mxu0 %v6200
    %6402 = vmatpush.bf16.msra.mxu0 %v6192
    %6403 = vmatpush.bf16.msra.mxu0 %v6184
    %6404 = vmatpush.bf16.msra.mxu0 %v6176
    %6405 = vmatpush.bf16.msra.mxu0 %v6168
    %6406 = vmatmul.bf16.gmra.mxu0 %v5590
    %v6407 = vpop.f32.mrf.mxu0
    %v6408 = vadd.f32 %v6395, %v6407
    %v6409 = vpop.f32.mrf.mxu0
    %6410 = vdwg.mxu0
    %6411 = vmatpush.bf16.msra.mxu0 %v6161
    %6412 = vmatpush.bf16.msra.mxu0 %v6153
    %6413 = vmatpush.bf16.msra.mxu0 %v6145
    %6414 = vmatpush.bf16.msra.mxu0 %v6137
    %6415 = vmatpush.bf16.msra.mxu0 %v6129
    %6416 = vmatpush.bf16.msra.mxu0 %v6121
    %6417 = vmatpush.bf16.msra.mxu0 %v6113
    %6418 = vmatpush.bf16.msra.mxu0 %v6105
    %6419 = vmatmul.bf16.gmra.mxu0 %v5589
    %v6420 = vpop.f32.mrf.mxu0
    %v6421 = vadd.f32 0.0, %v6420
    %v6422 = vpop.f32.mrf.mxu0
    %6423 = vdwg.mxu0
    %6424 = vmatpush.bf16.msra.mxu0 %v6225
    %6425 = vmatpush.bf16.msra.mxu0 %v6217
    %6426 = vmatpush.bf16.msra.mxu0 %v6209
    %6427 = vmatpush.bf16.msra.mxu0 %v6201
    %6428 = vmatpush.bf16.msra.mxu0 %v6193
    %6429 = vmatpush.bf16.msra.mxu0 %v6185
    %6430 = vmatpush.bf16.msra.mxu0 %v6177
    %6431 = vmatpush.bf16.msra.mxu0 %v6169
    %6432 = vmatmul.bf16.gmra.mxu0 %v5590
    %v6433 = vpop.f32.mrf.mxu0
    %v6434 = vadd.f32 %v6421, %v6433
    %v6435 = vpop.f32.mrf.mxu0
    %6436 = vdwg.mxu0
    %6437 = vmatpush.bf16.msra.mxu0 %v6162
    %6438 = vmatpush.bf16.msra.mxu0 %v6154
    %6439 = vmatpush.bf16.msra.mxu0 %v6146
    %6440 = vmatpush.bf16.msra.mxu0 %v6138
    %6441 = vmatpush.bf16.msra.mxu0 %v6130
    %6442 = vmatpush.bf16.msra.mxu0 %v6122
    %6443 = vmatpush.bf16.msra.mxu0 %v6114
    %6444 = vmatpush.bf16.msra.mxu0 %v6106
    %6445 = vmatmul.bf16.gmra.mxu0 %v5589
    %v6446 = vpop.f32.mrf.mxu0
    %v6447 = vadd.f32 0.0, %v6446
    %v6448 = vpop.f32.mrf.mxu0
    %6449 = vdwg.mxu0
    %6450 = vmatpush.bf16.msra.mxu0 %v6226
    %6451 = vmatpush.bf16.msra.mxu0 %v6218
    %6452 = vmatpush.bf16.msra.mxu0 %v6210
    %6453 = vmatpush.bf16.msra.mxu0 %v6202
    %6454 = vmatpush.bf16.msra.mxu0 %v6194
    %6455 = vmatpush.bf16.msra.mxu0 %v6186
    %6456 = vmatpush.bf16.msra.mxu0 %v6178
    %6457 = vmatpush.bf16.msra.mxu0 %v6170
    %6458 = vmatmul.bf16.gmra.mxu0 %v5590
    %v6459 = vpop.f32.mrf.mxu0
    %v6460 = vadd.f32 %v6447, %v6459
    %v6461 = vpop.f32.mrf.mxu0
    %6462 = vdwg.mxu0
    %6463 = vmatpush.bf16.msra.mxu0 %v6163
    %6464 = vmatpush.bf16.msra.mxu0 %v6155
    %6465 = vmatpush.bf16.msra.mxu0 %v6147
    %6466 = vmatpush.bf16.msra.mxu0 %v6139
    %6467 = vmatpush.bf16.msra.mxu0 %v6131
    %6468 = vmatpush.bf16.msra.mxu0 %v6123
    %6469 = vmatpush.bf16.msra.mxu0 %v6115
    %6470 = vmatpush.bf16.msra.mxu0 %v6107
    %6471 = vmatmul.bf16.gmra.mxu0 %v5589
    %v6472 = vpop.f32.mrf.mxu0
    %v6473 = vadd.f32 0.0, %v6472
    %v6474 = vpop.f32.mrf.mxu0
    %6475 = vdwg.mxu0
    %6476 = vmatpush.bf16.msra.mxu0 %v6227
    %6477 = vmatpush.bf16.msra.mxu0 %v6219
    %6478 = vmatpush.bf16.msra.mxu0 %v6211
    %6479 = vmatpush.bf16.msra.mxu0 %v6203
    %6480 = vmatpush.bf16.msra.mxu0 %v6195
    %6481 = vmatpush.bf16.msra.mxu0 %v6187
    %6482 = vmatpush.bf16.msra.mxu0 %v6179
    %6483 = vmatpush.bf16.msra.mxu0 %v6171
    %6484 = vmatmul.bf16.gmra.mxu0 %v5590
    %v6485 = vpop.f32.mrf.mxu0
    %v6486 = vadd.f32 %v6473, %v6485
    %v6487 = vpop.f32.mrf.mxu0
    %6488 = vdwg.mxu0
    %6489 = vmatpush.bf16.msra.mxu0 %v6164
    %6490 = vmatpush.bf16.msra.mxu0 %v6156
    %6491 = vmatpush.bf16.msra.mxu0 %v6148
    %6492 = vmatpush.bf16.msra.mxu0 %v6140
    %6493 = vmatpush.bf16.msra.mxu0 %v6132
    %6494 = vmatpush.bf16.msra.mxu0 %v6124
    %6495 = vmatpush.bf16.msra.mxu0 %v6116
    %6496 = vmatpush.bf16.msra.mxu0 %v6108
    %6497 = vmatmul.bf16.gmra.mxu0 %v5589
    %v6498 = vpop.f32.mrf.mxu0
    %v6499 = vadd.f32 0.0, %v6498
    %v6500 = vpop.f32.mrf.mxu0
    %6501 = vdwg.mxu0
    %6502 = vmatpush.bf16.msra.mxu0 %v6228
    %6503 = vmatpush.bf16.msra.mxu0 %v6220
    %6504 = vmatpush.bf16.msra.mxu0 %v6212
    %6505 = vmatpush.bf16.msra.mxu0 %v6204
    %6506 = vmatpush.bf16.msra.mxu0 %v6196
    %6507 = vmatpush.bf16.msra.mxu0 %v6188
    %6508 = vmatpush.bf16.msra.mxu0 %v6180
    %6509 = vmatpush.bf16.msra.mxu0 %v6172
    %6510 = vmatmul.bf16.gmra.mxu0 %v5590
    %v6511 = vpop.f32.mrf.mxu0
    %v6512 = vadd.f32 %v6499, %v6511
    %v6513 = vpop.f32.mrf.mxu0
    %6514 = vdwg.mxu0
    %6515 = vmatpush.bf16.msra.mxu0 %v6165
    %6516 = vmatpush.bf16.msra.mxu0 %v6157
    %6517 = vmatpush.bf16.msra.mxu0 %v6149
    %6518 = vmatpush.bf16.msra.mxu0 %v6141
    %6519 = vmatpush.bf16.msra.mxu0 %v6133
    %6520 = vmatpush.bf16.msra.mxu0 %v6125
    %6521 = vmatpush.bf16.msra.mxu0 %v6117
    %6522 = vmatpush.bf16.msra.mxu0 %v6109
    %6523 = vmatmul.bf16.gmra.mxu0 %v5589
    %v6524 = vpop.f32.mrf.mxu0
    %v6525 = vadd.f32 0.0, %v6524
    %v6526 = vpop.f32.mrf.mxu0
    %6527 = vdwg.mxu0
    %6528 = vmatpush.bf16.msra.mxu0 %v6229
    %6529 = vmatpush.bf16.msra.mxu0 %v6221
    %6530 = vmatpush.bf16.msra.mxu0 %v6213
    %6531 = vmatpush.bf16.msra.mxu0 %v6205
    %6532 = vmatpush.bf16.msra.mxu0 %v6197
    %6533 = vmatpush.bf16.msra.mxu0 %v6189
    %6534 = vmatpush.bf16.msra.mxu0 %v6181
    %6535 = vmatpush.bf16.msra.mxu0 %v6173
    %6536 = vmatmul.bf16.gmra.mxu0 %v5590
    %v6537 = vpop.f32.mrf.mxu0
    %v6538 = vadd.f32 %v6525, %v6537
    %v6539 = vpop.f32.mrf.mxu0
    %6540 = vdwg.mxu0
    %6541 = vmatpush.bf16.msra.mxu0 %v6166
    %6542 = vmatpush.bf16.msra.mxu0 %v6158
    %6543 = vmatpush.bf16.msra.mxu0 %v6150
    %6544 = vmatpush.bf16.msra.mxu0 %v6142
    %6545 = vmatpush.bf16.msra.mxu0 %v6134
    %6546 = vmatpush.bf16.msra.mxu0 %v6126
    %6547 = vmatpush.bf16.msra.mxu0 %v6118
    %6548 = vmatpush.bf16.msra.mxu0 %v6110
    %6549 = vmatmul.bf16.gmra.mxu0 %v5589
    %v6550 = vpop.f32.mrf.mxu0
    %v6551 = vadd.f32 0.0, %v6550
    %v6552 = vpop.f32.mrf.mxu0
    %6553 = vdwg.mxu0
    %6554 = vmatpush.bf16.msra.mxu0 %v6230
    %6555 = vmatpush.bf16.msra.mxu0 %v6222
    %6556 = vmatpush.bf16.msra.mxu0 %v6214
    %6557 = vmatpush.bf16.msra.mxu0 %v6206
    %6558 = vmatpush.bf16.msra.mxu0 %v6198
    %6559 = vmatpush.bf16.msra.mxu0 %v6190
    %6560 = vmatpush.bf16.msra.mxu0 %v6182
    %6561 = vmatpush.bf16.msra.mxu0 %v6174
    %6562 = vmatmul.bf16.gmra.mxu0 %v5590
    %v6563 = vpop.f32.mrf.mxu0
    %v6564 = vadd.f32 %v6551, %v6563
    %v6565 = vpop.f32.mrf.mxu0
    %6566 = vdwg.mxu0
    %v6575 = vrot.slane %v6408, 7
    %v6576 = vrot.slane %v6434, 6
    %v6577 = vrot.slane %v6460, 5
    %v6578 = vrot.slane %v6486, 4
    %v6579 = vrot.slane %v6512, 3
    %v6580 = vrot.slane %v6538, 2
    %v6581 = vrot.slane %v6564, 1
    %v6582 = vsel %vm169, %v6382, %v6575
    %v6583 = vsel %vm2214, %v6576, %v6577
    %v6584 = vsel %vm2216, %v6582, %v6583
    %v6585 = vsel %vm2218, %v6578, %v6579
    %v6586 = vsel %vm2220, %v6580, %v6581
    %v6587 = vsel %vm2222, %v6585, %v6586
    %v6588 = vsel %vm2224, %v6584, %v6587
    %v6590 = vadd.f32 %v5583, %v6588
    %v6591 = vxor.u32 %v6590, 2147483648
    %v6592 = vmul.f32 %v6591, 1.442695
    %v6593 = vpow.pop %v6592
    %v6594 = vadd.f32 %v6593, 1.0
    %v6595 = vrcp.pop %v6594
    %v6596 = vmul.f32 %v6594, %v6595
    %v6597 = vsub.f32 1.0, %v6596
    %v6598 = vmul.f32 %v6595, %v6597
    %v6599 = vadd.f32 %v6595, %v6598
    %vm6600 = vweird.f32 %v6594
    %vm6601 = vweird.f32 %v6595
    %vm6602 = vmor %vm6600, %vm6601
    %v6603 = vsel %vm6602, %v6595, %v6599
    %v6604 = vand.u32 2147483647, %v6594
    %vm6605 = vcmp.eq.f32.partialorder %v6604, 8.507059e+37
    %v6606 = vand.u32 %v6594, 2147483648
    %v6607 = vor.u32 1.1754944e-38, %v6606
    %v6608 = vsel %vm6605, %v6607, %v6603
    %v6609 = vmul.f32 1.0, %v6608
    %v6611 = vrot.slane %v6590, 2
    %v6613 = vxor.u32 %v6611, 2147483648
    %v6614 = vmul.f32 %v6613, 1.442695
    %v6615 = vpow.pop %v6614
    %v6616 = vadd.f32 %v6615, 1.0
    %v6617 = vrcp.pop %v6616
    %v6618 = vmul.f32 %v6616, %v6617
    %v6619 = vsub.f32 1.0, %v6618
    %v6620 = vmul.f32 %v6617, %v6619
    %v6621 = vadd.f32 %v6617, %v6620
    %vm6622 = vweird.f32 %v6616
    %vm6623 = vweird.f32 %v6617
    %vm6624 = vmor %vm6622, %vm6623
    %v6625 = vsel %vm6624, %v6617, %v6621
    %v6626 = vand.u32 2147483647, %v6616
    %vm6627 = vcmp.eq.f32.partialorder %v6626, 8.507059e+37
    %v6628 = vand.u32 %v6616, 2147483648
    %v6629 = vor.u32 1.1754944e-38, %v6628
    %v6630 = vsel %vm6627, %v6629, %v6625
    %v6631 = vmul.f32 1.0, %v6630
    %v6632 = vrot.slane %v6590, 4
    %v6634 = vtanh.pop %v6632
    %v6635 = vrot.slane %v6590, 6
    %v6637 = vxor.u32 %v6635, 2147483648
    %v6638 = vmul.f32 %v6637, 1.442695
    %v6639 = vpow.pop %v6638
    %v6640 = vadd.f32 %v6639, 1.0
    %v6641 = vrcp.pop %v6640
    %v6642 = vmul.f32 %v6640, %v6641
    %v6643 = vsub.f32 1.0, %v6642
    %v6644 = vmul.f32 %v6641, %v6643
    %v6645 = vadd.f32 %v6641, %v6644
    %vm6646 = vweird.f32 %v6640
    %vm6647 = vweird.f32 %v6641
    %vm6648 = vmor %vm6646, %vm6647
    %v6649 = vsel %vm6648, %v6641, %v6645
    %v6650 = vand.u32 2147483647, %v6640
    %vm6651 = vcmp.eq.f32.partialorder %v6650, 8.507059e+37
    %v6652 = vand.u32 %v6640, 2147483648
    %v6653 = vor.u32 1.1754944e-38, %v6652
    %v6654 = vsel %vm6651, %v6653, %v6649
    %v6655 = vmul.f32 1.0, %v6654
    %v6656 = vmul.f32 %v6631, %v5568
    %v6657 = vmul.f32 %v6609, %v6634
    %v6658 = vadd.f32 %v6656, %v6657
    %v6659 = vtanh.pop %v6658
    %v6660 = vmul.f32 %v6655, %v6659
    %s6661 = scalar_lea.vmem %s7, 4
    %6662 = vst.msk [vmem:[%s6661] ss:$8 sm:$0x3] %vm2301, %v6660
    %6663 = vst.msk [vmem:[%s6661] ss:$8 sm:$0x0] %vm2301, %v6660
    %s6664 = sadd.s32 %s2304, 4
    %p6665 = scmp.eq.s32.totalorder %s6664, 7
    // Predicated region
    $region66: #{oracle_gold_rollout.2} parent=1 // pred_check
      %p6666 = pneg %p6665
    $region67: #{oracle_gold_rollout.2} parent=1 // pred_check_branch
      %6668 = sbr.rel (%p6666) target = $region69
    $region68: #{oracle_gold_rollout.2} parent=1 // pred_region
      %6669 = vst.msk [vmem:[#allocation13] sm:$0x3] %vm2301, %v6658
    $region69: #{oracle_gold_rollout.2} parent=1 // pred_fallthru
      _
    %s6670 = scalar_lea.vmem [#allocation4], 5
    %v6671 = vld [vmem:[%s6670] ss:$8 sm:$0xf]
    %v6672 = vld [vmem:[%s6670] ss:$8 sm:$0xf0]
    %v6673 = vor.u32 %v6671, %v6672
    %v6675 = vperm.slane %v6660, 0
    %v6676 = vperm.slane %v6660, 1
    %v6679 = vpack.c.bf16 %v6675, %v6675
    %v6680 = vpack.c.bf16 %v6676, %v6676
    %v6681 = vld [vmem:[#allocation11] sm:$0xff]
    %v6682 = vld [vmem:[#allocation11 + $0x8] sm:$0xff]
    %v6683 = vld [vmem:[#allocation11 + $0x10] sm:$0xff]
    %v6684 = vld [vmem:[#allocation11 + $0x18] sm:$0xff]
    %v6685 = vld [vmem:[#allocation11 + $0x20] sm:$0xff]
    %v6686 = vld [vmem:[#allocation11 + $0x28] sm:$0xff]
    %v6687 = vld [vmem:[#allocation11 + $0x30] sm:$0xff]
    %v6688 = vld [vmem:[#allocation11 + $0x38] sm:$0xff]
    %v6689 = vld [vmem:[#allocation11 + $0x40] sm:$0xff]
    %v6690 = vld [vmem:[#allocation11 + $0x48] sm:$0xff]
    %v6691 = vld [vmem:[#allocation11 + $0x50] sm:$0xff]
    %v6692 = vld [vmem:[#allocation11 + $0x58] sm:$0xff]
    %v6693 = vld [vmem:[#allocation11 + $0x60] sm:$0xff]
    %v6694 = vld [vmem:[#allocation11 + $0x68] sm:$0xff]
    %v6695 = vld [vmem:[#allocation11 + $0x70] sm:$0xff]
    %v6696 = vld [vmem:[#allocation11 + $0x78] sm:$0xff]
    %v6697 = vld [vmem:[#allocation11 + $0x80] sm:$0xff]
    %v6698 = vld [vmem:[#allocation11 + $0x88] sm:$0xff]
    %v6699 = vld [vmem:[#allocation11 + $0x90] sm:$0xff]
    %v6700 = vld [vmem:[#allocation11 + $0x98] sm:$0xff]
    %v6701 = vld [vmem:[#allocation11 + $0xa0] sm:$0xff]
    %v6702 = vld [vmem:[#allocation11 + $0xa8] sm:$0xff]
    %v6703 = vld [vmem:[#allocation11 + $0xb0] sm:$0xff]
    %v6704 = vld [vmem:[#allocation11 + $0xb8] sm:$0xff]
    %v6705 = vld [vmem:[#allocation11 + $0xc0] sm:$0xff]
    %v6706 = vld [vmem:[#allocation11 + $0xc8] sm:$0xff]
    %v6707 = vld [vmem:[#allocation11 + $0xd0] sm:$0xff]
    %v6708 = vld [vmem:[#allocation11 + $0xd8] sm:$0xff]
    %v6709 = vld [vmem:[#allocation11 + $0xe0] sm:$0xff]
    %v6710 = vld [vmem:[#allocation11 + $0xe8] sm:$0xff]
    %v6711 = vld [vmem:[#allocation11 + $0xf0] sm:$0xff]
    %v6712 = vld [vmem:[#allocation11 + $0xf8] sm:$0xff]
    %v6713 = vld [vmem:[#allocation11 + $0x100] sm:$0xff]
    %v6714 = vld [vmem:[#allocation11 + $0x108] sm:$0xff]
    %v6715 = vld [vmem:[#allocation11 + $0x110] sm:$0xff]
    %v6716 = vld [vmem:[#allocation11 + $0x118] sm:$0xff]
    %v6717 = vld [vmem:[#allocation11 + $0x120] sm:$0xff]
    %v6718 = vld [vmem:[#allocation11 + $0x128] sm:$0xff]
    %v6719 = vld [vmem:[#allocation11 + $0x130] sm:$0xff]
    %v6720 = vld [vmem:[#allocation11 + $0x138] sm:$0xff]
    %v6721 = vld [vmem:[#allocation11 + $0x140] sm:$0xff]
    %v6722 = vld [vmem:[#allocation11 + $0x148] sm:$0xff]
    %v6723 = vld [vmem:[#allocation11 + $0x150] sm:$0xff]
    %v6724 = vld [vmem:[#allocation11 + $0x158] sm:$0xff]
    %v6725 = vld [vmem:[#allocation11 + $0x160] sm:$0xff]
    %v6726 = vld [vmem:[#allocation11 + $0x168] sm:$0xff]
    %v6727 = vld [vmem:[#allocation11 + $0x170] sm:$0xff]
    %v6728 = vld [vmem:[#allocation11 + $0x178] sm:$0xff]
    %v6729 = vld [vmem:[#allocation11 + $0x180] sm:$0xff]
    %v6730 = vld [vmem:[#allocation11 + $0x188] sm:$0xff]
    %v6731 = vld [vmem:[#allocation11 + $0x190] sm:$0xff]
    %v6732 = vld [vmem:[#allocation11 + $0x198] sm:$0xff]
    %v6733 = vld [vmem:[#allocation11 + $0x1a0] sm:$0xff]
    %v6734 = vld [vmem:[#allocation11 + $0x1a8] sm:$0xff]
    %v6735 = vld [vmem:[#allocation11 + $0x1b0] sm:$0xff]
    %v6736 = vld [vmem:[#allocation11 + $0x1b8] sm:$0xff]
    %v6737 = vld [vmem:[#allocation11 + $0x1c0] sm:$0xff]
    %v6738 = vld [vmem:[#allocation11 + $0x1c8] sm:$0xff]
    %v6739 = vld [vmem:[#allocation11 + $0x1d0] sm:$0xff]
    %v6740 = vld [vmem:[#allocation11 + $0x1d8] sm:$0xff]
    %v6741 = vld [vmem:[#allocation11 + $0x1e0] sm:$0xff]
    %v6742 = vld [vmem:[#allocation11 + $0x1e8] sm:$0xff]
    %v6743 = vld [vmem:[#allocation11 + $0x1f0] sm:$0xff]
    %v6744 = vld [vmem:[#allocation11 + $0x1f8] sm:$0xff]
    %v6745 = vld [vmem:[#allocation11 + $0x200] sm:$0xff]
    %v6746 = vld [vmem:[#allocation11 + $0x208] sm:$0xff]
    %v6747 = vld [vmem:[#allocation11 + $0x210] sm:$0xff]
    %v6748 = vld [vmem:[#allocation11 + $0x218] sm:$0xff]
    %v6749 = vld [vmem:[#allocation11 + $0x220] sm:$0xff]
    %v6750 = vld [vmem:[#allocation11 + $0x228] sm:$0xff]
    %v6751 = vld [vmem:[#allocation11 + $0x230] sm:$0xff]
    %v6752 = vld [vmem:[#allocation11 + $0x238] sm:$0xff]
    %v6753 = vld [vmem:[#allocation11 + $0x240] sm:$0xff]
    %v6754 = vld [vmem:[#allocation11 + $0x248] sm:$0xff]
    %v6755 = vld [vmem:[#allocation11 + $0x250] sm:$0xff]
    %v6756 = vld [vmem:[#allocation11 + $0x258] sm:$0xff]
    %v6757 = vld [vmem:[#allocation11 + $0x260] sm:$0xff]
    %v6758 = vld [vmem:[#allocation11 + $0x268] sm:$0xff]
    %v6759 = vld [vmem:[#allocation11 + $0x270] sm:$0xff]
    %v6760 = vld [vmem:[#allocation11 + $0x278] sm:$0xff]
    %v6761 = vld [vmem:[#allocation11 + $0x280] sm:$0xff]
    %v6762 = vld [vmem:[#allocation11 + $0x288] sm:$0xff]
    %v6763 = vld [vmem:[#allocation11 + $0x290] sm:$0xff]
    %v6764 = vld [vmem:[#allocation11 + $0x298] sm:$0xff]
    %v6765 = vld [vmem:[#allocation11 + $0x2a0] sm:$0xff]
    %v6766 = vld [vmem:[#allocation11 + $0x2a8] sm:$0xff]
    %v6767 = vld [vmem:[#allocation11 + $0x2b0] sm:$0xff]
    %v6768 = vld [vmem:[#allocation11 + $0x2b8] sm:$0xff]
    %v6769 = vld [vmem:[#allocation11 + $0x2c0] sm:$0xff]
    %v6770 = vld [vmem:[#allocation11 + $0x2c8] sm:$0xff]
    %v6771 = vld [vmem:[#allocation11 + $0x2d0] sm:$0xff]
    %v6772 = vld [vmem:[#allocation11 + $0x2d8] sm:$0xff]
    %v6773 = vld [vmem:[#allocation11 + $0x2e0] sm:$0xff]
    %v6774 = vld [vmem:[#allocation11 + $0x2e8] sm:$0xff]
    %v6775 = vld [vmem:[#allocation11 + $0x2f0] sm:$0xff]
    %v6776 = vld [vmem:[#allocation11 + $0x2f8] sm:$0xff]
    %v6777 = vld [vmem:[#allocation11 + $0x300] sm:$0xff]
    %v6778 = vld [vmem:[#allocation11 + $0x308] sm:$0xff]
    %v6779 = vld [vmem:[#allocation11 + $0x310] sm:$0xff]
    %v6780 = vld [vmem:[#allocation11 + $0x318] sm:$0xff]
    %v6781 = vld [vmem:[#allocation11 + $0x320] sm:$0xff]
    %v6782 = vld [vmem:[#allocation11 + $0x328] sm:$0xff]
    %v6783 = vld [vmem:[#allocation11 + $0x330] sm:$0xff]
    %v6784 = vld [vmem:[#allocation11 + $0x338] sm:$0xff]
    %v6785 = vld [vmem:[#allocation11 + $0x340] sm:$0xff]
    %v6786 = vld [vmem:[#allocation11 + $0x348] sm:$0xff]
    %v6787 = vld [vmem:[#allocation11 + $0x350] sm:$0xff]
    %v6788 = vld [vmem:[#allocation11 + $0x358] sm:$0xff]
    %v6789 = vld [vmem:[#allocation11 + $0x360] sm:$0xff]
    %v6790 = vld [vmem:[#allocation11 + $0x368] sm:$0xff]
    %v6791 = vld [vmem:[#allocation11 + $0x370] sm:$0xff]
    %v6792 = vld [vmem:[#allocation11 + $0x378] sm:$0xff]
    %v6793 = vld [vmem:[#allocation11 + $0x380] sm:$0xff]
    %v6794 = vld [vmem:[#allocation11 + $0x388] sm:$0xff]
    %v6795 = vld [vmem:[#allocation11 + $0x390] sm:$0xff]
    %v6796 = vld [vmem:[#allocation11 + $0x398] sm:$0xff]
    %v6797 = vld [vmem:[#allocation11 + $0x3a0] sm:$0xff]
    %v6798 = vld [vmem:[#allocation11 + $0x3a8] sm:$0xff]
    %v6799 = vld [vmem:[#allocation11 + $0x3b0] sm:$0xff]
    %v6800 = vld [vmem:[#allocation11 + $0x3b8] sm:$0xff]
    %v6801 = vld [vmem:[#allocation11 + $0x3c0] sm:$0xff]
    %v6802 = vld [vmem:[#allocation11 + $0x3c8] sm:$0xff]
    %v6803 = vld [vmem:[#allocation11 + $0x3d0] sm:$0xff]
    %v6804 = vld [vmem:[#allocation11 + $0x3d8] sm:$0xff]
    %v6805 = vld [vmem:[#allocation11 + $0x3e0] sm:$0xff]
    %v6806 = vld [vmem:[#allocation11 + $0x3e8] sm:$0xff]
    %v6807 = vld [vmem:[#allocation11 + $0x3f0] sm:$0xff]
    %v6808 = vld [vmem:[#allocation11 + $0x3f8] sm:$0xff]
    %v6937 = vunpack.c.l.b16 %v6681
    %v6938 = vunpack.c.h.b16 %v6681
    %v6939 = vunpack.c.l.b16 %v6682
    %v6940 = vunpack.c.h.b16 %v6682
    %v6941 = vunpack.c.l.b16 %v6683
    %v6942 = vunpack.c.h.b16 %v6683
    %v6943 = vunpack.c.l.b16 %v6684
    %v6944 = vunpack.c.h.b16 %v6684
    %v6945 = vunpack.c.l.b16 %v6685
    %v6946 = vunpack.c.h.b16 %v6685
    %v6947 = vunpack.c.l.b16 %v6686
    %v6948 = vunpack.c.h.b16 %v6686
    %v6949 = vunpack.c.l.b16 %v6687
    %v6950 = vunpack.c.h.b16 %v6687
    %v6951 = vunpack.c.l.b16 %v6688
    %v6952 = vunpack.c.h.b16 %v6688
    %v6953 = vunpack.c.l.b16 %v6689
    %v6954 = vunpack.c.h.b16 %v6689
    %v6955 = vunpack.c.l.b16 %v6690
    %v6956 = vunpack.c.h.b16 %v6690
    %v6957 = vunpack.c.l.b16 %v6691
    %v6958 = vunpack.c.h.b16 %v6691
    %v6959 = vunpack.c.l.b16 %v6692
    %v6960 = vunpack.c.h.b16 %v6692
    %v6961 = vunpack.c.l.b16 %v6693
    %v6962 = vunpack.c.h.b16 %v6693
    %v6963 = vunpack.c.l.b16 %v6694
    %v6964 = vunpack.c.h.b16 %v6694
    %v6965 = vunpack.c.l.b16 %v6695
    %v6966 = vunpack.c.h.b16 %v6695
    %v6967 = vunpack.c.l.b16 %v6696
    %v6968 = vunpack.c.h.b16 %v6696
    %v6969 = vunpack.c.l.b16 %v6697
    %v6970 = vunpack.c.h.b16 %v6697
    %v6971 = vunpack.c.l.b16 %v6698
    %v6972 = vunpack.c.h.b16 %v6698
    %v6973 = vunpack.c.l.b16 %v6699
    %v6974 = vunpack.c.h.b16 %v6699
    %v6975 = vunpack.c.l.b16 %v6700
    %v6976 = vunpack.c.h.b16 %v6700
    %v6977 = vunpack.c.l.b16 %v6701
    %v6978 = vunpack.c.h.b16 %v6701
    %v6979 = vunpack.c.l.b16 %v6702
    %v6980 = vunpack.c.h.b16 %v6702
    %v6981 = vunpack.c.l.b16 %v6703
    %v6982 = vunpack.c.h.b16 %v6703
    %v6983 = vunpack.c.l.b16 %v6704
    %v6984 = vunpack.c.h.b16 %v6704
    %v6985 = vunpack.c.l.b16 %v6705
    %v6986 = vunpack.c.h.b16 %v6705
    %v6987 = vunpack.c.l.b16 %v6706
    %v6988 = vunpack.c.h.b16 %v6706
    %v6989 = vunpack.c.l.b16 %v6707
    %v6990 = vunpack.c.h.b16 %v6707
    %v6991 = vunpack.c.l.b16 %v6708
    %v6992 = vunpack.c.h.b16 %v6708
    %v6993 = vunpack.c.l.b16 %v6709
    %v6994 = vunpack.c.h.b16 %v6709
    %v6995 = vunpack.c.l.b16 %v6710
    %v6996 = vunpack.c.h.b16 %v6710
    %v6997 = vunpack.c.l.b16 %v6711
    %v6998 = vunpack.c.h.b16 %v6711
    %v6999 = vunpack.c.l.b16 %v6712
    %v7000 = vunpack.c.h.b16 %v6712
    %v7001 = vunpack.c.l.b16 %v6713
    %v7002 = vunpack.c.h.b16 %v6713
    %v7003 = vunpack.c.l.b16 %v6714
    %v7004 = vunpack.c.h.b16 %v6714
    %v7005 = vunpack.c.l.b16 %v6715
    %v7006 = vunpack.c.h.b16 %v6715
    %v7007 = vunpack.c.l.b16 %v6716
    %v7008 = vunpack.c.h.b16 %v6716
    %v7009 = vunpack.c.l.b16 %v6717
    %v7010 = vunpack.c.h.b16 %v6717
    %v7011 = vunpack.c.l.b16 %v6718
    %v7012 = vunpack.c.h.b16 %v6718
    %v7013 = vunpack.c.l.b16 %v6719
    %v7014 = vunpack.c.h.b16 %v6719
    %v7015 = vunpack.c.l.b16 %v6720
    %v7016 = vunpack.c.h.b16 %v6720
    %v7017 = vunpack.c.l.b16 %v6721
    %v7018 = vunpack.c.h.b16 %v6721
    %v7019 = vunpack.c.l.b16 %v6722
    %v7020 = vunpack.c.h.b16 %v6722
    %v7021 = vunpack.c.l.b16 %v6723
    %v7022 = vunpack.c.h.b16 %v6723
    %v7023 = vunpack.c.l.b16 %v6724
    %v7024 = vunpack.c.h.b16 %v6724
    %v7025 = vunpack.c.l.b16 %v6725
    %v7026 = vunpack.c.h.b16 %v6725
    %v7027 = vunpack.c.l.b16 %v6726
    %v7028 = vunpack.c.h.b16 %v6726
    %v7029 = vunpack.c.l.b16 %v6727
    %v7030 = vunpack.c.h.b16 %v6727
    %v7031 = vunpack.c.l.b16 %v6728
    %v7032 = vunpack.c.h.b16 %v6728
    %v7033 = vunpack.c.l.b16 %v6729
    %v7034 = vunpack.c.h.b16 %v6729
    %v7035 = vunpack.c.l.b16 %v6730
    %v7036 = vunpack.c.h.b16 %v6730
    %v7037 = vunpack.c.l.b16 %v6731
    %v7038 = vunpack.c.h.b16 %v6731
    %v7039 = vunpack.c.l.b16 %v6732
    %v7040 = vunpack.c.h.b16 %v6732
    %v7041 = vunpack.c.l.b16 %v6733
    %v7042 = vunpack.c.h.b16 %v6733
    %v7043 = vunpack.c.l.b16 %v6734
    %v7044 = vunpack.c.h.b16 %v6734
    %v7045 = vunpack.c.l.b16 %v6735
    %v7046 = vunpack.c.h.b16 %v6735
    %v7047 = vunpack.c.l.b16 %v6736
    %v7048 = vunpack.c.h.b16 %v6736
    %v7049 = vunpack.c.l.b16 %v6737
    %v7050 = vunpack.c.h.b16 %v6737
    %v7051 = vunpack.c.l.b16 %v6738
    %v7052 = vunpack.c.h.b16 %v6738
    %v7053 = vunpack.c.l.b16 %v6739
    %v7054 = vunpack.c.h.b16 %v6739
    %v7055 = vunpack.c.l.b16 %v6740
    %v7056 = vunpack.c.h.b16 %v6740
    %v7057 = vunpack.c.l.b16 %v6741
    %v7058 = vunpack.c.h.b16 %v6741
    %v7059 = vunpack.c.l.b16 %v6742
    %v7060 = vunpack.c.h.b16 %v6742
    %v7061 = vunpack.c.l.b16 %v6743
    %v7062 = vunpack.c.h.b16 %v6743
    %v7063 = vunpack.c.l.b16 %v6744
    %v7064 = vunpack.c.h.b16 %v6744
    %v7065 = vunpack.c.l.b16 %v6745
    %v7066 = vunpack.c.h.b16 %v6745
    %v7067 = vunpack.c.l.b16 %v6746
    %v7068 = vunpack.c.h.b16 %v6746
    %v7069 = vunpack.c.l.b16 %v6747
    %v7070 = vunpack.c.h.b16 %v6747
    %v7071 = vunpack.c.l.b16 %v6748
    %v7072 = vunpack.c.h.b16 %v6748
    %v7073 = vunpack.c.l.b16 %v6749
    %v7074 = vunpack.c.h.b16 %v6749
    %v7075 = vunpack.c.l.b16 %v6750
    %v7076 = vunpack.c.h.b16 %v6750
    %v7077 = vunpack.c.l.b16 %v6751
    %v7078 = vunpack.c.h.b16 %v6751
    %v7079 = vunpack.c.l.b16 %v6752
    %v7080 = vunpack.c.h.b16 %v6752
    %v7081 = vunpack.c.l.b16 %v6753
    %v7082 = vunpack.c.h.b16 %v6753
    %v7083 = vunpack.c.l.b16 %v6754
    %v7084 = vunpack.c.h.b16 %v6754
    %v7085 = vunpack.c.l.b16 %v6755
    %v7086 = vunpack.c.h.b16 %v6755
    %v7087 = vunpack.c.l.b16 %v6756
    %v7088 = vunpack.c.h.b16 %v6756
    %v7089 = vunpack.c.l.b16 %v6757
    %v7090 = vunpack.c.h.b16 %v6757
    %v7091 = vunpack.c.l.b16 %v6758
    %v7092 = vunpack.c.h.b16 %v6758
    %v7093 = vunpack.c.l.b16 %v6759
    %v7094 = vunpack.c.h.b16 %v6759
    %v7095 = vunpack.c.l.b16 %v6760
    %v7096 = vunpack.c.h.b16 %v6760
    %v7097 = vunpack.c.l.b16 %v6761
    %v7098 = vunpack.c.h.b16 %v6761
    %v7099 = vunpack.c.l.b16 %v6762
    %v7100 = vunpack.c.h.b16 %v6762
    %v7101 = vunpack.c.l.b16 %v6763
    %v7102 = vunpack.c.h.b16 %v6763
    %v7103 = vunpack.c.l.b16 %v6764
    %v7104 = vunpack.c.h.b16 %v6764
    %v7105 = vunpack.c.l.b16 %v6765
    %v7106 = vunpack.c.h.b16 %v6765
    %v7107 = vunpack.c.l.b16 %v6766
    %v7108 = vunpack.c.h.b16 %v6766
    %v7109 = vunpack.c.l.b16 %v6767
    %v7110 = vunpack.c.h.b16 %v6767
    %v7111 = vunpack.c.l.b16 %v6768
    %v7112 = vunpack.c.h.b16 %v6768
    %v7113 = vunpack.c.l.b16 %v6769
    %v7114 = vunpack.c.h.b16 %v6769
    %v7115 = vunpack.c.l.b16 %v6770
    %v7116 = vunpack.c.h.b16 %v6770
    %v7117 = vunpack.c.l.b16 %v6771
    %v7118 = vunpack.c.h.b16 %v6771
    %v7119 = vunpack.c.l.b16 %v6772
    %v7120 = vunpack.c.h.b16 %v6772
    %v7121 = vunpack.c.l.b16 %v6773
    %v7122 = vunpack.c.h.b16 %v6773
    %v7123 = vunpack.c.l.b16 %v6774
    %v7124 = vunpack.c.h.b16 %v6774
    %v7125 = vunpack.c.l.b16 %v6775
    %v7126 = vunpack.c.h.b16 %v6775
    %v7127 = vunpack.c.l.b16 %v6776
    %v7128 = vunpack.c.h.b16 %v6776
    %v7129 = vunpack.c.l.b16 %v6777
    %v7130 = vunpack.c.h.b16 %v6777
    %v7131 = vunpack.c.l.b16 %v6778
    %v7132 = vunpack.c.h.b16 %v6778
    %v7133 = vunpack.c.l.b16 %v6779
    %v7134 = vunpack.c.h.b16 %v6779
    %v7135 = vunpack.c.l.b16 %v6780
    %v7136 = vunpack.c.h.b16 %v6780
    %v7137 = vunpack.c.l.b16 %v6781
    %v7138 = vunpack.c.h.b16 %v6781
    %v7139 = vunpack.c.l.b16 %v6782
    %v7140 = vunpack.c.h.b16 %v6782
    %v7141 = vunpack.c.l.b16 %v6783
    %v7142 = vunpack.c.h.b16 %v6783
    %v7143 = vunpack.c.l.b16 %v6784
    %v7144 = vunpack.c.h.b16 %v6784
    %v7145 = vunpack.c.l.b16 %v6785
    %v7146 = vunpack.c.h.b16 %v6785
    %v7147 = vunpack.c.l.b16 %v6786
    %v7148 = vunpack.c.h.b16 %v6786
    %v7149 = vunpack.c.l.b16 %v6787
    %v7150 = vunpack.c.h.b16 %v6787
    %v7151 = vunpack.c.l.b16 %v6788
    %v7152 = vunpack.c.h.b16 %v6788
    %v7153 = vunpack.c.l.b16 %v6789
    %v7154 = vunpack.c.h.b16 %v6789
    %v7155 = vunpack.c.l.b16 %v6790
    %v7156 = vunpack.c.h.b16 %v6790
    %v7157 = vunpack.c.l.b16 %v6791
    %v7158 = vunpack.c.h.b16 %v6791
    %v7159 = vunpack.c.l.b16 %v6792
    %v7160 = vunpack.c.h.b16 %v6792
    %v7161 = vunpack.c.l.b16 %v6793
    %v7162 = vunpack.c.h.b16 %v6793
    %v7163 = vunpack.c.l.b16 %v6794
    %v7164 = vunpack.c.h.b16 %v6794
    %v7165 = vunpack.c.l.b16 %v6795
    %v7166 = vunpack.c.h.b16 %v6795
    %v7167 = vunpack.c.l.b16 %v6796
    %v7168 = vunpack.c.h.b16 %v6796
    %v7169 = vunpack.c.l.b16 %v6797
    %v7170 = vunpack.c.h.b16 %v6797
    %v7171 = vunpack.c.l.b16 %v6798
    %v7172 = vunpack.c.h.b16 %v6798
    %v7173 = vunpack.c.l.b16 %v6799
    %v7174 = vunpack.c.h.b16 %v6799
    %v7175 = vunpack.c.l.b16 %v6800
    %v7176 = vunpack.c.h.b16 %v6800
    %v7177 = vunpack.c.l.b16 %v6801
    %v7178 = vunpack.c.h.b16 %v6801
    %v7179 = vunpack.c.l.b16 %v6802
    %v7180 = vunpack.c.h.b16 %v6802
    %v7181 = vunpack.c.l.b16 %v6803
    %v7182 = vunpack.c.h.b16 %v6803
    %v7183 = vunpack.c.l.b16 %v6804
    %v7184 = vunpack.c.h.b16 %v6804
    %v7185 = vunpack.c.l.b16 %v6805
    %v7186 = vunpack.c.h.b16 %v6805
    %v7187 = vunpack.c.l.b16 %v6806
    %v7188 = vunpack.c.h.b16 %v6806
    %v7189 = vunpack.c.l.b16 %v6807
    %v7190 = vunpack.c.h.b16 %v6807
    %v7191 = vunpack.c.l.b16 %v6808
    %v7192 = vunpack.c.h.b16 %v6808
    %v7193 = vpack.c.b16 %v6945, %v6937
    %v7194 = vpack.c.b16 %v6946, %v6938
    %v7195 = vpack.c.b16 %v6947, %v6939
    %v7196 = vpack.c.b16 %v6948, %v6940
    %v7197 = vpack.c.b16 %v6949, %v6941
    %v7198 = vpack.c.b16 %v6950, %v6942
    %v7199 = vpack.c.b16 %v6951, %v6943
    %v7200 = vpack.c.b16 %v6952, %v6944
    %v7201 = vpack.c.b16 %v6961, %v6953
    %v7202 = vpack.c.b16 %v6962, %v6954
    %v7203 = vpack.c.b16 %v6963, %v6955
    %v7204 = vpack.c.b16 %v6964, %v6956
    %v7205 = vpack.c.b16 %v6965, %v6957
    %v7206 = vpack.c.b16 %v6966, %v6958
    %v7207 = vpack.c.b16 %v6967, %v6959
    %v7208 = vpack.c.b16 %v6968, %v6960
    %v7209 = vpack.c.b16 %v6977, %v6969
    %v7210 = vpack.c.b16 %v6978, %v6970
    %v7211 = vpack.c.b16 %v6979, %v6971
    %v7212 = vpack.c.b16 %v6980, %v6972
    %v7213 = vpack.c.b16 %v6981, %v6973
    %v7214 = vpack.c.b16 %v6982, %v6974
    %v7215 = vpack.c.b16 %v6983, %v6975
    %v7216 = vpack.c.b16 %v6984, %v6976
    %v7217 = vpack.c.b16 %v6993, %v6985
    %v7218 = vpack.c.b16 %v6994, %v6986
    %v7219 = vpack.c.b16 %v6995, %v6987
    %v7220 = vpack.c.b16 %v6996, %v6988
    %v7221 = vpack.c.b16 %v6997, %v6989
    %v7222 = vpack.c.b16 %v6998, %v6990
    %v7223 = vpack.c.b16 %v6999, %v6991
    %v7224 = vpack.c.b16 %v7000, %v6992
    %v7225 = vpack.c.b16 %v7009, %v7001
    %v7226 = vpack.c.b16 %v7010, %v7002
    %v7227 = vpack.c.b16 %v7011, %v7003
    %v7228 = vpack.c.b16 %v7012, %v7004
    %v7229 = vpack.c.b16 %v7013, %v7005
    %v7230 = vpack.c.b16 %v7014, %v7006
    %v7231 = vpack.c.b16 %v7015, %v7007
    %v7232 = vpack.c.b16 %v7016, %v7008
    %v7233 = vpack.c.b16 %v7025, %v7017
    %v7234 = vpack.c.b16 %v7026, %v7018
    %v7235 = vpack.c.b16 %v7027, %v7019
    %v7236 = vpack.c.b16 %v7028, %v7020
    %v7237 = vpack.c.b16 %v7029, %v7021
    %v7238 = vpack.c.b16 %v7030, %v7022
    %v7239 = vpack.c.b16 %v7031, %v7023
    %v7240 = vpack.c.b16 %v7032, %v7024
    %v7241 = vpack.c.b16 %v7041, %v7033
    %v7242 = vpack.c.b16 %v7042, %v7034
    %v7243 = vpack.c.b16 %v7043, %v7035
    %v7244 = vpack.c.b16 %v7044, %v7036
    %v7245 = vpack.c.b16 %v7045, %v7037
    %v7246 = vpack.c.b16 %v7046, %v7038
    %v7247 = vpack.c.b16 %v7047, %v7039
    %v7248 = vpack.c.b16 %v7048, %v7040
    %v7249 = vpack.c.b16 %v7057, %v7049
    %v7250 = vpack.c.b16 %v7058, %v7050
    %v7251 = vpack.c.b16 %v7059, %v7051
    %v7252 = vpack.c.b16 %v7060, %v7052
    %v7253 = vpack.c.b16 %v7061, %v7053
    %v7254 = vpack.c.b16 %v7062, %v7054
    %v7255 = vpack.c.b16 %v7063, %v7055
    %v7256 = vpack.c.b16 %v7064, %v7056
    %v7257 = vpack.c.b16 %v7073, %v7065
    %v7258 = vpack.c.b16 %v7074, %v7066
    %v7259 = vpack.c.b16 %v7075, %v7067
    %v7260 = vpack.c.b16 %v7076, %v7068
    %v7261 = vpack.c.b16 %v7077, %v7069
    %v7262 = vpack.c.b16 %v7078, %v7070
    %v7263 = vpack.c.b16 %v7079, %v7071
    %v7264 = vpack.c.b16 %v7080, %v7072
    %v7265 = vpack.c.b16 %v7089, %v7081
    %v7266 = vpack.c.b16 %v7090, %v7082
    %v7267 = vpack.c.b16 %v7091, %v7083
    %v7268 = vpack.c.b16 %v7092, %v7084
    %v7269 = vpack.c.b16 %v7093, %v7085
    %v7270 = vpack.c.b16 %v7094, %v7086
    %v7271 = vpack.c.b16 %v7095, %v7087
    %v7272 = vpack.c.b16 %v7096, %v7088
    %v7273 = vpack.c.b16 %v7105, %v7097
    %v7274 = vpack.c.b16 %v7106, %v7098
    %v7275 = vpack.c.b16 %v7107, %v7099
    %v7276 = vpack.c.b16 %v7108, %v7100
    %v7277 = vpack.c.b16 %v7109, %v7101
    %v7278 = vpack.c.b16 %v7110, %v7102
    %v7279 = vpack.c.b16 %v7111, %v7103
    %v7280 = vpack.c.b16 %v7112, %v7104
    %v7281 = vpack.c.b16 %v7121, %v7113
    %v7282 = vpack.c.b16 %v7122, %v7114
    %v7283 = vpack.c.b16 %v7123, %v7115
    %v7284 = vpack.c.b16 %v7124, %v7116
    %v7285 = vpack.c.b16 %v7125, %v7117
    %v7286 = vpack.c.b16 %v7126, %v7118
    %v7287 = vpack.c.b16 %v7127, %v7119
    %v7288 = vpack.c.b16 %v7128, %v7120
    %v7289 = vpack.c.b16 %v7137, %v7129
    %v7290 = vpack.c.b16 %v7138, %v7130
    %v7291 = vpack.c.b16 %v7139, %v7131
    %v7292 = vpack.c.b16 %v7140, %v7132
    %v7293 = vpack.c.b16 %v7141, %v7133
    %v7294 = vpack.c.b16 %v7142, %v7134
    %v7295 = vpack.c.b16 %v7143, %v7135
    %v7296 = vpack.c.b16 %v7144, %v7136
    %v7297 = vpack.c.b16 %v7153, %v7145
    %v7298 = vpack.c.b16 %v7154, %v7146
    %v7299 = vpack.c.b16 %v7155, %v7147
    %v7300 = vpack.c.b16 %v7156, %v7148
    %v7301 = vpack.c.b16 %v7157, %v7149
    %v7302 = vpack.c.b16 %v7158, %v7150
    %v7303 = vpack.c.b16 %v7159, %v7151
    %v7304 = vpack.c.b16 %v7160, %v7152
    %v7305 = vpack.c.b16 %v7169, %v7161
    %v7306 = vpack.c.b16 %v7170, %v7162
    %v7307 = vpack.c.b16 %v7171, %v7163
    %v7308 = vpack.c.b16 %v7172, %v7164
    %v7309 = vpack.c.b16 %v7173, %v7165
    %v7310 = vpack.c.b16 %v7174, %v7166
    %v7311 = vpack.c.b16 %v7175, %v7167
    %v7312 = vpack.c.b16 %v7176, %v7168
    %v7313 = vpack.c.b16 %v7185, %v7177
    %v7314 = vpack.c.b16 %v7186, %v7178
    %v7315 = vpack.c.b16 %v7187, %v7179
    %v7316 = vpack.c.b16 %v7188, %v7180
    %v7317 = vpack.c.b16 %v7189, %v7181
    %v7318 = vpack.c.b16 %v7190, %v7182
    %v7319 = vpack.c.b16 %v7191, %v7183
    %v7320 = vpack.c.b16 %v7192, %v7184
    %7449 = vmatpush.bf16.msra.mxu0 %v7249
    %7450 = vmatpush.bf16.msra.mxu0 %v7241
    %7451 = vmatpush.bf16.msra.mxu0 %v7233
    %7452 = vmatpush.bf16.msra.mxu0 %v7225
    %7453 = vmatpush.bf16.msra.mxu0 %v7217
    %7454 = vmatpush.bf16.msra.mxu0 %v7209
    %7455 = vmatpush.bf16.msra.mxu0 %v7201
    %7456 = vmatpush.bf16.msra.mxu0 %v7193
    %7457 = vmatmul.bf16.gmra.mxu0 %v6679
    %v7458 = vpop.f32.mrf.mxu0
    %v7459 = vadd.f32 0.0, %v7458
    %v7460 = vpop.f32.mrf.mxu0
    %7461 = vdwg.mxu0
    %7462 = vmatpush.bf16.msra.mxu0 %v7313
    %7463 = vmatpush.bf16.msra.mxu0 %v7305
    %7464 = vmatpush.bf16.msra.mxu0 %v7297
    %7465 = vmatpush.bf16.msra.mxu0 %v7289
    %7466 = vmatpush.bf16.msra.mxu0 %v7281
    %7467 = vmatpush.bf16.msra.mxu0 %v7273
    %7468 = vmatpush.bf16.msra.mxu0 %v7265
    %7469 = vmatpush.bf16.msra.mxu0 %v7257
    %7470 = vmatmul.bf16.gmra.mxu0 %v6680
    %v7471 = vpop.f32.mrf.mxu0
    %v7472 = vadd.f32 %v7459, %v7471
    %v7473 = vpop.f32.mrf.mxu0
    %7474 = vdwg.mxu0
    %7475 = vmatpush.bf16.msra.mxu0 %v7250
    %7476 = vmatpush.bf16.msra.mxu0 %v7242
    %7477 = vmatpush.bf16.msra.mxu0 %v7234
    %7478 = vmatpush.bf16.msra.mxu0 %v7226
    %7479 = vmatpush.bf16.msra.mxu0 %v7218
    %7480 = vmatpush.bf16.msra.mxu0 %v7210
    %7481 = vmatpush.bf16.msra.mxu0 %v7202
    %7482 = vmatpush.bf16.msra.mxu0 %v7194
    %7483 = vmatmul.bf16.gmra.mxu0 %v6679
    %v7484 = vpop.f32.mrf.mxu0
    %v7485 = vadd.f32 0.0, %v7484
    %v7486 = vpop.f32.mrf.mxu0
    %7487 = vdwg.mxu0
    %7488 = vmatpush.bf16.msra.mxu0 %v7314
    %7489 = vmatpush.bf16.msra.mxu0 %v7306
    %7490 = vmatpush.bf16.msra.mxu0 %v7298
    %7491 = vmatpush.bf16.msra.mxu0 %v7290
    %7492 = vmatpush.bf16.msra.mxu0 %v7282
    %7493 = vmatpush.bf16.msra.mxu0 %v7274
    %7494 = vmatpush.bf16.msra.mxu0 %v7266
    %7495 = vmatpush.bf16.msra.mxu0 %v7258
    %7496 = vmatmul.bf16.gmra.mxu0 %v6680
    %v7497 = vpop.f32.mrf.mxu0
    %v7498 = vadd.f32 %v7485, %v7497
    %v7499 = vpop.f32.mrf.mxu0
    %7500 = vdwg.mxu0
    %7501 = vmatpush.bf16.msra.mxu0 %v7251
    %7502 = vmatpush.bf16.msra.mxu0 %v7243
    %7503 = vmatpush.bf16.msra.mxu0 %v7235
    %7504 = vmatpush.bf16.msra.mxu0 %v7227
    %7505 = vmatpush.bf16.msra.mxu0 %v7219
    %7506 = vmatpush.bf16.msra.mxu0 %v7211
    %7507 = vmatpush.bf16.msra.mxu0 %v7203
    %7508 = vmatpush.bf16.msra.mxu0 %v7195
    %7509 = vmatmul.bf16.gmra.mxu0 %v6679
    %v7510 = vpop.f32.mrf.mxu0
    %v7511 = vadd.f32 0.0, %v7510
    %v7512 = vpop.f32.mrf.mxu0
    %7513 = vdwg.mxu0
    %7514 = vmatpush.bf16.msra.mxu0 %v7315
    %7515 = vmatpush.bf16.msra.mxu0 %v7307
    %7516 = vmatpush.bf16.msra.mxu0 %v7299
    %7517 = vmatpush.bf16.msra.mxu0 %v7291
    %7518 = vmatpush.bf16.msra.mxu0 %v7283
    %7519 = vmatpush.bf16.msra.mxu0 %v7275
    %7520 = vmatpush.bf16.msra.mxu0 %v7267
    %7521 = vmatpush.bf16.msra.mxu0 %v7259
    %7522 = vmatmul.bf16.gmra.mxu0 %v6680
    %v7523 = vpop.f32.mrf.mxu0
    %v7524 = vadd.f32 %v7511, %v7523
    %v7525 = vpop.f32.mrf.mxu0
    %7526 = vdwg.mxu0
    %7527 = vmatpush.bf16.msra.mxu0 %v7252
    %7528 = vmatpush.bf16.msra.mxu0 %v7244
    %7529 = vmatpush.bf16.msra.mxu0 %v7236
    %7530 = vmatpush.bf16.msra.mxu0 %v7228
    %7531 = vmatpush.bf16.msra.mxu0 %v7220
    %7532 = vmatpush.bf16.msra.mxu0 %v7212
    %7533 = vmatpush.bf16.msra.mxu0 %v7204
    %7534 = vmatpush.bf16.msra.mxu0 %v7196
    %7535 = vmatmul.bf16.gmra.mxu0 %v6679
    %v7536 = vpop.f32.mrf.mxu0
    %v7537 = vadd.f32 0.0, %v7536
    %v7538 = vpop.f32.mrf.mxu0
    %7539 = vdwg.mxu0
    %7540 = vmatpush.bf16.msra.mxu0 %v7316
    %7541 = vmatpush.bf16.msra.mxu0 %v7308
    %7542 = vmatpush.bf16.msra.mxu0 %v7300
    %7543 = vmatpush.bf16.msra.mxu0 %v7292
    %7544 = vmatpush.bf16.msra.mxu0 %v7284
    %7545 = vmatpush.bf16.msra.mxu0 %v7276
    %7546 = vmatpush.bf16.msra.mxu0 %v7268
    %7547 = vmatpush.bf16.msra.mxu0 %v7260
    %7548 = vmatmul.bf16.gmra.mxu0 %v6680
    %v7549 = vpop.f32.mrf.mxu0
    %v7550 = vadd.f32 %v7537, %v7549
    %v7551 = vpop.f32.mrf.mxu0
    %7552 = vdwg.mxu0
    %7553 = vmatpush.bf16.msra.mxu0 %v7253
    %7554 = vmatpush.bf16.msra.mxu0 %v7245
    %7555 = vmatpush.bf16.msra.mxu0 %v7237
    %7556 = vmatpush.bf16.msra.mxu0 %v7229
    %7557 = vmatpush.bf16.msra.mxu0 %v7221
    %7558 = vmatpush.bf16.msra.mxu0 %v7213
    %7559 = vmatpush.bf16.msra.mxu0 %v7205
    %7560 = vmatpush.bf16.msra.mxu0 %v7197
    %7561 = vmatmul.bf16.gmra.mxu0 %v6679
    %v7562 = vpop.f32.mrf.mxu0
    %v7563 = vadd.f32 0.0, %v7562
    %v7564 = vpop.f32.mrf.mxu0
    %7565 = vdwg.mxu0
    %7566 = vmatpush.bf16.msra.mxu0 %v7317
    %7567 = vmatpush.bf16.msra.mxu0 %v7309
    %7568 = vmatpush.bf16.msra.mxu0 %v7301
    %7569 = vmatpush.bf16.msra.mxu0 %v7293
    %7570 = vmatpush.bf16.msra.mxu0 %v7285
    %7571 = vmatpush.bf16.msra.mxu0 %v7277
    %7572 = vmatpush.bf16.msra.mxu0 %v7269
    %7573 = vmatpush.bf16.msra.mxu0 %v7261
    %7574 = vmatmul.bf16.gmra.mxu0 %v6680
    %v7575 = vpop.f32.mrf.mxu0
    %v7576 = vadd.f32 %v7563, %v7575
    %v7577 = vpop.f32.mrf.mxu0
    %7578 = vdwg.mxu0
    %7579 = vmatpush.bf16.msra.mxu0 %v7254
    %7580 = vmatpush.bf16.msra.mxu0 %v7246
    %7581 = vmatpush.bf16.msra.mxu0 %v7238
    %7582 = vmatpush.bf16.msra.mxu0 %v7230
    %7583 = vmatpush.bf16.msra.mxu0 %v7222
    %7584 = vmatpush.bf16.msra.mxu0 %v7214
    %7585 = vmatpush.bf16.msra.mxu0 %v7206
    %7586 = vmatpush.bf16.msra.mxu0 %v7198
    %7587 = vmatmul.bf16.gmra.mxu0 %v6679
    %v7588 = vpop.f32.mrf.mxu0
    %v7589 = vadd.f32 0.0, %v7588
    %v7590 = vpop.f32.mrf.mxu0
    %7591 = vdwg.mxu0
    %7592 = vmatpush.bf16.msra.mxu0 %v7318
    %7593 = vmatpush.bf16.msra.mxu0 %v7310
    %7594 = vmatpush.bf16.msra.mxu0 %v7302
    %7595 = vmatpush.bf16.msra.mxu0 %v7294
    %7596 = vmatpush.bf16.msra.mxu0 %v7286
    %7597 = vmatpush.bf16.msra.mxu0 %v7278
    %7598 = vmatpush.bf16.msra.mxu0 %v7270
    %7599 = vmatpush.bf16.msra.mxu0 %v7262
    %7600 = vmatmul.bf16.gmra.mxu0 %v6680
    %v7601 = vpop.f32.mrf.mxu0
    %v7602 = vadd.f32 %v7589, %v7601
    %v7603 = vpop.f32.mrf.mxu0
    %7604 = vdwg.mxu0
    %7605 = vmatpush.bf16.msra.mxu0 %v7255
    %7606 = vmatpush.bf16.msra.mxu0 %v7247
    %7607 = vmatpush.bf16.msra.mxu0 %v7239
    %7608 = vmatpush.bf16.msra.mxu0 %v7231
    %7609 = vmatpush.bf16.msra.mxu0 %v7223
    %7610 = vmatpush.bf16.msra.mxu0 %v7215
    %7611 = vmatpush.bf16.msra.mxu0 %v7207
    %7612 = vmatpush.bf16.msra.mxu0 %v7199
    %7613 = vmatmul.bf16.gmra.mxu0 %v6679
    %v7614 = vpop.f32.mrf.mxu0
    %v7615 = vadd.f32 0.0, %v7614
    %v7616 = vpop.f32.mrf.mxu0
    %7617 = vdwg.mxu0
    %7618 = vmatpush.bf16.msra.mxu0 %v7319
    %7619 = vmatpush.bf16.msra.mxu0 %v7311
    %7620 = vmatpush.bf16.msra.mxu0 %v7303
    %7621 = vmatpush.bf16.msra.mxu0 %v7295
    %7622 = vmatpush.bf16.msra.mxu0 %v7287
    %7623 = vmatpush.bf16.msra.mxu0 %v7279
    %7624 = vmatpush.bf16.msra.mxu0 %v7271
    %7625 = vmatpush.bf16.msra.mxu0 %v7263
    %7626 = vmatmul.bf16.gmra.mxu0 %v6680
    %v7627 = vpop.f32.mrf.mxu0
    %v7628 = vadd.f32 %v7615, %v7627
    %v7629 = vpop.f32.mrf.mxu0
    %7630 = vdwg.mxu0
    %7631 = vmatpush.bf16.msra.mxu0 %v7256
    %7632 = vmatpush.bf16.msra.mxu0 %v7248
    %7633 = vmatpush.bf16.msra.mxu0 %v7240
    %7634 = vmatpush.bf16.msra.mxu0 %v7232
    %7635 = vmatpush.bf16.msra.mxu0 %v7224
    %7636 = vmatpush.bf16.msra.mxu0 %v7216
    %7637 = vmatpush.bf16.msra.mxu0 %v7208
    %7638 = vmatpush.bf16.msra.mxu0 %v7200
    %7639 = vmatmul.bf16.gmra.mxu0 %v6679
    %v7640 = vpop.f32.mrf.mxu0
    %v7641 = vadd.f32 0.0, %v7640
    %v7642 = vpop.f32.mrf.mxu0
    %7643 = vdwg.mxu0
    %7644 = vmatpush.bf16.msra.mxu0 %v7320
    %7645 = vmatpush.bf16.msra.mxu0 %v7312
    %7646 = vmatpush.bf16.msra.mxu0 %v7304
    %7647 = vmatpush.bf16.msra.mxu0 %v7296
    %7648 = vmatpush.bf16.msra.mxu0 %v7288
    %7649 = vmatpush.bf16.msra.mxu0 %v7280
    %7650 = vmatpush.bf16.msra.mxu0 %v7272
    %7651 = vmatpush.bf16.msra.mxu0 %v7264
    %7652 = vmatmul.bf16.gmra.mxu0 %v6680
    %v7653 = vpop.f32.mrf.mxu0
    %v7654 = vadd.f32 %v7641, %v7653
    %v7655 = vpop.f32.mrf.mxu0
    %7656 = vdwg.mxu0
    %v7665 = vrot.slane %v7498, 7
    %v7666 = vrot.slane %v7524, 6
    %v7667 = vrot.slane %v7550, 5
    %v7668 = vrot.slane %v7576, 4
    %v7669 = vrot.slane %v7602, 3
    %v7670 = vrot.slane %v7628, 2
    %v7671 = vrot.slane %v7654, 1
    %v7672 = vsel %vm169, %v7472, %v7665
    %v7673 = vsel %vm2214, %v7666, %v7667
    %v7674 = vsel %vm2216, %v7672, %v7673
    %v7675 = vsel %vm2218, %v7668, %v7669
    %v7676 = vsel %vm2220, %v7670, %v7671
    %v7677 = vsel %vm2222, %v7675, %v7676
    %v7678 = vsel %vm2224, %v7674, %v7677
    %v7680 = vadd.f32 %v6673, %v7678
    %v7681 = vxor.u32 %v7680, 2147483648
    %v7682 = vmul.f32 %v7681, 1.442695
    %v7683 = vpow.pop %v7682
    %v7684 = vadd.f32 %v7683, 1.0
    %v7685 = vrcp.pop %v7684
    %v7686 = vmul.f32 %v7684, %v7685
    %v7687 = vsub.f32 1.0, %v7686
    %v7688 = vmul.f32 %v7685, %v7687
    %v7689 = vadd.f32 %v7685, %v7688
    %vm7690 = vweird.f32 %v7684
    %vm7691 = vweird.f32 %v7685
    %vm7692 = vmor %vm7690, %vm7691
    %v7693 = vsel %vm7692, %v7685, %v7689
    %v7694 = vand.u32 2147483647, %v7684
    %vm7695 = vcmp.eq.f32.partialorder %v7694, 8.507059e+37
    %v7696 = vand.u32 %v7684, 2147483648
    %v7697 = vor.u32 1.1754944e-38, %v7696
    %v7698 = vsel %vm7695, %v7697, %v7693
    %v7699 = vmul.f32 1.0, %v7698
    %v7701 = vrot.slane %v7680, 2
    %v7703 = vxor.u32 %v7701, 2147483648
    %v7704 = vmul.f32 %v7703, 1.442695
    %v7705 = vpow.pop %v7704
    %v7706 = vadd.f32 %v7705, 1.0
    %v7707 = vrcp.pop %v7706
    %v7708 = vmul.f32 %v7706, %v7707
    %v7709 = vsub.f32 1.0, %v7708
    %v7710 = vmul.f32 %v7707, %v7709
    %v7711 = vadd.f32 %v7707, %v7710
    %vm7712 = vweird.f32 %v7706
    %vm7713 = vweird.f32 %v7707
    %vm7714 = vmor %vm7712, %vm7713
    %v7715 = vsel %vm7714, %v7707, %v7711
    %v7716 = vand.u32 2147483647, %v7706
    %vm7717 = vcmp.eq.f32.partialorder %v7716, 8.507059e+37
    %v7718 = vand.u32 %v7706, 2147483648
    %v7719 = vor.u32 1.1754944e-38, %v7718
    %v7720 = vsel %vm7717, %v7719, %v7715
    %v7721 = vmul.f32 1.0, %v7720
    %v7722 = vrot.slane %v7680, 4
    %v7724 = vtanh.pop %v7722
    %v7725 = vrot.slane %v7680, 6
    %v7727 = vxor.u32 %v7725, 2147483648
    %v7728 = vmul.f32 %v7727, 1.442695
    %v7729 = vpow.pop %v7728
    %v7730 = vadd.f32 %v7729, 1.0
    %v7731 = vrcp.pop %v7730
    %v7732 = vmul.f32 %v7730, %v7731
    %v7733 = vsub.f32 1.0, %v7732
    %v7734 = vmul.f32 %v7731, %v7733
    %v7735 = vadd.f32 %v7731, %v7734
    %vm7736 = vweird.f32 %v7730
    %vm7737 = vweird.f32 %v7731
    %vm7738 = vmor %vm7736, %vm7737
    %v7739 = vsel %vm7738, %v7731, %v7735
    %v7740 = vand.u32 2147483647, %v7730
    %vm7741 = vcmp.eq.f32.partialorder %v7740, 8.507059e+37
    %v7742 = vand.u32 %v7730, 2147483648
    %v7743 = vor.u32 1.1754944e-38, %v7742
    %v7744 = vsel %vm7741, %v7743, %v7739
    %v7745 = vmul.f32 1.0, %v7744
    %v7746 = vmul.f32 %v7721, %v6658
    %v7747 = vmul.f32 %v7699, %v7724
    %v7748 = vadd.f32 %v7746, %v7747
    %v7749 = vtanh.pop %v7748
    %v7750 = vmul.f32 %v7745, %v7749
    %s7751 = scalar_lea.vmem %s7, 5
    %7752 = vst.msk [vmem:[%s7751] ss:$8 sm:$0x3] %vm2301, %v7750
    %7753 = vst.msk [vmem:[%s7751] ss:$8 sm:$0x0] %vm2301, %v7750
    %s7754 = sadd.s32 %s2304, 5
    %p7755 = scmp.eq.s32.totalorder %s7754, 7
    // Predicated region
    $region70: #{oracle_gold_rollout.2} parent=1 // pred_check
      %p7756 = pneg %p7755
    $region71: #{oracle_gold_rollout.2} parent=1 // pred_check_branch
      %7758 = sbr.rel (%p7756) target = $region73
    $region72: #{oracle_gold_rollout.2} parent=1 // pred_region
      %7759 = vst.msk [vmem:[#allocation13] sm:$0x3] %vm2301, %v7748
    $region73: #{oracle_gold_rollout.2} parent=1 // pred_fallthru
      _
    %s7760 = scalar_lea.vmem [#allocation4], 6
    %v7761 = vld [vmem:[%s7760] ss:$8 sm:$0xf]
    %v7762 = vld [vmem:[%s7760] ss:$8 sm:$0xf0]
    %v7763 = vor.u32 %v7761, %v7762
    %v7765 = vperm.slane %v7750, 0
    %v7766 = vperm.slane %v7750, 1
    %v7769 = vpack.c.bf16 %v7765, %v7765
    %v7770 = vpack.c.bf16 %v7766, %v7766
    %v7771 = vld [vmem:[#allocation11] sm:$0xff]
    %v7772 = vld [vmem:[#allocation11 + $0x8] sm:$0xff]
    %v7773 = vld [vmem:[#allocation11 + $0x10] sm:$0xff]
    %v7774 = vld [vmem:[#allocation11 + $0x18] sm:$0xff]
    %v7775 = vld [vmem:[#allocation11 + $0x20] sm:$0xff]
    %v7776 = vld [vmem:[#allocation11 + $0x28] sm:$0xff]
    %v7777 = vld [vmem:[#allocation11 + $0x30] sm:$0xff]
    %v7778 = vld [vmem:[#allocation11 + $0x38] sm:$0xff]
    %v7779 = vld [vmem:[#allocation11 + $0x40] sm:$0xff]
    %v7780 = vld [vmem:[#allocation11 + $0x48] sm:$0xff]
    %v7781 = vld [vmem:[#allocation11 + $0x50] sm:$0xff]
    %v7782 = vld [vmem:[#allocation11 + $0x58] sm:$0xff]
    %v7783 = vld [vmem:[#allocation11 + $0x60] sm:$0xff]
    %v7784 = vld [vmem:[#allocation11 + $0x68] sm:$0xff]
    %v7785 = vld [vmem:[#allocation11 + $0x70] sm:$0xff]
    %v7786 = vld [vmem:[#allocation11 + $0x78] sm:$0xff]
    %v7787 = vld [vmem:[#allocation11 + $0x80] sm:$0xff]
    %v7788 = vld [vmem:[#allocation11 + $0x88] sm:$0xff]
    %v7789 = vld [vmem:[#allocation11 + $0x90] sm:$0xff]
    %v7790 = vld [vmem:[#allocation11 + $0x98] sm:$0xff]
    %v7791 = vld [vmem:[#allocation11 + $0xa0] sm:$0xff]
    %v7792 = vld [vmem:[#allocation11 + $0xa8] sm:$0xff]
    %v7793 = vld [vmem:[#allocation11 + $0xb0] sm:$0xff]
    %v7794 = vld [vmem:[#allocation11 + $0xb8] sm:$0xff]
    %v7795 = vld [vmem:[#allocation11 + $0xc0] sm:$0xff]
    %v7796 = vld [vmem:[#allocation11 + $0xc8] sm:$0xff]
    %v7797 = vld [vmem:[#allocation11 + $0xd0] sm:$0xff]
    %v7798 = vld [vmem:[#allocation11 + $0xd8] sm:$0xff]
    %v7799 = vld [vmem:[#allocation11 + $0xe0] sm:$0xff]
    %v7800 = vld [vmem:[#allocation11 + $0xe8] sm:$0xff]
    %v7801 = vld [vmem:[#allocation11 + $0xf0] sm:$0xff]
    %v7802 = vld [vmem:[#allocation11 + $0xf8] sm:$0xff]
    %v7803 = vld [vmem:[#allocation11 + $0x100] sm:$0xff]
    %v7804 = vld [vmem:[#allocation11 + $0x108] sm:$0xff]
    %v7805 = vld [vmem:[#allocation11 + $0x110] sm:$0xff]
    %v7806 = vld [vmem:[#allocation11 + $0x118] sm:$0xff]
    %v7807 = vld [vmem:[#allocation11 + $0x120] sm:$0xff]
    %v7808 = vld [vmem:[#allocation11 + $0x128] sm:$0xff]
    %v7809 = vld [vmem:[#allocation11 + $0x130] sm:$0xff]
    %v7810 = vld [vmem:[#allocation11 + $0x138] sm:$0xff]
    %v7811 = vld [vmem:[#allocation11 + $0x140] sm:$0xff]
    %v7812 = vld [vmem:[#allocation11 + $0x148] sm:$0xff]
    %v7813 = vld [vmem:[#allocation11 + $0x150] sm:$0xff]
    %v7814 = vld [vmem:[#allocation11 + $0x158] sm:$0xff]
    %v7815 = vld [vmem:[#allocation11 + $0x160] sm:$0xff]
    %v7816 = vld [vmem:[#allocation11 + $0x168] sm:$0xff]
    %v7817 = vld [vmem:[#allocation11 + $0x170] sm:$0xff]
    %v7818 = vld [vmem:[#allocation11 + $0x178] sm:$0xff]
    %v7819 = vld [vmem:[#allocation11 + $0x180] sm:$0xff]
    %v7820 = vld [vmem:[#allocation11 + $0x188] sm:$0xff]
    %v7821 = vld [vmem:[#allocation11 + $0x190] sm:$0xff]
    %v7822 = vld [vmem:[#allocation11 + $0x198] sm:$0xff]
    %v7823 = vld [vmem:[#allocation11 + $0x1a0] sm:$0xff]
    %v7824 = vld [vmem:[#allocation11 + $0x1a8] sm:$0xff]
    %v7825 = vld [vmem:[#allocation11 + $0x1b0] sm:$0xff]
    %v7826 = vld [vmem:[#allocation11 + $0x1b8] sm:$0xff]
    %v7827 = vld [vmem:[#allocation11 + $0x1c0] sm:$0xff]
    %v7828 = vld [vmem:[#allocation11 + $0x1c8] sm:$0xff]
    %v7829 = vld [vmem:[#allocation11 + $0x1d0] sm:$0xff]
    %v7830 = vld [vmem:[#allocation11 + $0x1d8] sm:$0xff]
    %v7831 = vld [vmem:[#allocation11 + $0x1e0] sm:$0xff]
    %v7832 = vld [vmem:[#allocation11 + $0x1e8] sm:$0xff]
    %v7833 = vld [vmem:[#allocation11 + $0x1f0] sm:$0xff]
    %v7834 = vld [vmem:[#allocation11 + $0x1f8] sm:$0xff]
    %v7835 = vld [vmem:[#allocation11 + $0x200] sm:$0xff]
    %v7836 = vld [vmem:[#allocation11 + $0x208] sm:$0xff]
    %v7837 = vld [vmem:[#allocation11 + $0x210] sm:$0xff]
    %v7838 = vld [vmem:[#allocation11 + $0x218] sm:$0xff]
    %v7839 = vld [vmem:[#allocation11 + $0x220] sm:$0xff]
    %v7840 = vld [vmem:[#allocation11 + $0x228] sm:$0xff]
    %v7841 = vld [vmem:[#allocation11 + $0x230] sm:$0xff]
    %v7842 = vld [vmem:[#allocation11 + $0x238] sm:$0xff]
    %v7843 = vld [vmem:[#allocation11 + $0x240] sm:$0xff]
    %v7844 = vld [vmem:[#allocation11 + $0x248] sm:$0xff]
    %v7845 = vld [vmem:[#allocation11 + $0x250] sm:$0xff]
    %v7846 = vld [vmem:[#allocation11 + $0x258] sm:$0xff]
    %v7847 = vld [vmem:[#allocation11 + $0x260] sm:$0xff]
    %v7848 = vld [vmem:[#allocation11 + $0x268] sm:$0xff]
    %v7849 = vld [vmem:[#allocation11 + $0x270] sm:$0xff]
    %v7850 = vld [vmem:[#allocation11 + $0x278] sm:$0xff]
    %v7851 = vld [vmem:[#allocation11 + $0x280] sm:$0xff]
    %v7852 = vld [vmem:[#allocation11 + $0x288] sm:$0xff]
    %v7853 = vld [vmem:[#allocation11 + $0x290] sm:$0xff]
    %v7854 = vld [vmem:[#allocation11 + $0x298] sm:$0xff]
    %v7855 = vld [vmem:[#allocation11 + $0x2a0] sm:$0xff]
    %v7856 = vld [vmem:[#allocation11 + $0x2a8] sm:$0xff]
    %v7857 = vld [vmem:[#allocation11 + $0x2b0] sm:$0xff]
    %v7858 = vld [vmem:[#allocation11 + $0x2b8] sm:$0xff]
    %v7859 = vld [vmem:[#allocation11 + $0x2c0] sm:$0xff]
    %v7860 = vld [vmem:[#allocation11 + $0x2c8] sm:$0xff]
    %v7861 = vld [vmem:[#allocation11 + $0x2d0] sm:$0xff]
    %v7862 = vld [vmem:[#allocation11 + $0x2d8] sm:$0xff]
    %v7863 = vld [vmem:[#allocation11 + $0x2e0] sm:$0xff]
    %v7864 = vld [vmem:[#allocation11 + $0x2e8] sm:$0xff]
    %v7865 = vld [vmem:[#allocation11 + $0x2f0] sm:$0xff]
    %v7866 = vld [vmem:[#allocation11 + $0x2f8] sm:$0xff]
    %v7867 = vld [vmem:[#allocation11 + $0x300] sm:$0xff]
    %v7868 = vld [vmem:[#allocation11 + $0x308] sm:$0xff]
    %v7869 = vld [vmem:[#allocation11 + $0x310] sm:$0xff]
    %v7870 = vld [vmem:[#allocation11 + $0x318] sm:$0xff]
    %v7871 = vld [vmem:[#allocation11 + $0x320] sm:$0xff]
    %v7872 = vld [vmem:[#allocation11 + $0x328] sm:$0xff]
    %v7873 = vld [vmem:[#allocation11 + $0x330] sm:$0xff]
    %v7874 = vld [vmem:[#allocation11 + $0x338] sm:$0xff]
    %v7875 = vld [vmem:[#allocation11 + $0x340] sm:$0xff]
    %v7876 = vld [vmem:[#allocation11 + $0x348] sm:$0xff]
    %v7877 = vld [vmem:[#allocation11 + $0x350] sm:$0xff]
    %v7878 = vld [vmem:[#allocation11 + $0x358] sm:$0xff]
    %v7879 = vld [vmem:[#allocation11 + $0x360] sm:$0xff]
    %v7880 = vld [vmem:[#allocation11 + $0x368] sm:$0xff]
    %v7881 = vld [vmem:[#allocation11 + $0x370] sm:$0xff]
    %v7882 = vld [vmem:[#allocation11 + $0x378] sm:$0xff]
    %v7883 = vld [vmem:[#allocation11 + $0x380] sm:$0xff]
    %v7884 = vld [vmem:[#allocation11 + $0x388] sm:$0xff]
    %v7885 = vld [vmem:[#allocation11 + $0x390] sm:$0xff]
    %v7886 = vld [vmem:[#allocation11 + $0x398] sm:$0xff]
    %v7887 = vld [vmem:[#allocation11 + $0x3a0] sm:$0xff]
    %v7888 = vld [vmem:[#allocation11 + $0x3a8] sm:$0xff]
    %v7889 = vld [vmem:[#allocation11 + $0x3b0] sm:$0xff]
    %v7890 = vld [vmem:[#allocation11 + $0x3b8] sm:$0xff]
    %v7891 = vld [vmem:[#allocation11 + $0x3c0] sm:$0xff]
    %v7892 = vld [vmem:[#allocation11 + $0x3c8] sm:$0xff]
    %v7893 = vld [vmem:[#allocation11 + $0x3d0] sm:$0xff]
    %v7894 = vld [vmem:[#allocation11 + $0x3d8] sm:$0xff]
    %v7895 = vld [vmem:[#allocation11 + $0x3e0] sm:$0xff]
    %v7896 = vld [vmem:[#allocation11 + $0x3e8] sm:$0xff]
    %v7897 = vld [vmem:[#allocation11 + $0x3f0] sm:$0xff]
    %v7898 = vld [vmem:[#allocation11 + $0x3f8] sm:$0xff]
    %v8027 = vunpack.c.l.b16 %v7771
    %v8028 = vunpack.c.h.b16 %v7771
    %v8029 = vunpack.c.l.b16 %v7772
    %v8030 = vunpack.c.h.b16 %v7772
    %v8031 = vunpack.c.l.b16 %v7773
    %v8032 = vunpack.c.h.b16 %v7773
    %v8033 = vunpack.c.l.b16 %v7774
    %v8034 = vunpack.c.h.b16 %v7774
    %v8035 = vunpack.c.l.b16 %v7775
    %v8036 = vunpack.c.h.b16 %v7775
    %v8037 = vunpack.c.l.b16 %v7776
    %v8038 = vunpack.c.h.b16 %v7776
    %v8039 = vunpack.c.l.b16 %v7777
    %v8040 = vunpack.c.h.b16 %v7777
    %v8041 = vunpack.c.l.b16 %v7778
    %v8042 = vunpack.c.h.b16 %v7778
    %v8043 = vunpack.c.l.b16 %v7779
    %v8044 = vunpack.c.h.b16 %v7779
    %v8045 = vunpack.c.l.b16 %v7780
    %v8046 = vunpack.c.h.b16 %v7780
    %v8047 = vunpack.c.l.b16 %v7781
    %v8048 = vunpack.c.h.b16 %v7781
    %v8049 = vunpack.c.l.b16 %v7782
    %v8050 = vunpack.c.h.b16 %v7782
    %v8051 = vunpack.c.l.b16 %v7783
    %v8052 = vunpack.c.h.b16 %v7783
    %v8053 = vunpack.c.l.b16 %v7784
    %v8054 = vunpack.c.h.b16 %v7784
    %v8055 = vunpack.c.l.b16 %v7785
    %v8056 = vunpack.c.h.b16 %v7785
    %v8057 = vunpack.c.l.b16 %v7786
    %v8058 = vunpack.c.h.b16 %v7786
    %v8059 = vunpack.c.l.b16 %v7787
    %v8060 = vunpack.c.h.b16 %v7787
    %v8061 = vunpack.c.l.b16 %v7788
    %v8062 = vunpack.c.h.b16 %v7788
    %v8063 = vunpack.c.l.b16 %v7789
    %v8064 = vunpack.c.h.b16 %v7789
    %v8065 = vunpack.c.l.b16 %v7790
    %v8066 = vunpack.c.h.b16 %v7790
    %v8067 = vunpack.c.l.b16 %v7791
    %v8068 = vunpack.c.h.b16 %v7791
    %v8069 = vunpack.c.l.b16 %v7792
    %v8070 = vunpack.c.h.b16 %v7792
    %v8071 = vunpack.c.l.b16 %v7793
    %v8072 = vunpack.c.h.b16 %v7793
    %v8073 = vunpack.c.l.b16 %v7794
    %v8074 = vunpack.c.h.b16 %v7794
    %v8075 = vunpack.c.l.b16 %v7795
    %v8076 = vunpack.c.h.b16 %v7795
    %v8077 = vunpack.c.l.b16 %v7796
    %v8078 = vunpack.c.h.b16 %v7796
    %v8079 = vunpack.c.l.b16 %v7797
    %v8080 = vunpack.c.h.b16 %v7797
    %v8081 = vunpack.c.l.b16 %v7798
    %v8082 = vunpack.c.h.b16 %v7798
    %v8083 = vunpack.c.l.b16 %v7799
    %v8084 = vunpack.c.h.b16 %v7799
    %v8085 = vunpack.c.l.b16 %v7800
    %v8086 = vunpack.c.h.b16 %v7800
    %v8087 = vunpack.c.l.b16 %v7801
    %v8088 = vunpack.c.h.b16 %v7801
    %v8089 = vunpack.c.l.b16 %v7802
    %v8090 = vunpack.c.h.b16 %v7802
    %v8091 = vunpack.c.l.b16 %v7803
    %v8092 = vunpack.c.h.b16 %v7803
    %v8093 = vunpack.c.l.b16 %v7804
    %v8094 = vunpack.c.h.b16 %v7804
    %v8095 = vunpack.c.l.b16 %v7805
    %v8096 = vunpack.c.h.b16 %v7805
    %v8097 = vunpack.c.l.b16 %v7806
    %v8098 = vunpack.c.h.b16 %v7806
    %v8099 = vunpack.c.l.b16 %v7807
    %v8100 = vunpack.c.h.b16 %v7807
    %v8101 = vunpack.c.l.b16 %v7808
    %v8102 = vunpack.c.h.b16 %v7808
    %v8103 = vunpack.c.l.b16 %v7809
    %v8104 = vunpack.c.h.b16 %v7809
    %v8105 = vunpack.c.l.b16 %v7810
    %v8106 = vunpack.c.h.b16 %v7810
    %v8107 = vunpack.c.l.b16 %v7811
    %v8108 = vunpack.c.h.b16 %v7811
    %v8109 = vunpack.c.l.b16 %v7812
    %v8110 = vunpack.c.h.b16 %v7812
    %v8111 = vunpack.c.l.b16 %v7813
    %v8112 = vunpack.c.h.b16 %v7813
    %v8113 = vunpack.c.l.b16 %v7814
    %v8114 = vunpack.c.h.b16 %v7814
    %v8115 = vunpack.c.l.b16 %v7815
    %v8116 = vunpack.c.h.b16 %v7815
    %v8117 = vunpack.c.l.b16 %v7816
    %v8118 = vunpack.c.h.b16 %v7816
    %v8119 = vunpack.c.l.b16 %v7817
    %v8120 = vunpack.c.h.b16 %v7817
    %v8121 = vunpack.c.l.b16 %v7818
    %v8122 = vunpack.c.h.b16 %v7818
    %v8123 = vunpack.c.l.b16 %v7819
    %v8124 = vunpack.c.h.b16 %v7819
    %v8125 = vunpack.c.l.b16 %v7820
    %v8126 = vunpack.c.h.b16 %v7820
    %v8127 = vunpack.c.l.b16 %v7821
    %v8128 = vunpack.c.h.b16 %v7821
    %v8129 = vunpack.c.l.b16 %v7822
    %v8130 = vunpack.c.h.b16 %v7822
    %v8131 = vunpack.c.l.b16 %v7823
    %v8132 = vunpack.c.h.b16 %v7823
    %v8133 = vunpack.c.l.b16 %v7824
    %v8134 = vunpack.c.h.b16 %v7824
    %v8135 = vunpack.c.l.b16 %v7825
    %v8136 = vunpack.c.h.b16 %v7825
    %v8137 = vunpack.c.l.b16 %v7826
    %v8138 = vunpack.c.h.b16 %v7826
    %v8139 = vunpack.c.l.b16 %v7827
    %v8140 = vunpack.c.h.b16 %v7827
    %v8141 = vunpack.c.l.b16 %v7828
    %v8142 = vunpack.c.h.b16 %v7828
    %v8143 = vunpack.c.l.b16 %v7829
    %v8144 = vunpack.c.h.b16 %v7829
    %v8145 = vunpack.c.l.b16 %v7830
    %v8146 = vunpack.c.h.b16 %v7830
    %v8147 = vunpack.c.l.b16 %v7831
    %v8148 = vunpack.c.h.b16 %v7831
    %v8149 = vunpack.c.l.b16 %v7832
    %v8150 = vunpack.c.h.b16 %v7832
    %v8151 = vunpack.c.l.b16 %v7833
    %v8152 = vunpack.c.h.b16 %v7833
    %v8153 = vunpack.c.l.b16 %v7834
    %v8154 = vunpack.c.h.b16 %v7834
    %v8155 = vunpack.c.l.b16 %v7835
    %v8156 = vunpack.c.h.b16 %v7835
    %v8157 = vunpack.c.l.b16 %v7836
    %v8158 = vunpack.c.h.b16 %v7836
    %v8159 = vunpack.c.l.b16 %v7837
    %v8160 = vunpack.c.h.b16 %v7837
    %v8161 = vunpack.c.l.b16 %v7838
    %v8162 = vunpack.c.h.b16 %v7838
    %v8163 = vunpack.c.l.b16 %v7839
    %v8164 = vunpack.c.h.b16 %v7839
    %v8165 = vunpack.c.l.b16 %v7840
    %v8166 = vunpack.c.h.b16 %v7840
    %v8167 = vunpack.c.l.b16 %v7841
    %v8168 = vunpack.c.h.b16 %v7841
    %v8169 = vunpack.c.l.b16 %v7842
    %v8170 = vunpack.c.h.b16 %v7842
    %v8171 = vunpack.c.l.b16 %v7843
    %v8172 = vunpack.c.h.b16 %v7843
    %v8173 = vunpack.c.l.b16 %v7844
    %v8174 = vunpack.c.h.b16 %v7844
    %v8175 = vunpack.c.l.b16 %v7845
    %v8176 = vunpack.c.h.b16 %v7845
    %v8177 = vunpack.c.l.b16 %v7846
    %v8178 = vunpack.c.h.b16 %v7846
    %v8179 = vunpack.c.l.b16 %v7847
    %v8180 = vunpack.c.h.b16 %v7847
    %v8181 = vunpack.c.l.b16 %v7848
    %v8182 = vunpack.c.h.b16 %v7848
    %v8183 = vunpack.c.l.b16 %v7849
    %v8184 = vunpack.c.h.b16 %v7849
    %v8185 = vunpack.c.l.b16 %v7850
    %v8186 = vunpack.c.h.b16 %v7850
    %v8187 = vunpack.c.l.b16 %v7851
    %v8188 = vunpack.c.h.b16 %v7851
    %v8189 = vunpack.c.l.b16 %v7852
    %v8190 = vunpack.c.h.b16 %v7852
    %v8191 = vunpack.c.l.b16 %v7853
    %v8192 = vunpack.c.h.b16 %v7853
    %v8193 = vunpack.c.l.b16 %v7854
    %v8194 = vunpack.c.h.b16 %v7854
    %v8195 = vunpack.c.l.b16 %v7855
    %v8196 = vunpack.c.h.b16 %v7855
    %v8197 = vunpack.c.l.b16 %v7856
    %v8198 = vunpack.c.h.b16 %v7856
    %v8199 = vunpack.c.l.b16 %v7857
    %v8200 = vunpack.c.h.b16 %v7857
    %v8201 = vunpack.c.l.b16 %v7858
    %v8202 = vunpack.c.h.b16 %v7858
    %v8203 = vunpack.c.l.b16 %v7859
    %v8204 = vunpack.c.h.b16 %v7859
    %v8205 = vunpack.c.l.b16 %v7860
    %v8206 = vunpack.c.h.b16 %v7860
    %v8207 = vunpack.c.l.b16 %v7861
    %v8208 = vunpack.c.h.b16 %v7861
    %v8209 = vunpack.c.l.b16 %v7862
    %v8210 = vunpack.c.h.b16 %v7862
    %v8211 = vunpack.c.l.b16 %v7863
    %v8212 = vunpack.c.h.b16 %v7863
    %v8213 = vunpack.c.l.b16 %v7864
    %v8214 = vunpack.c.h.b16 %v7864
    %v8215 = vunpack.c.l.b16 %v7865
    %v8216 = vunpack.c.h.b16 %v7865
    %v8217 = vunpack.c.l.b16 %v7866
    %v8218 = vunpack.c.h.b16 %v7866
    %v8219 = vunpack.c.l.b16 %v7867
    %v8220 = vunpack.c.h.b16 %v7867
    %v8221 = vunpack.c.l.b16 %v7868
    %v8222 = vunpack.c.h.b16 %v7868
    %v8223 = vunpack.c.l.b16 %v7869
    %v8224 = vunpack.c.h.b16 %v7869
    %v8225 = vunpack.c.l.b16 %v7870
    %v8226 = vunpack.c.h.b16 %v7870
    %v8227 = vunpack.c.l.b16 %v7871
    %v8228 = vunpack.c.h.b16 %v7871
    %v8229 = vunpack.c.l.b16 %v7872
    %v8230 = vunpack.c.h.b16 %v7872
    %v8231 = vunpack.c.l.b16 %v7873
    %v8232 = vunpack.c.h.b16 %v7873
    %v8233 = vunpack.c.l.b16 %v7874
    %v8234 = vunpack.c.h.b16 %v7874
    %v8235 = vunpack.c.l.b16 %v7875
    %v8236 = vunpack.c.h.b16 %v7875
    %v8237 = vunpack.c.l.b16 %v7876
    %v8238 = vunpack.c.h.b16 %v7876
    %v8239 = vunpack.c.l.b16 %v7877
    %v8240 = vunpack.c.h.b16 %v7877
    %v8241 = vunpack.c.l.b16 %v7878
    %v8242 = vunpack.c.h.b16 %v7878
    %v8243 = vunpack.c.l.b16 %v7879
    %v8244 = vunpack.c.h.b16 %v7879
    %v8245 = vunpack.c.l.b16 %v7880
    %v8246 = vunpack.c.h.b16 %v7880
    %v8247 = vunpack.c.l.b16 %v7881
    %v8248 = vunpack.c.h.b16 %v7881
    %v8249 = vunpack.c.l.b16 %v7882
    %v8250 = vunpack.c.h.b16 %v7882
    %v8251 = vunpack.c.l.b16 %v7883
    %v8252 = vunpack.c.h.b16 %v7883
    %v8253 = vunpack.c.l.b16 %v7884
    %v8254 = vunpack.c.h.b16 %v7884
    %v8255 = vunpack.c.l.b16 %v7885
    %v8256 = vunpack.c.h.b16 %v7885
    %v8257 = vunpack.c.l.b16 %v7886
    %v8258 = vunpack.c.h.b16 %v7886
    %v8259 = vunpack.c.l.b16 %v7887
    %v8260 = vunpack.c.h.b16 %v7887
    %v8261 = vunpack.c.l.b16 %v7888
    %v8262 = vunpack.c.h.b16 %v7888
    %v8263 = vunpack.c.l.b16 %v7889
    %v8264 = vunpack.c.h.b16 %v7889
    %v8265 = vunpack.c.l.b16 %v7890
    %v8266 = vunpack.c.h.b16 %v7890
    %v8267 = vunpack.c.l.b16 %v7891
    %v8268 = vunpack.c.h.b16 %v7891
    %v8269 = vunpack.c.l.b16 %v7892
    %v8270 = vunpack.c.h.b16 %v7892
    %v8271 = vunpack.c.l.b16 %v7893
    %v8272 = vunpack.c.h.b16 %v7893
    %v8273 = vunpack.c.l.b16 %v7894
    %v8274 = vunpack.c.h.b16 %v7894
    %v8275 = vunpack.c.l.b16 %v7895
    %v8276 = vunpack.c.h.b16 %v7895
    %v8277 = vunpack.c.l.b16 %v7896
    %v8278 = vunpack.c.h.b16 %v7896
    %v8279 = vunpack.c.l.b16 %v7897
    %v8280 = vunpack.c.h.b16 %v7897
    %v8281 = vunpack.c.l.b16 %v7898
    %v8282 = vunpack.c.h.b16 %v7898
    %v8283 = vpack.c.b16 %v8035, %v8027
    %v8284 = vpack.c.b16 %v8036, %v8028
    %v8285 = vpack.c.b16 %v8037, %v8029
    %v8286 = vpack.c.b16 %v8038, %v8030
    %v8287 = vpack.c.b16 %v8039, %v8031
    %v8288 = vpack.c.b16 %v8040, %v8032
    %v8289 = vpack.c.b16 %v8041, %v8033
    %v8290 = vpack.c.b16 %v8042, %v8034
    %v8291 = vpack.c.b16 %v8051, %v8043
    %v8292 = vpack.c.b16 %v8052, %v8044
    %v8293 = vpack.c.b16 %v8053, %v8045
    %v8294 = vpack.c.b16 %v8054, %v8046
    %v8295 = vpack.c.b16 %v8055, %v8047
    %v8296 = vpack.c.b16 %v8056, %v8048
    %v8297 = vpack.c.b16 %v8057, %v8049
    %v8298 = vpack.c.b16 %v8058, %v8050
    %v8299 = vpack.c.b16 %v8067, %v8059
    %v8300 = vpack.c.b16 %v8068, %v8060
    %v8301 = vpack.c.b16 %v8069, %v8061
    %v8302 = vpack.c.b16 %v8070, %v8062
    %v8303 = vpack.c.b16 %v8071, %v8063
    %v8304 = vpack.c.b16 %v8072, %v8064
    %v8305 = vpack.c.b16 %v8073, %v8065
    %v8306 = vpack.c.b16 %v8074, %v8066
    %v8307 = vpack.c.b16 %v8083, %v8075
    %v8308 = vpack.c.b16 %v8084, %v8076
    %v8309 = vpack.c.b16 %v8085, %v8077
    %v8310 = vpack.c.b16 %v8086, %v8078
    %v8311 = vpack.c.b16 %v8087, %v8079
    %v8312 = vpack.c.b16 %v8088, %v8080
    %v8313 = vpack.c.b16 %v8089, %v8081
    %v8314 = vpack.c.b16 %v8090, %v8082
    %v8315 = vpack.c.b16 %v8099, %v8091
    %v8316 = vpack.c.b16 %v8100, %v8092
    %v8317 = vpack.c.b16 %v8101, %v8093
    %v8318 = vpack.c.b16 %v8102, %v8094
    %v8319 = vpack.c.b16 %v8103, %v8095
    %v8320 = vpack.c.b16 %v8104, %v8096
    %v8321 = vpack.c.b16 %v8105, %v8097
    %v8322 = vpack.c.b16 %v8106, %v8098
    %v8323 = vpack.c.b16 %v8115, %v8107
    %v8324 = vpack.c.b16 %v8116, %v8108
    %v8325 = vpack.c.b16 %v8117, %v8109
    %v8326 = vpack.c.b16 %v8118, %v8110
    %v8327 = vpack.c.b16 %v8119, %v8111
    %v8328 = vpack.c.b16 %v8120, %v8112
    %v8329 = vpack.c.b16 %v8121, %v8113
    %v8330 = vpack.c.b16 %v8122, %v8114
    %v8331 = vpack.c.b16 %v8131, %v8123
    %v8332 = vpack.c.b16 %v8132, %v8124
    %v8333 = vpack.c.b16 %v8133, %v8125
    %v8334 = vpack.c.b16 %v8134, %v8126
    %v8335 = vpack.c.b16 %v8135, %v8127
    %v8336 = vpack.c.b16 %v8136, %v8128
    %v8337 = vpack.c.b16 %v8137, %v8129
    %v8338 = vpack.c.b16 %v8138, %v8130
    %v8339 = vpack.c.b16 %v8147, %v8139
    %v8340 = vpack.c.b16 %v8148, %v8140
    %v8341 = vpack.c.b16 %v8149, %v8141
    %v8342 = vpack.c.b16 %v8150, %v8142
    %v8343 = vpack.c.b16 %v8151, %v8143
    %v8344 = vpack.c.b16 %v8152, %v8144
    %v8345 = vpack.c.b16 %v8153, %v8145
    %v8346 = vpack.c.b16 %v8154, %v8146
    %v8347 = vpack.c.b16 %v8163, %v8155
    %v8348 = vpack.c.b16 %v8164, %v8156
    %v8349 = vpack.c.b16 %v8165, %v8157
    %v8350 = vpack.c.b16 %v8166, %v8158
    %v8351 = vpack.c.b16 %v8167, %v8159
    %v8352 = vpack.c.b16 %v8168, %v8160
    %v8353 = vpack.c.b16 %v8169, %v8161
    %v8354 = vpack.c.b16 %v8170, %v8162
    %v8355 = vpack.c.b16 %v8179, %v8171
    %v8356 = vpack.c.b16 %v8180, %v8172
    %v8357 = vpack.c.b16 %v8181, %v8173
    %v8358 = vpack.c.b16 %v8182, %v8174
    %v8359 = vpack.c.b16 %v8183, %v8175
    %v8360 = vpack.c.b16 %v8184, %v8176
    %v8361 = vpack.c.b16 %v8185, %v8177
    %v8362 = vpack.c.b16 %v8186, %v8178
    %v8363 = vpack.c.b16 %v8195, %v8187
    %v8364 = vpack.c.b16 %v8196, %v8188
    %v8365 = vpack.c.b16 %v8197, %v8189
    %v8366 = vpack.c.b16 %v8198, %v8190
    %v8367 = vpack.c.b16 %v8199, %v8191
    %v8368 = vpack.c.b16 %v8200, %v8192
    %v8369 = vpack.c.b16 %v8201, %v8193
    %v8370 = vpack.c.b16 %v8202, %v8194
    %v8371 = vpack.c.b16 %v8211, %v8203
    %v8372 = vpack.c.b16 %v8212, %v8204
    %v8373 = vpack.c.b16 %v8213, %v8205
    %v8374 = vpack.c.b16 %v8214, %v8206
    %v8375 = vpack.c.b16 %v8215, %v8207
    %v8376 = vpack.c.b16 %v8216, %v8208
    %v8377 = vpack.c.b16 %v8217, %v8209
    %v8378 = vpack.c.b16 %v8218, %v8210
    %v8379 = vpack.c.b16 %v8227, %v8219
    %v8380 = vpack.c.b16 %v8228, %v8220
    %v8381 = vpack.c.b16 %v8229, %v8221
    %v8382 = vpack.c.b16 %v8230, %v8222
    %v8383 = vpack.c.b16 %v8231, %v8223
    %v8384 = vpack.c.b16 %v8232, %v8224
    %v8385 = vpack.c.b16 %v8233, %v8225
    %v8386 = vpack.c.b16 %v8234, %v8226
    %v8387 = vpack.c.b16 %v8243, %v8235
    %v8388 = vpack.c.b16 %v8244, %v8236
    %v8389 = vpack.c.b16 %v8245, %v8237
    %v8390 = vpack.c.b16 %v8246, %v8238
    %v8391 = vpack.c.b16 %v8247, %v8239
    %v8392 = vpack.c.b16 %v8248, %v8240
    %v8393 = vpack.c.b16 %v8249, %v8241
    %v8394 = vpack.c.b16 %v8250, %v8242
    %v8395 = vpack.c.b16 %v8259, %v8251
    %v8396 = vpack.c.b16 %v8260, %v8252
    %v8397 = vpack.c.b16 %v8261, %v8253
    %v8398 = vpack.c.b16 %v8262, %v8254
    %v8399 = vpack.c.b16 %v8263, %v8255
    %v8400 = vpack.c.b16 %v8264, %v8256
    %v8401 = vpack.c.b16 %v8265, %v8257
    %v8402 = vpack.c.b16 %v8266, %v8258
    %v8403 = vpack.c.b16 %v8275, %v8267
    %v8404 = vpack.c.b16 %v8276, %v8268
    %v8405 = vpack.c.b16 %v8277, %v8269
    %v8406 = vpack.c.b16 %v8278, %v8270
    %v8407 = vpack.c.b16 %v8279, %v8271
    %v8408 = vpack.c.b16 %v8280, %v8272
    %v8409 = vpack.c.b16 %v8281, %v8273
    %v8410 = vpack.c.b16 %v8282, %v8274
    %8539 = vmatpush.bf16.msra.mxu0 %v8339
    %8540 = vmatpush.bf16.msra.mxu0 %v8331
    %8541 = vmatpush.bf16.msra.mxu0 %v8323
    %8542 = vmatpush.bf16.msra.mxu0 %v8315
    %8543 = vmatpush.bf16.msra.mxu0 %v8307
    %8544 = vmatpush.bf16.msra.mxu0 %v8299
    %8545 = vmatpush.bf16.msra.mxu0 %v8291
    %8546 = vmatpush.bf16.msra.mxu0 %v8283
    %8547 = vmatmul.bf16.gmra.mxu0 %v7769
    %v8548 = vpop.f32.mrf.mxu0
    %v8549 = vadd.f32 0.0, %v8548
    %v8550 = vpop.f32.mrf.mxu0
    %8551 = vdwg.mxu0
    %8552 = vmatpush.bf16.msra.mxu0 %v8403
    %8553 = vmatpush.bf16.msra.mxu0 %v8395
    %8554 = vmatpush.bf16.msra.mxu0 %v8387
    %8555 = vmatpush.bf16.msra.mxu0 %v8379
    %8556 = vmatpush.bf16.msra.mxu0 %v8371
    %8557 = vmatpush.bf16.msra.mxu0 %v8363
    %8558 = vmatpush.bf16.msra.mxu0 %v8355
    %8559 = vmatpush.bf16.msra.mxu0 %v8347
    %8560 = vmatmul.bf16.gmra.mxu0 %v7770
    %v8561 = vpop.f32.mrf.mxu0
    %v8562 = vadd.f32 %v8549, %v8561
    %v8563 = vpop.f32.mrf.mxu0
    %8564 = vdwg.mxu0
    %8565 = vmatpush.bf16.msra.mxu0 %v8340
    %8566 = vmatpush.bf16.msra.mxu0 %v8332
    %8567 = vmatpush.bf16.msra.mxu0 %v8324
    %8568 = vmatpush.bf16.msra.mxu0 %v8316
    %8569 = vmatpush.bf16.msra.mxu0 %v8308
    %8570 = vmatpush.bf16.msra.mxu0 %v8300
    %8571 = vmatpush.bf16.msra.mxu0 %v8292
    %8572 = vmatpush.bf16.msra.mxu0 %v8284
    %8573 = vmatmul.bf16.gmra.mxu0 %v7769
    %v8574 = vpop.f32.mrf.mxu0
    %v8575 = vadd.f32 0.0, %v8574
    %v8576 = vpop.f32.mrf.mxu0
    %8577 = vdwg.mxu0
    %8578 = vmatpush.bf16.msra.mxu0 %v8404
    %8579 = vmatpush.bf16.msra.mxu0 %v8396
    %8580 = vmatpush.bf16.msra.mxu0 %v8388
    %8581 = vmatpush.bf16.msra.mxu0 %v8380
    %8582 = vmatpush.bf16.msra.mxu0 %v8372
    %8583 = vmatpush.bf16.msra.mxu0 %v8364
    %8584 = vmatpush.bf16.msra.mxu0 %v8356
    %8585 = vmatpush.bf16.msra.mxu0 %v8348
    %8586 = vmatmul.bf16.gmra.mxu0 %v7770
    %v8587 = vpop.f32.mrf.mxu0
    %v8588 = vadd.f32 %v8575, %v8587
    %v8589 = vpop.f32.mrf.mxu0
    %8590 = vdwg.mxu0
    %8591 = vmatpush.bf16.msra.mxu0 %v8341
    %8592 = vmatpush.bf16.msra.mxu0 %v8333
    %8593 = vmatpush.bf16.msra.mxu0 %v8325
    %8594 = vmatpush.bf16.msra.mxu0 %v8317
    %8595 = vmatpush.bf16.msra.mxu0 %v8309
    %8596 = vmatpush.bf16.msra.mxu0 %v8301
    %8597 = vmatpush.bf16.msra.mxu0 %v8293
    %8598 = vmatpush.bf16.msra.mxu0 %v8285
    %8599 = vmatmul.bf16.gmra.mxu0 %v7769
    %v8600 = vpop.f32.mrf.mxu0
    %v8601 = vadd.f32 0.0, %v8600
    %v8602 = vpop.f32.mrf.mxu0
    %8603 = vdwg.mxu0
    %8604 = vmatpush.bf16.msra.mxu0 %v8405
    %8605 = vmatpush.bf16.msra.mxu0 %v8397
    %8606 = vmatpush.bf16.msra.mxu0 %v8389
    %8607 = vmatpush.bf16.msra.mxu0 %v8381
    %8608 = vmatpush.bf16.msra.mxu0 %v8373
    %8609 = vmatpush.bf16.msra.mxu0 %v8365
    %8610 = vmatpush.bf16.msra.mxu0 %v8357
    %8611 = vmatpush.bf16.msra.mxu0 %v8349
    %8612 = vmatmul.bf16.gmra.mxu0 %v7770
    %v8613 = vpop.f32.mrf.mxu0
    %v8614 = vadd.f32 %v8601, %v8613
    %v8615 = vpop.f32.mrf.mxu0
    %8616 = vdwg.mxu0
    %8617 = vmatpush.bf16.msra.mxu0 %v8342
    %8618 = vmatpush.bf16.msra.mxu0 %v8334
    %8619 = vmatpush.bf16.msra.mxu0 %v8326
    %8620 = vmatpush.bf16.msra.mxu0 %v8318
    %8621 = vmatpush.bf16.msra.mxu0 %v8310
    %8622 = vmatpush.bf16.msra.mxu0 %v8302
    %8623 = vmatpush.bf16.msra.mxu0 %v8294
    %8624 = vmatpush.bf16.msra.mxu0 %v8286
    %8625 = vmatmul.bf16.gmra.mxu0 %v7769
    %v8626 = vpop.f32.mrf.mxu0
    %v8627 = vadd.f32 0.0, %v8626
    %v8628 = vpop.f32.mrf.mxu0
    %8629 = vdwg.mxu0
    %8630 = vmatpush.bf16.msra.mxu0 %v8406
    %8631 = vmatpush.bf16.msra.mxu0 %v8398
    %8632 = vmatpush.bf16.msra.mxu0 %v8390
    %8633 = vmatpush.bf16.msra.mxu0 %v8382
    %8634 = vmatpush.bf16.msra.mxu0 %v8374
    %8635 = vmatpush.bf16.msra.mxu0 %v8366
    %8636 = vmatpush.bf16.msra.mxu0 %v8358
    %8637 = vmatpush.bf16.msra.mxu0 %v8350
    %8638 = vmatmul.bf16.gmra.mxu0 %v7770
    %v8639 = vpop.f32.mrf.mxu0
    %v8640 = vadd.f32 %v8627, %v8639
    %v8641 = vpop.f32.mrf.mxu0
    %8642 = vdwg.mxu0
    %8643 = vmatpush.bf16.msra.mxu0 %v8343
    %8644 = vmatpush.bf16.msra.mxu0 %v8335
    %8645 = vmatpush.bf16.msra.mxu0 %v8327
    %8646 = vmatpush.bf16.msra.mxu0 %v8319
    %8647 = vmatpush.bf16.msra.mxu0 %v8311
    %8648 = vmatpush.bf16.msra.mxu0 %v8303
    %8649 = vmatpush.bf16.msra.mxu0 %v8295
    %8650 = vmatpush.bf16.msra.mxu0 %v8287
    %8651 = vmatmul.bf16.gmra.mxu0 %v7769
    %v8652 = vpop.f32.mrf.mxu0
    %v8653 = vadd.f32 0.0, %v8652
    %v8654 = vpop.f32.mrf.mxu0
    %8655 = vdwg.mxu0
    %8656 = vmatpush.bf16.msra.mxu0 %v8407
    %8657 = vmatpush.bf16.msra.mxu0 %v8399
    %8658 = vmatpush.bf16.msra.mxu0 %v8391
    %8659 = vmatpush.bf16.msra.mxu0 %v8383
    %8660 = vmatpush.bf16.msra.mxu0 %v8375
    %8661 = vmatpush.bf16.msra.mxu0 %v8367
    %8662 = vmatpush.bf16.msra.mxu0 %v8359
    %8663 = vmatpush.bf16.msra.mxu0 %v8351
    %8664 = vmatmul.bf16.gmra.mxu0 %v7770
    %v8665 = vpop.f32.mrf.mxu0
    %v8666 = vadd.f32 %v8653, %v8665
    %v8667 = vpop.f32.mrf.mxu0
    %8668 = vdwg.mxu0
    %8669 = vmatpush.bf16.msra.mxu0 %v8344
    %8670 = vmatpush.bf16.msra.mxu0 %v8336
    %8671 = vmatpush.bf16.msra.mxu0 %v8328
    %8672 = vmatpush.bf16.msra.mxu0 %v8320
    %8673 = vmatpush.bf16.msra.mxu0 %v8312
    %8674 = vmatpush.bf16.msra.mxu0 %v8304
    %8675 = vmatpush.bf16.msra.mxu0 %v8296
    %8676 = vmatpush.bf16.msra.mxu0 %v8288
    %8677 = vmatmul.bf16.gmra.mxu0 %v7769
    %v8678 = vpop.f32.mrf.mxu0
    %v8679 = vadd.f32 0.0, %v8678
    %v8680 = vpop.f32.mrf.mxu0
    %8681 = vdwg.mxu0
    %8682 = vmatpush.bf16.msra.mxu0 %v8408
    %8683 = vmatpush.bf16.msra.mxu0 %v8400
    %8684 = vmatpush.bf16.msra.mxu0 %v8392
    %8685 = vmatpush.bf16.msra.mxu0 %v8384
    %8686 = vmatpush.bf16.msra.mxu0 %v8376
    %8687 = vmatpush.bf16.msra.mxu0 %v8368
    %8688 = vmatpush.bf16.msra.mxu0 %v8360
    %8689 = vmatpush.bf16.msra.mxu0 %v8352
    %8690 = vmatmul.bf16.gmra.mxu0 %v7770
    %v8691 = vpop.f32.mrf.mxu0
    %v8692 = vadd.f32 %v8679, %v8691
    %v8693 = vpop.f32.mrf.mxu0
    %8694 = vdwg.mxu0
    %8695 = vmatpush.bf16.msra.mxu0 %v8345
    %8696 = vmatpush.bf16.msra.mxu0 %v8337
    %8697 = vmatpush.bf16.msra.mxu0 %v8329
    %8698 = vmatpush.bf16.msra.mxu0 %v8321
    %8699 = vmatpush.bf16.msra.mxu0 %v8313
    %8700 = vmatpush.bf16.msra.mxu0 %v8305
    %8701 = vmatpush.bf16.msra.mxu0 %v8297
    %8702 = vmatpush.bf16.msra.mxu0 %v8289
    %8703 = vmatmul.bf16.gmra.mxu0 %v7769
    %v8704 = vpop.f32.mrf.mxu0
    %v8705 = vadd.f32 0.0, %v8704
    %v8706 = vpop.f32.mrf.mxu0
    %8707 = vdwg.mxu0
    %8708 = vmatpush.bf16.msra.mxu0 %v8409
    %8709 = vmatpush.bf16.msra.mxu0 %v8401
    %8710 = vmatpush.bf16.msra.mxu0 %v8393
    %8711 = vmatpush.bf16.msra.mxu0 %v8385
    %8712 = vmatpush.bf16.msra.mxu0 %v8377
    %8713 = vmatpush.bf16.msra.mxu0 %v8369
    %8714 = vmatpush.bf16.msra.mxu0 %v8361
    %8715 = vmatpush.bf16.msra.mxu0 %v8353
    %8716 = vmatmul.bf16.gmra.mxu0 %v7770
    %v8717 = vpop.f32.mrf.mxu0
    %v8718 = vadd.f32 %v8705, %v8717
    %v8719 = vpop.f32.mrf.mxu0
    %8720 = vdwg.mxu0
    %8721 = vmatpush.bf16.msra.mxu0 %v8346
    %8722 = vmatpush.bf16.msra.mxu0 %v8338
    %8723 = vmatpush.bf16.msra.mxu0 %v8330
    %8724 = vmatpush.bf16.msra.mxu0 %v8322
    %8725 = vmatpush.bf16.msra.mxu0 %v8314
    %8726 = vmatpush.bf16.msra.mxu0 %v8306
    %8727 = vmatpush.bf16.msra.mxu0 %v8298
    %8728 = vmatpush.bf16.msra.mxu0 %v8290
    %8729 = vmatmul.bf16.gmra.mxu0 %v7769
    %v8730 = vpop.f32.mrf.mxu0
    %v8731 = vadd.f32 0.0, %v8730
    %v8732 = vpop.f32.mrf.mxu0
    %8733 = vdwg.mxu0
    %8734 = vmatpush.bf16.msra.mxu0 %v8410
    %8735 = vmatpush.bf16.msra.mxu0 %v8402
    %8736 = vmatpush.bf16.msra.mxu0 %v8394
    %8737 = vmatpush.bf16.msra.mxu0 %v8386
    %8738 = vmatpush.bf16.msra.mxu0 %v8378
    %8739 = vmatpush.bf16.msra.mxu0 %v8370
    %8740 = vmatpush.bf16.msra.mxu0 %v8362
    %8741 = vmatpush.bf16.msra.mxu0 %v8354
    %8742 = vmatmul.bf16.gmra.mxu0 %v7770
    %v8743 = vpop.f32.mrf.mxu0
    %v8744 = vadd.f32 %v8731, %v8743
    %v8745 = vpop.f32.mrf.mxu0
    %8746 = vdwg.mxu0
    %v8755 = vrot.slane %v8588, 7
    %v8756 = vrot.slane %v8614, 6
    %v8757 = vrot.slane %v8640, 5
    %v8758 = vrot.slane %v8666, 4
    %v8759 = vrot.slane %v8692, 3
    %v8760 = vrot.slane %v8718, 2
    %v8761 = vrot.slane %v8744, 1
    %v8762 = vsel %vm169, %v8562, %v8755
    %v8763 = vsel %vm2214, %v8756, %v8757
    %v8764 = vsel %vm2216, %v8762, %v8763
    %v8765 = vsel %vm2218, %v8758, %v8759
    %v8766 = vsel %vm2220, %v8760, %v8761
    %v8767 = vsel %vm2222, %v8765, %v8766
    %v8768 = vsel %vm2224, %v8764, %v8767
    %v8770 = vadd.f32 %v7763, %v8768
    %v8771 = vxor.u32 %v8770, 2147483648
    %v8772 = vmul.f32 %v8771, 1.442695
    %v8773 = vpow.pop %v8772
    %v8774 = vadd.f32 %v8773, 1.0
    %v8775 = vrcp.pop %v8774
    %v8776 = vmul.f32 %v8774, %v8775
    %v8777 = vsub.f32 1.0, %v8776
    %v8778 = vmul.f32 %v8775, %v8777
    %v8779 = vadd.f32 %v8775, %v8778
    %vm8780 = vweird.f32 %v8774
    %vm8781 = vweird.f32 %v8775
    %vm8782 = vmor %vm8780, %vm8781
    %v8783 = vsel %vm8782, %v8775, %v8779
    %v8784 = vand.u32 2147483647, %v8774
    %vm8785 = vcmp.eq.f32.partialorder %v8784, 8.507059e+37
    %v8786 = vand.u32 %v8774, 2147483648
    %v8787 = vor.u32 1.1754944e-38, %v8786
    %v8788 = vsel %vm8785, %v8787, %v8783
    %v8789 = vmul.f32 1.0, %v8788
    %v8791 = vrot.slane %v8770, 2
    %v8793 = vxor.u32 %v8791, 2147483648
    %v8794 = vmul.f32 %v8793, 1.442695
    %v8795 = vpow.pop %v8794
    %v8796 = vadd.f32 %v8795, 1.0
    %v8797 = vrcp.pop %v8796
    %v8798 = vmul.f32 %v8796, %v8797
    %v8799 = vsub.f32 1.0, %v8798
    %v8800 = vmul.f32 %v8797, %v8799
    %v8801 = vadd.f32 %v8797, %v8800
    %vm8802 = vweird.f32 %v8796
    %vm8803 = vweird.f32 %v8797
    %vm8804 = vmor %vm8802, %vm8803
    %v8805 = vsel %vm8804, %v8797, %v8801
    %v8806 = vand.u32 2147483647, %v8796
    %vm8807 = vcmp.eq.f32.partialorder %v8806, 8.507059e+37
    %v8808 = vand.u32 %v8796, 2147483648
    %v8809 = vor.u32 1.1754944e-38, %v8808
    %v8810 = vsel %vm8807, %v8809, %v8805
    %v8811 = vmul.f32 1.0, %v8810
    %v8812 = vrot.slane %v8770, 4
    %v8814 = vtanh.pop %v8812
    %v8815 = vrot.slane %v8770, 6
    %v8817 = vxor.u32 %v8815, 2147483648
    %v8818 = vmul.f32 %v8817, 1.442695
    %v8819 = vpow.pop %v8818
    %v8820 = vadd.f32 %v8819, 1.0
    %v8821 = vrcp.pop %v8820
    %v8822 = vmul.f32 %v8820, %v8821
    %v8823 = vsub.f32 1.0, %v8822
    %v8824 = vmul.f32 %v8821, %v8823
    %v8825 = vadd.f32 %v8821, %v8824
    %vm8826 = vweird.f32 %v8820
    %vm8827 = vweird.f32 %v8821
    %vm8828 = vmor %vm8826, %vm8827
    %v8829 = vsel %vm8828, %v8821, %v8825
    %v8830 = vand.u32 2147483647, %v8820
    %vm8831 = vcmp.eq.f32.partialorder %v8830, 8.507059e+37
    %v8832 = vand.u32 %v8820, 2147483648
    %v8833 = vor.u32 1.1754944e-38, %v8832
    %v8834 = vsel %vm8831, %v8833, %v8829
    %v8835 = vmul.f32 1.0, %v8834
    %v8836 = vmul.f32 %v8811, %v7748
    %v8837 = vmul.f32 %v8789, %v8814
    %v8838 = vadd.f32 %v8836, %v8837
    %v8839 = vtanh.pop %v8838
    %v8840 = vmul.f32 %v8835, %v8839
    %s8841 = scalar_lea.vmem %s7, 6
    %8842 = vst.msk [vmem:[%s8841] ss:$8 sm:$0x3] %vm2301, %v8840
    %8843 = vst.msk [vmem:[%s8841] ss:$8 sm:$0x0] %vm2301, %v8840
    %s8844 = sadd.s32 %s2304, 6
    %p8845 = scmp.eq.s32.totalorder %s8844, 7
    // Predicated region
    $region74: #{oracle_gold_rollout.2} parent=1 // pred_check
      %p8846 = pneg %p8845
    $region75: #{oracle_gold_rollout.2} parent=1 // pred_check_branch
      %8848 = sbr.rel (%p8846) target = $region77
    $region76: #{oracle_gold_rollout.2} parent=1 // pred_region
      %8849 = vst.msk [vmem:[#allocation13] sm:$0x3] %vm2301, %v8838
    $region77: #{oracle_gold_rollout.2} parent=1 // pred_fallthru
      _
    %s8850 = scalar_lea.vmem [#allocation4], 7
    %v8851 = vld [vmem:[%s8850] ss:$8 sm:$0xf]
    %v8852 = vld [vmem:[%s8850] ss:$8 sm:$0xf0]
    %v8853 = vor.u32 %v8851, %v8852
    %v8855 = vperm.slane %v8840, 0
    %v8856 = vperm.slane %v8840, 1
    %v8859 = vpack.c.bf16 %v8855, %v8855
    %v8860 = vpack.c.bf16 %v8856, %v8856
    %v8861 = vld [vmem:[#allocation11] sm:$0xff]
    %v8862 = vld [vmem:[#allocation11 + $0x8] sm:$0xff]
    %v8863 = vld [vmem:[#allocation11 + $0x10] sm:$0xff]
    %v8864 = vld [vmem:[#allocation11 + $0x18] sm:$0xff]
    %v8865 = vld [vmem:[#allocation11 + $0x20] sm:$0xff]
    %v8866 = vld [vmem:[#allocation11 + $0x28] sm:$0xff]
    %v8867 = vld [vmem:[#allocation11 + $0x30] sm:$0xff]
    %v8868 = vld [vmem:[#allocation11 + $0x38] sm:$0xff]
    %v8869 = vld [vmem:[#allocation11 + $0x40] sm:$0xff]
    %v8870 = vld [vmem:[#allocation11 + $0x48] sm:$0xff]
    %v8871 = vld [vmem:[#allocation11 + $0x50] sm:$0xff]
    %v8872 = vld [vmem:[#allocation11 + $0x58] sm:$0xff]
    %v8873 = vld [vmem:[#allocation11 + $0x60] sm:$0xff]
    %v8874 = vld [vmem:[#allocation11 + $0x68] sm:$0xff]
    %v8875 = vld [vmem:[#allocation11 + $0x70] sm:$0xff]
    %v8876 = vld [vmem:[#allocation11 + $0x78] sm:$0xff]
    %v8877 = vld [vmem:[#allocation11 + $0x80] sm:$0xff]
    %v8878 = vld [vmem:[#allocation11 + $0x88] sm:$0xff]
    %v8879 = vld [vmem:[#allocation11 + $0x90] sm:$0xff]
    %v8880 = vld [vmem:[#allocation11 + $0x98] sm:$0xff]
    %v8881 = vld [vmem:[#allocation11 + $0xa0] sm:$0xff]
    %v8882 = vld [vmem:[#allocation11 + $0xa8] sm:$0xff]
    %v8883 = vld [vmem:[#allocation11 + $0xb0] sm:$0xff]
    %v8884 = vld [vmem:[#allocation11 + $0xb8] sm:$0xff]
    %v8885 = vld [vmem:[#allocation11 + $0xc0] sm:$0xff]
    %v8886 = vld [vmem:[#allocation11 + $0xc8] sm:$0xff]
    %v8887 = vld [vmem:[#allocation11 + $0xd0] sm:$0xff]
    %v8888 = vld [vmem:[#allocation11 + $0xd8] sm:$0xff]
    %v8889 = vld [vmem:[#allocation11 + $0xe0] sm:$0xff]
    %v8890 = vld [vmem:[#allocation11 + $0xe8] sm:$0xff]
    %v8891 = vld [vmem:[#allocation11 + $0xf0] sm:$0xff]
    %v8892 = vld [vmem:[#allocation11 + $0xf8] sm:$0xff]
    %v8893 = vld [vmem:[#allocation11 + $0x100] sm:$0xff]
    %v8894 = vld [vmem:[#allocation11 + $0x108] sm:$0xff]
    %v8895 = vld [vmem:[#allocation11 + $0x110] sm:$0xff]
    %v8896 = vld [vmem:[#allocation11 + $0x118] sm:$0xff]
    %v8897 = vld [vmem:[#allocation11 + $0x120] sm:$0xff]
    %v8898 = vld [vmem:[#allocation11 + $0x128] sm:$0xff]
    %v8899 = vld [vmem:[#allocation11 + $0x130] sm:$0xff]
    %v8900 = vld [vmem:[#allocation11 + $0x138] sm:$0xff]
    %v8901 = vld [vmem:[#allocation11 + $0x140] sm:$0xff]
    %v8902 = vld [vmem:[#allocation11 + $0x148] sm:$0xff]
    %v8903 = vld [vmem:[#allocation11 + $0x150] sm:$0xff]
    %v8904 = vld [vmem:[#allocation11 + $0x158] sm:$0xff]
    %v8905 = vld [vmem:[#allocation11 + $0x160] sm:$0xff]
    %v8906 = vld [vmem:[#allocation11 + $0x168] sm:$0xff]
    %v8907 = vld [vmem:[#allocation11 + $0x170] sm:$0xff]
    %v8908 = vld [vmem:[#allocation11 + $0x178] sm:$0xff]
    %v8909 = vld [vmem:[#allocation11 + $0x180] sm:$0xff]
    %v8910 = vld [vmem:[#allocation11 + $0x188] sm:$0xff]
    %v8911 = vld [vmem:[#allocation11 + $0x190] sm:$0xff]
    %v8912 = vld [vmem:[#allocation11 + $0x198] sm:$0xff]
    %v8913 = vld [vmem:[#allocation11 + $0x1a0] sm:$0xff]
    %v8914 = vld [vmem:[#allocation11 + $0x1a8] sm:$0xff]
    %v8915 = vld [vmem:[#allocation11 + $0x1b0] sm:$0xff]
    %v8916 = vld [vmem:[#allocation11 + $0x1b8] sm:$0xff]
    %v8917 = vld [vmem:[#allocation11 + $0x1c0] sm:$0xff]
    %v8918 = vld [vmem:[#allocation11 + $0x1c8] sm:$0xff]
    %v8919 = vld [vmem:[#allocation11 + $0x1d0] sm:$0xff]
    %v8920 = vld [vmem:[#allocation11 + $0x1d8] sm:$0xff]
    %v8921 = vld [vmem:[#allocation11 + $0x1e0] sm:$0xff]
    %v8922 = vld [vmem:[#allocation11 + $0x1e8] sm:$0xff]
    %v8923 = vld [vmem:[#allocation11 + $0x1f0] sm:$0xff]
    %v8924 = vld [vmem:[#allocation11 + $0x1f8] sm:$0xff]
    %v8925 = vld [vmem:[#allocation11 + $0x200] sm:$0xff]
    %v8926 = vld [vmem:[#allocation11 + $0x208] sm:$0xff]
    %v8927 = vld [vmem:[#allocation11 + $0x210] sm:$0xff]
    %v8928 = vld [vmem:[#allocation11 + $0x218] sm:$0xff]
    %v8929 = vld [vmem:[#allocation11 + $0x220] sm:$0xff]
    %v8930 = vld [vmem:[#allocation11 + $0x228] sm:$0xff]
    %v8931 = vld [vmem:[#allocation11 + $0x230] sm:$0xff]
    %v8932 = vld [vmem:[#allocation11 + $0x238] sm:$0xff]
    %v8933 = vld [vmem:[#allocation11 + $0x240] sm:$0xff]
    %v8934 = vld [vmem:[#allocation11 + $0x248] sm:$0xff]
    %v8935 = vld [vmem:[#allocation11 + $0x250] sm:$0xff]
    %v8936 = vld [vmem:[#allocation11 + $0x258] sm:$0xff]
    %v8937 = vld [vmem:[#allocation11 + $0x260] sm:$0xff]
    %v8938 = vld [vmem:[#allocation11 + $0x268] sm:$0xff]
    %v8939 = vld [vmem:[#allocation11 + $0x270] sm:$0xff]
    %v8940 = vld [vmem:[#allocation11 + $0x278] sm:$0xff]
    %v8941 = vld [vmem:[#allocation11 + $0x280] sm:$0xff]
    %v8942 = vld [vmem:[#allocation11 + $0x288] sm:$0xff]
    %v8943 = vld [vmem:[#allocation11 + $0x290] sm:$0xff]
    %v8944 = vld [vmem:[#allocation11 + $0x298] sm:$0xff]
    %v8945 = vld [vmem:[#allocation11 + $0x2a0] sm:$0xff]
    %v8946 = vld [vmem:[#allocation11 + $0x2a8] sm:$0xff]
    %v8947 = vld [vmem:[#allocation11 + $0x2b0] sm:$0xff]
    %v8948 = vld [vmem:[#allocation11 + $0x2b8] sm:$0xff]
    %v8949 = vld [vmem:[#allocation11 + $0x2c0] sm:$0xff]
    %v8950 = vld [vmem:[#allocation11 + $0x2c8] sm:$0xff]
    %v8951 = vld [vmem:[#allocation11 + $0x2d0] sm:$0xff]
    %v8952 = vld [vmem:[#allocation11 + $0x2d8] sm:$0xff]
    %v8953 = vld [vmem:[#allocation11 + $0x2e0] sm:$0xff]
    %v8954 = vld [vmem:[#allocation11 + $0x2e8] sm:$0xff]
    %v8955 = vld [vmem:[#allocation11 + $0x2f0] sm:$0xff]
    %v8956 = vld [vmem:[#allocation11 + $0x2f8] sm:$0xff]
    %v8957 = vld [vmem:[#allocation11 + $0x300] sm:$0xff]
    %v8958 = vld [vmem:[#allocation11 + $0x308] sm:$0xff]
    %v8959 = vld [vmem:[#allocation11 + $0x310] sm:$0xff]
    %v8960 = vld [vmem:[#allocation11 + $0x318] sm:$0xff]
    %v8961 = vld [vmem:[#allocation11 + $0x320] sm:$0xff]
    %v8962 = vld [vmem:[#allocation11 + $0x328] sm:$0xff]
    %v8963 = vld [vmem:[#allocation11 + $0x330] sm:$0xff]
    %v8964 = vld [vmem:[#allocation11 + $0x338] sm:$0xff]
    %v8965 = vld [vmem:[#allocation11 + $0x340] sm:$0xff]
    %v8966 = vld [vmem:[#allocation11 + $0x348] sm:$0xff]
    %v8967 = vld [vmem:[#allocation11 + $0x350] sm:$0xff]
    %v8968 = vld [vmem:[#allocation11 + $0x358] sm:$0xff]
    %v8969 = vld [vmem:[#allocation11 + $0x360] sm:$0xff]
    %v8970 = vld [vmem:[#allocation11 + $0x368] sm:$0xff]
    %v8971 = vld [vmem:[#allocation11 + $0x370] sm:$0xff]
    %v8972 = vld [vmem:[#allocation11 + $0x378] sm:$0xff]
    %v8973 = vld [vmem:[#allocation11 + $0x380] sm:$0xff]
    %v8974 = vld [vmem:[#allocation11 + $0x388] sm:$0xff]
    %v8975 = vld [vmem:[#allocation11 + $0x390] sm:$0xff]
    %v8976 = vld [vmem:[#allocation11 + $0x398] sm:$0xff]
    %v8977 = vld [vmem:[#allocation11 + $0x3a0] sm:$0xff]
    %v8978 = vld [vmem:[#allocation11 + $0x3a8] sm:$0xff]
    %v8979 = vld [vmem:[#allocation11 + $0x3b0] sm:$0xff]
    %v8980 = vld [vmem:[#allocation11 + $0x3b8] sm:$0xff]
    %v8981 = vld [vmem:[#allocation11 + $0x3c0] sm:$0xff]
    %v8982 = vld [vmem:[#allocation11 + $0x3c8] sm:$0xff]
    %v8983 = vld [vmem:[#allocation11 + $0x3d0] sm:$0xff]
    %v8984 = vld [vmem:[#allocation11 + $0x3d8] sm:$0xff]
    %v8985 = vld [vmem:[#allocation11 + $0x3e0] sm:$0xff]
    %v8986 = vld [vmem:[#allocation11 + $0x3e8] sm:$0xff]
    %v8987 = vld [vmem:[#allocation11 + $0x3f0] sm:$0xff]
    %v8988 = vld [vmem:[#allocation11 + $0x3f8] sm:$0xff]
    %v9117 = vunpack.c.l.b16 %v8861
    %v9118 = vunpack.c.h.b16 %v8861
    %v9119 = vunpack.c.l.b16 %v8862
    %v9120 = vunpack.c.h.b16 %v8862
    %v9121 = vunpack.c.l.b16 %v8863
    %v9122 = vunpack.c.h.b16 %v8863
    %v9123 = vunpack.c.l.b16 %v8864
    %v9124 = vunpack.c.h.b16 %v8864
    %v9125 = vunpack.c.l.b16 %v8865
    %v9126 = vunpack.c.h.b16 %v8865
    %v9127 = vunpack.c.l.b16 %v8866
    %v9128 = vunpack.c.h.b16 %v8866
    %v9129 = vunpack.c.l.b16 %v8867
    %v9130 = vunpack.c.h.b16 %v8867
    %v9131 = vunpack.c.l.b16 %v8868
    %v9132 = vunpack.c.h.b16 %v8868
    %v9133 = vunpack.c.l.b16 %v8869
    %v9134 = vunpack.c.h.b16 %v8869
    %v9135 = vunpack.c.l.b16 %v8870
    %v9136 = vunpack.c.h.b16 %v8870
    %v9137 = vunpack.c.l.b16 %v8871
    %v9138 = vunpack.c.h.b16 %v8871
    %v9139 = vunpack.c.l.b16 %v8872
    %v9140 = vunpack.c.h.b16 %v8872
    %v9141 = vunpack.c.l.b16 %v8873
    %v9142 = vunpack.c.h.b16 %v8873
    %v9143 = vunpack.c.l.b16 %v8874
    %v9144 = vunpack.c.h.b16 %v8874
    %v9145 = vunpack.c.l.b16 %v8875
    %v9146 = vunpack.c.h.b16 %v8875
    %v9147 = vunpack.c.l.b16 %v8876
    %v9148 = vunpack.c.h.b16 %v8876
    %v9149 = vunpack.c.l.b16 %v8877
    %v9150 = vunpack.c.h.b16 %v8877
    %v9151 = vunpack.c.l.b16 %v8878
    %v9152 = vunpack.c.h.b16 %v8878
    %v9153 = vunpack.c.l.b16 %v8879
    %v9154 = vunpack.c.h.b16 %v8879
    %v9155 = vunpack.c.l.b16 %v8880
    %v9156 = vunpack.c.h.b16 %v8880
    %v9157 = vunpack.c.l.b16 %v8881
    %v9158 = vunpack.c.h.b16 %v8881
    %v9159 = vunpack.c.l.b16 %v8882
    %v9160 = vunpack.c.h.b16 %v8882
    %v9161 = vunpack.c.l.b16 %v8883
    %v9162 = vunpack.c.h.b16 %v8883
    %v9163 = vunpack.c.l.b16 %v8884
    %v9164 = vunpack.c.h.b16 %v8884
    %v9165 = vunpack.c.l.b16 %v8885
    %v9166 = vunpack.c.h.b16 %v8885
    %v9167 = vunpack.c.l.b16 %v8886
    %v9168 = vunpack.c.h.b16 %v8886
    %v9169 = vunpack.c.l.b16 %v8887
    %v9170 = vunpack.c.h.b16 %v8887
    %v9171 = vunpack.c.l.b16 %v8888
    %v9172 = vunpack.c.h.b16 %v8888
    %v9173 = vunpack.c.l.b16 %v8889
    %v9174 = vunpack.c.h.b16 %v8889
    %v9175 = vunpack.c.l.b16 %v8890
    %v9176 = vunpack.c.h.b16 %v8890
    %v9177 = vunpack.c.l.b16 %v8891
    %v9178 = vunpack.c.h.b16 %v8891
    %v9179 = vunpack.c.l.b16 %v8892
    %v9180 = vunpack.c.h.b16 %v8892
    %v9181 = vunpack.c.l.b16 %v8893
    %v9182 = vunpack.c.h.b16 %v8893
    %v9183 = vunpack.c.l.b16 %v8894
    %v9184 = vunpack.c.h.b16 %v8894
    %v9185 = vunpack.c.l.b16 %v8895
    %v9186 = vunpack.c.h.b16 %v8895
    %v9187 = vunpack.c.l.b16 %v8896
    %v9188 = vunpack.c.h.b16 %v8896
    %v9189 = vunpack.c.l.b16 %v8897
    %v9190 = vunpack.c.h.b16 %v8897
    %v9191 = vunpack.c.l.b16 %v8898
    %v9192 = vunpack.c.h.b16 %v8898
    %v9193 = vunpack.c.l.b16 %v8899
    %v9194 = vunpack.c.h.b16 %v8899
    %v9195 = vunpack.c.l.b16 %v8900
    %v9196 = vunpack.c.h.b16 %v8900
    %v9197 = vunpack.c.l.b16 %v8901
    %v9198 = vunpack.c.h.b16 %v8901
    %v9199 = vunpack.c.l.b16 %v8902
    %v9200 = vunpack.c.h.b16 %v8902
    %v9201 = vunpack.c.l.b16 %v8903
    %v9202 = vunpack.c.h.b16 %v8903
    %v9203 = vunpack.c.l.b16 %v8904
    %v9204 = vunpack.c.h.b16 %v8904
    %v9205 = vunpack.c.l.b16 %v8905
    %v9206 = vunpack.c.h.b16 %v8905
    %v9207 = vunpack.c.l.b16 %v8906
    %v9208 = vunpack.c.h.b16 %v8906
    %v9209 = vunpack.c.l.b16 %v8907
    %v9210 = vunpack.c.h.b16 %v8907
    %v9211 = vunpack.c.l.b16 %v8908
    %v9212 = vunpack.c.h.b16 %v8908
    %v9213 = vunpack.c.l.b16 %v8909
    %v9214 = vunpack.c.h.b16 %v8909
    %v9215 = vunpack.c.l.b16 %v8910
    %v9216 = vunpack.c.h.b16 %v8910
    %v9217 = vunpack.c.l.b16 %v8911
    %v9218 = vunpack.c.h.b16 %v8911
    %v9219 = vunpack.c.l.b16 %v8912
    %v9220 = vunpack.c.h.b16 %v8912
    %v9221 = vunpack.c.l.b16 %v8913
    %v9222 = vunpack.c.h.b16 %v8913
    %v9223 = vunpack.c.l.b16 %v8914
    %v9224 = vunpack.c.h.b16 %v8914
    %v9225 = vunpack.c.l.b16 %v8915
    %v9226 = vunpack.c.h.b16 %v8915
    %v9227 = vunpack.c.l.b16 %v8916
    %v9228 = vunpack.c.h.b16 %v8916
    %v9229 = vunpack.c.l.b16 %v8917
    %v9230 = vunpack.c.h.b16 %v8917
    %v9231 = vunpack.c.l.b16 %v8918
    %v9232 = vunpack.c.h.b16 %v8918
    %v9233 = vunpack.c.l.b16 %v8919
    %v9234 = vunpack.c.h.b16 %v8919
    %v9235 = vunpack.c.l.b16 %v8920
    %v9236 = vunpack.c.h.b16 %v8920
    %v9237 = vunpack.c.l.b16 %v8921
    %v9238 = vunpack.c.h.b16 %v8921
    %v9239 = vunpack.c.l.b16 %v8922
    %v9240 = vunpack.c.h.b16 %v8922
    %v9241 = vunpack.c.l.b16 %v8923
    %v9242 = vunpack.c.h.b16 %v8923
    %v9243 = vunpack.c.l.b16 %v8924
    %v9244 = vunpack.c.h.b16 %v8924
    %v9245 = vunpack.c.l.b16 %v8925
    %v9246 = vunpack.c.h.b16 %v8925
    %v9247 = vunpack.c.l.b16 %v8926
    %v9248 = vunpack.c.h.b16 %v8926
    %v9249 = vunpack.c.l.b16 %v8927
    %v9250 = vunpack.c.h.b16 %v8927
    %v9251 = vunpack.c.l.b16 %v8928
    %v9252 = vunpack.c.h.b16 %v8928
    %v9253 = vunpack.c.l.b16 %v8929
    %v9254 = vunpack.c.h.b16 %v8929
    %v9255 = vunpack.c.l.b16 %v8930
    %v9256 = vunpack.c.h.b16 %v8930
    %v9257 = vunpack.c.l.b16 %v8931
    %v9258 = vunpack.c.h.b16 %v8931
    %v9259 = vunpack.c.l.b16 %v8932
    %v9260 = vunpack.c.h.b16 %v8932
    %v9261 = vunpack.c.l.b16 %v8933
    %v9262 = vunpack.c.h.b16 %v8933
    %v9263 = vunpack.c.l.b16 %v8934
    %v9264 = vunpack.c.h.b16 %v8934
    %v9265 = vunpack.c.l.b16 %v8935
    %v9266 = vunpack.c.h.b16 %v8935
    %v9267 = vunpack.c.l.b16 %v8936
    %v9268 = vunpack.c.h.b16 %v8936
    %v9269 = vunpack.c.l.b16 %v8937
    %v9270 = vunpack.c.h.b16 %v8937
    %v9271 = vunpack.c.l.b16 %v8938
    %v9272 = vunpack.c.h.b16 %v8938
    %v9273 = vunpack.c.l.b16 %v8939
    %v9274 = vunpack.c.h.b16 %v8939
    %v9275 = vunpack.c.l.b16 %v8940
    %v9276 = vunpack.c.h.b16 %v8940
    %v9277 = vunpack.c.l.b16 %v8941
    %v9278 = vunpack.c.h.b16 %v8941
    %v9279 = vunpack.c.l.b16 %v8942
    %v9280 = vunpack.c.h.b16 %v8942
    %v9281 = vunpack.c.l.b16 %v8943
    %v9282 = vunpack.c.h.b16 %v8943
    %v9283 = vunpack.c.l.b16 %v8944
    %v9284 = vunpack.c.h.b16 %v8944
    %v9285 = vunpack.c.l.b16 %v8945
    %v9286 = vunpack.c.h.b16 %v8945
    %v9287 = vunpack.c.l.b16 %v8946
    %v9288 = vunpack.c.h.b16 %v8946
    %v9289 = vunpack.c.l.b16 %v8947
    %v9290 = vunpack.c.h.b16 %v8947
    %v9291 = vunpack.c.l.b16 %v8948
    %v9292 = vunpack.c.h.b16 %v8948
    %v9293 = vunpack.c.l.b16 %v8949
    %v9294 = vunpack.c.h.b16 %v8949
    %v9295 = vunpack.c.l.b16 %v8950
    %v9296 = vunpack.c.h.b16 %v8950
    %v9297 = vunpack.c.l.b16 %v8951
    %v9298 = vunpack.c.h.b16 %v8951
    %v9299 = vunpack.c.l.b16 %v8952
    %v9300 = vunpack.c.h.b16 %v8952
    %v9301 = vunpack.c.l.b16 %v8953
    %v9302 = vunpack.c.h.b16 %v8953
    %v9303 = vunpack.c.l.b16 %v8954
    %v9304 = vunpack.c.h.b16 %v8954
    %v9305 = vunpack.c.l.b16 %v8955
    %v9306 = vunpack.c.h.b16 %v8955
    %v9307 = vunpack.c.l.b16 %v8956
    %v9308 = vunpack.c.h.b16 %v8956
    %v9309 = vunpack.c.l.b16 %v8957
    %v9310 = vunpack.c.h.b16 %v8957
    %v9311 = vunpack.c.l.b16 %v8958
    %v9312 = vunpack.c.h.b16 %v8958
    %v9313 = vunpack.c.l.b16 %v8959
    %v9314 = vunpack.c.h.b16 %v8959
    %v9315 = vunpack.c.l.b16 %v8960
    %v9316 = vunpack.c.h.b16 %v8960
    %v9317 = vunpack.c.l.b16 %v8961
    %v9318 = vunpack.c.h.b16 %v8961
    %v9319 = vunpack.c.l.b16 %v8962
    %v9320 = vunpack.c.h.b16 %v8962
    %v9321 = vunpack.c.l.b16 %v8963
    %v9322 = vunpack.c.h.b16 %v8963
    %v9323 = vunpack.c.l.b16 %v8964
    %v9324 = vunpack.c.h.b16 %v8964
    %v9325 = vunpack.c.l.b16 %v8965
    %v9326 = vunpack.c.h.b16 %v8965
    %v9327 = vunpack.c.l.b16 %v8966
    %v9328 = vunpack.c.h.b16 %v8966
    %v9329 = vunpack.c.l.b16 %v8967
    %v9330 = vunpack.c.h.b16 %v8967
    %v9331 = vunpack.c.l.b16 %v8968
    %v9332 = vunpack.c.h.b16 %v8968
    %v9333 = vunpack.c.l.b16 %v8969
    %v9334 = vunpack.c.h.b16 %v8969
    %v9335 = vunpack.c.l.b16 %v8970
    %v9336 = vunpack.c.h.b16 %v8970
    %v9337 = vunpack.c.l.b16 %v8971
    %v9338 = vunpack.c.h.b16 %v8971
    %v9339 = vunpack.c.l.b16 %v8972
    %v9340 = vunpack.c.h.b16 %v8972
    %v9341 = vunpack.c.l.b16 %v8973
    %v9342 = vunpack.c.h.b16 %v8973
    %v9343 = vunpack.c.l.b16 %v8974
    %v9344 = vunpack.c.h.b16 %v8974
    %v9345 = vunpack.c.l.b16 %v8975
    %v9346 = vunpack.c.h.b16 %v8975
    %v9347 = vunpack.c.l.b16 %v8976
    %v9348 = vunpack.c.h.b16 %v8976
    %v9349 = vunpack.c.l.b16 %v8977
    %v9350 = vunpack.c.h.b16 %v8977
    %v9351 = vunpack.c.l.b16 %v8978
    %v9352 = vunpack.c.h.b16 %v8978
    %v9353 = vunpack.c.l.b16 %v8979
    %v9354 = vunpack.c.h.b16 %v8979
    %v9355 = vunpack.c.l.b16 %v8980
    %v9356 = vunpack.c.h.b16 %v8980
    %v9357 = vunpack.c.l.b16 %v8981
    %v9358 = vunpack.c.h.b16 %v8981
    %v9359 = vunpack.c.l.b16 %v8982
    %v9360 = vunpack.c.h.b16 %v8982
    %v9361 = vunpack.c.l.b16 %v8983
    %v9362 = vunpack.c.h.b16 %v8983
    %v9363 = vunpack.c.l.b16 %v8984
    %v9364 = vunpack.c.h.b16 %v8984
    %v9365 = vunpack.c.l.b16 %v8985
    %v9366 = vunpack.c.h.b16 %v8985
    %v9367 = vunpack.c.l.b16 %v8986
    %v9368 = vunpack.c.h.b16 %v8986
    %v9369 = vunpack.c.l.b16 %v8987
    %v9370 = vunpack.c.h.b16 %v8987
    %v9371 = vunpack.c.l.b16 %v8988
    %v9372 = vunpack.c.h.b16 %v8988
    %v9373 = vpack.c.b16 %v9125, %v9117
    %v9374 = vpack.c.b16 %v9126, %v9118
    %v9375 = vpack.c.b16 %v9127, %v9119
    %v9376 = vpack.c.b16 %v9128, %v9120
    %v9377 = vpack.c.b16 %v9129, %v9121
    %v9378 = vpack.c.b16 %v9130, %v9122
    %v9379 = vpack.c.b16 %v9131, %v9123
    %v9380 = vpack.c.b16 %v9132, %v9124
    %v9381 = vpack.c.b16 %v9141, %v9133
    %v9382 = vpack.c.b16 %v9142, %v9134
    %v9383 = vpack.c.b16 %v9143, %v9135
    %v9384 = vpack.c.b16 %v9144, %v9136
    %v9385 = vpack.c.b16 %v9145, %v9137
    %v9386 = vpack.c.b16 %v9146, %v9138
    %v9387 = vpack.c.b16 %v9147, %v9139
    %v9388 = vpack.c.b16 %v9148, %v9140
    %v9389 = vpack.c.b16 %v9157, %v9149
    %v9390 = vpack.c.b16 %v9158, %v9150
    %v9391 = vpack.c.b16 %v9159, %v9151
    %v9392 = vpack.c.b16 %v9160, %v9152
    %v9393 = vpack.c.b16 %v9161, %v9153
    %v9394 = vpack.c.b16 %v9162, %v9154
    %v9395 = vpack.c.b16 %v9163, %v9155
    %v9396 = vpack.c.b16 %v9164, %v9156
    %v9397 = vpack.c.b16 %v9173, %v9165
    %v9398 = vpack.c.b16 %v9174, %v9166
    %v9399 = vpack.c.b16 %v9175, %v9167
    %v9400 = vpack.c.b16 %v9176, %v9168
    %v9401 = vpack.c.b16 %v9177, %v9169
    %v9402 = vpack.c.b16 %v9178, %v9170
    %v9403 = vpack.c.b16 %v9179, %v9171
    %v9404 = vpack.c.b16 %v9180, %v9172
    %v9405 = vpack.c.b16 %v9189, %v9181
    %v9406 = vpack.c.b16 %v9190, %v9182
    %v9407 = vpack.c.b16 %v9191, %v9183
    %v9408 = vpack.c.b16 %v9192, %v9184
    %v9409 = vpack.c.b16 %v9193, %v9185
    %v9410 = vpack.c.b16 %v9194, %v9186
    %v9411 = vpack.c.b16 %v9195, %v9187
    %v9412 = vpack.c.b16 %v9196, %v9188
    %v9413 = vpack.c.b16 %v9205, %v9197
    %v9414 = vpack.c.b16 %v9206, %v9198
    %v9415 = vpack.c.b16 %v9207, %v9199
    %v9416 = vpack.c.b16 %v9208, %v9200
    %v9417 = vpack.c.b16 %v9209, %v9201
    %v9418 = vpack.c.b16 %v9210, %v9202
    %v9419 = vpack.c.b16 %v9211, %v9203
    %v9420 = vpack.c.b16 %v9212, %v9204
    %v9421 = vpack.c.b16 %v9221, %v9213
    %v9422 = vpack.c.b16 %v9222, %v9214
    %v9423 = vpack.c.b16 %v9223, %v9215
    %v9424 = vpack.c.b16 %v9224, %v9216
    %v9425 = vpack.c.b16 %v9225, %v9217
    %v9426 = vpack.c.b16 %v9226, %v9218
    %v9427 = vpack.c.b16 %v9227, %v9219
    %v9428 = vpack.c.b16 %v9228, %v9220
    %v9429 = vpack.c.b16 %v9237, %v9229
    %v9430 = vpack.c.b16 %v9238, %v9230
    %v9431 = vpack.c.b16 %v9239, %v9231
    %v9432 = vpack.c.b16 %v9240, %v9232
    %v9433 = vpack.c.b16 %v9241, %v9233
    %v9434 = vpack.c.b16 %v9242, %v9234
    %v9435 = vpack.c.b16 %v9243, %v9235
    %v9436 = vpack.c.b16 %v9244, %v9236
    %v9437 = vpack.c.b16 %v9253, %v9245
    %v9438 = vpack.c.b16 %v9254, %v9246
    %v9439 = vpack.c.b16 %v9255, %v9247
    %v9440 = vpack.c.b16 %v9256, %v9248
    %v9441 = vpack.c.b16 %v9257, %v9249
    %v9442 = vpack.c.b16 %v9258, %v9250
    %v9443 = vpack.c.b16 %v9259, %v9251
    %v9444 = vpack.c.b16 %v9260, %v9252
    %v9445 = vpack.c.b16 %v9269, %v9261
    %v9446 = vpack.c.b16 %v9270, %v9262
    %v9447 = vpack.c.b16 %v9271, %v9263
    %v9448 = vpack.c.b16 %v9272, %v9264
    %v9449 = vpack.c.b16 %v9273, %v9265
    %v9450 = vpack.c.b16 %v9274, %v9266
    %v9451 = vpack.c.b16 %v9275, %v9267
    %v9452 = vpack.c.b16 %v9276, %v9268
    %v9453 = vpack.c.b16 %v9285, %v9277
    %v9454 = vpack.c.b16 %v9286, %v9278
    %v9455 = vpack.c.b16 %v9287, %v9279
    %v9456 = vpack.c.b16 %v9288, %v9280
    %v9457 = vpack.c.b16 %v9289, %v9281
    %v9458 = vpack.c.b16 %v9290, %v9282
    %v9459 = vpack.c.b16 %v9291, %v9283
    %v9460 = vpack.c.b16 %v9292, %v9284
    %v9461 = vpack.c.b16 %v9301, %v9293
    %v9462 = vpack.c.b16 %v9302, %v9294
    %v9463 = vpack.c.b16 %v9303, %v9295
    %v9464 = vpack.c.b16 %v9304, %v9296
    %v9465 = vpack.c.b16 %v9305, %v9297
    %v9466 = vpack.c.b16 %v9306, %v9298
    %v9467 = vpack.c.b16 %v9307, %v9299
    %v9468 = vpack.c.b16 %v9308, %v9300
    %v9469 = vpack.c.b16 %v9317, %v9309
    %v9470 = vpack.c.b16 %v9318, %v9310
    %v9471 = vpack.c.b16 %v9319, %v9311
    %v9472 = vpack.c.b16 %v9320, %v9312
    %v9473 = vpack.c.b16 %v9321, %v9313
    %v9474 = vpack.c.b16 %v9322, %v9314
    %v9475 = vpack.c.b16 %v9323, %v9315
    %v9476 = vpack.c.b16 %v9324, %v9316
    %v9477 = vpack.c.b16 %v9333, %v9325
    %v9478 = vpack.c.b16 %v9334, %v9326
    %v9479 = vpack.c.b16 %v9335, %v9327
    %v9480 = vpack.c.b16 %v9336, %v9328
    %v9481 = vpack.c.b16 %v9337, %v9329
    %v9482 = vpack.c.b16 %v9338, %v9330
    %v9483 = vpack.c.b16 %v9339, %v9331
    %v9484 = vpack.c.b16 %v9340, %v9332
    %v9485 = vpack.c.b16 %v9349, %v9341
    %v9486 = vpack.c.b16 %v9350, %v9342
    %v9487 = vpack.c.b16 %v9351, %v9343
    %v9488 = vpack.c.b16 %v9352, %v9344
    %v9489 = vpack.c.b16 %v9353, %v9345
    %v9490 = vpack.c.b16 %v9354, %v9346
    %v9491 = vpack.c.b16 %v9355, %v9347
    %v9492 = vpack.c.b16 %v9356, %v9348
    %v9493 = vpack.c.b16 %v9365, %v9357
    %v9494 = vpack.c.b16 %v9366, %v9358
    %v9495 = vpack.c.b16 %v9367, %v9359
    %v9496 = vpack.c.b16 %v9368, %v9360
    %v9497 = vpack.c.b16 %v9369, %v9361
    %v9498 = vpack.c.b16 %v9370, %v9362
    %v9499 = vpack.c.b16 %v9371, %v9363
    %v9500 = vpack.c.b16 %v9372, %v9364
    %9629 = vmatpush.bf16.msra.mxu0 %v9429
    %9630 = vmatpush.bf16.msra.mxu0 %v9421
    %9631 = vmatpush.bf16.msra.mxu0 %v9413
    %9632 = vmatpush.bf16.msra.mxu0 %v9405
    %9633 = vmatpush.bf16.msra.mxu0 %v9397
    %9634 = vmatpush.bf16.msra.mxu0 %v9389
    %9635 = vmatpush.bf16.msra.mxu0 %v9381
    %9636 = vmatpush.bf16.msra.mxu0 %v9373
    %9637 = vmatmul.bf16.gmra.mxu0 %v8859
    %v9638 = vpop.f32.mrf.mxu0
    %v9639 = vadd.f32 0.0, %v9638
    %v9640 = vpop.f32.mrf.mxu0
    %9641 = vdwg.mxu0
    %9642 = vmatpush.bf16.msra.mxu0 %v9493
    %9643 = vmatpush.bf16.msra.mxu0 %v9485
    %9644 = vmatpush.bf16.msra.mxu0 %v9477
    %9645 = vmatpush.bf16.msra.mxu0 %v9469
    %9646 = vmatpush.bf16.msra.mxu0 %v9461
    %9647 = vmatpush.bf16.msra.mxu0 %v9453
    %9648 = vmatpush.bf16.msra.mxu0 %v9445
    %9649 = vmatpush.bf16.msra.mxu0 %v9437
    %9650 = vmatmul.bf16.gmra.mxu0 %v8860
    %v9651 = vpop.f32.mrf.mxu0
    %v9652 = vadd.f32 %v9639, %v9651
    %v9653 = vpop.f32.mrf.mxu0
    %9654 = vdwg.mxu0
    %9655 = vmatpush.bf16.msra.mxu0 %v9430
    %9656 = vmatpush.bf16.msra.mxu0 %v9422
    %9657 = vmatpush.bf16.msra.mxu0 %v9414
    %9658 = vmatpush.bf16.msra.mxu0 %v9406
    %9659 = vmatpush.bf16.msra.mxu0 %v9398
    %9660 = vmatpush.bf16.msra.mxu0 %v9390
    %9661 = vmatpush.bf16.msra.mxu0 %v9382
    %9662 = vmatpush.bf16.msra.mxu0 %v9374
    %9663 = vmatmul.bf16.gmra.mxu0 %v8859
    %v9664 = vpop.f32.mrf.mxu0
    %v9665 = vadd.f32 0.0, %v9664
    %v9666 = vpop.f32.mrf.mxu0
    %9667 = vdwg.mxu0
    %9668 = vmatpush.bf16.msra.mxu0 %v9494
    %9669 = vmatpush.bf16.msra.mxu0 %v9486
    %9670 = vmatpush.bf16.msra.mxu0 %v9478
    %9671 = vmatpush.bf16.msra.mxu0 %v9470
    %9672 = vmatpush.bf16.msra.mxu0 %v9462
    %9673 = vmatpush.bf16.msra.mxu0 %v9454
    %9674 = vmatpush.bf16.msra.mxu0 %v9446
    %9675 = vmatpush.bf16.msra.mxu0 %v9438
    %9676 = vmatmul.bf16.gmra.mxu0 %v8860
    %v9677 = vpop.f32.mrf.mxu0
    %v9678 = vadd.f32 %v9665, %v9677
    %v9679 = vpop.f32.mrf.mxu0
    %9680 = vdwg.mxu0
    %9681 = vmatpush.bf16.msra.mxu0 %v9431
    %9682 = vmatpush.bf16.msra.mxu0 %v9423
    %9683 = vmatpush.bf16.msra.mxu0 %v9415
    %9684 = vmatpush.bf16.msra.mxu0 %v9407
    %9685 = vmatpush.bf16.msra.mxu0 %v9399
    %9686 = vmatpush.bf16.msra.mxu0 %v9391
    %9687 = vmatpush.bf16.msra.mxu0 %v9383
    %9688 = vmatpush.bf16.msra.mxu0 %v9375
    %9689 = vmatmul.bf16.gmra.mxu0 %v8859
    %v9690 = vpop.f32.mrf.mxu0
    %v9691 = vadd.f32 0.0, %v9690
    %v9692 = vpop.f32.mrf.mxu0
    %9693 = vdwg.mxu0
    %9694 = vmatpush.bf16.msra.mxu0 %v9495
    %9695 = vmatpush.bf16.msra.mxu0 %v9487
    %9696 = vmatpush.bf16.msra.mxu0 %v9479
    %9697 = vmatpush.bf16.msra.mxu0 %v9471
    %9698 = vmatpush.bf16.msra.mxu0 %v9463
    %9699 = vmatpush.bf16.msra.mxu0 %v9455
    %9700 = vmatpush.bf16.msra.mxu0 %v9447
    %9701 = vmatpush.bf16.msra.mxu0 %v9439
    %9702 = vmatmul.bf16.gmra.mxu0 %v8860
    %v9703 = vpop.f32.mrf.mxu0
    %v9704 = vadd.f32 %v9691, %v9703
    %v9705 = vpop.f32.mrf.mxu0
    %9706 = vdwg.mxu0
    %9707 = vmatpush.bf16.msra.mxu0 %v9432
    %9708 = vmatpush.bf16.msra.mxu0 %v9424
    %9709 = vmatpush.bf16.msra.mxu0 %v9416
    %9710 = vmatpush.bf16.msra.mxu0 %v9408
    %9711 = vmatpush.bf16.msra.mxu0 %v9400
    %9712 = vmatpush.bf16.msra.mxu0 %v9392
    %9713 = vmatpush.bf16.msra.mxu0 %v9384
    %9714 = vmatpush.bf16.msra.mxu0 %v9376
    %9715 = vmatmul.bf16.gmra.mxu0 %v8859
    %v9716 = vpop.f32.mrf.mxu0
    %v9717 = vadd.f32 0.0, %v9716
    %v9718 = vpop.f32.mrf.mxu0
    %9719 = vdwg.mxu0
    %9720 = vmatpush.bf16.msra.mxu0 %v9496
    %9721 = vmatpush.bf16.msra.mxu0 %v9488
    %9722 = vmatpush.bf16.msra.mxu0 %v9480
    %9723 = vmatpush.bf16.msra.mxu0 %v9472
    %9724 = vmatpush.bf16.msra.mxu0 %v9464
    %9725 = vmatpush.bf16.msra.mxu0 %v9456
    %9726 = vmatpush.bf16.msra.mxu0 %v9448
    %9727 = vmatpush.bf16.msra.mxu0 %v9440
    %9728 = vmatmul.bf16.gmra.mxu0 %v8860
    %v9729 = vpop.f32.mrf.mxu0
    %v9730 = vadd.f32 %v9717, %v9729
    %v9731 = vpop.f32.mrf.mxu0
    %9732 = vdwg.mxu0
    %9733 = vmatpush.bf16.msra.mxu0 %v9433
    %9734 = vmatpush.bf16.msra.mxu0 %v9425
    %9735 = vmatpush.bf16.msra.mxu0 %v9417
    %9736 = vmatpush.bf16.msra.mxu0 %v9409
    %9737 = vmatpush.bf16.msra.mxu0 %v9401
    %9738 = vmatpush.bf16.msra.mxu0 %v9393
    %9739 = vmatpush.bf16.msra.mxu0 %v9385
    %9740 = vmatpush.bf16.msra.mxu0 %v9377
    %9741 = vmatmul.bf16.gmra.mxu0 %v8859
    %v9742 = vpop.f32.mrf.mxu0
    %v9743 = vadd.f32 0.0, %v9742
    %v9744 = vpop.f32.mrf.mxu0
    %9745 = vdwg.mxu0
    %9746 = vmatpush.bf16.msra.mxu0 %v9497
    %9747 = vmatpush.bf16.msra.mxu0 %v9489
    %9748 = vmatpush.bf16.msra.mxu0 %v9481
    %9749 = vmatpush.bf16.msra.mxu0 %v9473
    %9750 = vmatpush.bf16.msra.mxu0 %v9465
    %9751 = vmatpush.bf16.msra.mxu0 %v9457
    %9752 = vmatpush.bf16.msra.mxu0 %v9449
    %9753 = vmatpush.bf16.msra.mxu0 %v9441
    %9754 = vmatmul.bf16.gmra.mxu0 %v8860
    %v9755 = vpop.f32.mrf.mxu0
    %v9756 = vadd.f32 %v9743, %v9755
    %v9757 = vpop.f32.mrf.mxu0
    %9758 = vdwg.mxu0
    %9759 = vmatpush.bf16.msra.mxu0 %v9434
    %9760 = vmatpush.bf16.msra.mxu0 %v9426
    %9761 = vmatpush.bf16.msra.mxu0 %v9418
    %9762 = vmatpush.bf16.msra.mxu0 %v9410
    %9763 = vmatpush.bf16.msra.mxu0 %v9402
    %9764 = vmatpush.bf16.msra.mxu0 %v9394
    %9765 = vmatpush.bf16.msra.mxu0 %v9386
    %9766 = vmatpush.bf16.msra.mxu0 %v9378
    %9767 = vmatmul.bf16.gmra.mxu0 %v8859
    %v9768 = vpop.f32.mrf.mxu0
    %v9769 = vadd.f32 0.0, %v9768
    %v9770 = vpop.f32.mrf.mxu0
    %9771 = vdwg.mxu0
    %9772 = vmatpush.bf16.msra.mxu0 %v9498
    %9773 = vmatpush.bf16.msra.mxu0 %v9490
    %9774 = vmatpush.bf16.msra.mxu0 %v9482
    %9775 = vmatpush.bf16.msra.mxu0 %v9474
    %9776 = vmatpush.bf16.msra.mxu0 %v9466
    %9777 = vmatpush.bf16.msra.mxu0 %v9458
    %9778 = vmatpush.bf16.msra.mxu0 %v9450
    %9779 = vmatpush.bf16.msra.mxu0 %v9442
    %9780 = vmatmul.bf16.gmra.mxu0 %v8860
    %v9781 = vpop.f32.mrf.mxu0
    %v9782 = vadd.f32 %v9769, %v9781
    %v9783 = vpop.f32.mrf.mxu0
    %9784 = vdwg.mxu0
    %9785 = vmatpush.bf16.msra.mxu0 %v9435
    %9786 = vmatpush.bf16.msra.mxu0 %v9427
    %9787 = vmatpush.bf16.msra.mxu0 %v9419
    %9788 = vmatpush.bf16.msra.mxu0 %v9411
    %9789 = vmatpush.bf16.msra.mxu0 %v9403
    %9790 = vmatpush.bf16.msra.mxu0 %v9395
    %9791 = vmatpush.bf16.msra.mxu0 %v9387
    %9792 = vmatpush.bf16.msra.mxu0 %v9379
    %9793 = vmatmul.bf16.gmra.mxu0 %v8859
    %v9794 = vpop.f32.mrf.mxu0
    %v9795 = vadd.f32 0.0, %v9794
    %v9796 = vpop.f32.mrf.mxu0
    %9797 = vdwg.mxu0
    %9798 = vmatpush.bf16.msra.mxu0 %v9499
    %9799 = vmatpush.bf16.msra.mxu0 %v9491
    %9800 = vmatpush.bf16.msra.mxu0 %v9483
    %9801 = vmatpush.bf16.msra.mxu0 %v9475
    %9802 = vmatpush.bf16.msra.mxu0 %v9467
    %9803 = vmatpush.bf16.msra.mxu0 %v9459
    %9804 = vmatpush.bf16.msra.mxu0 %v9451
    %9805 = vmatpush.bf16.msra.mxu0 %v9443
    %9806 = vmatmul.bf16.gmra.mxu0 %v8860
    %v9807 = vpop.f32.mrf.mxu0
    %v9808 = vadd.f32 %v9795, %v9807
    %v9809 = vpop.f32.mrf.mxu0
    %9810 = vdwg.mxu0
    %9811 = vmatpush.bf16.msra.mxu0 %v9436
    %9812 = vmatpush.bf16.msra.mxu0 %v9428
    %9813 = vmatpush.bf16.msra.mxu0 %v9420
    %9814 = vmatpush.bf16.msra.mxu0 %v9412
    %9815 = vmatpush.bf16.msra.mxu0 %v9404
    %9816 = vmatpush.bf16.msra.mxu0 %v9396
    %9817 = vmatpush.bf16.msra.mxu0 %v9388
    %9818 = vmatpush.bf16.msra.mxu0 %v9380
    %9819 = vmatmul.bf16.gmra.mxu0 %v8859
    %v9820 = vpop.f32.mrf.mxu0
    %v9821 = vadd.f32 0.0, %v9820
    %v9822 = vpop.f32.mrf.mxu0
    %9823 = vdwg.mxu0
    %9824 = vmatpush.bf16.msra.mxu0 %v9500
    %9825 = vmatpush.bf16.msra.mxu0 %v9492
    %9826 = vmatpush.bf16.msra.mxu0 %v9484
    %9827 = vmatpush.bf16.msra.mxu0 %v9476
    %9828 = vmatpush.bf16.msra.mxu0 %v9468
    %9829 = vmatpush.bf16.msra.mxu0 %v9460
    %9830 = vmatpush.bf16.msra.mxu0 %v9452
    %9831 = vmatpush.bf16.msra.mxu0 %v9444
    %9832 = vmatmul.bf16.gmra.mxu0 %v8860
    %v9833 = vpop.f32.mrf.mxu0
    %v9834 = vadd.f32 %v9821, %v9833
    %v9835 = vpop.f32.mrf.mxu0
    %9836 = vdwg.mxu0
    %v9845 = vrot.slane %v9678, 7
    %v9846 = vrot.slane %v9704, 6
    %v9847 = vrot.slane %v9730, 5
    %v9848 = vrot.slane %v9756, 4
    %v9849 = vrot.slane %v9782, 3
    %v9850 = vrot.slane %v9808, 2
    %v9851 = vrot.slane %v9834, 1
    %v9852 = vsel %vm169, %v9652, %v9845
    %v9853 = vsel %vm2214, %v9846, %v9847
    %v9854 = vsel %vm2216, %v9852, %v9853
    %v9855 = vsel %vm2218, %v9848, %v9849
    %v9856 = vsel %vm2220, %v9850, %v9851
    %v9857 = vsel %vm2222, %v9855, %v9856
    %v9858 = vsel %vm2224, %v9854, %v9857
    %v9860 = vadd.f32 %v8853, %v9858
    %v9861 = vxor.u32 %v9860, 2147483648
    %v9862 = vmul.f32 %v9861, 1.442695
    %v9863 = vpow.pop %v9862
    %v9864 = vadd.f32 %v9863, 1.0
    %v9865 = vrcp.pop %v9864
    %v9866 = vmul.f32 %v9864, %v9865
    %v9867 = vsub.f32 1.0, %v9866
    %v9868 = vmul.f32 %v9865, %v9867
    %v9869 = vadd.f32 %v9865, %v9868
    %vm9870 = vweird.f32 %v9864
    %vm9871 = vweird.f32 %v9865
    %vm9872 = vmor %vm9870, %vm9871
    %v9873 = vsel %vm9872, %v9865, %v9869
    %v9874 = vand.u32 2147483647, %v9864
    %vm9875 = vcmp.eq.f32.partialorder %v9874, 8.507059e+37
    %v9876 = vand.u32 %v9864, 2147483648
    %v9877 = vor.u32 1.1754944e-38, %v9876
    %v9878 = vsel %vm9875, %v9877, %v9873
    %v9879 = vmul.f32 1.0, %v9878
    %v9881 = vrot.slane %v9860, 2
    %v9883 = vxor.u32 %v9881, 2147483648
    %v9884 = vmul.f32 %v9883, 1.442695
    %v9885 = vpow.pop %v9884
    %v9886 = vadd.f32 %v9885, 1.0
    %v9887 = vrcp.pop %v9886
    %v9888 = vmul.f32 %v9886, %v9887
    %v9889 = vsub.f32 1.0, %v9888
    %v9890 = vmul.f32 %v9887, %v9889
    %v9891 = vadd.f32 %v9887, %v9890
    %vm9892 = vweird.f32 %v9886
    %vm9893 = vweird.f32 %v9887
    %vm9894 = vmor %vm9892, %vm9893
    %v9895 = vsel %vm9894, %v9887, %v9891
    %v9896 = vand.u32 2147483647, %v9886
    %vm9897 = vcmp.eq.f32.partialorder %v9896, 8.507059e+37
    %v9898 = vand.u32 %v9886, 2147483648
    %v9899 = vor.u32 1.1754944e-38, %v9898
    %v9900 = vsel %vm9897, %v9899, %v9895
    %v9901 = vmul.f32 1.0, %v9900
    %v9902 = vrot.slane %v9860, 4
    %v9904 = vtanh.pop %v9902
    %v9905 = vrot.slane %v9860, 6
    %v9907 = vxor.u32 %v9905, 2147483648
    %v9908 = vmul.f32 %v9907, 1.442695
    %v9909 = vpow.pop %v9908
    %v9910 = vadd.f32 %v9909, 1.0
    %v9911 = vrcp.pop %v9910
    %v9912 = vmul.f32 %v9910, %v9911
    %v9913 = vsub.f32 1.0, %v9912
    %v9914 = vmul.f32 %v9911, %v9913
    %v9915 = vadd.f32 %v9911, %v9914
    %vm9916 = vweird.f32 %v9910
    %vm9917 = vweird.f32 %v9911
    %vm9918 = vmor %vm9916, %vm9917
    %v9919 = vsel %vm9918, %v9911, %v9915
    %v9920 = vand.u32 2147483647, %v9910
    %vm9921 = vcmp.eq.f32.partialorder %v9920, 8.507059e+37
    %v9922 = vand.u32 %v9910, 2147483648
    %v9923 = vor.u32 1.1754944e-38, %v9922
    %v9924 = vsel %vm9921, %v9923, %v9919
    %v9925 = vmul.f32 1.0, %v9924
    %v9926 = vmul.f32 %v9901, %v8838
    %v9927 = vmul.f32 %v9879, %v9904
    %v9928 = vadd.f32 %v9926, %v9927
    %v9929 = vtanh.pop %v9928
    %v9930 = vmul.f32 %v9925, %v9929
    %s9931 = scalar_lea.vmem %s7, 7
    %9932 = vst.msk [vmem:[%s9931] ss:$8 sm:$0x3] %vm2301, %v9930
    %9933 = vst.msk [vmem:[%s9931] ss:$8 sm:$0x0] %vm2301, %v9930
    %s9934 = sadd.s32 %s2304, 7
    %p9935 = scmp.eq.s32.totalorder %s9934, 7
    // Predicated region
    $region78: #{oracle_gold_rollout.2} parent=1 // pred_check
      %p9936 = pneg %p9935
    $region79: #{oracle_gold_rollout.2} parent=1 // pred_check_branch
      %9938 = sbr.rel (%p9936) target = $region81
    $region80: #{oracle_gold_rollout.2} parent=1 // pred_region
      %9939 = vst.msk [vmem:[#allocation13] sm:$0x3] %vm2301, %v9928
    $region81: #{oracle_gold_rollout.2} parent=1 // pred_fallthru
      _
    %9940 = vst.msk [vmem:[#allocation2] sm:$0x3] %vm2301, %v9930
    %9941 = vst.msk [vmem:[#allocation3] sm:$0x3] %vm2301, %v9928
    // Predicated region
    $region82: #{oracle_gold_rollout.2} parent=1 // pred_check
      _
    $region83: #{oracle_gold_rollout.2} parent=1 // pred_check_branch
      %9943 = sbr.rel (0) target = $region85
    $region84: #{oracle_gold_rollout.2} parent=1 // pred_region
      _
    $region85: #{oracle_gold_rollout.2} parent=1 // pred_fallthru
      _
    // Predicated region
    $region86: #{oracle_gold_rollout.2} parent=1 // pred_check
      _
    $region87: #{oracle_gold_rollout.2} parent=1 // pred_check_branch
      %9945 = sbr.rel (0) target = $region89
    $region88: #{oracle_gold_rollout.2} parent=1 // pred_region
      %9947 = vsyncadd [#allocation7], 0
      %s9949 = sshll.u32 [#allocation13], 4
      %s9950 = int_to_ptr.vmem [resolvable:$true] %s9949
      %s9951 = sshll.u32 %s8, 4
      %s9952 = int_to_ptr.hbm [resolvable:$true] %s9951
      %9954 = dma.vmem_to_hbm [thread:$0]  %s9950, 32, %s9952, [#allocation7]
    $region89: #{oracle_gold_rollout.2} parent=1 // pred_fallthru
      _
    // Predicated region
    $region90: #{oracle_gold_rollout.2} parent=1 // pred_check
      _
    $region91: #{oracle_gold_rollout.2} parent=1 // pred_check_branch
      %9956 = sbr.rel (0) target = $region93
    $region92: #{oracle_gold_rollout.2} parent=1 // pred_region
      _
    $region93: #{oracle_gold_rollout.2} parent=1 // pred_fallthru
      _
    // Predicated region
    $region94: #{oracle_gold_rollout.2} parent=1 // pred_check
      _
    $region95: #{oracle_gold_rollout.2} parent=1 // pred_check_branch
      %9958 = sbr.rel (0) target = $region97
    $region96: #{oracle_gold_rollout.2} parent=1 // pred_region
      %9960 = dma.done [#allocation7], 32
    $region97: #{oracle_gold_rollout.2} parent=1 // pred_fallthru
      _
    %9961 = vsyncpa [#allocation6], 1
    %9962 = vsyncpa [#allocation9], 1
    %9963 = vsyncpa [#allocation12], 1
    %9964 = vsyncpa [#allocation7], 1

</llo_original>
